<compile_context>
chip_gen: v6e
topology: v6e:2x2x1
jax: 0.10.0
libtpu: 0.0.40
codegen_flags: <defaults>
</compile_context>

<pallas_src>
import functools

import numpy as np
import jax
import jax.numpy as jnp
from jax import lax
from jax.experimental import pallas as pl
from jax.experimental.pallas import tpu as pltpu


# ----------------------------------------------------------------------------
# Static per-level geometry
# ----------------------------------------------------------------------------

def _level_dims(S, F, N):
    """(H, Cin, Cout, M, Wwide_next) for the 5 conv levels (square images)."""
    chans = [1, F, 2 * F, 4 * F, 8 * F, 16 * F]
    dims = []
    H = S
    for l in range(5):
        Wwide = N * (H + 2)
        M = Wwide - 2
        Wnext = N * (H // 2 + 2) if l < 4 else 0
        dims.append((H, chans[l], chans[l + 1], M, Wnext))
        H //= 2
    return dims


# ----------------------------------------------------------------------------
# The single fused kernel (no grid, no scratch, no dynamic indexing)
# ----------------------------------------------------------------------------

def _unet_kernel(
    x_ref,
    wb1, wb2, wb3, wb4, wb5,
    brow_ref,
    vv1, vv2, vv3, vv4,
    hh1, hh2, hh3, hh4,
    sel_ref, fc1w_ref, fc1b_ref,
    wih1, whh1, lb1,
    wih2, whh2, lb2,
    fc2w_ref, fc2b_ref,
    o_ref,
    *, dims, N, HID,
):
    f32 = jnp.float32
    bf16 = jnp.bfloat16
    wbs = (wb1, wb2, wb3, wb4, wb5)
    vvs = (vv1, vv2, vv3, vv4)
    hhs = (hh1, hh2, hh3, hh4)

    brow = brow_ref[...]                      # packed per-row conv biases (f32)

    # ---- Encoder ladder + bottleneck ---------------------------------------
    # Activation layout per level: A (Cin*(H+2), N*(W+2)) f32, width on lanes,
    # channel-major row stacking, zero rows/cols as the conv padding.
    a = x_ref[...]
    y = None
    boff = 0
    for l in range(5):
        H, Cin, Cout, M, Wnext = dims[l]
        # 3x3 conv (stride 1, pad 1) + bias + ReLU as ONE matmul: the three kw
        # shifts are concatenated along the contraction dim; kh and Cin are
        # already folded into the block-Toeplitz weight.
        patch = jnp.concatenate([a[:, kw:kw + M] for kw in range(3)], axis=0)
        y = jnp.dot(wbs[l][...], patch.astype(bf16),
                    preferred_element_type=f32)                 # (Cout*H, M)
        y = jnp.maximum(y + brow[boff:boff + Cout * H, :], 0.0)
        boff += Cout * H

        if l < 4:
            # Fused 2x2 max-pool + re-padding via constant 0/1 selection
            # matmuls: vertical pair-max from the left, horizontal pair-max
            # (and zero-border insertion for the next level) from the right.
            R = Cout * (H // 2 + 2)
            vv = vvs[l][...]                                    # (R, 2*Cout*H)
            yb = y.astype(bf16)
            vert = jnp.maximum(
                jnp.dot(vv[:, 0:Cout * H], yb, preferred_element_type=f32),
                jnp.dot(vv[:, Cout * H:2 * Cout * H], yb,
                        preferred_element_type=f32))            # (R, M)
            hh = hhs[l][...]                                    # (M, 2*Wnext)
            vb = vert.astype(bf16)
            a = jnp.maximum(
                jnp.dot(vb, hh[:, 0:Wnext], preferred_element_type=f32),
                jnp.dot(vb, hh[:, Wnext:2 * Wnext],
                        preferred_element_type=f32))            # (R, Wnext)

    # ---- fc1 + ReLU ---------------------------------------------------------
    # Bottleneck y is (16F*Hb, M5); gather each frame's (w=0, w=1) columns with
    # a constant selection matmul, then contract the (w, c, h) feature rows
    # against the permuted fc1 weight (torch NCHW flatten order).
    yb = y.astype(bf16)
    cols = jnp.dot(yb, sel_ref[...], preferred_element_type=f32)   # (CH*Hb, 2N)
    feat = jnp.concatenate([cols[:, 0:N], cols[:, N:2 * N]], axis=0)
    fc1 = lax.dot_general(feat.astype(bf16), fc1w_ref[...],
                          (((0,), (0,)), ((), ())),
                          preferred_element_type=f32)              # (N, HID)
    fc1 = jnp.maximum(fc1 + fc1b_ref[...], 0.0)

    # ---- 2-layer bidirectional LSTM (seq=N frames, batch=1) ----------------
    def bilstm(xseq, wih_ref, whh_ref, b_ref):
        T = xseq.shape[0]
        H4 = 4 * HID
        # Input projections of BOTH directions for all timesteps in one matmul.
        gates = jnp.dot(xseq.astype(bf16), wih_ref[...],
                        preferred_element_type=f32) + b_ref[...]   # (T, 8H)
        whh = whh_ref[...]
        whh_f = whh[:, 0:H4]
        whh_r = whh[:, H4:2 * H4]

        def cell(g, c):
            i = jax.nn.sigmoid(g[:, 0:HID])
            f = jax.nn.sigmoid(g[:, HID:2 * HID])
            gg = jnp.tanh(g[:, 2 * HID:3 * HID])
            o = jax.nn.sigmoid(g[:, 3 * HID:4 * HID])
            c = f * c + i * gg
            return o * jnp.tanh(c), c

        z = jnp.zeros((1, HID), f32)
        hf, cf, hr, cr = z, z, z, z
        fwd = [None] * T
        rev = [None] * T
        # Statically unrolled; forward and reverse chains are interleaved so
        # one direction's MXU push hides under the other's transcendentals.
        for t in range(T):
            tr = T - 1 - t
            gf = gates[t:t + 1, 0:H4] + jnp.dot(
                hf.astype(bf16), whh_f, preferred_element_type=f32)
            gr = gates[tr:tr + 1, H4:2 * H4] + jnp.dot(
                hr.astype(bf16), whh_r, preferred_element_type=f32)
            hf, cf = cell(gf, cf)
            hr, cr = cell(gr, cr)
            fwd[t] = hf
            rev[tr] = hr
        return jnp.concatenate(
            [jnp.concatenate(fwd, axis=0), jnp.concatenate(rev, axis=0)],
            axis=1)                                                # (T, 2H)

    l1 = bilstm(fc1, wih1, whh1, lb1)
    l2 = bilstm(l1, wih2, whh2, lb2)

    # ---- fc2 ----------------------------------------------------------------
    o_ref[...] = jnp.dot(l2.astype(bf16), fc2w_ref[...],
                         preferred_element_type=f32) + fc2b_ref[...]


# ----------------------------------------------------------------------------
# Host-side constant tables (pure 0/1 selection matrices, numpy at trace time)
# ----------------------------------------------------------------------------

def _build_selection_tables(N, dims):
    vv_list, hh_list = [], []
    for l in range(4):
        H, _, Cout, M, Wnext = dims[l]
        H2, W, W2 = H // 2, H, H // 2
        R = Cout * (H2 + 2)
        ve = np.zeros((R, Cout * H), np.float32)
        vo = np.zeros((R, Cout * H), np.float32)
        for co in range(Cout):
            for hp in range(H2):
                ve[co * (H2 + 2) + 1 + hp, co * H + 2 * hp] = 1.0
                vo[co * (H2 + 2) + 1 + hp, co * H + 2 * hp + 1] = 1.0
        vv_list.append(np.concatenate([ve, vo], axis=1))          # (R, 2*Cout*H)

        he = np.zeros((M, Wnext), np.float32)
        ho = np.zeros((M, Wnext), np.float32)
        for n in range(N):
            for w2 in range(W2):
                he[n * (W + 2) + 2 * w2, n * (W2 + 2) + 1 + w2] = 1.0
                ho[n * (W + 2) + 2 * w2 + 1, n * (W2 + 2) + 1 + w2] = 1.0
        hh_list.append(np.concatenate([he, ho], axis=1))          # (M, 2*Wnext)

    # fc1 gather: pick each frame's (w=0, w=1) bottleneck columns.
    Hb, _, _, M5, _ = dims[4]
    Wb = Hb
    sel = np.zeros((M5, Wb * N), np.float32)
    for n in range(N):
        for w in range(Wb):
            sel[n * (Wb + 2) + w, w * N + n] = 1.0
    return vv_list, hh_list, sel


def _conv_to_matmul(w, H):
    """(3,3,Cin,Cout) conv weight -> (Cout*H, 3*Cin*(H+2)) block-Toeplitz."""
    Hp = H + 2
    Cin, Cout = w.shape[2], w.shape[3]
    eye = np.stack([np.eye(H, Hp, k) for k in range(3)]).astype(np.float32)
    wb = jnp.einsum('xyio,xrs->oryis', w, eye)        # (Cout, H, 3, Cin, Hp)
    return wb.reshape(Cout * H, 3 * Cin * Hp)


# ----------------------------------------------------------------------------
# Parameters (deterministic synthetic init) and wrapper
# ----------------------------------------------------------------------------

def init_params(key, *, F, HID, S):
    keys = jax.random.split(key, 32)
    it = iter(keys)

    def nrm(shape, scale=0.05):
        return scale * jax.random.normal(next(it), shape, dtype=jnp.float32)

    chans = [1, F, 2 * F, 4 * F, 8 * F, 16 * F]
    p = {}
    for i, name in enumerate(["enc1", "enc2", "enc3", "enc4", "bott"]):
        cin, cout = chans[i], chans[i + 1]
        p[name + "_w"] = nrm((3, 3, cin, cout))      # (kh, kw, Cin, Cout)
        p[name + "_b"] = nrm((cout,))

    feat_dim = chans[-1] * (S // 16) * (S // 16)     # analogue of 131072
    p["fc1_w"] = nrm((feat_dim, HID))                # rows in torch (C,H,W) order
    p["fc1_b"] = nrm((HID,))

    lstm = []
    in_dim = HID
    for _layer in range(2):
        layer_p = []
        for _direction in range(2):
            layer_p += [nrm((in_dim, 4 * HID)),      # W_ih^T
                        nrm((HID, 4 * HID)),         # W_hh^T
                        nrm((1, 4 * HID))]           # b_ih + b_hh (combined)
        lstm.append(tuple(layer_p))
        in_dim = 2 * HID
    p["lstm"] = lstm

    p["fc2_w"] = nrm((2 * HID, 1))
    p["fc2_b"] = nrm((1,))
    return p


def unet_retrain_forward(x, params, *, F, HID):
    # x: (1, T, S, S, D) -- scaled analogue of (1, T, 256, 256, D).
    T, S = x.shape[1], x.shape[2]
    N = T
    bf16 = jnp.bfloat16
    dims = _level_dims(S, F, N)

    # x[:, :, :, :, 8].view(T, 1, S, S) -> lane-dense row-stacked wide layout:
    # (S+2, N*(S+2)) with a 1-px zero border per frame (the conv padding).
    img = x[0, :, :, :, 8]                                    # (T, S, S)
    pad = jnp.pad(img, ((0, 0), (1, 1), (1, 1)))              # (T, S+2, S+2)
    x2d = jnp.transpose(pad, (1, 0, 2)).reshape(S + 2, N * (S + 2))

    wbs, brows = [], []
    for i, name in enumerate(("enc1", "enc2", "enc3", "enc4", "bott")):
        H = dims[i][0]
        wbs.append(_conv_to_matmul(params[name + "_w"], H).astype(bf16))
        brows.append(jnp.repeat(params[name + "_b"], H)[:, None])
    brow_pack = jnp.concatenate(brows, axis=0)                # (sum Cout*H, 1)

    vv_np, hh_np, sel_np = _build_selection_tables(N, dims)
    vvs = [jnp.asarray(v, bf16) for v in vv_np]
    hhs = [jnp.asarray(h, bf16) for h in hh_np]
    sel = jnp.asarray(sel_np, bf16)

    # fc1 weight: rows in torch (c, h, w) flatten order -> (w, c, h) blocks so
    # the kernel's (w | c,h) feature stacking contracts exactly.
    C5, Hb = 16 * F, S // 16
    fc1w = (params["fc1_w"].reshape(C5, Hb, Hb, HID)
            .transpose(2, 0, 1, 3).reshape(Hb * C5 * Hb, HID).astype(bf16))
    fc1b = params["fc1_b"].reshape(1, HID)

    lstm_ops = []
    for (wih_f, whh_f, b_f, wih_r, whh_r, b_r) in params["lstm"]:
        lstm_ops += [jnp.concatenate([wih_f, wih_r], axis=1).astype(bf16),
                     jnp.concatenate([whh_f, whh_r], axis=1).astype(bf16),
                     jnp.concatenate([b_f, b_r], axis=1)]

    operands = ([x2d] + wbs + [brow_pack] + vvs + hhs
                + [sel, fc1w, fc1b] + lstm_ops
                + [params["fc2_w"].astype(bf16), params["fc2_b"].reshape(1, 1)])

    kern = functools.partial(_unet_kernel, dims=tuple(dims), N=N, HID=HID)
    # TODO(synk): optional v7x-only win: split the conv ladder over the two
    # TensorCores with a parallel grid axis (frames 3+3) and run the LSTM after
    # a barrier; kept single-program here since v5e/v6e have one TC.
    out = pl.pallas_call(
        kern,
        out_shape=jax.ShapeDtypeStruct((T, 1), jnp.float32),
        compiler_params=pltpu.CompilerParams(
            vmem_limit_bytes=64 * 1024 * 1024),
    )(*operands)
    return out[:, 0]                                          # (T,), like .squeeze()


# ----------------------------------------------------------------------------

if __name__ == "__main__":
    T, S, D, F, HID = 6, 32, 12, 4, 128

    key = jax.random.PRNGKey(0)
    pkey, xkey = jax.random.split(key)
    params = init_params(pkey, F=F, HID=HID, S=S)
    x = jax.random.normal(xkey, (1, T, S, S, D), dtype=jnp.float32)

    fwd = jax.jit(functools.partial(unet_retrain_forward, F=F, HID=HID))
    out = jax.block_until_ready(fwd(x, params))
    assert out.shape == (T,), out.shape
    assert bool(jnp.all(jnp.isfinite(out)))
    print("KERNEL_OK")
</pallas_src>

<mosaic_0001>
module attributes {stable_mosaic.version = 11 : i64} {
  func.func @_unet_kernel(%arg0: memref<34x204xf32, #tpu.memory_space<vmem>>, %arg1: memref<128x102xbf16, #tpu.memory_space<vmem>>, %arg2: memref<128x216xbf16, #tpu.memory_space<vmem>>, %arg3: memref<128x240xbf16, #tpu.memory_space<vmem>>, %arg4: memref<128x288xbf16, #tpu.memory_space<vmem>>, %arg5: memref<128x384xbf16, #tpu.memory_space<vmem>>, %arg6: memref<640x1xf32, #tpu.memory_space<vmem>>, %arg7: memref<72x256xbf16, #tpu.memory_space<vmem>>, %arg8: memref<80x256xbf16, #tpu.memory_space<vmem>>, %arg9: memref<96x256xbf16, #tpu.memory_space<vmem>>, %arg10: memref<128x256xbf16, #tpu.memory_space<vmem>>, %arg11: memref<202x216xbf16, #tpu.memory_space<vmem>>, %arg12: memref<106x120xbf16, #tpu.memory_space<vmem>>, %arg13: memref<58x72xbf16, #tpu.memory_space<vmem>>, %arg14: memref<34x48xbf16, #tpu.memory_space<vmem>>, %arg15: memref<22x12xbf16, #tpu.memory_space<vmem>>, %arg16: memref<256x128xbf16, #tpu.memory_space<vmem>>, %arg17: memref<1x128xf32, #tpu.memory_space<vmem>>, %arg18: memref<128x1024xbf16, #tpu.memory_space<vmem>>, %arg19: memref<128x1024xbf16, #tpu.memory_space<vmem>>, %arg20: memref<1x1024xf32, #tpu.memory_space<vmem>>, %arg21: memref<256x1024xbf16, #tpu.memory_space<vmem>>, %arg22: memref<128x1024xbf16, #tpu.memory_space<vmem>>, %arg23: memref<1x1024xf32, #tpu.memory_space<vmem>>, %arg24: memref<256x1xbf16, #tpu.memory_space<vmem>>, %arg25: memref<1x1xf32, #tpu.memory_space<vmem>>, %arg26: memref<6x1xf32, #tpu.memory_space<vmem>>) attributes {dimension_semantics = [], scalar_prefetch = 0 : i64, scratch_operands = 0 : i64, tpu.core_type = #tpu.core_type<tc>} {
    %c0 = arith.constant 0 : index
    %c0_0 = arith.constant 0 : index
    %0 = vector.load %arg6[%c0, %c0_0] : memref<640x1xf32, #tpu.memory_space<vmem>>, vector<640x1xf32>
    %c0_1 = arith.constant 0 : index
    %c0_2 = arith.constant 0 : index
    %1 = vector.load %arg0[%c0_1, %c0_2] : memref<34x204xf32, #tpu.memory_space<vmem>>, vector<34x204xf32>
    %2 = vector.extract_strided_slice %1 {offsets = [0, 0], sizes = [34, 202], strides = [1, 1]} : vector<34x204xf32> to vector<34x202xf32>
    %3 = vector.extract_strided_slice %1 {offsets = [0, 1], sizes = [34, 202], strides = [1, 1]} : vector<34x204xf32> to vector<34x202xf32>
    %4 = vector.extract_strided_slice %1 {offsets = [0, 2], sizes = [34, 202], strides = [1, 1]} : vector<34x204xf32> to vector<34x202xf32>
    %5 = tpu.concatenate %2, %3, %4 in 0 : vector<34x202xf32>, vector<34x202xf32>, vector<34x202xf32> -> vector<102x202xf32>
    %c0_3 = arith.constant 0 : index
    %c0_4 = arith.constant 0 : index
    %6 = vector.load %arg1[%c0_3, %c0_4] : memref<128x102xbf16, #tpu.memory_space<vmem>>, vector<128x102xbf16>
    %7 = arith.truncf %5 : vector<102x202xf32> to vector<102x202xbf16>
    %cst = arith.constant dense<0.000000e+00> : vector<128x202xf32>
    %8 = tpu.matmul %6, %7, %cst {dimension_numbers = #tpu.dot_dimension_numbers<[1], [0], [0], [1], [0, 0, 1, 1], [], []>} : vector<128x102xbf16>, vector<102x202xbf16>, vector<128x202xf32> -> vector<128x202xf32>
    %9 = vector.extract_strided_slice %0 {offsets = [0, 0], sizes = [128, 1], strides = [1, 1]} : vector<640x1xf32> to vector<128x1xf32>
    %10 = vector.broadcast %9 : vector<128x1xf32> to vector<128x202xf32>
    %11 = arith.addf %8, %10 : vector<128x202xf32>
    %cst_5 = arith.constant 0.000000e+00 : f32
    %12 = vector.broadcast %cst_5 : f32 to vector<128x202xf32>
    %13 = arith.maximumf %11, %12 : vector<128x202xf32>
    %c0_6 = arith.constant 0 : index
    %c0_7 = arith.constant 0 : index
    %14 = vector.load %arg7[%c0_6, %c0_7] : memref<72x256xbf16, #tpu.memory_space<vmem>>, vector<72x256xbf16>
    %15 = arith.truncf %13 : vector<128x202xf32> to vector<128x202xbf16>
    %16 = vector.extract_strided_slice %14 {offsets = [0, 0], sizes = [72, 128], strides = [1, 1]} : vector<72x256xbf16> to vector<72x128xbf16>
    %cst_8 = arith.constant dense<0.000000e+00> : vector<72x202xf32>
    %17 = tpu.matmul %16, %15, %cst_8 {dimension_numbers = #tpu.dot_dimension_numbers<[1], [0], [0], [1], [0, 0, 1, 1], [], []>} : vector<72x128xbf16>, vector<128x202xbf16>, vector<72x202xf32> -> vector<72x202xf32>
    %18 = vector.extract_strided_slice %14 {offsets = [0, 128], sizes = [72, 128], strides = [1, 1]} : vector<72x256xbf16> to vector<72x128xbf16>
    %cst_9 = arith.constant dense<0.000000e+00> : vector<72x202xf32>
    %19 = tpu.matmul %18, %15, %cst_9 {dimension_numbers = #tpu.dot_dimension_numbers<[1], [0], [0], [1], [0, 0, 1, 1], [], []>} : vector<72x128xbf16>, vector<128x202xbf16>, vector<72x202xf32> -> vector<72x202xf32>
    %20 = arith.maximumf %17, %19 : vector<72x202xf32>
    %c0_10 = arith.constant 0 : index
    %c0_11 = arith.constant 0 : index
    %21 = vector.load %arg11[%c0_10, %c0_11] : memref<202x216xbf16, #tpu.memory_space<vmem>>, vector<202x216xbf16>
    %22 = arith.truncf %20 : vector<72x202xf32> to vector<72x202xbf16>
    %23 = vector.extract_strided_slice %21 {offsets = [0, 0], sizes = [202, 108], strides = [1, 1]} : vector<202x216xbf16> to vector<202x108xbf16>
    %cst_12 = arith.constant dense<0.000000e+00> : vector<72x108xf32>
    %24 = tpu.matmul %22, %23, %cst_12 {dimension_numbers = #tpu.dot_dimension_numbers<[1], [0], [0], [1], [0, 0, 1, 1], [], []>} : vector<72x202xbf16>, vector<202x108xbf16>, vector<72x108xf32> -> vector<72x108xf32>
    %25 = vector.extract_strided_slice %21 {offsets = [0, 108], sizes = [202, 108], strides = [1, 1]} : vector<202x216xbf16> to vector<202x108xbf16>
    %cst_13 = arith.constant dense<0.000000e+00> : vector<72x108xf32>
    %26 = tpu.matmul %22, %25, %cst_13 {dimension_numbers = #tpu.dot_dimension_numbers<[1], [0], [0], [1], [0, 0, 1, 1], [], []>} : vector<72x202xbf16>, vector<202x108xbf16>, vector<72x108xf32> -> vector<72x108xf32>
    %27 = arith.maximumf %24, %26 : vector<72x108xf32>
    %28 = vector.extract_strided_slice %27 {offsets = [0, 0], sizes = [72, 106], strides = [1, 1]} : vector<72x108xf32> to vector<72x106xf32>
    %29 = vector.extract_strided_slice %27 {offsets = [0, 1], sizes = [72, 106], strides = [1, 1]} : vector<72x108xf32> to vector<72x106xf32>
    %30 = vector.extract_strided_slice %27 {offsets = [0, 2], sizes = [72, 106], strides = [1, 1]} : vector<72x108xf32> to vector<72x106xf32>
    %31 = tpu.concatenate %28, %29, %30 in 0 : vector<72x106xf32>, vector<72x106xf32>, vector<72x106xf32> -> vector<216x106xf32>
    %c0_14 = arith.constant 0 : index
    %c0_15 = arith.constant 0 : index
    %32 = vector.load %arg2[%c0_14, %c0_15] : memref<128x216xbf16, #tpu.memory_space<vmem>>, vector<128x216xbf16>
    %33 = arith.truncf %31 : vector<216x106xf32> to vector<216x106xbf16>
    %cst_16 = arith.constant dense<0.000000e+00> : vector<128x106xf32>
    %34 = tpu.matmul %32, %33, %cst_16 {dimension_numbers = #tpu.dot_dimension_numbers<[1], [0], [0], [1], [0, 0, 1, 1], [], []>} : vector<128x216xbf16>, vector<216x106xbf16>, vector<128x106xf32> -> vector<128x106xf32>
    %35 = vector.extract_strided_slice %0 {offsets = [128, 0], sizes = [128, 1], strides = [1, 1]} : vector<640x1xf32> to vector<128x1xf32>
    %36 = vector.broadcast %35 : vector<128x1xf32> to vector<128x106xf32>
    %37 = arith.addf %34, %36 : vector<128x106xf32>
    %cst_17 = arith.constant 0.000000e+00 : f32
    %38 = vector.broadcast %cst_17 : f32 to vector<128x106xf32>
    %39 = arith.maximumf %37, %38 : vector<128x106xf32>
    %c0_18 = arith.constant 0 : index
    %c0_19 = arith.constant 0 : index
    %40 = vector.load %arg8[%c0_18, %c0_19] : memref<80x256xbf16, #tpu.memory_space<vmem>>, vector<80x256xbf16>
    %41 = arith.truncf %39 : vector<128x106xf32> to vector<128x106xbf16>
    %42 = vector.extract_strided_slice %40 {offsets = [0, 0], sizes = [80, 128], strides = [1, 1]} : vector<80x256xbf16> to vector<80x128xbf16>
    %cst_20 = arith.constant dense<0.000000e+00> : vector<80x106xf32>
    %43 = tpu.matmul %42, %41, %cst_20 {dimension_numbers = #tpu.dot_dimension_numbers<[1], [0], [0], [1], [0, 0, 1, 1], [], []>} : vector<80x128xbf16>, vector<128x106xbf16>, vector<80x106xf32> -> vector<80x106xf32>
    %44 = vector.extract_strided_slice %40 {offsets = [0, 128], sizes = [80, 128], strides = [1, 1]} : vector<80x256xbf16> to vector<80x128xbf16>
    %cst_21 = arith.constant dense<0.000000e+00> : vector<80x106xf32>
    %45 = tpu.matmul %44, %41, %cst_21 {dimension_numbers = #tpu.dot_dimension_numbers<[1], [0], [0], [1], [0, 0, 1, 1], [], []>} : vector<80x128xbf16>, vector<128x106xbf16>, vector<80x106xf32> -> vector<80x106xf32>
    %46 = arith.maximumf %43, %45 : vector<80x106xf32>
    %c0_22 = arith.constant 0 : index
    %c0_23 = arith.constant 0 : index
    %47 = vector.load %arg12[%c0_22, %c0_23] : memref<106x120xbf16, #tpu.memory_space<vmem>>, vector<106x120xbf16>
    %48 = arith.truncf %46 : vector<80x106xf32> to vector<80x106xbf16>
    %49 = vector.extract_strided_slice %47 {offsets = [0, 0], sizes = [106, 60], strides = [1, 1]} : vector<106x120xbf16> to vector<106x60xbf16>
    %cst_24 = arith.constant dense<0.000000e+00> : vector<80x60xf32>
    %50 = tpu.matmul %48, %49, %cst_24 {dimension_numbers = #tpu.dot_dimension_numbers<[1], [0], [0], [1], [0, 0, 1, 1], [], []>} : vector<80x106xbf16>, vector<106x60xbf16>, vector<80x60xf32> -> vector<80x60xf32>
    %51 = vector.extract_strided_slice %47 {offsets = [0, 60], sizes = [106, 60], strides = [1, 1]} : vector<106x120xbf16> to vector<106x60xbf16>
    %cst_25 = arith.constant dense<0.000000e+00> : vector<80x60xf32>
    %52 = tpu.matmul %48, %51, %cst_25 {dimension_numbers = #tpu.dot_dimension_numbers<[1], [0], [0], [1], [0, 0, 1, 1], [], []>} : vector<80x106xbf16>, vector<106x60xbf16>, vector<80x60xf32> -> vector<80x60xf32>
    %53 = arith.maximumf %50, %52 : vector<80x60xf32>
    %54 = vector.extract_strided_slice %53 {offsets = [0, 0], sizes = [80, 58], strides = [1, 1]} : vector<80x60xf32> to vector<80x58xf32>
    %55 = vector.extract_strided_slice %53 {offsets = [0, 1], sizes = [80, 58], strides = [1, 1]} : vector<80x60xf32> to vector<80x58xf32>
    %56 = vector.extract_strided_slice %53 {offsets = [0, 2], sizes = [80, 58], strides = [1, 1]} : vector<80x60xf32> to vector<80x58xf32>
    %57 = tpu.concatenate %54, %55, %56 in 0 : vector<80x58xf32>, vector<80x58xf32>, vector<80x58xf32> -> vector<240x58xf32>
    %c0_26 = arith.constant 0 : index
    %c0_27 = arith.constant 0 : index
    %58 = vector.load %arg3[%c0_26, %c0_27] : memref<128x240xbf16, #tpu.memory_space<vmem>>, vector<128x240xbf16>
    %59 = arith.truncf %57 : vector<240x58xf32> to vector<240x58xbf16>
    %cst_28 = arith.constant dense<0.000000e+00> : vector<128x58xf32>
    %60 = tpu.matmul %58, %59, %cst_28 {dimension_numbers = #tpu.dot_dimension_numbers<[1], [0], [0], [1], [0, 0, 1, 1], [], []>} : vector<128x240xbf16>, vector<240x58xbf16>, vector<128x58xf32> -> vector<128x58xf32>
    %61 = vector.extract_strided_slice %0 {offsets = [256, 0], sizes = [128, 1], strides = [1, 1]} : vector<640x1xf32> to vector<128x1xf32>
    %62 = vector.broadcast %61 : vector<128x1xf32> to vector<128x58xf32>
    %63 = arith.addf %60, %62 : vector<128x58xf32>
    %cst_29 = arith.constant 0.000000e+00 : f32
    %64 = vector.broadcast %cst_29 : f32 to vector<128x58xf32>
    %65 = arith.maximumf %63, %64 : vector<128x58xf32>
    %c0_30 = arith.constant 0 : index
    %c0_31 = arith.constant 0 : index
    %66 = vector.load %arg9[%c0_30, %c0_31] : memref<96x256xbf16, #tpu.memory_space<vmem>>, vector<96x256xbf16>
    %67 = arith.truncf %65 : vector<128x58xf32> to vector<128x58xbf16>
    %68 = vector.extract_strided_slice %66 {offsets = [0, 0], sizes = [96, 128], strides = [1, 1]} : vector<96x256xbf16> to vector<96x128xbf16>
    %cst_32 = arith.constant dense<0.000000e+00> : vector<96x58xf32>
    %69 = tpu.matmul %68, %67, %cst_32 {dimension_numbers = #tpu.dot_dimension_numbers<[1], [0], [0], [1], [0, 0, 1, 1], [], []>} : vector<96x128xbf16>, vector<128x58xbf16>, vector<96x58xf32> -> vector<96x58xf32>
    %70 = vector.extract_strided_slice %66 {offsets = [0, 128], sizes = [96, 128], strides = [1, 1]} : vector<96x256xbf16> to vector<96x128xbf16>
    %cst_33 = arith.constant dense<0.000000e+00> : vector<96x58xf32>
    %71 = tpu.matmul %70, %67, %cst_33 {dimension_numbers = #tpu.dot_dimension_numbers<[1], [0], [0], [1], [0, 0, 1, 1], [], []>} : vector<96x128xbf16>, vector<128x58xbf16>, vector<96x58xf32> -> vector<96x58xf32>
    %72 = arith.maximumf %69, %71 : vector<96x58xf32>
    %c0_34 = arith.constant 0 : index
    %c0_35 = arith.constant 0 : index
    %73 = vector.load %arg13[%c0_34, %c0_35] : memref<58x72xbf16, #tpu.memory_space<vmem>>, vector<58x72xbf16>
    %74 = arith.truncf %72 : vector<96x58xf32> to vector<96x58xbf16>
    %75 = vector.extract_strided_slice %73 {offsets = [0, 0], sizes = [58, 36], strides = [1, 1]} : vector<58x72xbf16> to vector<58x36xbf16>
    %cst_36 = arith.constant dense<0.000000e+00> : vector<96x36xf32>
    %76 = tpu.matmul %74, %75, %cst_36 {dimension_numbers = #tpu.dot_dimension_numbers<[1], [0], [0], [1], [0, 0, 1, 1], [], []>} : vector<96x58xbf16>, vector<58x36xbf16>, vector<96x36xf32> -> vector<96x36xf32>
    %77 = vector.extract_strided_slice %73 {offsets = [0, 36], sizes = [58, 36], strides = [1, 1]} : vector<58x72xbf16> to vector<58x36xbf16>
    %cst_37 = arith.constant dense<0.000000e+00> : vector<96x36xf32>
    %78 = tpu.matmul %74, %77, %cst_37 {dimension_numbers = #tpu.dot_dimension_numbers<[1], [0], [0], [1], [0, 0, 1, 1], [], []>} : vector<96x58xbf16>, vector<58x36xbf16>, vector<96x36xf32> -> vector<96x36xf32>
    %79 = arith.maximumf %76, %78 : vector<96x36xf32>
    %80 = vector.extract_strided_slice %79 {offsets = [0, 0], sizes = [96, 34], strides = [1, 1]} : vector<96x36xf32> to vector<96x34xf32>
    %81 = vector.extract_strided_slice %79 {offsets = [0, 1], sizes = [96, 34], strides = [1, 1]} : vector<96x36xf32> to vector<96x34xf32>
    %82 = vector.extract_strided_slice %79 {offsets = [0, 2], sizes = [96, 34], strides = [1, 1]} : vector<96x36xf32> to vector<96x34xf32>
    %83 = tpu.concatenate %80, %81, %82 in 0 : vector<96x34xf32>, vector<96x34xf32>, vector<96x34xf32> -> vector<288x34xf32>
    %c0_38 = arith.constant 0 : index
    %c0_39 = arith.constant 0 : index
    %84 = vector.load %arg4[%c0_38, %c0_39] : memref<128x288xbf16, #tpu.memory_space<vmem>>, vector<128x288xbf16>
    %85 = arith.truncf %83 : vector<288x34xf32> to vector<288x34xbf16>
    %cst_40 = arith.constant dense<0.000000e+00> : vector<128x34xf32>
    %86 = tpu.matmul %84, %85, %cst_40 {dimension_numbers = #tpu.dot_dimension_numbers<[1], [0], [0], [1], [0, 0, 1, 1], [], []>} : vector<128x288xbf16>, vector<288x34xbf16>, vector<128x34xf32> -> vector<128x34xf32>
    %87 = vector.extract_strided_slice %0 {offsets = [384, 0], sizes = [128, 1], strides = [1, 1]} : vector<640x1xf32> to vector<128x1xf32>
    %88 = vector.broadcast %87 : vector<128x1xf32> to vector<128x34xf32>
    %89 = arith.addf %86, %88 : vector<128x34xf32>
    %cst_41 = arith.constant 0.000000e+00 : f32
    %90 = vector.broadcast %cst_41 : f32 to vector<128x34xf32>
    %91 = arith.maximumf %89, %90 : vector<128x34xf32>
    %c0_42 = arith.constant 0 : index
    %c0_43 = arith.constant 0 : index
    %92 = vector.load %arg10[%c0_42, %c0_43] : memref<128x256xbf16, #tpu.memory_space<vmem>>, vector<128x256xbf16>
    %93 = arith.truncf %91 : vector<128x34xf32> to vector<128x34xbf16>
    %94 = vector.extract_strided_slice %92 {offsets = [0, 0], sizes = [128, 128], strides = [1, 1]} : vector<128x256xbf16> to vector<128x128xbf16>
    %cst_44 = arith.constant dense<0.000000e+00> : vector<128x34xf32>
    %95 = tpu.matmul %94, %93, %cst_44 {dimension_numbers = #tpu.dot_dimension_numbers<[1], [0], [0], [1], [0, 0, 1, 1], [], []>} : vector<128x128xbf16>, vector<128x34xbf16>, vector<128x34xf32> -> vector<128x34xf32>
    %96 = vector.extract_strided_slice %92 {offsets = [0, 128], sizes = [128, 128], strides = [1, 1]} : vector<128x256xbf16> to vector<128x128xbf16>
    %cst_45 = arith.constant dense<0.000000e+00> : vector<128x34xf32>
    %97 = tpu.matmul %96, %93, %cst_45 {dimension_numbers = #tpu.dot_dimension_numbers<[1], [0], [0], [1], [0, 0, 1, 1], [], []>} : vector<128x128xbf16>, vector<128x34xbf16>, vector<128x34xf32> -> vector<128x34xf32>
    %98 = arith.maximumf %95, %97 : vector<128x34xf32>
    %c0_46 = arith.constant 0 : index
    %c0_47 = arith.constant 0 : index
    %99 = vector.load %arg14[%c0_46, %c0_47] : memref<34x48xbf16, #tpu.memory_space<vmem>>, vector<34x48xbf16>
    %100 = arith.truncf %98 : vector<128x34xf32> to vector<128x34xbf16>
    %101 = vector.extract_strided_slice %99 {offsets = [0, 0], sizes = [34, 24], strides = [1, 1]} : vector<34x48xbf16> to vector<34x24xbf16>
    %cst_48 = arith.constant dense<0.000000e+00> : vector<128x24xf32>
    %102 = tpu.matmul %100, %101, %cst_48 {dimension_numbers = #tpu.dot_dimension_numbers<[1], [0], [0], [1], [0, 0, 1, 1], [], []>} : vector<128x34xbf16>, vector<34x24xbf16>, vector<128x24xf32> -> vector<128x24xf32>
    %103 = vector.extract_strided_slice %99 {offsets = [0, 24], sizes = [34, 24], strides = [1, 1]} : vector<34x48xbf16> to vector<34x24xbf16>
    %cst_49 = arith.constant dense<0.000000e+00> : vector<128x24xf32>
    %104 = tpu.matmul %100, %103, %cst_49 {dimension_numbers = #tpu.dot_dimension_numbers<[1], [0], [0], [1], [0, 0, 1, 1], [], []>} : vector<128x34xbf16>, vector<34x24xbf16>, vector<128x24xf32> -> vector<128x24xf32>
    %105 = arith.maximumf %102, %104 : vector<128x24xf32>
    %106 = vector.extract_strided_slice %105 {offsets = [0, 0], sizes = [128, 22], strides = [1, 1]} : vector<128x24xf32> to vector<128x22xf32>
    %107 = vector.extract_strided_slice %105 {offsets = [0, 1], sizes = [128, 22], strides = [1, 1]} : vector<128x24xf32> to vector<128x22xf32>
    %108 = vector.extract_strided_slice %105 {offsets = [0, 2], sizes = [128, 22], strides = [1, 1]} : vector<128x24xf32> to vector<128x22xf32>
    %109 = tpu.concatenate %106, %107, %108 in 0 : vector<128x22xf32>, vector<128x22xf32>, vector<128x22xf32> -> vector<384x22xf32>
    %c0_50 = arith.constant 0 : index
    %c0_51 = arith.constant 0 : index
    %110 = vector.load %arg5[%c0_50, %c0_51] : memref<128x384xbf16, #tpu.memory_space<vmem>>, vector<128x384xbf16>
    %111 = arith.truncf %109 : vector<384x22xf32> to vector<384x22xbf16>
    %cst_52 = arith.constant dense<0.000000e+00> : vector<128x22xf32>
    %112 = tpu.matmul %110, %111, %cst_52 {dimension_numbers = #tpu.dot_dimension_numbers<[1], [0], [0], [1], [0, 0, 1, 1], [], []>} : vector<128x384xbf16>, vector<384x22xbf16>, vector<128x22xf32> -> vector<128x22xf32>
    %113 = vector.extract_strided_slice %0 {offsets = [512, 0], sizes = [128, 1], strides = [1, 1]} : vector<640x1xf32> to vector<128x1xf32>
    %114 = vector.broadcast %113 : vector<128x1xf32> to vector<128x22xf32>
    %115 = arith.addf %112, %114 : vector<128x22xf32>
    %cst_53 = arith.constant 0.000000e+00 : f32
    %116 = vector.broadcast %cst_53 : f32 to vector<128x22xf32>
    %117 = arith.maximumf %115, %116 : vector<128x22xf32>
    %118 = arith.truncf %117 : vector<128x22xf32> to vector<128x22xbf16>
    %c0_54 = arith.constant 0 : index
    %c0_55 = arith.constant 0 : index
    %119 = vector.load %arg15[%c0_54, %c0_55] : memref<22x12xbf16, #tpu.memory_space<vmem>>, vector<22x12xbf16>
    %cst_56 = arith.constant dense<0.000000e+00> : vector<128x12xf32>
    %120 = tpu.matmul %118, %119, %cst_56 {dimension_numbers = #tpu.dot_dimension_numbers<[1], [0], [0], [1], [0, 0, 1, 1], [], []>} : vector<128x22xbf16>, vector<22x12xbf16>, vector<128x12xf32> -> vector<128x12xf32>
    %121 = vector.extract_strided_slice %120 {offsets = [0, 0], sizes = [128, 6], strides = [1, 1]} : vector<128x12xf32> to vector<128x6xf32>
    %122 = vector.extract_strided_slice %120 {offsets = [0, 6], sizes = [128, 6], strides = [1, 1]} : vector<128x12xf32> to vector<128x6xf32>
    %123 = tpu.concatenate %121, %122 in 0 : vector<128x6xf32>, vector<128x6xf32> -> vector<256x6xf32>
    %124 = arith.truncf %123 : vector<256x6xf32> to vector<256x6xbf16>
    %c0_57 = arith.constant 0 : index
    %c0_58 = arith.constant 0 : index
    %125 = vector.load %arg16[%c0_57, %c0_58] : memref<256x128xbf16, #tpu.memory_space<vmem>>, vector<256x128xbf16>
    %cst_59 = arith.constant dense<0.000000e+00> : vector<6x128xf32>
    %126 = tpu.matmul %124, %125, %cst_59 {dimension_numbers = #tpu.dot_dimension_numbers<[0], [0], [1], [1], [0, 1, 1, 1], [], []>} : vector<256x6xbf16>, vector<256x128xbf16>, vector<6x128xf32> -> vector<6x128xf32>
    %c0_60 = arith.constant 0 : index
    %c0_61 = arith.constant 0 : index
    %127 = vector.load %arg17[%c0_60, %c0_61] : memref<1x128xf32, #tpu.memory_space<vmem>>, vector<1x128xf32>
    %128 = vector.broadcast %127 : vector<1x128xf32> to vector<6x128xf32>
    %129 = arith.addf %126, %128 : vector<6x128xf32>
    %cst_62 = arith.constant 0.000000e+00 : f32
    %130 = vector.broadcast %cst_62 : f32 to vector<6x128xf32>
    %131 = arith.maximumf %129, %130 : vector<6x128xf32>
    %132 = arith.truncf %131 : vector<6x128xf32> to vector<6x128xbf16>
    %c0_63 = arith.constant 0 : index
    %c0_64 = arith.constant 0 : index
    %133 = vector.load %arg18[%c0_63, %c0_64] : memref<128x1024xbf16, #tpu.memory_space<vmem>>, vector<128x1024xbf16>
    %cst_65 = arith.constant dense<0.000000e+00> : vector<6x1024xf32>
    %134 = tpu.matmul %132, %133, %cst_65 {dimension_numbers = #tpu.dot_dimension_numbers<[1], [0], [0], [1], [0, 0, 1, 1], [], []>} : vector<6x128xbf16>, vector<128x1024xbf16>, vector<6x1024xf32> -> vector<6x1024xf32>
    %c0_66 = arith.constant 0 : index
    %c0_67 = arith.constant 0 : index
    %135 = vector.load %arg20[%c0_66, %c0_67] : memref<1x1024xf32, #tpu.memory_space<vmem>>, vector<1x1024xf32>
    %136 = vector.broadcast %135 : vector<1x1024xf32> to vector<6x1024xf32>
    %137 = arith.addf %134, %136 : vector<6x1024xf32>
    %c0_68 = arith.constant 0 : index
    %c0_69 = arith.constant 0 : index
    %138 = vector.load %arg19[%c0_68, %c0_69] : memref<128x1024xbf16, #tpu.memory_space<vmem>>, vector<128x1024xbf16>
    %139 = vector.extract_strided_slice %138 {offsets = [0, 0], sizes = [128, 512], strides = [1, 1]} : vector<128x1024xbf16> to vector<128x512xbf16>
    %140 = vector.extract_strided_slice %138 {offsets = [0, 512], sizes = [128, 512], strides = [1, 1]} : vector<128x1024xbf16> to vector<128x512xbf16>
    %cst_70 = arith.constant 0.000000e+00 : f32
    %141 = vector.broadcast %cst_70 : f32 to vector<1x128xf32>
    %142 = vector.extract_strided_slice %137 {offsets = [0, 0], sizes = [1, 512], strides = [1, 1]} : vector<6x1024xf32> to vector<1x512xf32>
    %143 = arith.truncf %141 : vector<1x128xf32> to vector<1x128xbf16>
    %cst_71 = arith.constant dense<0.000000e+00> : vector<1x512xf32>
    %144 = tpu.matmul %143, %139, %cst_71 {dimension_numbers = #tpu.dot_dimension_numbers<[1], [0], [0], [1], [0, 0, 1, 1], [], []>} : vector<1x128xbf16>, vector<128x512xbf16>, vector<1x512xf32> -> vector<1x512xf32>
    %145 = arith.addf %142, %144 : vector<1x512xf32>
    %146 = vector.extract_strided_slice %137 {offsets = [5, 512], sizes = [1, 512], strides = [1, 1]} : vector<6x1024xf32> to vector<1x512xf32>
    %147 = arith.truncf %141 : vector<1x128xf32> to vector<1x128xbf16>
    %cst_72 = arith.constant dense<0.000000e+00> : vector<1x512xf32>
    %148 = tpu.matmul %147, %140, %cst_72 {dimension_numbers = #tpu.dot_dimension_numbers<[1], [0], [0], [1], [0, 0, 1, 1], [], []>} : vector<1x128xbf16>, vector<128x512xbf16>, vector<1x512xf32> -> vector<1x512xf32>
    %149 = arith.addf %146, %148 : vector<1x512xf32>
    %150 = vector.extract_strided_slice %145 {offsets = [0, 0], sizes = [1, 128], strides = [1, 1]} : vector<1x512xf32> to vector<1x128xf32>
    %151 = arith.negf %150 : vector<1x128xf32>
    %152 = math.exp %151 : vector<1x128xf32>
    %cst_73 = arith.constant 1.000000e+00 : f32
    %153 = vector.broadcast %cst_73 : f32 to vector<1x128xf32>
    %154 = arith.addf %153, %152 : vector<1x128xf32>
    %155 = arith.divf %153, %154 : vector<1x128xf32>
    %156 = vector.extract_strided_slice %145 {offsets = [0, 128], sizes = [1, 128], strides = [1, 1]} : vector<1x512xf32> to vector<1x128xf32>
    %157 = arith.negf %156 : vector<1x128xf32>
    %158 = math.exp %157 : vector<1x128xf32>
    %cst_74 = arith.constant 1.000000e+00 : f32
    %159 = vector.broadcast %cst_74 : f32 to vector<1x128xf32>
    %160 = arith.addf %159, %158 : vector<1x128xf32>
    %161 = arith.divf %159, %160 : vector<1x128xf32>
    %162 = vector.extract_strided_slice %145 {offsets = [0, 256], sizes = [1, 128], strides = [1, 1]} : vector<1x512xf32> to vector<1x128xf32>
    %163 = math.tanh %162 : vector<1x128xf32>
    %164 = vector.extract_strided_slice %145 {offsets = [0, 384], sizes = [1, 128], strides = [1, 1]} : vector<1x512xf32> to vector<1x128xf32>
    %165 = arith.negf %164 : vector<1x128xf32>
    %166 = math.exp %165 : vector<1x128xf32>
    %cst_75 = arith.constant 1.000000e+00 : f32
    %167 = vector.broadcast %cst_75 : f32 to vector<1x128xf32>
    %168 = arith.addf %167, %166 : vector<1x128xf32>
    %169 = arith.divf %167, %168 : vector<1x128xf32>
    %170 = arith.mulf %161, %141 : vector<1x128xf32>
    %171 = arith.mulf %155, %163 : vector<1x128xf32>
    %172 = arith.addf %170, %171 : vector<1x128xf32>
    %173 = math.tanh %172 : vector<1x128xf32>
    %174 = arith.mulf %169, %173 : vector<1x128xf32>
    %175 = vector.extract_strided_slice %149 {offsets = [0, 0], sizes = [1, 128], strides = [1, 1]} : vector<1x512xf32> to vector<1x128xf32>
    %176 = arith.negf %175 : vector<1x128xf32>
    %177 = math.exp %176 : vector<1x128xf32>
    %cst_76 = arith.constant 1.000000e+00 : f32
    %178 = vector.broadcast %cst_76 : f32 to vector<1x128xf32>
    %179 = arith.addf %178, %177 : vector<1x128xf32>
    %180 = arith.divf %178, %179 : vector<1x128xf32>
    %181 = vector.extract_strided_slice %149 {offsets = [0, 128], sizes = [1, 128], strides = [1, 1]} : vector<1x512xf32> to vector<1x128xf32>
    %182 = arith.negf %181 : vector<1x128xf32>
    %183 = math.exp %182 : vector<1x128xf32>
    %cst_77 = arith.constant 1.000000e+00 : f32
    %184 = vector.broadcast %cst_77 : f32 to vector<1x128xf32>
    %185 = arith.addf %184, %183 : vector<1x128xf32>
    %186 = arith.divf %184, %185 : vector<1x128xf32>
    %187 = vector.extract_strided_slice %149 {offsets = [0, 256], sizes = [1, 128], strides = [1, 1]} : vector<1x512xf32> to vector<1x128xf32>
    %188 = math.tanh %187 : vector<1x128xf32>
    %189 = vector.extract_strided_slice %149 {offsets = [0, 384], sizes = [1, 128], strides = [1, 1]} : vector<1x512xf32> to vector<1x128xf32>
    %190 = arith.negf %189 : vector<1x128xf32>
    %191 = math.exp %190 : vector<1x128xf32>
    %cst_78 = arith.constant 1.000000e+00 : f32
    %192 = vector.broadcast %cst_78 : f32 to vector<1x128xf32>
    %193 = arith.addf %192, %191 : vector<1x128xf32>
    %194 = arith.divf %192, %193 : vector<1x128xf32>
    %195 = arith.mulf %186, %141 : vector<1x128xf32>
    %196 = arith.mulf %180, %188 : vector<1x128xf32>
    %197 = arith.addf %195, %196 : vector<1x128xf32>
    %198 = math.tanh %197 : vector<1x128xf32>
    %199 = arith.mulf %194, %198 : vector<1x128xf32>
    %200 = vector.extract_strided_slice %137 {offsets = [1, 0], sizes = [1, 512], strides = [1, 1]} : vector<6x1024xf32> to vector<1x512xf32>
    %201 = arith.truncf %174 : vector<1x128xf32> to vector<1x128xbf16>
    %cst_79 = arith.constant dense<0.000000e+00> : vector<1x512xf32>
    %202 = tpu.matmul %201, %139, %cst_79 {dimension_numbers = #tpu.dot_dimension_numbers<[1], [0], [0], [1], [0, 0, 1, 1], [], []>} : vector<1x128xbf16>, vector<128x512xbf16>, vector<1x512xf32> -> vector<1x512xf32>
    %203 = arith.addf %200, %202 : vector<1x512xf32>
    %204 = vector.extract_strided_slice %137 {offsets = [4, 512], sizes = [1, 512], strides = [1, 1]} : vector<6x1024xf32> to vector<1x512xf32>
    %205 = arith.truncf %199 : vector<1x128xf32> to vector<1x128xbf16>
    %cst_80 = arith.constant dense<0.000000e+00> : vector<1x512xf32>
    %206 = tpu.matmul %205, %140, %cst_80 {dimension_numbers = #tpu.dot_dimension_numbers<[1], [0], [0], [1], [0, 0, 1, 1], [], []>} : vector<1x128xbf16>, vector<128x512xbf16>, vector<1x512xf32> -> vector<1x512xf32>
    %207 = arith.addf %204, %206 : vector<1x512xf32>
    %208 = vector.extract_strided_slice %203 {offsets = [0, 0], sizes = [1, 128], strides = [1, 1]} : vector<1x512xf32> to vector<1x128xf32>
    %209 = arith.negf %208 : vector<1x128xf32>
    %210 = math.exp %209 : vector<1x128xf32>
    %cst_81 = arith.constant 1.000000e+00 : f32
    %211 = vector.broadcast %cst_81 : f32 to vector<1x128xf32>
    %212 = arith.addf %211, %210 : vector<1x128xf32>
    %213 = arith.divf %211, %212 : vector<1x128xf32>
    %214 = vector.extract_strided_slice %203 {offsets = [0, 128], sizes = [1, 128], strides = [1, 1]} : vector<1x512xf32> to vector<1x128xf32>
    %215 = arith.negf %214 : vector<1x128xf32>
    %216 = math.exp %215 : vector<1x128xf32>
    %cst_82 = arith.constant 1.000000e+00 : f32
    %217 = vector.broadcast %cst_82 : f32 to vector<1x128xf32>
    %218 = arith.addf %217, %216 : vector<1x128xf32>
    %219 = arith.divf %217, %218 : vector<1x128xf32>
    %220 = vector.extract_strided_slice %203 {offsets = [0, 256], sizes = [1, 128], strides = [1, 1]} : vector<1x512xf32> to vector<1x128xf32>
    %221 = math.tanh %220 : vector<1x128xf32>
    %222 = vector.extract_strided_slice %203 {offsets = [0, 384], sizes = [1, 128], strides = [1, 1]} : vector<1x512xf32> to vector<1x128xf32>
    %223 = arith.negf %222 : vector<1x128xf32>
    %224 = math.exp %223 : vector<1x128xf32>
    %cst_83 = arith.constant 1.000000e+00 : f32
    %225 = vector.broadcast %cst_83 : f32 to vector<1x128xf32>
    %226 = arith.addf %225, %224 : vector<1x128xf32>
    %227 = arith.divf %225, %226 : vector<1x128xf32>
    %228 = arith.mulf %219, %172 : vector<1x128xf32>
    %229 = arith.mulf %213, %221 : vector<1x128xf32>
    %230 = arith.addf %228, %229 : vector<1x128xf32>
    %231 = math.tanh %230 : vector<1x128xf32>
    %232 = arith.mulf %227, %231 : vector<1x128xf32>
    %233 = vector.extract_strided_slice %207 {offsets = [0, 0], sizes = [1, 128], strides = [1, 1]} : vector<1x512xf32> to vector<1x128xf32>
    %234 = arith.negf %233 : vector<1x128xf32>
    %235 = math.exp %234 : vector<1x128xf32>
    %cst_84 = arith.constant 1.000000e+00 : f32
    %236 = vector.broadcast %cst_84 : f32 to vector<1x128xf32>
    %237 = arith.addf %236, %235 : vector<1x128xf32>
    %238 = arith.divf %236, %237 : vector<1x128xf32>
    %239 = vector.extract_strided_slice %207 {offsets = [0, 128], sizes = [1, 128], strides = [1, 1]} : vector<1x512xf32> to vector<1x128xf32>
    %240 = arith.negf %239 : vector<1x128xf32>
    %241 = math.exp %240 : vector<1x128xf32>
    %cst_85 = arith.constant 1.000000e+00 : f32
    %242 = vector.broadcast %cst_85 : f32 to vector<1x128xf32>
    %243 = arith.addf %242, %241 : vector<1x128xf32>
    %244 = arith.divf %242, %243 : vector<1x128xf32>
    %245 = vector.extract_strided_slice %207 {offsets = [0, 256], sizes = [1, 128], strides = [1, 1]} : vector<1x512xf32> to vector<1x128xf32>
    %246 = math.tanh %245 : vector<1x128xf32>
    %247 = vector.extract_strided_slice %207 {offsets = [0, 384], sizes = [1, 128], strides = [1, 1]} : vector<1x512xf32> to vector<1x128xf32>
    %248 = arith.negf %247 : vector<1x128xf32>
    %249 = math.exp %248 : vector<1x128xf32>
    %cst_86 = arith.constant 1.000000e+00 : f32
    %250 = vector.broadcast %cst_86 : f32 to vector<1x128xf32>
    %251 = arith.addf %250, %249 : vector<1x128xf32>
    %252 = arith.divf %250, %251 : vector<1x128xf32>
    %253 = arith.mulf %244, %197 : vector<1x128xf32>
    %254 = arith.mulf %238, %246 : vector<1x128xf32>
    %255 = arith.addf %253, %254 : vector<1x128xf32>
    %256 = math.tanh %255 : vector<1x128xf32>
    %257 = arith.mulf %252, %256 : vector<1x128xf32>
    %258 = vector.extract_strided_slice %137 {offsets = [2, 0], sizes = [1, 512], strides = [1, 1]} : vector<6x1024xf32> to vector<1x512xf32>
    %259 = arith.truncf %232 : vector<1x128xf32> to vector<1x128xbf16>
    %cst_87 = arith.constant dense<0.000000e+00> : vector<1x512xf32>
    %260 = tpu.matmul %259, %139, %cst_87 {dimension_numbers = #tpu.dot_dimension_numbers<[1], [0], [0], [1], [0, 0, 1, 1], [], []>} : vector<1x128xbf16>, vector<128x512xbf16>, vector<1x512xf32> -> vector<1x512xf32>
    %261 = arith.addf %258, %260 : vector<1x512xf32>
    %262 = vector.extract_strided_slice %137 {offsets = [3, 512], sizes = [1, 512], strides = [1, 1]} : vector<6x1024xf32> to vector<1x512xf32>
    %263 = arith.truncf %257 : vector<1x128xf32> to vector<1x128xbf16>
    %cst_88 = arith.constant dense<0.000000e+00> : vector<1x512xf32>
    %264 = tpu.matmul %263, %140, %cst_88 {dimension_numbers = #tpu.dot_dimension_numbers<[1], [0], [0], [1], [0, 0, 1, 1], [], []>} : vector<1x128xbf16>, vector<128x512xbf16>, vector<1x512xf32> -> vector<1x512xf32>
    %265 = arith.addf %262, %264 : vector<1x512xf32>
    %266 = vector.extract_strided_slice %261 {offsets = [0, 0], sizes = [1, 128], strides = [1, 1]} : vector<1x512xf32> to vector<1x128xf32>
    %267 = arith.negf %266 : vector<1x128xf32>
    %268 = math.exp %267 : vector<1x128xf32>
    %cst_89 = arith.constant 1.000000e+00 : f32
    %269 = vector.broadcast %cst_89 : f32 to vector<1x128xf32>
    %270 = arith.addf %269, %268 : vector<1x128xf32>
    %271 = arith.divf %269, %270 : vector<1x128xf32>
    %272 = vector.extract_strided_slice %261 {offsets = [0, 128], sizes = [1, 128], strides = [1, 1]} : vector<1x512xf32> to vector<1x128xf32>
    %273 = arith.negf %272 : vector<1x128xf32>
    %274 = math.exp %273 : vector<1x128xf32>
    %cst_90 = arith.constant 1.000000e+00 : f32
    %275 = vector.broadcast %cst_90 : f32 to vector<1x128xf32>
    %276 = arith.addf %275, %274 : vector<1x128xf32>
    %277 = arith.divf %275, %276 : vector<1x128xf32>
    %278 = vector.extract_strided_slice %261 {offsets = [0, 256], sizes = [1, 128], strides = [1, 1]} : vector<1x512xf32> to vector<1x128xf32>
    %279 = math.tanh %278 : vector<1x128xf32>
    %280 = vector.extract_strided_slice %261 {offsets = [0, 384], sizes = [1, 128], strides = [1, 1]} : vector<1x512xf32> to vector<1x128xf32>
    %281 = arith.negf %280 : vector<1x128xf32>
    %282 = math.exp %281 : vector<1x128xf32>
    %cst_91 = arith.constant 1.000000e+00 : f32
    %283 = vector.broadcast %cst_91 : f32 to vector<1x128xf32>
    %284 = arith.addf %283, %282 : vector<1x128xf32>
    %285 = arith.divf %283, %284 : vector<1x128xf32>
    %286 = arith.mulf %277, %230 : vector<1x128xf32>
    %287 = arith.mulf %271, %279 : vector<1x128xf32>
    %288 = arith.addf %286, %287 : vector<1x128xf32>
    %289 = math.tanh %288 : vector<1x128xf32>
    %290 = arith.mulf %285, %289 : vector<1x128xf32>
    %291 = vector.extract_strided_slice %265 {offsets = [0, 0], sizes = [1, 128], strides = [1, 1]} : vector<1x512xf32> to vector<1x128xf32>
    %292 = arith.negf %291 : vector<1x128xf32>
    %293 = math.exp %292 : vector<1x128xf32>
    %cst_92 = arith.constant 1.000000e+00 : f32
    %294 = vector.broadcast %cst_92 : f32 to vector<1x128xf32>
    %295 = arith.addf %294, %293 : vector<1x128xf32>
    %296 = arith.divf %294, %295 : vector<1x128xf32>
    %297 = vector.extract_strided_slice %265 {offsets = [0, 128], sizes = [1, 128], strides = [1, 1]} : vector<1x512xf32> to vector<1x128xf32>
    %298 = arith.negf %297 : vector<1x128xf32>
    %299 = math.exp %298 : vector<1x128xf32>
    %cst_93 = arith.constant 1.000000e+00 : f32
    %300 = vector.broadcast %cst_93 : f32 to vector<1x128xf32>
    %301 = arith.addf %300, %299 : vector<1x128xf32>
    %302 = arith.divf %300, %301 : vector<1x128xf32>
    %303 = vector.extract_strided_slice %265 {offsets = [0, 256], sizes = [1, 128], strides = [1, 1]} : vector<1x512xf32> to vector<1x128xf32>
    %304 = math.tanh %303 : vector<1x128xf32>
    %305 = vector.extract_strided_slice %265 {offsets = [0, 384], sizes = [1, 128], strides = [1, 1]} : vector<1x512xf32> to vector<1x128xf32>
    %306 = arith.negf %305 : vector<1x128xf32>
    %307 = math.exp %306 : vector<1x128xf32>
    %cst_94 = arith.constant 1.000000e+00 : f32
    %308 = vector.broadcast %cst_94 : f32 to vector<1x128xf32>
    %309 = arith.addf %308, %307 : vector<1x128xf32>
    %310 = arith.divf %308, %309 : vector<1x128xf32>
    %311 = arith.mulf %302, %255 : vector<1x128xf32>
    %312 = arith.mulf %296, %304 : vector<1x128xf32>
    %313 = arith.addf %311, %312 : vector<1x128xf32>
    %314 = math.tanh %313 : vector<1x128xf32>
    %315 = arith.mulf %310, %314 : vector<1x128xf32>
    %316 = vector.extract_strided_slice %137 {offsets = [3, 0], sizes = [1, 512], strides = [1, 1]} : vector<6x1024xf32> to vector<1x512xf32>
    %317 = arith.truncf %290 : vector<1x128xf32> to vector<1x128xbf16>
    %cst_95 = arith.constant dense<0.000000e+00> : vector<1x512xf32>
    %318 = tpu.matmul %317, %139, %cst_95 {dimension_numbers = #tpu.dot_dimension_numbers<[1], [0], [0], [1], [0, 0, 1, 1], [], []>} : vector<1x128xbf16>, vector<128x512xbf16>, vector<1x512xf32> -> vector<1x512xf32>
    %319 = arith.addf %316, %318 : vector<1x512xf32>
    %320 = vector.extract_strided_slice %137 {offsets = [2, 512], sizes = [1, 512], strides = [1, 1]} : vector<6x1024xf32> to vector<1x512xf32>
    %321 = arith.truncf %315 : vector<1x128xf32> to vector<1x128xbf16>
    %cst_96 = arith.constant dense<0.000000e+00> : vector<1x512xf32>
    %322 = tpu.matmul %321, %140, %cst_96 {dimension_numbers = #tpu.dot_dimension_numbers<[1], [0], [0], [1], [0, 0, 1, 1], [], []>} : vector<1x128xbf16>, vector<128x512xbf16>, vector<1x512xf32> -> vector<1x512xf32>
    %323 = arith.addf %320, %322 : vector<1x512xf32>
    %324 = vector.extract_strided_slice %319 {offsets = [0, 0], sizes = [1, 128], strides = [1, 1]} : vector<1x512xf32> to vector<1x128xf32>
    %325 = arith.negf %324 : vector<1x128xf32>
    %326 = math.exp %325 : vector<1x128xf32>
    %cst_97 = arith.constant 1.000000e+00 : f32
    %327 = vector.broadcast %cst_97 : f32 to vector<1x128xf32>
    %328 = arith.addf %327, %326 : vector<1x128xf32>
    %329 = arith.divf %327, %328 : vector<1x128xf32>
    %330 = vector.extract_strided_slice %319 {offsets = [0, 128], sizes = [1, 128], strides = [1, 1]} : vector<1x512xf32> to vector<1x128xf32>
    %331 = arith.negf %330 : vector<1x128xf32>
    %332 = math.exp %331 : vector<1x128xf32>
    %cst_98 = arith.constant 1.000000e+00 : f32
    %333 = vector.broadcast %cst_98 : f32 to vector<1x128xf32>
    %334 = arith.addf %333, %332 : vector<1x128xf32>
    %335 = arith.divf %333, %334 : vector<1x128xf32>
    %336 = vector.extract_strided_slice %319 {offsets = [0, 256], sizes = [1, 128], strides = [1, 1]} : vector<1x512xf32> to vector<1x128xf32>
    %337 = math.tanh %336 : vector<1x128xf32>
    %338 = vector.extract_strided_slice %319 {offsets = [0, 384], sizes = [1, 128], strides = [1, 1]} : vector<1x512xf32> to vector<1x128xf32>
    %339 = arith.negf %338 : vector<1x128xf32>
    %340 = math.exp %339 : vector<1x128xf32>
    %cst_99 = arith.constant 1.000000e+00 : f32
    %341 = vector.broadcast %cst_99 : f32 to vector<1x128xf32>
    %342 = arith.addf %341, %340 : vector<1x128xf32>
    %343 = arith.divf %341, %342 : vector<1x128xf32>
    %344 = arith.mulf %335, %288 : vector<1x128xf32>
    %345 = arith.mulf %329, %337 : vector<1x128xf32>
    %346 = arith.addf %344, %345 : vector<1x128xf32>
    %347 = math.tanh %346 : vector<1x128xf32>
    %348 = arith.mulf %343, %347 : vector<1x128xf32>
    %349 = vector.extract_strided_slice %323 {offsets = [0, 0], sizes = [1, 128], strides = [1, 1]} : vector<1x512xf32> to vector<1x128xf32>
    %350 = arith.negf %349 : vector<1x128xf32>
    %351 = math.exp %350 : vector<1x128xf32>
    %cst_100 = arith.constant 1.000000e+00 : f32
    %352 = vector.broadcast %cst_100 : f32 to vector<1x128xf32>
    %353 = arith.addf %352, %351 : vector<1x128xf32>
    %354 = arith.divf %352, %353 : vector<1x128xf32>
    %355 = vector.extract_strided_slice %323 {offsets = [0, 128], sizes = [1, 128], strides = [1, 1]} : vector<1x512xf32> to vector<1x128xf32>
    %356 = arith.negf %355 : vector<1x128xf32>
    %357 = math.exp %356 : vector<1x128xf32>
    %cst_101 = arith.constant 1.000000e+00 : f32
    %358 = vector.broadcast %cst_101 : f32 to vector<1x128xf32>
    %359 = arith.addf %358, %357 : vector<1x128xf32>
    %360 = arith.divf %358, %359 : vector<1x128xf32>
    %361 = vector.extract_strided_slice %323 {offsets = [0, 256], sizes = [1, 128], strides = [1, 1]} : vector<1x512xf32> to vector<1x128xf32>
    %362 = math.tanh %361 : vector<1x128xf32>
    %363 = vector.extract_strided_slice %323 {offsets = [0, 384], sizes = [1, 128], strides = [1, 1]} : vector<1x512xf32> to vector<1x128xf32>
    %364 = arith.negf %363 : vector<1x128xf32>
    %365 = math.exp %364 : vector<1x128xf32>
    %cst_102 = arith.constant 1.000000e+00 : f32
    %366 = vector.broadcast %cst_102 : f32 to vector<1x128xf32>
    %367 = arith.addf %366, %365 : vector<1x128xf32>
    %368 = arith.divf %366, %367 : vector<1x128xf32>
    %369 = arith.mulf %360, %313 : vector<1x128xf32>
    %370 = arith.mulf %354, %362 : vector<1x128xf32>
    %371 = arith.addf %369, %370 : vector<1x128xf32>
    %372 = math.tanh %371 : vector<1x128xf32>
    %373 = arith.mulf %368, %372 : vector<1x128xf32>
    %374 = vector.extract_strided_slice %137 {offsets = [4, 0], sizes = [1, 512], strides = [1, 1]} : vector<6x1024xf32> to vector<1x512xf32>
    %375 = arith.truncf %348 : vector<1x128xf32> to vector<1x128xbf16>
    %cst_103 = arith.constant dense<0.000000e+00> : vector<1x512xf32>
    %376 = tpu.matmul %375, %139, %cst_103 {dimension_numbers = #tpu.dot_dimension_numbers<[1], [0], [0], [1], [0, 0, 1, 1], [], []>} : vector<1x128xbf16>, vector<128x512xbf16>, vector<1x512xf32> -> vector<1x512xf32>
    %377 = arith.addf %374, %376 : vector<1x512xf32>
    %378 = vector.extract_strided_slice %137 {offsets = [1, 512], sizes = [1, 512], strides = [1, 1]} : vector<6x1024xf32> to vector<1x512xf32>
    %379 = arith.truncf %373 : vector<1x128xf32> to vector<1x128xbf16>
    %cst_104 = arith.constant dense<0.000000e+00> : vector<1x512xf32>
    %380 = tpu.matmul %379, %140, %cst_104 {dimension_numbers = #tpu.dot_dimension_numbers<[1], [0], [0], [1], [0, 0, 1, 1], [], []>} : vector<1x128xbf16>, vector<128x512xbf16>, vector<1x512xf32> -> vector<1x512xf32>
    %381 = arith.addf %378, %380 : vector<1x512xf32>
    %382 = vector.extract_strided_slice %377 {offsets = [0, 0], sizes = [1, 128], strides = [1, 1]} : vector<1x512xf32> to vector<1x128xf32>
    %383 = arith.negf %382 : vector<1x128xf32>
    %384 = math.exp %383 : vector<1x128xf32>
    %cst_105 = arith.constant 1.000000e+00 : f32
    %385 = vector.broadcast %cst_105 : f32 to vector<1x128xf32>
    %386 = arith.addf %385, %384 : vector<1x128xf32>
    %387 = arith.divf %385, %386 : vector<1x128xf32>
    %388 = vector.extract_strided_slice %377 {offsets = [0, 128], sizes = [1, 128], strides = [1, 1]} : vector<1x512xf32> to vector<1x128xf32>
    %389 = arith.negf %388 : vector<1x128xf32>
    %390 = math.exp %389 : vector<1x128xf32>
    %cst_106 = arith.constant 1.000000e+00 : f32
    %391 = vector.broadcast %cst_106 : f32 to vector<1x128xf32>
    %392 = arith.addf %391, %390 : vector<1x128xf32>
    %393 = arith.divf %391, %392 : vector<1x128xf32>
    %394 = vector.extract_strided_slice %377 {offsets = [0, 256], sizes = [1, 128], strides = [1, 1]} : vector<1x512xf32> to vector<1x128xf32>
    %395 = math.tanh %394 : vector<1x128xf32>
    %396 = vector.extract_strided_slice %377 {offsets = [0, 384], sizes = [1, 128], strides = [1, 1]} : vector<1x512xf32> to vector<1x128xf32>
    %397 = arith.negf %396 : vector<1x128xf32>
    %398 = math.exp %397 : vector<1x128xf32>
    %cst_107 = arith.constant 1.000000e+00 : f32
    %399 = vector.broadcast %cst_107 : f32 to vector<1x128xf32>
    %400 = arith.addf %399, %398 : vector<1x128xf32>
    %401 = arith.divf %399, %400 : vector<1x128xf32>
    %402 = arith.mulf %393, %346 : vector<1x128xf32>
    %403 = arith.mulf %387, %395 : vector<1x128xf32>
    %404 = arith.addf %402, %403 : vector<1x128xf32>
    %405 = math.tanh %404 : vector<1x128xf32>
    %406 = arith.mulf %401, %405 : vector<1x128xf32>
    %407 = vector.extract_strided_slice %381 {offsets = [0, 0], sizes = [1, 128], strides = [1, 1]} : vector<1x512xf32> to vector<1x128xf32>
    %408 = arith.negf %407 : vector<1x128xf32>
    %409 = math.exp %408 : vector<1x128xf32>
    %cst_108 = arith.constant 1.000000e+00 : f32
    %410 = vector.broadcast %cst_108 : f32 to vector<1x128xf32>
    %411 = arith.addf %410, %409 : vector<1x128xf32>
    %412 = arith.divf %410, %411 : vector<1x128xf32>
    %413 = vector.extract_strided_slice %381 {offsets = [0, 128], sizes = [1, 128], strides = [1, 1]} : vector<1x512xf32> to vector<1x128xf32>
    %414 = arith.negf %413 : vector<1x128xf32>
    %415 = math.exp %414 : vector<1x128xf32>
    %cst_109 = arith.constant 1.000000e+00 : f32
    %416 = vector.broadcast %cst_109 : f32 to vector<1x128xf32>
    %417 = arith.addf %416, %415 : vector<1x128xf32>
    %418 = arith.divf %416, %417 : vector<1x128xf32>
    %419 = vector.extract_strided_slice %381 {offsets = [0, 256], sizes = [1, 128], strides = [1, 1]} : vector<1x512xf32> to vector<1x128xf32>
    %420 = math.tanh %419 : vector<1x128xf32>
    %421 = vector.extract_strided_slice %381 {offsets = [0, 384], sizes = [1, 128], strides = [1, 1]} : vector<1x512xf32> to vector<1x128xf32>
    %422 = arith.negf %421 : vector<1x128xf32>
    %423 = math.exp %422 : vector<1x128xf32>
    %cst_110 = arith.constant 1.000000e+00 : f32
    %424 = vector.broadcast %cst_110 : f32 to vector<1x128xf32>
    %425 = arith.addf %424, %423 : vector<1x128xf32>
    %426 = arith.divf %424, %425 : vector<1x128xf32>
    %427 = arith.mulf %418, %371 : vector<1x128xf32>
    %428 = arith.mulf %412, %420 : vector<1x128xf32>
    %429 = arith.addf %427, %428 : vector<1x128xf32>
    %430 = math.tanh %429 : vector<1x128xf32>
    %431 = arith.mulf %426, %430 : vector<1x128xf32>
    %432 = vector.extract_strided_slice %137 {offsets = [5, 0], sizes = [1, 512], strides = [1, 1]} : vector<6x1024xf32> to vector<1x512xf32>
    %433 = arith.truncf %406 : vector<1x128xf32> to vector<1x128xbf16>
    %cst_111 = arith.constant dense<0.000000e+00> : vector<1x512xf32>
    %434 = tpu.matmul %433, %139, %cst_111 {dimension_numbers = #tpu.dot_dimension_numbers<[1], [0], [0], [1], [0, 0, 1, 1], [], []>} : vector<1x128xbf16>, vector<128x512xbf16>, vector<1x512xf32> -> vector<1x512xf32>
    %435 = arith.addf %432, %434 : vector<1x512xf32>
    %436 = vector.extract_strided_slice %137 {offsets = [0, 512], sizes = [1, 512], strides = [1, 1]} : vector<6x1024xf32> to vector<1x512xf32>
    %437 = arith.truncf %431 : vector<1x128xf32> to vector<1x128xbf16>
    %cst_112 = arith.constant dense<0.000000e+00> : vector<1x512xf32>
    %438 = tpu.matmul %437, %140, %cst_112 {dimension_numbers = #tpu.dot_dimension_numbers<[1], [0], [0], [1], [0, 0, 1, 1], [], []>} : vector<1x128xbf16>, vector<128x512xbf16>, vector<1x512xf32> -> vector<1x512xf32>
    %439 = arith.addf %436, %438 : vector<1x512xf32>
    %440 = vector.extract_strided_slice %435 {offsets = [0, 0], sizes = [1, 128], strides = [1, 1]} : vector<1x512xf32> to vector<1x128xf32>
    %441 = arith.negf %440 : vector<1x128xf32>
    %442 = math.exp %441 : vector<1x128xf32>
    %cst_113 = arith.constant 1.000000e+00 : f32
    %443 = vector.broadcast %cst_113 : f32 to vector<1x128xf32>
    %444 = arith.addf %443, %442 : vector<1x128xf32>
    %445 = arith.divf %443, %444 : vector<1x128xf32>
    %446 = vector.extract_strided_slice %435 {offsets = [0, 128], sizes = [1, 128], strides = [1, 1]} : vector<1x512xf32> to vector<1x128xf32>
    %447 = arith.negf %446 : vector<1x128xf32>
    %448 = math.exp %447 : vector<1x128xf32>
    %cst_114 = arith.constant 1.000000e+00 : f32
    %449 = vector.broadcast %cst_114 : f32 to vector<1x128xf32>
    %450 = arith.addf %449, %448 : vector<1x128xf32>
    %451 = arith.divf %449, %450 : vector<1x128xf32>
    %452 = vector.extract_strided_slice %435 {offsets = [0, 256], sizes = [1, 128], strides = [1, 1]} : vector<1x512xf32> to vector<1x128xf32>
    %453 = math.tanh %452 : vector<1x128xf32>
    %454 = vector.extract_strided_slice %435 {offsets = [0, 384], sizes = [1, 128], strides = [1, 1]} : vector<1x512xf32> to vector<1x128xf32>
    %455 = arith.negf %454 : vector<1x128xf32>
    %456 = math.exp %455 : vector<1x128xf32>
    %cst_115 = arith.constant 1.000000e+00 : f32
    %457 = vector.broadcast %cst_115 : f32 to vector<1x128xf32>
    %458 = arith.addf %457, %456 : vector<1x128xf32>
    %459 = arith.divf %457, %458 : vector<1x128xf32>
    %460 = arith.mulf %451, %404 : vector<1x128xf32>
    %461 = arith.mulf %445, %453 : vector<1x128xf32>
    %462 = arith.addf %460, %461 : vector<1x128xf32>
    %463 = math.tanh %462 : vector<1x128xf32>
    %464 = arith.mulf %459, %463 : vector<1x128xf32>
    %465 = vector.extract_strided_slice %439 {offsets = [0, 0], sizes = [1, 128], strides = [1, 1]} : vector<1x512xf32> to vector<1x128xf32>
    %466 = arith.negf %465 : vector<1x128xf32>
    %467 = math.exp %466 : vector<1x128xf32>
    %cst_116 = arith.constant 1.000000e+00 : f32
    %468 = vector.broadcast %cst_116 : f32 to vector<1x128xf32>
    %469 = arith.addf %468, %467 : vector<1x128xf32>
    %470 = arith.divf %468, %469 : vector<1x128xf32>
    %471 = vector.extract_strided_slice %439 {offsets = [0, 128], sizes = [1, 128], strides = [1, 1]} : vector<1x512xf32> to vector<1x128xf32>
    %472 = arith.negf %471 : vector<1x128xf32>
    %473 = math.exp %472 : vector<1x128xf32>
    %cst_117 = arith.constant 1.000000e+00 : f32
    %474 = vector.broadcast %cst_117 : f32 to vector<1x128xf32>
    %475 = arith.addf %474, %473 : vector<1x128xf32>
    %476 = arith.divf %474, %475 : vector<1x128xf32>
    %477 = vector.extract_strided_slice %439 {offsets = [0, 256], sizes = [1, 128], strides = [1, 1]} : vector<1x512xf32> to vector<1x128xf32>
    %478 = math.tanh %477 : vector<1x128xf32>
    %479 = vector.extract_strided_slice %439 {offsets = [0, 384], sizes = [1, 128], strides = [1, 1]} : vector<1x512xf32> to vector<1x128xf32>
    %480 = arith.negf %479 : vector<1x128xf32>
    %481 = math.exp %480 : vector<1x128xf32>
    %cst_118 = arith.constant 1.000000e+00 : f32
    %482 = vector.broadcast %cst_118 : f32 to vector<1x128xf32>
    %483 = arith.addf %482, %481 : vector<1x128xf32>
    %484 = arith.divf %482, %483 : vector<1x128xf32>
    %485 = arith.mulf %476, %429 : vector<1x128xf32>
    %486 = arith.mulf %470, %478 : vector<1x128xf32>
    %487 = arith.addf %485, %486 : vector<1x128xf32>
    %488 = math.tanh %487 : vector<1x128xf32>
    %489 = arith.mulf %484, %488 : vector<1x128xf32>
    %490 = tpu.concatenate %174, %232, %290, %348, %406, %464 in 0 : vector<1x128xf32>, vector<1x128xf32>, vector<1x128xf32>, vector<1x128xf32>, vector<1x128xf32>, vector<1x128xf32> -> vector<6x128xf32>
    %491 = tpu.concatenate %489, %431, %373, %315, %257, %199 in 0 : vector<1x128xf32>, vector<1x128xf32>, vector<1x128xf32>, vector<1x128xf32>, vector<1x128xf32>, vector<1x128xf32> -> vector<6x128xf32>
    %492 = tpu.concatenate %490, %491 in 1 : vector<6x128xf32>, vector<6x128xf32> -> vector<6x256xf32>
    %493 = arith.truncf %492 : vector<6x256xf32> to vector<6x256xbf16>
    %c0_119 = arith.constant 0 : index
    %c0_120 = arith.constant 0 : index
    %494 = vector.load %arg21[%c0_119, %c0_120] : memref<256x1024xbf16, #tpu.memory_space<vmem>>, vector<256x1024xbf16>
    %cst_121 = arith.constant dense<0.000000e+00> : vector<6x1024xf32>
    %495 = tpu.matmul %493, %494, %cst_121 {dimension_numbers = #tpu.dot_dimension_numbers<[1], [0], [0], [1], [0, 0, 1, 1], [], []>} : vector<6x256xbf16>, vector<256x1024xbf16>, vector<6x1024xf32> -> vector<6x1024xf32>
    %c0_122 = arith.constant 0 : index
    %c0_123 = arith.constant 0 : index
    %496 = vector.load %arg23[%c0_122, %c0_123] : memref<1x1024xf32, #tpu.memory_space<vmem>>, vector<1x1024xf32>
    %497 = vector.broadcast %496 : vector<1x1024xf32> to vector<6x1024xf32>
    %498 = arith.addf %495, %497 : vector<6x1024xf32>
    %c0_124 = arith.constant 0 : index
    %c0_125 = arith.constant 0 : index
    %499 = vector.load %arg22[%c0_124, %c0_125] : memref<128x1024xbf16, #tpu.memory_space<vmem>>, vector<128x1024xbf16>
    %500 = vector.extract_strided_slice %499 {offsets = [0, 0], sizes = [128, 512], strides = [1, 1]} : vector<128x1024xbf16> to vector<128x512xbf16>
    %501 = vector.extract_strided_slice %499 {offsets = [0, 512], sizes = [128, 512], strides = [1, 1]} : vector<128x1024xbf16> to vector<128x512xbf16>
    %cst_126 = arith.constant 0.000000e+00 : f32
    %502 = vector.broadcast %cst_126 : f32 to vector<1x128xf32>
    %503 = vector.extract_strided_slice %498 {offsets = [0, 0], sizes = [1, 512], strides = [1, 1]} : vector<6x1024xf32> to vector<1x512xf32>
    %504 = arith.truncf %502 : vector<1x128xf32> to vector<1x128xbf16>
    %cst_127 = arith.constant dense<0.000000e+00> : vector<1x512xf32>
    %505 = tpu.matmul %504, %500, %cst_127 {dimension_numbers = #tpu.dot_dimension_numbers<[1], [0], [0], [1], [0, 0, 1, 1], [], []>} : vector<1x128xbf16>, vector<128x512xbf16>, vector<1x512xf32> -> vector<1x512xf32>
    %506 = arith.addf %503, %505 : vector<1x512xf32>
    %507 = vector.extract_strided_slice %498 {offsets = [5, 512], sizes = [1, 512], strides = [1, 1]} : vector<6x1024xf32> to vector<1x512xf32>
    %508 = arith.truncf %502 : vector<1x128xf32> to vector<1x128xbf16>
    %cst_128 = arith.constant dense<0.000000e+00> : vector<1x512xf32>
    %509 = tpu.matmul %508, %501, %cst_128 {dimension_numbers = #tpu.dot_dimension_numbers<[1], [0], [0], [1], [0, 0, 1, 1], [], []>} : vector<1x128xbf16>, vector<128x512xbf16>, vector<1x512xf32> -> vector<1x512xf32>
    %510 = arith.addf %507, %509 : vector<1x512xf32>
    %511 = vector.extract_strided_slice %506 {offsets = [0, 0], sizes = [1, 128], strides = [1, 1]} : vector<1x512xf32> to vector<1x128xf32>
    %512 = arith.negf %511 : vector<1x128xf32>
    %513 = math.exp %512 : vector<1x128xf32>
    %cst_129 = arith.constant 1.000000e+00 : f32
    %514 = vector.broadcast %cst_129 : f32 to vector<1x128xf32>
    %515 = arith.addf %514, %513 : vector<1x128xf32>
    %516 = arith.divf %514, %515 : vector<1x128xf32>
    %517 = vector.extract_strided_slice %506 {offsets = [0, 128], sizes = [1, 128], strides = [1, 1]} : vector<1x512xf32> to vector<1x128xf32>
    %518 = arith.negf %517 : vector<1x128xf32>
    %519 = math.exp %518 : vector<1x128xf32>
    %cst_130 = arith.constant 1.000000e+00 : f32
    %520 = vector.broadcast %cst_130 : f32 to vector<1x128xf32>
    %521 = arith.addf %520, %519 : vector<1x128xf32>
    %522 = arith.divf %520, %521 : vector<1x128xf32>
    %523 = vector.extract_strided_slice %506 {offsets = [0, 256], sizes = [1, 128], strides = [1, 1]} : vector<1x512xf32> to vector<1x128xf32>
    %524 = math.tanh %523 : vector<1x128xf32>
    %525 = vector.extract_strided_slice %506 {offsets = [0, 384], sizes = [1, 128], strides = [1, 1]} : vector<1x512xf32> to vector<1x128xf32>
    %526 = arith.negf %525 : vector<1x128xf32>
    %527 = math.exp %526 : vector<1x128xf32>
    %cst_131 = arith.constant 1.000000e+00 : f32
    %528 = vector.broadcast %cst_131 : f32 to vector<1x128xf32>
    %529 = arith.addf %528, %527 : vector<1x128xf32>
    %530 = arith.divf %528, %529 : vector<1x128xf32>
    %531 = arith.mulf %522, %502 : vector<1x128xf32>
    %532 = arith.mulf %516, %524 : vector<1x128xf32>
    %533 = arith.addf %531, %532 : vector<1x128xf32>
    %534 = math.tanh %533 : vector<1x128xf32>
    %535 = arith.mulf %530, %534 : vector<1x128xf32>
    %536 = vector.extract_strided_slice %510 {offsets = [0, 0], sizes = [1, 128], strides = [1, 1]} : vector<1x512xf32> to vector<1x128xf32>
    %537 = arith.negf %536 : vector<1x128xf32>
    %538 = math.exp %537 : vector<1x128xf32>
    %cst_132 = arith.constant 1.000000e+00 : f32
    %539 = vector.broadcast %cst_132 : f32 to vector<1x128xf32>
    %540 = arith.addf %539, %538 : vector<1x128xf32>
    %541 = arith.divf %539, %540 : vector<1x128xf32>
    %542 = vector.extract_strided_slice %510 {offsets = [0, 128], sizes = [1, 128], strides = [1, 1]} : vector<1x512xf32> to vector<1x128xf32>
    %543 = arith.negf %542 : vector<1x128xf32>
    %544 = math.exp %543 : vector<1x128xf32>
    %cst_133 = arith.constant 1.000000e+00 : f32
    %545 = vector.broadcast %cst_133 : f32 to vector<1x128xf32>
    %546 = arith.addf %545, %544 : vector<1x128xf32>
    %547 = arith.divf %545, %546 : vector<1x128xf32>
    %548 = vector.extract_strided_slice %510 {offsets = [0, 256], sizes = [1, 128], strides = [1, 1]} : vector<1x512xf32> to vector<1x128xf32>
    %549 = math.tanh %548 : vector<1x128xf32>
    %550 = vector.extract_strided_slice %510 {offsets = [0, 384], sizes = [1, 128], strides = [1, 1]} : vector<1x512xf32> to vector<1x128xf32>
    %551 = arith.negf %550 : vector<1x128xf32>
    %552 = math.exp %551 : vector<1x128xf32>
    %cst_134 = arith.constant 1.000000e+00 : f32
    %553 = vector.broadcast %cst_134 : f32 to vector<1x128xf32>
    %554 = arith.addf %553, %552 : vector<1x128xf32>
    %555 = arith.divf %553, %554 : vector<1x128xf32>
    %556 = arith.mulf %547, %502 : vector<1x128xf32>
    %557 = arith.mulf %541, %549 : vector<1x128xf32>
    %558 = arith.addf %556, %557 : vector<1x128xf32>
    %559 = math.tanh %558 : vector<1x128xf32>
    %560 = arith.mulf %555, %559 : vector<1x128xf32>
    %561 = vector.extract_strided_slice %498 {offsets = [1, 0], sizes = [1, 512], strides = [1, 1]} : vector<6x1024xf32> to vector<1x512xf32>
    %562 = arith.truncf %535 : vector<1x128xf32> to vector<1x128xbf16>
    %cst_135 = arith.constant dense<0.000000e+00> : vector<1x512xf32>
    %563 = tpu.matmul %562, %500, %cst_135 {dimension_numbers = #tpu.dot_dimension_numbers<[1], [0], [0], [1], [0, 0, 1, 1], [], []>} : vector<1x128xbf16>, vector<128x512xbf16>, vector<1x512xf32> -> vector<1x512xf32>
    %564 = arith.addf %561, %563 : vector<1x512xf32>
    %565 = vector.extract_strided_slice %498 {offsets = [4, 512], sizes = [1, 512], strides = [1, 1]} : vector<6x1024xf32> to vector<1x512xf32>
    %566 = arith.truncf %560 : vector<1x128xf32> to vector<1x128xbf16>
    %cst_136 = arith.constant dense<0.000000e+00> : vector<1x512xf32>
    %567 = tpu.matmul %566, %501, %cst_136 {dimension_numbers = #tpu.dot_dimension_numbers<[1], [0], [0], [1], [0, 0, 1, 1], [], []>} : vector<1x128xbf16>, vector<128x512xbf16>, vector<1x512xf32> -> vector<1x512xf32>
    %568 = arith.addf %565, %567 : vector<1x512xf32>
    %569 = vector.extract_strided_slice %564 {offsets = [0, 0], sizes = [1, 128], strides = [1, 1]} : vector<1x512xf32> to vector<1x128xf32>
    %570 = arith.negf %569 : vector<1x128xf32>
    %571 = math.exp %570 : vector<1x128xf32>
    %cst_137 = arith.constant 1.000000e+00 : f32
    %572 = vector.broadcast %cst_137 : f32 to vector<1x128xf32>
    %573 = arith.addf %572, %571 : vector<1x128xf32>
    %574 = arith.divf %572, %573 : vector<1x128xf32>
    %575 = vector.extract_strided_slice %564 {offsets = [0, 128], sizes = [1, 128], strides = [1, 1]} : vector<1x512xf32> to vector<1x128xf32>
    %576 = arith.negf %575 : vector<1x128xf32>
    %577 = math.exp %576 : vector<1x128xf32>
    %cst_138 = arith.constant 1.000000e+00 : f32
    %578 = vector.broadcast %cst_138 : f32 to vector<1x128xf32>
    %579 = arith.addf %578, %577 : vector<1x128xf32>
    %580 = arith.divf %578, %579 : vector<1x128xf32>
    %581 = vector.extract_strided_slice %564 {offsets = [0, 256], sizes = [1, 128], strides = [1, 1]} : vector<1x512xf32> to vector<1x128xf32>
    %582 = math.tanh %581 : vector<1x128xf32>
    %583 = vector.extract_strided_slice %564 {offsets = [0, 384], sizes = [1, 128], strides = [1, 1]} : vector<1x512xf32> to vector<1x128xf32>
    %584 = arith.negf %583 : vector<1x128xf32>
    %585 = math.exp %584 : vector<1x128xf32>
    %cst_139 = arith.constant 1.000000e+00 : f32
    %586 = vector.broadcast %cst_139 : f32 to vector<1x128xf32>
    %587 = arith.addf %586, %585 : vector<1x128xf32>
    %588 = arith.divf %586, %587 : vector<1x128xf32>
    %589 = arith.mulf %580, %533 : vector<1x128xf32>
    %590 = arith.mulf %574, %582 : vector<1x128xf32>
    %591 = arith.addf %589, %590 : vector<1x128xf32>
    %592 = math.tanh %591 : vector<1x128xf32>
    %593 = arith.mulf %588, %592 : vector<1x128xf32>
    %594 = vector.extract_strided_slice %568 {offsets = [0, 0], sizes = [1, 128], strides = [1, 1]} : vector<1x512xf32> to vector<1x128xf32>
    %595 = arith.negf %594 : vector<1x128xf32>
    %596 = math.exp %595 : vector<1x128xf32>
    %cst_140 = arith.constant 1.000000e+00 : f32
    %597 = vector.broadcast %cst_140 : f32 to vector<1x128xf32>
    %598 = arith.addf %597, %596 : vector<1x128xf32>
    %599 = arith.divf %597, %598 : vector<1x128xf32>
    %600 = vector.extract_strided_slice %568 {offsets = [0, 128], sizes = [1, 128], strides = [1, 1]} : vector<1x512xf32> to vector<1x128xf32>
    %601 = arith.negf %600 : vector<1x128xf32>
    %602 = math.exp %601 : vector<1x128xf32>
    %cst_141 = arith.constant 1.000000e+00 : f32
    %603 = vector.broadcast %cst_141 : f32 to vector<1x128xf32>
    %604 = arith.addf %603, %602 : vector<1x128xf32>
    %605 = arith.divf %603, %604 : vector<1x128xf32>
    %606 = vector.extract_strided_slice %568 {offsets = [0, 256], sizes = [1, 128], strides = [1, 1]} : vector<1x512xf32> to vector<1x128xf32>
    %607 = math.tanh %606 : vector<1x128xf32>
    %608 = vector.extract_strided_slice %568 {offsets = [0, 384], sizes = [1, 128], strides = [1, 1]} : vector<1x512xf32> to vector<1x128xf32>
    %609 = arith.negf %608 : vector<1x128xf32>
    %610 = math.exp %609 : vector<1x128xf32>
    %cst_142 = arith.constant 1.000000e+00 : f32
    %611 = vector.broadcast %cst_142 : f32 to vector<1x128xf32>
    %612 = arith.addf %611, %610 : vector<1x128xf32>
    %613 = arith.divf %611, %612 : vector<1x128xf32>
    %614 = arith.mulf %605, %558 : vector<1x128xf32>
    %615 = arith.mulf %599, %607 : vector<1x128xf32>
    %616 = arith.addf %614, %615 : vector<1x128xf32>
    %617 = math.tanh %616 : vector<1x128xf32>
    %618 = arith.mulf %613, %617 : vector<1x128xf32>
    %619 = vector.extract_strided_slice %498 {offsets = [2, 0], sizes = [1, 512], strides = [1, 1]} : vector<6x1024xf32> to vector<1x512xf32>
    %620 = arith.truncf %593 : vector<1x128xf32> to vector<1x128xbf16>
    %cst_143 = arith.constant dense<0.000000e+00> : vector<1x512xf32>
    %621 = tpu.matmul %620, %500, %cst_143 {dimension_numbers = #tpu.dot_dimension_numbers<[1], [0], [0], [1], [0, 0, 1, 1], [], []>} : vector<1x128xbf16>, vector<128x512xbf16>, vector<1x512xf32> -> vector<1x512xf32>
    %622 = arith.addf %619, %621 : vector<1x512xf32>
    %623 = vector.extract_strided_slice %498 {offsets = [3, 512], sizes = [1, 512], strides = [1, 1]} : vector<6x1024xf32> to vector<1x512xf32>
    %624 = arith.truncf %618 : vector<1x128xf32> to vector<1x128xbf16>
    %cst_144 = arith.constant dense<0.000000e+00> : vector<1x512xf32>
    %625 = tpu.matmul %624, %501, %cst_144 {dimension_numbers = #tpu.dot_dimension_numbers<[1], [0], [0], [1], [0, 0, 1, 1], [], []>} : vector<1x128xbf16>, vector<128x512xbf16>, vector<1x512xf32> -> vector<1x512xf32>
    %626 = arith.addf %623, %625 : vector<1x512xf32>
    %627 = vector.extract_strided_slice %622 {offsets = [0, 0], sizes = [1, 128], strides = [1, 1]} : vector<1x512xf32> to vector<1x128xf32>
    %628 = arith.negf %627 : vector<1x128xf32>
    %629 = math.exp %628 : vector<1x128xf32>
    %cst_145 = arith.constant 1.000000e+00 : f32
    %630 = vector.broadcast %cst_145 : f32 to vector<1x128xf32>
    %631 = arith.addf %630, %629 : vector<1x128xf32>
    %632 = arith.divf %630, %631 : vector<1x128xf32>
    %633 = vector.extract_strided_slice %622 {offsets = [0, 128], sizes = [1, 128], strides = [1, 1]} : vector<1x512xf32> to vector<1x128xf32>
    %634 = arith.negf %633 : vector<1x128xf32>
    %635 = math.exp %634 : vector<1x128xf32>
    %cst_146 = arith.constant 1.000000e+00 : f32
    %636 = vector.broadcast %cst_146 : f32 to vector<1x128xf32>
    %637 = arith.addf %636, %635 : vector<1x128xf32>
    %638 = arith.divf %636, %637 : vector<1x128xf32>
    %639 = vector.extract_strided_slice %622 {offsets = [0, 256], sizes = [1, 128], strides = [1, 1]} : vector<1x512xf32> to vector<1x128xf32>
    %640 = math.tanh %639 : vector<1x128xf32>
    %641 = vector.extract_strided_slice %622 {offsets = [0, 384], sizes = [1, 128], strides = [1, 1]} : vector<1x512xf32> to vector<1x128xf32>
    %642 = arith.negf %641 : vector<1x128xf32>
    %643 = math.exp %642 : vector<1x128xf32>
    %cst_147 = arith.constant 1.000000e+00 : f32
    %644 = vector.broadcast %cst_147 : f32 to vector<1x128xf32>
    %645 = arith.addf %644, %643 : vector<1x128xf32>
    %646 = arith.divf %644, %645 : vector<1x128xf32>
    %647 = arith.mulf %638, %591 : vector<1x128xf32>
    %648 = arith.mulf %632, %640 : vector<1x128xf32>
    %649 = arith.addf %647, %648 : vector<1x128xf32>
    %650 = math.tanh %649 : vector<1x128xf32>
    %651 = arith.mulf %646, %650 : vector<1x128xf32>
    %652 = vector.extract_strided_slice %626 {offsets = [0, 0], sizes = [1, 128], strides = [1, 1]} : vector<1x512xf32> to vector<1x128xf32>
    %653 = arith.negf %652 : vector<1x128xf32>
    %654 = math.exp %653 : vector<1x128xf32>
    %cst_148 = arith.constant 1.000000e+00 : f32
    %655 = vector.broadcast %cst_148 : f32 to vector<1x128xf32>
    %656 = arith.addf %655, %654 : vector<1x128xf32>
    %657 = arith.divf %655, %656 : vector<1x128xf32>
    %658 = vector.extract_strided_slice %626 {offsets = [0, 128], sizes = [1, 128], strides = [1, 1]} : vector<1x512xf32> to vector<1x128xf32>
    %659 = arith.negf %658 : vector<1x128xf32>
    %660 = math.exp %659 : vector<1x128xf32>
    %cst_149 = arith.constant 1.000000e+00 : f32
    %661 = vector.broadcast %cst_149 : f32 to vector<1x128xf32>
    %662 = arith.addf %661, %660 : vector<1x128xf32>
    %663 = arith.divf %661, %662 : vector<1x128xf32>
    %664 = vector.extract_strided_slice %626 {offsets = [0, 256], sizes = [1, 128], strides = [1, 1]} : vector<1x512xf32> to vector<1x128xf32>
    %665 = math.tanh %664 : vector<1x128xf32>
    %666 = vector.extract_strided_slice %626 {offsets = [0, 384], sizes = [1, 128], strides = [1, 1]} : vector<1x512xf32> to vector<1x128xf32>
    %667 = arith.negf %666 : vector<1x128xf32>
    %668 = math.exp %667 : vector<1x128xf32>
    %cst_150 = arith.constant 1.000000e+00 : f32
    %669 = vector.broadcast %cst_150 : f32 to vector<1x128xf32>
    %670 = arith.addf %669, %668 : vector<1x128xf32>
    %671 = arith.divf %669, %670 : vector<1x128xf32>
    %672 = arith.mulf %663, %616 : vector<1x128xf32>
    %673 = arith.mulf %657, %665 : vector<1x128xf32>
    %674 = arith.addf %672, %673 : vector<1x128xf32>
    %675 = math.tanh %674 : vector<1x128xf32>
    %676 = arith.mulf %671, %675 : vector<1x128xf32>
    %677 = vector.extract_strided_slice %498 {offsets = [3, 0], sizes = [1, 512], strides = [1, 1]} : vector<6x1024xf32> to vector<1x512xf32>
    %678 = arith.truncf %651 : vector<1x128xf32> to vector<1x128xbf16>
    %cst_151 = arith.constant dense<0.000000e+00> : vector<1x512xf32>
    %679 = tpu.matmul %678, %500, %cst_151 {dimension_numbers = #tpu.dot_dimension_numbers<[1], [0], [0], [1], [0, 0, 1, 1], [], []>} : vector<1x128xbf16>, vector<128x512xbf16>, vector<1x512xf32> -> vector<1x512xf32>
    %680 = arith.addf %677, %679 : vector<1x512xf32>
    %681 = vector.extract_strided_slice %498 {offsets = [2, 512], sizes = [1, 512], strides = [1, 1]} : vector<6x1024xf32> to vector<1x512xf32>
    %682 = arith.truncf %676 : vector<1x128xf32> to vector<1x128xbf16>
    %cst_152 = arith.constant dense<0.000000e+00> : vector<1x512xf32>
    %683 = tpu.matmul %682, %501, %cst_152 {dimension_numbers = #tpu.dot_dimension_numbers<[1], [0], [0], [1], [0, 0, 1, 1], [], []>} : vector<1x128xbf16>, vector<128x512xbf16>, vector<1x512xf32> -> vector<1x512xf32>
    %684 = arith.addf %681, %683 : vector<1x512xf32>
    %685 = vector.extract_strided_slice %680 {offsets = [0, 0], sizes = [1, 128], strides = [1, 1]} : vector<1x512xf32> to vector<1x128xf32>
    %686 = arith.negf %685 : vector<1x128xf32>
    %687 = math.exp %686 : vector<1x128xf32>
    %cst_153 = arith.constant 1.000000e+00 : f32
    %688 = vector.broadcast %cst_153 : f32 to vector<1x128xf32>
    %689 = arith.addf %688, %687 : vector<1x128xf32>
    %690 = arith.divf %688, %689 : vector<1x128xf32>
    %691 = vector.extract_strided_slice %680 {offsets = [0, 128], sizes = [1, 128], strides = [1, 1]} : vector<1x512xf32> to vector<1x128xf32>
    %692 = arith.negf %691 : vector<1x128xf32>
    %693 = math.exp %692 : vector<1x128xf32>
    %cst_154 = arith.constant 1.000000e+00 : f32
    %694 = vector.broadcast %cst_154 : f32 to vector<1x128xf32>
    %695 = arith.addf %694, %693 : vector<1x128xf32>
    %696 = arith.divf %694, %695 : vector<1x128xf32>
    %697 = vector.extract_strided_slice %680 {offsets = [0, 256], sizes = [1, 128], strides = [1, 1]} : vector<1x512xf32> to vector<1x128xf32>
    %698 = math.tanh %697 : vector<1x128xf32>
    %699 = vector.extract_strided_slice %680 {offsets = [0, 384], sizes = [1, 128], strides = [1, 1]} : vector<1x512xf32> to vector<1x128xf32>
    %700 = arith.negf %699 : vector<1x128xf32>
    %701 = math.exp %700 : vector<1x128xf32>
    %cst_155 = arith.constant 1.000000e+00 : f32
    %702 = vector.broadcast %cst_155 : f32 to vector<1x128xf32>
    %703 = arith.addf %702, %701 : vector<1x128xf32>
    %704 = arith.divf %702, %703 : vector<1x128xf32>
    %705 = arith.mulf %696, %649 : vector<1x128xf32>
    %706 = arith.mulf %690, %698 : vector<1x128xf32>
    %707 = arith.addf %705, %706 : vector<1x128xf32>
    %708 = math.tanh %707 : vector<1x128xf32>
    %709 = arith.mulf %704, %708 : vector<1x128xf32>
    %710 = vector.extract_strided_slice %684 {offsets = [0, 0], sizes = [1, 128], strides = [1, 1]} : vector<1x512xf32> to vector<1x128xf32>
    %711 = arith.negf %710 : vector<1x128xf32>
    %712 = math.exp %711 : vector<1x128xf32>
    %cst_156 = arith.constant 1.000000e+00 : f32
    %713 = vector.broadcast %cst_156 : f32 to vector<1x128xf32>
    %714 = arith.addf %713, %712 : vector<1x128xf32>
    %715 = arith.divf %713, %714 : vector<1x128xf32>
    %716 = vector.extract_strided_slice %684 {offsets = [0, 128], sizes = [1, 128], strides = [1, 1]} : vector<1x512xf32> to vector<1x128xf32>
    %717 = arith.negf %716 : vector<1x128xf32>
    %718 = math.exp %717 : vector<1x128xf32>
    %cst_157 = arith.constant 1.000000e+00 : f32
    %719 = vector.broadcast %cst_157 : f32 to vector<1x128xf32>
    %720 = arith.addf %719, %718 : vector<1x128xf32>
    %721 = arith.divf %719, %720 : vector<1x128xf32>
    %722 = vector.extract_strided_slice %684 {offsets = [0, 256], sizes = [1, 128], strides = [1, 1]} : vector<1x512xf32> to vector<1x128xf32>
    %723 = math.tanh %722 : vector<1x128xf32>
    %724 = vector.extract_strided_slice %684 {offsets = [0, 384], sizes = [1, 128], strides = [1, 1]} : vector<1x512xf32> to vector<1x128xf32>
    %725 = arith.negf %724 : vector<1x128xf32>
    %726 = math.exp %725 : vector<1x128xf32>
    %cst_158 = arith.constant 1.000000e+00 : f32
    %727 = vector.broadcast %cst_158 : f32 to vector<1x128xf32>
    %728 = arith.addf %727, %726 : vector<1x128xf32>
    %729 = arith.divf %727, %728 : vector<1x128xf32>
    %730 = arith.mulf %721, %674 : vector<1x128xf32>
    %731 = arith.mulf %715, %723 : vector<1x128xf32>
    %732 = arith.addf %730, %731 : vector<1x128xf32>
    %733 = math.tanh %732 : vector<1x128xf32>
    %734 = arith.mulf %729, %733 : vector<1x128xf32>
    %735 = vector.extract_strided_slice %498 {offsets = [4, 0], sizes = [1, 512], strides = [1, 1]} : vector<6x1024xf32> to vector<1x512xf32>
    %736 = arith.truncf %709 : vector<1x128xf32> to vector<1x128xbf16>
    %cst_159 = arith.constant dense<0.000000e+00> : vector<1x512xf32>
    %737 = tpu.matmul %736, %500, %cst_159 {dimension_numbers = #tpu.dot_dimension_numbers<[1], [0], [0], [1], [0, 0, 1, 1], [], []>} : vector<1x128xbf16>, vector<128x512xbf16>, vector<1x512xf32> -> vector<1x512xf32>
    %738 = arith.addf %735, %737 : vector<1x512xf32>
    %739 = vector.extract_strided_slice %498 {offsets = [1, 512], sizes = [1, 512], strides = [1, 1]} : vector<6x1024xf32> to vector<1x512xf32>
    %740 = arith.truncf %734 : vector<1x128xf32> to vector<1x128xbf16>
    %cst_160 = arith.constant dense<0.000000e+00> : vector<1x512xf32>
    %741 = tpu.matmul %740, %501, %cst_160 {dimension_numbers = #tpu.dot_dimension_numbers<[1], [0], [0], [1], [0, 0, 1, 1], [], []>} : vector<1x128xbf16>, vector<128x512xbf16>, vector<1x512xf32> -> vector<1x512xf32>
    %742 = arith.addf %739, %741 : vector<1x512xf32>
    %743 = vector.extract_strided_slice %738 {offsets = [0, 0], sizes = [1, 128], strides = [1, 1]} : vector<1x512xf32> to vector<1x128xf32>
    %744 = arith.negf %743 : vector<1x128xf32>
    %745 = math.exp %744 : vector<1x128xf32>
    %cst_161 = arith.constant 1.000000e+00 : f32
    %746 = vector.broadcast %cst_161 : f32 to vector<1x128xf32>
    %747 = arith.addf %746, %745 : vector<1x128xf32>
    %748 = arith.divf %746, %747 : vector<1x128xf32>
    %749 = vector.extract_strided_slice %738 {offsets = [0, 128], sizes = [1, 128], strides = [1, 1]} : vector<1x512xf32> to vector<1x128xf32>
    %750 = arith.negf %749 : vector<1x128xf32>
    %751 = math.exp %750 : vector<1x128xf32>
    %cst_162 = arith.constant 1.000000e+00 : f32
    %752 = vector.broadcast %cst_162 : f32 to vector<1x128xf32>
    %753 = arith.addf %752, %751 : vector<1x128xf32>
    %754 = arith.divf %752, %753 : vector<1x128xf32>
    %755 = vector.extract_strided_slice %738 {offsets = [0, 256], sizes = [1, 128], strides = [1, 1]} : vector<1x512xf32> to vector<1x128xf32>
    %756 = math.tanh %755 : vector<1x128xf32>
    %757 = vector.extract_strided_slice %738 {offsets = [0, 384], sizes = [1, 128], strides = [1, 1]} : vector<1x512xf32> to vector<1x128xf32>
    %758 = arith.negf %757 : vector<1x128xf32>
    %759 = math.exp %758 : vector<1x128xf32>
    %cst_163 = arith.constant 1.000000e+00 : f32
    %760 = vector.broadcast %cst_163 : f32 to vector<1x128xf32>
    %761 = arith.addf %760, %759 : vector<1x128xf32>
    %762 = arith.divf %760, %761 : vector<1x128xf32>
    %763 = arith.mulf %754, %707 : vector<1x128xf32>
    %764 = arith.mulf %748, %756 : vector<1x128xf32>
    %765 = arith.addf %763, %764 : vector<1x128xf32>
    %766 = math.tanh %765 : vector<1x128xf32>
    %767 = arith.mulf %762, %766 : vector<1x128xf32>
    %768 = vector.extract_strided_slice %742 {offsets = [0, 0], sizes = [1, 128], strides = [1, 1]} : vector<1x512xf32> to vector<1x128xf32>
    %769 = arith.negf %768 : vector<1x128xf32>
    %770 = math.exp %769 : vector<1x128xf32>
    %cst_164 = arith.constant 1.000000e+00 : f32
    %771 = vector.broadcast %cst_164 : f32 to vector<1x128xf32>
    %772 = arith.addf %771, %770 : vector<1x128xf32>
    %773 = arith.divf %771, %772 : vector<1x128xf32>
    %774 = vector.extract_strided_slice %742 {offsets = [0, 128], sizes = [1, 128], strides = [1, 1]} : vector<1x512xf32> to vector<1x128xf32>
    %775 = arith.negf %774 : vector<1x128xf32>
    %776 = math.exp %775 : vector<1x128xf32>
    %cst_165 = arith.constant 1.000000e+00 : f32
    %777 = vector.broadcast %cst_165 : f32 to vector<1x128xf32>
    %778 = arith.addf %777, %776 : vector<1x128xf32>
    %779 = arith.divf %777, %778 : vector<1x128xf32>
    %780 = vector.extract_strided_slice %742 {offsets = [0, 256], sizes = [1, 128], strides = [1, 1]} : vector<1x512xf32> to vector<1x128xf32>
    %781 = math.tanh %780 : vector<1x128xf32>
    %782 = vector.extract_strided_slice %742 {offsets = [0, 384], sizes = [1, 128], strides = [1, 1]} : vector<1x512xf32> to vector<1x128xf32>
    %783 = arith.negf %782 : vector<1x128xf32>
    %784 = math.exp %783 : vector<1x128xf32>
    %cst_166 = arith.constant 1.000000e+00 : f32
    %785 = vector.broadcast %cst_166 : f32 to vector<1x128xf32>
    %786 = arith.addf %785, %784 : vector<1x128xf32>
    %787 = arith.divf %785, %786 : vector<1x128xf32>
    %788 = arith.mulf %779, %732 : vector<1x128xf32>
    %789 = arith.mulf %773, %781 : vector<1x128xf32>
    %790 = arith.addf %788, %789 : vector<1x128xf32>
    %791 = math.tanh %790 : vector<1x128xf32>
    %792 = arith.mulf %787, %791 : vector<1x128xf32>
    %793 = vector.extract_strided_slice %498 {offsets = [5, 0], sizes = [1, 512], strides = [1, 1]} : vector<6x1024xf32> to vector<1x512xf32>
    %794 = arith.truncf %767 : vector<1x128xf32> to vector<1x128xbf16>
    %cst_167 = arith.constant dense<0.000000e+00> : vector<1x512xf32>
    %795 = tpu.matmul %794, %500, %cst_167 {dimension_numbers = #tpu.dot_dimension_numbers<[1], [0], [0], [1], [0, 0, 1, 1], [], []>} : vector<1x128xbf16>, vector<128x512xbf16>, vector<1x512xf32> -> vector<1x512xf32>
    %796 = arith.addf %793, %795 : vector<1x512xf32>
    %797 = vector.extract_strided_slice %498 {offsets = [0, 512], sizes = [1, 512], strides = [1, 1]} : vector<6x1024xf32> to vector<1x512xf32>
    %798 = arith.truncf %792 : vector<1x128xf32> to vector<1x128xbf16>
    %cst_168 = arith.constant dense<0.000000e+00> : vector<1x512xf32>
    %799 = tpu.matmul %798, %501, %cst_168 {dimension_numbers = #tpu.dot_dimension_numbers<[1], [0], [0], [1], [0, 0, 1, 1], [], []>} : vector<1x128xbf16>, vector<128x512xbf16>, vector<1x512xf32> -> vector<1x512xf32>
    %800 = arith.addf %797, %799 : vector<1x512xf32>
    %801 = vector.extract_strided_slice %796 {offsets = [0, 0], sizes = [1, 128], strides = [1, 1]} : vector<1x512xf32> to vector<1x128xf32>
    %802 = arith.negf %801 : vector<1x128xf32>
    %803 = math.exp %802 : vector<1x128xf32>
    %cst_169 = arith.constant 1.000000e+00 : f32
    %804 = vector.broadcast %cst_169 : f32 to vector<1x128xf32>
    %805 = arith.addf %804, %803 : vector<1x128xf32>
    %806 = arith.divf %804, %805 : vector<1x128xf32>
    %807 = vector.extract_strided_slice %796 {offsets = [0, 128], sizes = [1, 128], strides = [1, 1]} : vector<1x512xf32> to vector<1x128xf32>
    %808 = arith.negf %807 : vector<1x128xf32>
    %809 = math.exp %808 : vector<1x128xf32>
    %cst_170 = arith.constant 1.000000e+00 : f32
    %810 = vector.broadcast %cst_170 : f32 to vector<1x128xf32>
    %811 = arith.addf %810, %809 : vector<1x128xf32>
    %812 = arith.divf %810, %811 : vector<1x128xf32>
    %813 = vector.extract_strided_slice %796 {offsets = [0, 256], sizes = [1, 128], strides = [1, 1]} : vector<1x512xf32> to vector<1x128xf32>
    %814 = math.tanh %813 : vector<1x128xf32>
    %815 = vector.extract_strided_slice %796 {offsets = [0, 384], sizes = [1, 128], strides = [1, 1]} : vector<1x512xf32> to vector<1x128xf32>
    %816 = arith.negf %815 : vector<1x128xf32>
    %817 = math.exp %816 : vector<1x128xf32>
    %cst_171 = arith.constant 1.000000e+00 : f32
    %818 = vector.broadcast %cst_171 : f32 to vector<1x128xf32>
    %819 = arith.addf %818, %817 : vector<1x128xf32>
    %820 = arith.divf %818, %819 : vector<1x128xf32>
    %821 = arith.mulf %812, %765 : vector<1x128xf32>
    %822 = arith.mulf %806, %814 : vector<1x128xf32>
    %823 = arith.addf %821, %822 : vector<1x128xf32>
    %824 = math.tanh %823 : vector<1x128xf32>
    %825 = arith.mulf %820, %824 : vector<1x128xf32>
    %826 = vector.extract_strided_slice %800 {offsets = [0, 0], sizes = [1, 128], strides = [1, 1]} : vector<1x512xf32> to vector<1x128xf32>
    %827 = arith.negf %826 : vector<1x128xf32>
    %828 = math.exp %827 : vector<1x128xf32>
    %cst_172 = arith.constant 1.000000e+00 : f32
    %829 = vector.broadcast %cst_172 : f32 to vector<1x128xf32>
    %830 = arith.addf %829, %828 : vector<1x128xf32>
    %831 = arith.divf %829, %830 : vector<1x128xf32>
    %832 = vector.extract_strided_slice %800 {offsets = [0, 128], sizes = [1, 128], strides = [1, 1]} : vector<1x512xf32> to vector<1x128xf32>
    %833 = arith.negf %832 : vector<1x128xf32>
    %834 = math.exp %833 : vector<1x128xf32>
    %cst_173 = arith.constant 1.000000e+00 : f32
    %835 = vector.broadcast %cst_173 : f32 to vector<1x128xf32>
    %836 = arith.addf %835, %834 : vector<1x128xf32>
    %837 = arith.divf %835, %836 : vector<1x128xf32>
    %838 = vector.extract_strided_slice %800 {offsets = [0, 256], sizes = [1, 128], strides = [1, 1]} : vector<1x512xf32> to vector<1x128xf32>
    %839 = math.tanh %838 : vector<1x128xf32>
    %840 = vector.extract_strided_slice %800 {offsets = [0, 384], sizes = [1, 128], strides = [1, 1]} : vector<1x512xf32> to vector<1x128xf32>
    %841 = arith.negf %840 : vector<1x128xf32>
    %842 = math.exp %841 : vector<1x128xf32>
    %cst_174 = arith.constant 1.000000e+00 : f32
    %843 = vector.broadcast %cst_174 : f32 to vector<1x128xf32>
    %844 = arith.addf %843, %842 : vector<1x128xf32>
    %845 = arith.divf %843, %844 : vector<1x128xf32>
    %846 = arith.mulf %837, %790 : vector<1x128xf32>
    %847 = arith.mulf %831, %839 : vector<1x128xf32>
    %848 = arith.addf %846, %847 : vector<1x128xf32>
    %849 = math.tanh %848 : vector<1x128xf32>
    %850 = arith.mulf %845, %849 : vector<1x128xf32>
    %851 = tpu.concatenate %535, %593, %651, %709, %767, %825 in 0 : vector<1x128xf32>, vector<1x128xf32>, vector<1x128xf32>, vector<1x128xf32>, vector<1x128xf32>, vector<1x128xf32> -> vector<6x128xf32>
    %852 = tpu.concatenate %850, %792, %734, %676, %618, %560 in 0 : vector<1x128xf32>, vector<1x128xf32>, vector<1x128xf32>, vector<1x128xf32>, vector<1x128xf32>, vector<1x128xf32> -> vector<6x128xf32>
    %853 = tpu.concatenate %851, %852 in 1 : vector<6x128xf32>, vector<6x128xf32> -> vector<6x256xf32>
    %854 = arith.truncf %853 : vector<6x256xf32> to vector<6x256xbf16>
    %c0_175 = arith.constant 0 : index
    %c0_176 = arith.constant 0 : index
    %855 = vector.load %arg24[%c0_175, %c0_176] : memref<256x1xbf16, #tpu.memory_space<vmem>>, vector<256x1xbf16>
    %cst_177 = arith.constant dense<0.000000e+00> : vector<6x1xf32>
    %856 = tpu.matmul %854, %855, %cst_177 {dimension_numbers = #tpu.dot_dimension_numbers<[1], [0], [0], [1], [0, 0, 1, 1], [], []>} : vector<6x256xbf16>, vector<256x1xbf16>, vector<6x1xf32> -> vector<6x1xf32>
    %c0_178 = arith.constant 0 : index
    %c0_179 = arith.constant 0 : index
    %857 = vector.load %arg25[%c0_178, %c0_179] : memref<1x1xf32, #tpu.memory_space<vmem>>, vector<1x1xf32>
    %858 = vector.broadcast %857 : vector<1x1xf32> to vector<6x1xf32>
    %859 = arith.addf %856, %858 : vector<6x1xf32>
    %c0_180 = arith.constant 0 : index
    %c0_181 = arith.constant 0 : index
    %860 = vector.load %arg26[%c0_180, %c0_181] : memref<6x1xf32, #tpu.memory_space<vmem>>, vector<6x1xf32>
    tpu.vector_store %arg26[%c0_180, %c0_181], %859 {strides = array<i32>} : memref<6x1xf32, #tpu.memory_space<vmem>>, vector<6x1xf32>,
    return
  }
}

</mosaic_0001>

<llo_original>
// kernel: unet_retrain_forward.1
$region0: #{unet_retrain_forward.1}
  #allocation0 [shape = 'u32[]', space=smem, size = 0x4, offset = 0x4, fixed_abs, tag = 'smem constant byte address 0x4 - core index']
  #allocation1 [shape = 'u32[144,128]{1,0:T(1,128)}', space=vmem, size = 0x12000, scoped, tag = 'internal scratch']
  #allocation2 [shape = 'f32[1,1]{1,0:T(1,128)S(1)}', space=vmem, size = 0x200, scoped, tag = 'scoped memory for unet_retrain_forward.1']
  %s0 = inlined_call_operand.vmem [shape: f32[34,204], index: 0, kind: input, shape index: {}]
  %s1 = inlined_call_operand.vmem [shape: bf16[128,102], index: 1, kind: input, shape index: {}]
  %s2 = inlined_call_operand.vmem [shape: bf16[128,216], index: 2, kind: input, shape index: {}]
  %s3 = inlined_call_operand.vmem [shape: bf16[128,240], index: 3, kind: input, shape index: {}]
  %s4 = inlined_call_operand.vmem [shape: bf16[128,288], index: 4, kind: input, shape index: {}]
  %s5 = inlined_call_operand.vmem [shape: bf16[128,384], index: 5, kind: input, shape index: {}]
  %s6 = inlined_call_operand.vmem [shape: f32[640,1], index: 6, kind: input, shape index: {}]
  %s7 = inlined_call_operand.vmem [shape: bf16[72,256], index: 7, kind: input, shape index: {}]
  %s8 = inlined_call_operand.vmem [shape: bf16[80,256], index: 8, kind: input, shape index: {}]
  %s9 = inlined_call_operand.vmem [shape: bf16[96,256], index: 9, kind: input, shape index: {}]
  %s10 = inlined_call_operand.vmem [shape: bf16[128,256], index: 10, kind: input, shape index: {}]
  %s11 = inlined_call_operand.vmem [shape: bf16[202,216], index: 11, kind: input, shape index: {}]
  %s12 = inlined_call_operand.vmem [shape: bf16[106,120], index: 12, kind: input, shape index: {}]
  %s13 = inlined_call_operand.vmem [shape: bf16[58,72], index: 13, kind: input, shape index: {}]
  %s14 = inlined_call_operand.vmem [shape: bf16[34,48], index: 14, kind: input, shape index: {}]
  %s15 = inlined_call_operand.vmem [shape: bf16[22,12], index: 15, kind: input, shape index: {}]
  %s16 = inlined_call_operand.vmem [shape: bf16[256,128], index: 16, kind: input, shape index: {}]
  %s17 = inlined_call_operand.vmem [shape: f32[1,128], index: 17, kind: input, shape index: {}]
  %s18 = inlined_call_operand.vmem [shape: bf16[128,1024], index: 18, kind: input, shape index: {}]
  %s19 = inlined_call_operand.vmem [shape: bf16[128,1024], index: 19, kind: input, shape index: {}]
  %s20 = inlined_call_operand.vmem [shape: f32[1,1024], index: 20, kind: input, shape index: {}]
  %s21 = inlined_call_operand.vmem [shape: bf16[256,1024], index: 21, kind: input, shape index: {}]
  %s22 = inlined_call_operand.vmem [shape: bf16[128,1024], index: 22, kind: input, shape index: {}]
  %s23 = inlined_call_operand.vmem [shape: f32[1,1024], index: 23, kind: input, shape index: {}]
  %s24 = inlined_call_operand.vmem [shape: bf16[256,1], index: 24, kind: input, shape index: {}]
  %s25 = inlined_call_operand.<no memory space> [shape: f32[1,1], index: 25, kind: input, shape index: {}]
  %s26 = inlined_call_operand.vmem [shape: f32[6,1], index: 26, kind: output, shape index: {}]
  %s27 = sld [smem:[#allocation0]]
  $region114: #{unet_retrain_forward.1} parent=0
    _
  %s29 = ssub.s32 1, %s27
  %s30 = scalar_select 0, %s29, %s27
  %v31 = vstv %s25
  %32 = vst [vmem:[#allocation2] sm:$0x1] %v31
  // Predicated region
  $region2: #{unet_retrain_forward.1} parent=0 // pred_check
    _
  $region3: #{unet_retrain_forward.1} parent=0 // pred_check_branch
    %34 = sbr.rel (0) target = $region5
  $region4: #{unet_retrain_forward.1} parent=0 // pred_region
    _
  $region5: #{unet_retrain_forward.1} parent=0 // pred_fallthru
    _
  // Predicated region
  $region6: #{unet_retrain_forward.1} parent=0 // pred_check
    _
  $region7: #{unet_retrain_forward.1} parent=0 // pred_check_branch
    %36 = sbr.rel (0) target = $region9
  $region8: #{unet_retrain_forward.1} parent=0 // pred_region
    _
  $region9: #{unet_retrain_forward.1} parent=0 // pred_fallthru
    _
  // Predicated region
  $region10: #{unet_retrain_forward.1} parent=0 // pred_check
    _
  $region11: #{unet_retrain_forward.1} parent=0 // pred_check_branch
    %38 = sbr.rel (0) target = $region13
  $region12: #{unet_retrain_forward.1} parent=0 // pred_region
    _
  $region13: #{unet_retrain_forward.1} parent=0 // pred_fallthru
    _
  // Predicated region
  $region14: #{unet_retrain_forward.1} parent=0 // pred_check
    _
  $region15: #{unet_retrain_forward.1} parent=0 // pred_check_branch
    %40 = sbr.rel (0) target = $region17
  $region16: #{unet_retrain_forward.1} parent=0 // pred_region
    _
  $region17: #{unet_retrain_forward.1} parent=0 // pred_fallthru
    _
  // Predicated region
  $region18: #{unet_retrain_forward.1} parent=0 // pred_check
    _
  $region19: #{unet_retrain_forward.1} parent=0 // pred_check_branch
    %42 = sbr.rel (0) target = $region21
  $region20: #{unet_retrain_forward.1} parent=0 // pred_region
    _
  $region21: #{unet_retrain_forward.1} parent=0 // pred_fallthru
    _
  // Predicated region
  $region22: #{unet_retrain_forward.1} parent=0 // pred_check
    _
  $region23: #{unet_retrain_forward.1} parent=0 // pred_check_branch
    %44 = sbr.rel (0) target = $region25
  $region24: #{unet_retrain_forward.1} parent=0 // pred_region
    _
  $region25: #{unet_retrain_forward.1} parent=0 // pred_fallthru
    _
  // Predicated region
  $region26: #{unet_retrain_forward.1} parent=0 // pred_check
    _
  $region27: #{unet_retrain_forward.1} parent=0 // pred_check_branch
    %46 = sbr.rel (0) target = $region29
  $region28: #{unet_retrain_forward.1} parent=0 // pred_region
    _
  $region29: #{unet_retrain_forward.1} parent=0 // pred_fallthru
    _
  // Predicated region
  $region30: #{unet_retrain_forward.1} parent=0 // pred_check
    _
  $region31: #{unet_retrain_forward.1} parent=0 // pred_check_branch
    %48 = sbr.rel (0) target = $region33
  $region32: #{unet_retrain_forward.1} parent=0 // pred_region
    _
  $region33: #{unet_retrain_forward.1} parent=0 // pred_fallthru
    _
  // Predicated region
  $region34: #{unet_retrain_forward.1} parent=0 // pred_check
    _
  $region35: #{unet_retrain_forward.1} parent=0 // pred_check_branch
    %50 = sbr.rel (0) target = $region37
  $region36: #{unet_retrain_forward.1} parent=0 // pred_region
    _
  $region37: #{unet_retrain_forward.1} parent=0 // pred_fallthru
    _
  // Predicated region
  $region38: #{unet_retrain_forward.1} parent=0 // pred_check
    _
  $region39: #{unet_retrain_forward.1} parent=0 // pred_check_branch
    %52 = sbr.rel (0) target = $region41
  $region40: #{unet_retrain_forward.1} parent=0 // pred_region
    _
  $region41: #{unet_retrain_forward.1} parent=0 // pred_fallthru
    _
  // Predicated region
  $region42: #{unet_retrain_forward.1} parent=0 // pred_check
    _
  $region43: #{unet_retrain_forward.1} parent=0 // pred_check_branch
    %54 = sbr.rel (0) target = $region45
  $region44: #{unet_retrain_forward.1} parent=0 // pred_region
    _
  $region45: #{unet_retrain_forward.1} parent=0 // pred_fallthru
    _
  // Predicated region
  $region46: #{unet_retrain_forward.1} parent=0 // pred_check
    _
  $region47: #{unet_retrain_forward.1} parent=0 // pred_check_branch
    %56 = sbr.rel (0) target = $region49
  $region48: #{unet_retrain_forward.1} parent=0 // pred_region
    _
  $region49: #{unet_retrain_forward.1} parent=0 // pred_fallthru
    _
  // Predicated region
  $region50: #{unet_retrain_forward.1} parent=0 // pred_check
    _
  $region51: #{unet_retrain_forward.1} parent=0 // pred_check_branch
    %58 = sbr.rel (0) target = $region53
  $region52: #{unet_retrain_forward.1} parent=0 // pred_region
    _
  $region53: #{unet_retrain_forward.1} parent=0 // pred_fallthru
    _
  // Predicated region
  $region54: #{unet_retrain_forward.1} parent=0 // pred_check
    _
  $region55: #{unet_retrain_forward.1} parent=0 // pred_check_branch
    %60 = sbr.rel (0) target = $region57
  $region56: #{unet_retrain_forward.1} parent=0 // pred_region
    _
  $region57: #{unet_retrain_forward.1} parent=0 // pred_fallthru
    _
  // Predicated region
  $region58: #{unet_retrain_forward.1} parent=0 // pred_check
    _
  $region59: #{unet_retrain_forward.1} parent=0 // pred_check_branch
    %62 = sbr.rel (0) target = $region61
  $region60: #{unet_retrain_forward.1} parent=0 // pred_region
    _
  $region61: #{unet_retrain_forward.1} parent=0 // pred_fallthru
    _
  // Predicated region
  $region62: #{unet_retrain_forward.1} parent=0 // pred_check
    _
  $region63: #{unet_retrain_forward.1} parent=0 // pred_check_branch
    %64 = sbr.rel (0) target = $region65
  $region64: #{unet_retrain_forward.1} parent=0 // pred_region
    _
  $region65: #{unet_retrain_forward.1} parent=0 // pred_fallthru
    _
  // Predicated region
  $region66: #{unet_retrain_forward.1} parent=0 // pred_check
    _
  $region67: #{unet_retrain_forward.1} parent=0 // pred_check_branch
    %66 = sbr.rel (0) target = $region69
  $region68: #{unet_retrain_forward.1} parent=0 // pred_region
    _
  $region69: #{unet_retrain_forward.1} parent=0 // pred_fallthru
    _
  // Predicated region
  $region70: #{unet_retrain_forward.1} parent=0 // pred_check
    _
  $region71: #{unet_retrain_forward.1} parent=0 // pred_check_branch
    %68 = sbr.rel (0) target = $region73
  $region72: #{unet_retrain_forward.1} parent=0 // pred_region
    _
  $region73: #{unet_retrain_forward.1} parent=0 // pred_fallthru
    _
  // Predicated region
  $region74: #{unet_retrain_forward.1} parent=0 // pred_check
    _
  $region75: #{unet_retrain_forward.1} parent=0 // pred_check_branch
    %70 = sbr.rel (0) target = $region77
  $region76: #{unet_retrain_forward.1} parent=0 // pred_region
    _
  $region77: #{unet_retrain_forward.1} parent=0 // pred_fallthru
    _
  // Predicated region
  $region78: #{unet_retrain_forward.1} parent=0 // pred_check
    _
  $region79: #{unet_retrain_forward.1} parent=0 // pred_check_branch
    %72 = sbr.rel (0) target = $region81
  $region80: #{unet_retrain_forward.1} parent=0 // pred_region
    _
  $region81: #{unet_retrain_forward.1} parent=0 // pred_fallthru
    _
  // Predicated region
  $region82: #{unet_retrain_forward.1} parent=0 // pred_check
    _
  $region83: #{unet_retrain_forward.1} parent=0 // pred_check_branch
    %74 = sbr.rel (0) target = $region85
  $region84: #{unet_retrain_forward.1} parent=0 // pred_region
    _
  $region85: #{unet_retrain_forward.1} parent=0 // pred_fallthru
    _
  // Predicated region
  $region86: #{unet_retrain_forward.1} parent=0 // pred_check
    _
  $region87: #{unet_retrain_forward.1} parent=0 // pred_check_branch
    %76 = sbr.rel (0) target = $region89
  $region88: #{unet_retrain_forward.1} parent=0 // pred_region
    _
  $region89: #{unet_retrain_forward.1} parent=0 // pred_fallthru
    _
  // Predicated region
  $region90: #{unet_retrain_forward.1} parent=0 // pred_check
    _
  $region91: #{unet_retrain_forward.1} parent=0 // pred_check_branch
    %78 = sbr.rel (0) target = $region93
  $region92: #{unet_retrain_forward.1} parent=0 // pred_region
    _
  $region93: #{unet_retrain_forward.1} parent=0 // pred_fallthru
    _
  // Predicated region
  $region94: #{unet_retrain_forward.1} parent=0 // pred_check
    _
  $region95: #{unet_retrain_forward.1} parent=0 // pred_check_branch
    %80 = sbr.rel (0) target = $region97
  $region96: #{unet_retrain_forward.1} parent=0 // pred_region
    _
  $region97: #{unet_retrain_forward.1} parent=0 // pred_fallthru
    _
  // Predicated region
  $region98: #{unet_retrain_forward.1} parent=0 // pred_check
    _
  $region99: #{unet_retrain_forward.1} parent=0 // pred_check_branch
    %82 = sbr.rel (0) target = $region101
  $region100: #{unet_retrain_forward.1} parent=0 // pred_region
    _
  $region101: #{unet_retrain_forward.1} parent=0 // pred_fallthru
    _
  // Predicated region
  $region102: #{unet_retrain_forward.1} parent=0 // pred_check
    _
  $region103: #{unet_retrain_forward.1} parent=0 // pred_check_branch
    %84 = sbr.rel (0) target = $region105
  $region104: #{unet_retrain_forward.1} parent=0 // pred_region
    _
  $region105: #{unet_retrain_forward.1} parent=0 // pred_fallthru
    _
  %v86 = vld [vmem:[%s6] sm:$0xff]
  %v87 = vld [vmem:[%s6 + $0x8] sm:$0xff]
  %v88 = vld [vmem:[%s6 + $0x10] sm:$0xff]
  %v89 = vld [vmem:[%s6 + $0x18] sm:$0xff]
  %v90 = vld [vmem:[%s6 + $0x20] sm:$0xff]
  %v91 = vld [vmem:[%s6 + $0x28] sm:$0xff]
  %v92 = vld [vmem:[%s6 + $0x30] sm:$0xff]
  %v93 = vld [vmem:[%s6 + $0x38] sm:$0xff]
  %v94 = vld [vmem:[%s6 + $0x40] sm:$0xff]
  %v95 = vld [vmem:[%s6 + $0x48] sm:$0xff]
  %v96 = vld [vmem:[%s6 + $0x50] sm:$0xff]
  %v97 = vld [vmem:[%s6 + $0x58] sm:$0xff]
  %v98 = vld [vmem:[%s6 + $0x60] sm:$0xff]
  %v99 = vld [vmem:[%s6 + $0x68] sm:$0xff]
  %v100 = vld [vmem:[%s6 + $0x70] sm:$0xff]
  %v101 = vld [vmem:[%s6 + $0x78] sm:$0xff]
  %v102 = vld [vmem:[%s6 + $0x80] sm:$0xff]
  %v103 = vld [vmem:[%s6 + $0x88] sm:$0xff]
  %v104 = vld [vmem:[%s6 + $0x90] sm:$0xff]
  %v105 = vld [vmem:[%s6 + $0x98] sm:$0xff]
  %v106 = vld [vmem:[%s6 + $0xa0] sm:$0xff]
  %v107 = vld [vmem:[%s6 + $0xa8] sm:$0xff]
  %v108 = vld [vmem:[%s6 + $0xb0] sm:$0xff]
  %v109 = vld [vmem:[%s6 + $0xb8] sm:$0xff]
  %v110 = vld [vmem:[%s6 + $0xc0] sm:$0xff]
  %v111 = vld [vmem:[%s6 + $0xc8] sm:$0xff]
  %v112 = vld [vmem:[%s6 + $0xd0] sm:$0xff]
  %v113 = vld [vmem:[%s6 + $0xd8] sm:$0xff]
  %v114 = vld [vmem:[%s6 + $0xe0] sm:$0xff]
  %v115 = vld [vmem:[%s6 + $0xe8] sm:$0xff]
  %v116 = vld [vmem:[%s6 + $0xf0] sm:$0xff]
  %v117 = vld [vmem:[%s6 + $0xf8] sm:$0xff]
  %v118 = vld [vmem:[%s6 + $0x100] sm:$0xff]
  %v119 = vld [vmem:[%s6 + $0x108] sm:$0xff]
  %v120 = vld [vmem:[%s6 + $0x110] sm:$0xff]
  %v121 = vld [vmem:[%s6 + $0x118] sm:$0xff]
  %v122 = vld [vmem:[%s6 + $0x120] sm:$0xff]
  %v123 = vld [vmem:[%s6 + $0x128] sm:$0xff]
  %v124 = vld [vmem:[%s6 + $0x130] sm:$0xff]
  %v125 = vld [vmem:[%s6 + $0x138] sm:$0xff]
  %v126 = vld [vmem:[%s6 + $0x140] sm:$0xff]
  %v127 = vld [vmem:[%s6 + $0x148] sm:$0xff]
  %v128 = vld [vmem:[%s6 + $0x150] sm:$0xff]
  %v129 = vld [vmem:[%s6 + $0x158] sm:$0xff]
  %v130 = vld [vmem:[%s6 + $0x160] sm:$0xff]
  %v131 = vld [vmem:[%s6 + $0x168] sm:$0xff]
  %v132 = vld [vmem:[%s6 + $0x170] sm:$0xff]
  %v133 = vld [vmem:[%s6 + $0x178] sm:$0xff]
  %v134 = vld [vmem:[%s6 + $0x180] sm:$0xff]
  %v135 = vld [vmem:[%s6 + $0x188] sm:$0xff]
  %v136 = vld [vmem:[%s6 + $0x190] sm:$0xff]
  %v137 = vld [vmem:[%s6 + $0x198] sm:$0xff]
  %v138 = vld [vmem:[%s6 + $0x1a0] sm:$0xff]
  %v139 = vld [vmem:[%s6 + $0x1a8] sm:$0xff]
  %v140 = vld [vmem:[%s6 + $0x1b0] sm:$0xff]
  %v141 = vld [vmem:[%s6 + $0x1b8] sm:$0xff]
  %v142 = vld [vmem:[%s6 + $0x1c0] sm:$0xff]
  %v143 = vld [vmem:[%s6 + $0x1c8] sm:$0xff]
  %v144 = vld [vmem:[%s6 + $0x1d0] sm:$0xff]
  %v145 = vld [vmem:[%s6 + $0x1d8] sm:$0xff]
  %v146 = vld [vmem:[%s6 + $0x1e0] sm:$0xff]
  %v147 = vld [vmem:[%s6 + $0x1e8] sm:$0xff]
  %v148 = vld [vmem:[%s6 + $0x1f0] sm:$0xff]
  %v149 = vld [vmem:[%s6 + $0x1f8] sm:$0xff]
  %v150 = vld [vmem:[%s6 + $0x200] sm:$0xff]
  %v151 = vld [vmem:[%s6 + $0x208] sm:$0xff]
  %v152 = vld [vmem:[%s6 + $0x210] sm:$0xff]
  %v153 = vld [vmem:[%s6 + $0x218] sm:$0xff]
  %v154 = vld [vmem:[%s6 + $0x220] sm:$0xff]
  %v155 = vld [vmem:[%s6 + $0x228] sm:$0xff]
  %v156 = vld [vmem:[%s6 + $0x230] sm:$0xff]
  %v157 = vld [vmem:[%s6 + $0x238] sm:$0xff]
  %v158 = vld [vmem:[%s6 + $0x240] sm:$0xff]
  %v159 = vld [vmem:[%s6 + $0x248] sm:$0xff]
  %v160 = vld [vmem:[%s6 + $0x250] sm:$0xff]
  %v161 = vld [vmem:[%s6 + $0x258] sm:$0xff]
  %v162 = vld [vmem:[%s6 + $0x260] sm:$0xff]
  %v163 = vld [vmem:[%s6 + $0x268] sm:$0xff]
  %v164 = vld [vmem:[%s6 + $0x270] sm:$0xff]
  %v165 = vld [vmem:[%s6 + $0x278] sm:$0xff]
  %v166 = vld [vmem:[%s0] sm:$0xff]
  %v167 = vld [vmem:[%s0 + $0x8] sm:$0xff]
  %v168 = vld [vmem:[%s0 + $0x10] sm:$0xff]
  %v169 = vld [vmem:[%s0 + $0x18] sm:$0xff]
  %v170 = vld [vmem:[%s0 + $0x20] sm:$0xff]
  %v171 = vld [vmem:[%s0 + $0x28] sm:$0xff]
  %v172 = vld [vmem:[%s0 + $0x30] sm:$0xff]
  %v173 = vld [vmem:[%s0 + $0x38] sm:$0xff]
  %v174 = vld [vmem:[%s0 + $0x40] sm:$0x3]
  %v175 = vld [vmem:[%s0 + $0x48] sm:$0x3]
  %vm186 = vcmask 1041408
  %v187 = vrot.slane %v166, 6
  %v188 = vrot.slane %v167, 6
  %v189 = vrot.slane %v168, 6
  %v190 = vsel %vm186, %v187, %v189
  %v191 = vrot.slane %v169, 6
  %v192 = vsel %vm186, %v188, %v191
  %v193 = vrot.slane %v170, 6
  %v194 = vsel %vm186, %v189, %v193
  %v195 = vrot.slane %v171, 6
  %v196 = vsel %vm186, %v191, %v195
  %v197 = vrot.slane %v172, 6
  %v198 = vsel %vm186, %v193, %v197
  %v199 = vrot.slane %v173, 6
  %v200 = vsel %vm186, %v195, %v199
  %v201 = vrot.slane %v174, 6
  %v202 = vsel %vm186, %v197, %v201
  %v203 = vrot.slane %v175, 6
  %v204 = vsel %vm186, %v199, %v203
  %205 = vrot.lane.b32.xlu0 %v187, 127
  %v206 = vpop.permute.xlu0 %205
  %207 = vrot.lane.b32.xlu0 %v188, 127
  %v208 = vpop.permute.xlu0 %207
  %209 = vrot.lane.b32.xlu0 %v190, 127
  %v210 = vpop.permute.xlu0 %209
  %211 = vrot.lane.b32.xlu0 %v192, 127
  %v212 = vpop.permute.xlu0 %211
  %213 = vrot.lane.b32.xlu0 %v194, 127
  %v214 = vpop.permute.xlu0 %213
  %215 = vrot.lane.b32.xlu0 %v196, 127
  %v216 = vpop.permute.xlu0 %215
  %217 = vrot.lane.b32.xlu0 %v198, 127
  %v218 = vpop.permute.xlu0 %217
  %219 = vrot.lane.b32.xlu0 %v200, 127
  %v220 = vpop.permute.xlu0 %219
  %221 = vrot.lane.b32.xlu0 %v202, 127
  %v222 = vpop.permute.xlu0 %221
  %223 = vrot.lane.b32.xlu0 %v204, 127
  %v224 = vpop.permute.xlu0 %223
  %vm225 = vcmask 1039360
  %v226 = vsel %vm225, %v206, %v208
  %v227 = vsel %vm225, %v210, %v212
  %v228 = vsel %vm225, %v214, %v216
  %v229 = vsel %vm225, %v218, %v220
  %v230 = vsel %vm225, %v222, %v224
  %vm241 = vcmask 1043456
  %v242 = vrot.slane %v166, 4
  %v243 = vrot.slane %v167, 4
  %v244 = vrot.slane %v168, 4
  %v245 = vsel %vm241, %v242, %v244
  %v246 = vrot.slane %v169, 4
  %v247 = vsel %vm241, %v243, %v246
  %v248 = vrot.slane %v170, 4
  %v249 = vsel %vm241, %v244, %v248
  %v250 = vrot.slane %v171, 4
  %v251 = vsel %vm241, %v246, %v250
  %v252 = vrot.slane %v172, 4
  %v253 = vsel %vm241, %v248, %v252
  %v254 = vrot.slane %v173, 4
  %v255 = vsel %vm241, %v250, %v254
  %v256 = vrot.slane %v174, 4
  %v257 = vsel %vm241, %v252, %v256
  %v258 = vrot.slane %v175, 4
  %v259 = vsel %vm241, %v254, %v258
  %260 = vrot.lane.b32.xlu0 %v242, 126
  %v261 = vpop.permute.xlu0 %260
  %262 = vrot.lane.b32.xlu0 %v243, 126
  %v263 = vpop.permute.xlu0 %262
  %264 = vrot.lane.b32.xlu0 %v245, 126
  %v265 = vpop.permute.xlu0 %264
  %266 = vrot.lane.b32.xlu0 %v247, 126
  %v267 = vpop.permute.xlu0 %266
  %268 = vrot.lane.b32.xlu0 %v249, 126
  %v269 = vpop.permute.xlu0 %268
  %270 = vrot.lane.b32.xlu0 %v251, 126
  %v271 = vpop.permute.xlu0 %270
  %272 = vrot.lane.b32.xlu0 %v253, 126
  %v273 = vpop.permute.xlu0 %272
  %274 = vrot.lane.b32.xlu0 %v255, 126
  %v275 = vpop.permute.xlu0 %274
  %276 = vrot.lane.b32.xlu0 %v257, 126
  %v277 = vpop.permute.xlu0 %276
  %278 = vrot.lane.b32.xlu0 %v259, 126
  %v279 = vpop.permute.xlu0 %278
  %vm280 = vcmask 1031168
  %v281 = vsel %vm280, %v261, %v263
  %v282 = vsel %vm280, %v265, %v267
  %v283 = vsel %vm280, %v269, %v271
  %v284 = vsel %vm280, %v273, %v275
  %v285 = vsel %vm280, %v277, %v279
  %v296 = vsel %vm186, %v174, %v226
  %v297 = vsel %vm186, %v175, %v208
  %v298 = vsel %vm241, %v230, %v281
  %v299 = vsel %vm241, %v224, %v263
  %v300 = vld [vmem:[%s1] sm:$0xf]
  %v301 = vld [vmem:[%s1 + $0x4] sm:$0xf]
  %v302 = vld [vmem:[%s1 + $0x8] sm:$0xf]
  %v303 = vld [vmem:[%s1 + $0xc] sm:$0xf]
  %v304 = vld [vmem:[%s1 + $0x10] sm:$0xf]
  %v305 = vld [vmem:[%s1 + $0x14] sm:$0xf]
  %v306 = vld [vmem:[%s1 + $0x18] sm:$0xf]
  %v307 = vld [vmem:[%s1 + $0x1c] sm:$0xf]
  %v308 = vld [vmem:[%s1 + $0x20] sm:$0xf]
  %v309 = vld [vmem:[%s1 + $0x24] sm:$0xf]
  %v310 = vld [vmem:[%s1 + $0x28] sm:$0xf]
  %v311 = vld [vmem:[%s1 + $0x2c] sm:$0xf]
  %v312 = vld [vmem:[%s1 + $0x30] sm:$0xf]
  %v313 = vld [vmem:[%s1 + $0x34] sm:$0xf]
  %v314 = vld [vmem:[%s1 + $0x38] sm:$0xf]
  %v315 = vld [vmem:[%s1 + $0x3c] sm:$0xf]
  %v316 = vpack.c.bf16 %v168, %v166
  %v317 = vpack.c.bf16 %v169, %v167
  %v318 = vpack.c.bf16 %v172, %v170
  %v319 = vpack.c.bf16 %v173, %v171
  %v320 = vpack.c.bf16 %v227, %v296
  %v321 = vpack.c.bf16 %v212, %v297
  %v322 = vpack.c.bf16 %v229, %v228
  %v323 = vpack.c.bf16 %v220, %v216
  %v324 = vpack.c.bf16 %v282, %v298
  %v325 = vpack.c.bf16 %v267, %v299
  %v326 = vpack.c.bf16 %v284, %v283
  %v327 = vpack.c.bf16 %v275, %v271
  %v328 = vpack.c.bf16 %v285, %v285
  %v329 = vpack.c.bf16 %v279, %v279
  %331 = vset.pattern.permute.xlu0 0
  %332 = vperm.xlu0 %331, %v86
  %v333 = vpop.permute.xlu0 %332
  %336 = vset.pattern.permute.xlu0 0
  %337 = vperm.xlu0 %336, %v87
  %v338 = vpop.permute.xlu0 %337
  %341 = vset.pattern.permute.xlu0 0
  %342 = vperm.xlu0 %341, %v88
  %v343 = vpop.permute.xlu0 %342
  %346 = vset.pattern.permute.xlu0 0
  %347 = vperm.xlu0 %346, %v89
  %v348 = vpop.permute.xlu0 %347
  %351 = vset.pattern.permute.xlu0 0
  %352 = vperm.xlu0 %351, %v90
  %v353 = vpop.permute.xlu0 %352
  %356 = vset.pattern.permute.xlu0 0
  %357 = vperm.xlu0 %356, %v91
  %v358 = vpop.permute.xlu0 %357
  %361 = vset.pattern.permute.xlu0 0
  %362 = vperm.xlu0 %361, %v92
  %v363 = vpop.permute.xlu0 %362
  %366 = vset.pattern.permute.xlu0 0
  %367 = vperm.xlu0 %366, %v93
  %v368 = vpop.permute.xlu0 %367
  %371 = vset.pattern.permute.xlu0 0
  %372 = vperm.xlu0 %371, %v94
  %v373 = vpop.permute.xlu0 %372
  %376 = vset.pattern.permute.xlu0 0
  %377 = vperm.xlu0 %376, %v95
  %v378 = vpop.permute.xlu0 %377
  %381 = vset.pattern.permute.xlu0 0
  %382 = vperm.xlu0 %381, %v96
  %v383 = vpop.permute.xlu0 %382
  %386 = vset.pattern.permute.xlu0 0
  %387 = vperm.xlu0 %386, %v97
  %v388 = vpop.permute.xlu0 %387
  %391 = vset.pattern.permute.xlu0 0
  %392 = vperm.xlu0 %391, %v98
  %v393 = vpop.permute.xlu0 %392
  %396 = vset.pattern.permute.xlu0 0
  %397 = vperm.xlu0 %396, %v99
  %v398 = vpop.permute.xlu0 %397
  %401 = vset.pattern.permute.xlu0 0
  %402 = vperm.xlu0 %401, %v100
  %v403 = vpop.permute.xlu0 %402
  %406 = vset.pattern.permute.xlu0 0
  %407 = vperm.xlu0 %406, %v101
  %v408 = vpop.permute.xlu0 %407
  %v426 = vunpack.c.l.b16 %v300
  %v427 = vunpack.c.l.b16 %v301
  %v428 = vunpack.c.l.b16 %v302
  %v429 = vunpack.c.l.b16 %v303
  %v430 = vunpack.c.l.b16 %v304
  %v431 = vunpack.c.l.b16 %v305
  %v432 = vunpack.c.l.b16 %v306
  %v433 = vunpack.c.l.b16 %v307
  %v434 = vunpack.c.l.b16 %v308
  %v435 = vunpack.c.l.b16 %v309
  %v436 = vunpack.c.l.b16 %v310
  %v437 = vunpack.c.l.b16 %v311
  %v438 = vunpack.c.l.b16 %v312
  %v439 = vunpack.c.l.b16 %v313
  %v440 = vunpack.c.l.b16 %v314
  %v441 = vunpack.c.l.b16 %v315
  %v442 = vpack.c.b16 %v427, %v426
  %v443 = vpack.c.b16 %v429, %v428
  %v444 = vpack.c.b16 %v431, %v430
  %v445 = vpack.c.b16 %v433, %v432
  %v446 = vpack.c.b16 %v435, %v434
  %v447 = vpack.c.b16 %v437, %v436
  %v448 = vpack.c.b16 %v439, %v438
  %v449 = vpack.c.b16 %v441, %v440
  %vm450 = vcmask 834560
  %v452 = vsel %vm450, %v442, 0
  %v455 = vsel %vm450, %v443, 0
  %v458 = vsel %vm450, %v444, 0
  %v461 = vsel %vm450, %v445, 0
  %v464 = vsel %vm450, %v446, 0
  %v467 = vsel %vm450, %v447, 0
  %v470 = vsel %vm450, %v448, 0
  %v473 = vsel %vm450, %v449, 0
  %vm475 = vcmask 1042432
  %v477 = vsel %vm475, %v328, 0
  %v480 = vsel %vm475, %v329, 0
  %482 = vmatprep.subr.bf16.mxu0 0
  %483 = vmatpush1.bf16.msra.mxu0 0
  %484 = vmatprep.subr.bf16.mxu0 %v480
  %485 = vmatpush1.bf16.msra.mxu0 %v477
  %486 = vmatprep.subr.bf16.mxu0 %v327
  %487 = vmatpush1.bf16.msra.mxu0 %v326
  %488 = vmatprep.subr.bf16.mxu0 %v325
  %489 = vmatpush1.bf16.msra.mxu0 %v324
  %490 = vmatprep.subr.bf16.mxu0 %v323
  %491 = vmatpush1.bf16.msra.mxu0 %v322
  %492 = vmatprep.subr.bf16.mxu0 %v321
  %493 = vmatpush1.bf16.msra.mxu0 %v320
  %494 = vmatprep.subr.bf16.mxu0 %v319
  %495 = vmatpush1.bf16.msra.mxu0 %v318
  %496 = vmatprep.subr.bf16.mxu0 %v317
  %497 = vmatpush1.bf16.msra.mxu0 %v316
  %498 = vmatprep.subr.bf16.mxu0 0
  %499 = vmatpush2.bf16.msra.mxu0 0
  %500 = vmatprep.subr.bf16.mxu0 0
  %501 = vmatpush2.bf16.msra.mxu0 0
  %502 = vmatprep.subr.bf16.mxu0 0
  %503 = vmatpush2.bf16.msra.mxu0 0
  %504 = vmatprep.subr.bf16.mxu0 0
  %505 = vmatpush2.bf16.msra.mxu0 0
  %506 = vmatprep.subr.bf16.mxu0 0
  %507 = vmatpush2.bf16.msra.mxu0 0
  %508 = vmatprep.subr.bf16.mxu0 0
  %509 = vmatpush2.bf16.msra.mxu0 0
  %510 = vmatprep.subr.bf16.mxu0 0
  %511 = vmatpush2.bf16.msra.mxu0 0
  %512 = vmatprep.subr.bf16.mxu0 0
  %513 = vmatpush2.bf16.msra.mxu0 0
  %514 = vmatprep.mubr.bf16.mxu0 0
  %515 = vmatmul.mubr.bf16.gmra.mxu0 %v452
  %v516 = vpop.f32.mrf.mxu0
  %v517 = vadd.f32 %v333, %v516
  %v518 = vpop.f32.mrf.mxu0
  %v519 = vadd.f32 %v333, %v518
  %v520 = vpop.f32.mrf.mxu0
  %v521 = vadd.f32 %v338, %v520
  %v522 = vpop.f32.mrf.mxu0
  %v523 = vadd.f32 %v338, %v522
  %524 = vmatprep.mubr.bf16.mxu0 0
  %525 = vmatmul.mubr.bf16.gmra.mxu0 %v455
  %v526 = vpop.f32.mrf.mxu0
  %v527 = vadd.f32 %v343, %v526
  %v528 = vpop.f32.mrf.mxu0
  %v529 = vadd.f32 %v343, %v528
  %v530 = vpop.f32.mrf.mxu0
  %v531 = vadd.f32 %v348, %v530
  %v532 = vpop.f32.mrf.mxu0
  %v533 = vadd.f32 %v348, %v532
  %534 = vmatprep.mubr.bf16.mxu0 0
  %535 = vmatmul.mubr.bf16.gmra.mxu0 %v458
  %v536 = vpop.f32.mrf.mxu0
  %v537 = vadd.f32 %v353, %v536
  %v538 = vpop.f32.mrf.mxu0
  %v539 = vadd.f32 %v353, %v538
  %v540 = vpop.f32.mrf.mxu0
  %v541 = vadd.f32 %v358, %v540
  %v542 = vpop.f32.mrf.mxu0
  %v543 = vadd.f32 %v358, %v542
  %544 = vmatprep.mubr.bf16.mxu0 0
  %545 = vmatmul.mubr.bf16.gmra.mxu0 %v461
  %v546 = vpop.f32.mrf.mxu0
  %v547 = vadd.f32 %v363, %v546
  %v548 = vpop.f32.mrf.mxu0
  %v549 = vadd.f32 %v363, %v548
  %v550 = vpop.f32.mrf.mxu0
  %v551 = vadd.f32 %v368, %v550
  %v552 = vpop.f32.mrf.mxu0
  %v553 = vadd.f32 %v368, %v552
  %554 = vmatprep.mubr.bf16.mxu0 0
  %555 = vmatmul.mubr.bf16.gmra.mxu0 %v464
  %v556 = vpop.f32.mrf.mxu0
  %v557 = vadd.f32 %v373, %v556
  %v558 = vpop.f32.mrf.mxu0
  %v559 = vadd.f32 %v373, %v558
  %v560 = vpop.f32.mrf.mxu0
  %v561 = vadd.f32 %v378, %v560
  %v562 = vpop.f32.mrf.mxu0
  %v563 = vadd.f32 %v378, %v562
  %564 = vmatprep.mubr.bf16.mxu0 0
  %565 = vmatmul.mubr.bf16.gmra.mxu0 %v467
  %v566 = vpop.f32.mrf.mxu0
  %v567 = vadd.f32 %v383, %v566
  %v568 = vpop.f32.mrf.mxu0
  %v569 = vadd.f32 %v383, %v568
  %v570 = vpop.f32.mrf.mxu0
  %v571 = vadd.f32 %v388, %v570
  %v572 = vpop.f32.mrf.mxu0
  %v573 = vadd.f32 %v388, %v572
  %574 = vmatprep.mubr.bf16.mxu0 0
  %575 = vmatmul.mubr.bf16.gmra.mxu0 %v470
  %v576 = vpop.f32.mrf.mxu0
  %v577 = vadd.f32 %v393, %v576
  %v578 = vpop.f32.mrf.mxu0
  %v579 = vadd.f32 %v393, %v578
  %v580 = vpop.f32.mrf.mxu0
  %v581 = vadd.f32 %v398, %v580
  %v582 = vpop.f32.mrf.mxu0
  %v583 = vadd.f32 %v398, %v582
  %584 = vmatprep.mubr.bf16.mxu0 0
  %585 = vmatmul.mubr.bf16.gmra.mxu0 %v473
  %v586 = vpop.f32.mrf.mxu0
  %v587 = vadd.f32 %v403, %v586
  %v588 = vpop.f32.mrf.mxu0
  %v589 = vadd.f32 %v403, %v588
  %v590 = vpop.f32.mrf.mxu0
  %v591 = vadd.f32 %v408, %v590
  %v592 = vpop.f32.mrf.mxu0
  %v593 = vadd.f32 %v408, %v592
  %594 = vdwg.mxu0
  %v595 = vmax.f32 %v517, 0.0
  %v596 = vmax.f32 %v519, 0.0
  %v597 = vmax.f32 %v521, 0.0
  %v598 = vmax.f32 %v523, 0.0
  %v599 = vmax.f32 %v527, 0.0
  %v600 = vmax.f32 %v529, 0.0
  %v601 = vmax.f32 %v531, 0.0
  %v602 = vmax.f32 %v533, 0.0
  %v603 = vmax.f32 %v537, 0.0
  %v604 = vmax.f32 %v539, 0.0
  %v605 = vmax.f32 %v541, 0.0
  %v606 = vmax.f32 %v543, 0.0
  %v607 = vmax.f32 %v547, 0.0
  %v608 = vmax.f32 %v549, 0.0
  %v609 = vmax.f32 %v551, 0.0
  %v610 = vmax.f32 %v553, 0.0
  %v611 = vmax.f32 %v557, 0.0
  %v612 = vmax.f32 %v559, 0.0
  %v613 = vmax.f32 %v561, 0.0
  %v614 = vmax.f32 %v563, 0.0
  %v615 = vmax.f32 %v567, 0.0
  %v616 = vmax.f32 %v569, 0.0
  %v617 = vmax.f32 %v571, 0.0
  %v618 = vmax.f32 %v573, 0.0
  %v619 = vmax.f32 %v577, 0.0
  %v620 = vmax.f32 %v579, 0.0
  %v621 = vmax.f32 %v581, 0.0
  %v622 = vmax.f32 %v583, 0.0
  %v623 = vmax.f32 %v587, 0.0
  %v624 = vmax.f32 %v589, 0.0
  %v625 = vmax.f32 %v591, 0.0
  %v626 = vmax.f32 %v593, 0.0
  %v627 = vld [vmem:[%s7] sm:$0xff]
  %v628 = vld [vmem:[%s7 + $0x8] sm:$0xff]
  %v629 = vld [vmem:[%s7 + $0x10] sm:$0xff]
  %v630 = vld [vmem:[%s7 + $0x18] sm:$0xff]
  %v631 = vld [vmem:[%s7 + $0x20] sm:$0xff]
  %v632 = vld [vmem:[%s7 + $0x28] sm:$0xff]
  %v633 = vld [vmem:[%s7 + $0x30] sm:$0xff]
  %v634 = vld [vmem:[%s7 + $0x38] sm:$0xff]
  %v635 = vld [vmem:[%s7 + $0x40] sm:$0xff]
  %v636 = vpack.c.bf16 %v597, %v595
  %v637 = vpack.c.bf16 %v598, %v596
  %v638 = vpack.c.bf16 %v601, %v599
  %v639 = vpack.c.bf16 %v602, %v600
  %v640 = vpack.c.bf16 %v605, %v603
  %v641 = vpack.c.bf16 %v606, %v604
  %v642 = vpack.c.bf16 %v609, %v607
  %v643 = vpack.c.bf16 %v610, %v608
  %v644 = vpack.c.bf16 %v613, %v611
  %v645 = vpack.c.bf16 %v614, %v612
  %v646 = vpack.c.bf16 %v617, %v615
  %v647 = vpack.c.bf16 %v618, %v616
  %v648 = vpack.c.bf16 %v621, %v619
  %v649 = vpack.c.bf16 %v622, %v620
  %v650 = vpack.c.bf16 %v625, %v623
  %v651 = vpack.c.bf16 %v626, %v624
  %v661 = vunpack.c.l.b16 %v627
  %v662 = vunpack.c.l.b16 %v628
  %v663 = vunpack.c.l.b16 %v629
  %v664 = vunpack.c.l.b16 %v630
  %v665 = vunpack.c.l.b16 %v631
  %v666 = vunpack.c.l.b16 %v632
  %v667 = vunpack.c.l.b16 %v633
  %v668 = vunpack.c.l.b16 %v634
  %v669 = vunpack.c.l.b16 %v635
  %v670 = vpack.c.b16 %v662, %v661
  %v671 = vpack.c.b16 %v664, %v663
  %v672 = vpack.c.b16 %v666, %v665
  %v673 = vpack.c.b16 %v668, %v667
  %v674 = vpack.c.b16 %v669, %v669
  %680 = vmatprep.subr.bf16.mxu0 %v651
  %681 = vmatpush1.bf16.msra.mxu0 %v650
  %682 = vmatprep.subr.bf16.mxu0 %v649
  %683 = vmatpush1.bf16.msra.mxu0 %v648
  %684 = vmatprep.subr.bf16.mxu0 %v647
  %685 = vmatpush1.bf16.msra.mxu0 %v646
  %686 = vmatprep.subr.bf16.mxu0 %v645
  %687 = vmatpush1.bf16.msra.mxu0 %v644
  %688 = vmatprep.subr.bf16.mxu0 %v643
  %689 = vmatpush1.bf16.msra.mxu0 %v642
  %690 = vmatprep.subr.bf16.mxu0 %v641
  %691 = vmatpush1.bf16.msra.mxu0 %v640
  %692 = vmatprep.subr.bf16.mxu0 %v639
  %693 = vmatpush1.bf16.msra.mxu0 %v638
  %694 = vmatprep.subr.bf16.mxu0 %v637
  %695 = vmatpush1.bf16.msra.mxu0 %v636
  %696 = vmatprep.subr.bf16.mxu0 0
  %697 = vmatpush2.bf16.msra.mxu0 0
  %698 = vmatprep.subr.bf16.mxu0 0
  %699 = vmatpush2.bf16.msra.mxu0 0
  %700 = vmatprep.subr.bf16.mxu0 0
  %701 = vmatpush2.bf16.msra.mxu0 0
  %702 = vmatprep.subr.bf16.mxu0 0
  %703 = vmatpush2.bf16.msra.mxu0 0
  %704 = vmatprep.subr.bf16.mxu0 0
  %705 = vmatpush2.bf16.msra.mxu0 0
  %706 = vmatprep.subr.bf16.mxu0 0
  %707 = vmatpush2.bf16.msra.mxu0 0
  %708 = vmatprep.subr.bf16.mxu0 0
  %709 = vmatpush2.bf16.msra.mxu0 0
  %710 = vmatprep.subr.bf16.mxu0 0
  %711 = vmatpush2.bf16.msra.mxu0 0
  %712 = vmatprep.mubr.bf16.mxu0 0
  %713 = vmatmul.mubr.bf16.gmra.mxu0 %v670
  %v714 = vpop.f32.mrf.mxu0
  %v715 = vadd.f32 0.0, %v714
  %v716 = vpop.f32.mrf.mxu0
  %v717 = vadd.f32 0.0, %v716
  %v718 = vpop.f32.mrf.mxu0
  %v719 = vadd.f32 0.0, %v718
  %v720 = vpop.f32.mrf.mxu0
  %v721 = vadd.f32 0.0, %v720
  %722 = vmatprep.mubr.bf16.mxu0 0
  %723 = vmatmul.mubr.bf16.gmra.mxu0 %v671
  %v724 = vpop.f32.mrf.mxu0
  %v725 = vadd.f32 0.0, %v724
  %v726 = vpop.f32.mrf.mxu0
  %v727 = vadd.f32 0.0, %v726
  %v728 = vpop.f32.mrf.mxu0
  %v729 = vadd.f32 0.0, %v728
  %v730 = vpop.f32.mrf.mxu0
  %v731 = vadd.f32 0.0, %v730
  %732 = vmatprep.mubr.bf16.mxu0 0
  %733 = vmatmul.mubr.bf16.gmra.mxu0 %v672
  %v734 = vpop.f32.mrf.mxu0
  %v735 = vadd.f32 0.0, %v734
  %v736 = vpop.f32.mrf.mxu0
  %v737 = vadd.f32 0.0, %v736
  %v738 = vpop.f32.mrf.mxu0
  %v739 = vadd.f32 0.0, %v738
  %v740 = vpop.f32.mrf.mxu0
  %v741 = vadd.f32 0.0, %v740
  %742 = vmatprep.mubr.bf16.mxu0 0
  %743 = vmatmul.mubr.bf16.gmra.mxu0 %v673
  %v744 = vpop.f32.mrf.mxu0
  %v745 = vadd.f32 0.0, %v744
  %v746 = vpop.f32.mrf.mxu0
  %v747 = vadd.f32 0.0, %v746
  %v748 = vpop.f32.mrf.mxu0
  %v749 = vadd.f32 0.0, %v748
  %v750 = vpop.f32.mrf.mxu0
  %v751 = vadd.f32 0.0, %v750
  %752 = vmatprep.mubr.bf16.mxu0 0
  %753 = vmatmul.mubr.bf16.gmra.mxu0 %v674
  %v754 = vpop.f32.mrf.mxu0
  %v755 = vadd.f32 0.0, %v754
  %v756 = vpop.f32.mrf.mxu0
  %v757 = vadd.f32 0.0, %v756
  %v758 = vpop.f32.mrf.mxu0
  %v759 = vpop.f32.mrf.mxu0
  %760 = vdwg.mxu0
  %v761 = vunpack.c.h.b16 %v627
  %v762 = vunpack.c.h.b16 %v628
  %v763 = vunpack.c.h.b16 %v629
  %v764 = vunpack.c.h.b16 %v630
  %v765 = vunpack.c.h.b16 %v631
  %v766 = vunpack.c.h.b16 %v632
  %v767 = vunpack.c.h.b16 %v633
  %v768 = vunpack.c.h.b16 %v634
  %v769 = vunpack.c.h.b16 %v635
  %v770 = vpack.c.b16 %v762, %v761
  %v771 = vpack.c.b16 %v764, %v763
  %v772 = vpack.c.b16 %v766, %v765
  %v773 = vpack.c.b16 %v768, %v767
  %v774 = vpack.c.b16 %v769, %v769
  %780 = vmatprep.subr.bf16.mxu0 %v651
  %781 = vmatpush1.bf16.msra.mxu0 %v650
  %782 = vmatprep.subr.bf16.mxu0 %v649
  %783 = vmatpush1.bf16.msra.mxu0 %v648
  %784 = vmatprep.subr.bf16.mxu0 %v647
  %785 = vmatpush1.bf16.msra.mxu0 %v646
  %786 = vmatprep.subr.bf16.mxu0 %v645
  %787 = vmatpush1.bf16.msra.mxu0 %v644
  %788 = vmatprep.subr.bf16.mxu0 %v643
  %789 = vmatpush1.bf16.msra.mxu0 %v642
  %790 = vmatprep.subr.bf16.mxu0 %v641
  %791 = vmatpush1.bf16.msra.mxu0 %v640
  %792 = vmatprep.subr.bf16.mxu0 %v639
  %793 = vmatpush1.bf16.msra.mxu0 %v638
  %794 = vmatprep.subr.bf16.mxu0 %v637
  %795 = vmatpush1.bf16.msra.mxu0 %v636
  %796 = vmatprep.subr.bf16.mxu0 0
  %797 = vmatpush2.bf16.msra.mxu0 0
  %798 = vmatprep.subr.bf16.mxu0 0
  %799 = vmatpush2.bf16.msra.mxu0 0
  %800 = vmatprep.subr.bf16.mxu0 0
  %801 = vmatpush2.bf16.msra.mxu0 0
  %802 = vmatprep.subr.bf16.mxu0 0
  %803 = vmatpush2.bf16.msra.mxu0 0
  %804 = vmatprep.subr.bf16.mxu0 0
  %805 = vmatpush2.bf16.msra.mxu0 0
  %806 = vmatprep.subr.bf16.mxu0 0
  %807 = vmatpush2.bf16.msra.mxu0 0
  %808 = vmatprep.subr.bf16.mxu0 0
  %809 = vmatpush2.bf16.msra.mxu0 0
  %810 = vmatprep.subr.bf16.mxu0 0
  %811 = vmatpush2.bf16.msra.mxu0 0
  %812 = vmatprep.mubr.bf16.mxu0 0
  %813 = vmatmul.mubr.bf16.gmra.mxu0 %v770
  %v814 = vpop.f32.mrf.mxu0
  %v815 = vadd.f32 0.0, %v814
  %v816 = vpop.f32.mrf.mxu0
  %v817 = vadd.f32 0.0, %v816
  %v818 = vpop.f32.mrf.mxu0
  %v819 = vadd.f32 0.0, %v818
  %v820 = vpop.f32.mrf.mxu0
  %v821 = vadd.f32 0.0, %v820
  %822 = vmatprep.mubr.bf16.mxu0 0
  %823 = vmatmul.mubr.bf16.gmra.mxu0 %v771
  %v824 = vpop.f32.mrf.mxu0
  %v825 = vadd.f32 0.0, %v824
  %v826 = vpop.f32.mrf.mxu0
  %v827 = vadd.f32 0.0, %v826
  %v828 = vpop.f32.mrf.mxu0
  %v829 = vadd.f32 0.0, %v828
  %v830 = vpop.f32.mrf.mxu0
  %v831 = vadd.f32 0.0, %v830
  %832 = vmatprep.mubr.bf16.mxu0 0
  %833 = vmatmul.mubr.bf16.gmra.mxu0 %v772
  %v834 = vpop.f32.mrf.mxu0
  %v835 = vadd.f32 0.0, %v834
  %v836 = vpop.f32.mrf.mxu0
  %v837 = vadd.f32 0.0, %v836
  %v838 = vpop.f32.mrf.mxu0
  %v839 = vadd.f32 0.0, %v838
  %v840 = vpop.f32.mrf.mxu0
  %v841 = vadd.f32 0.0, %v840
  %842 = vmatprep.mubr.bf16.mxu0 0
  %843 = vmatmul.mubr.bf16.gmra.mxu0 %v773
  %v844 = vpop.f32.mrf.mxu0
  %v845 = vadd.f32 0.0, %v844
  %v846 = vpop.f32.mrf.mxu0
  %v847 = vadd.f32 0.0, %v846
  %v848 = vpop.f32.mrf.mxu0
  %v849 = vadd.f32 0.0, %v848
  %v850 = vpop.f32.mrf.mxu0
  %v851 = vadd.f32 0.0, %v850
  %852 = vmatprep.mubr.bf16.mxu0 0
  %853 = vmatmul.mubr.bf16.gmra.mxu0 %v774
  %v854 = vpop.f32.mrf.mxu0
  %v855 = vadd.f32 0.0, %v854
  %v856 = vpop.f32.mrf.mxu0
  %v857 = vadd.f32 0.0, %v856
  %v858 = vpop.f32.mrf.mxu0
  %v859 = vpop.f32.mrf.mxu0
  %860 = vdwg.mxu0
  %v861 = vmax.f32 %v715, %v815
  %v862 = vmax.f32 %v717, %v817
  %v863 = vmax.f32 %v719, %v819
  %v864 = vmax.f32 %v721, %v821
  %v865 = vmax.f32 %v725, %v825
  %v866 = vmax.f32 %v727, %v827
  %v867 = vmax.f32 %v729, %v829
  %v868 = vmax.f32 %v731, %v831
  %v869 = vmax.f32 %v735, %v835
  %v870 = vmax.f32 %v737, %v837
  %v871 = vmax.f32 %v739, %v839
  %v872 = vmax.f32 %v741, %v841
  %v873 = vmax.f32 %v745, %v845
  %v874 = vmax.f32 %v747, %v847
  %v875 = vmax.f32 %v749, %v849
  %v876 = vmax.f32 %v751, %v851
  %v877 = vmax.f32 %v755, %v855
  %v878 = vmax.f32 %v757, %v857
  %v879 = vld [vmem:[%s11] sm:$0xff]
  %v880 = vld [vmem:[%s11 + $0x8] sm:$0xff]
  %v881 = vld [vmem:[%s11 + $0x10] sm:$0xff]
  %v882 = vld [vmem:[%s11 + $0x18] sm:$0xff]
  %v883 = vld [vmem:[%s11 + $0x20] sm:$0xff]
  %v884 = vld [vmem:[%s11 + $0x28] sm:$0xff]
  %v885 = vld [vmem:[%s11 + $0x30] sm:$0xff]
  %v886 = vld [vmem:[%s11 + $0x38] sm:$0xff]
  %v887 = vld [vmem:[%s11 + $0x40] sm:$0xff]
  %v888 = vld [vmem:[%s11 + $0x48] sm:$0xff]
  %v889 = vld [vmem:[%s11 + $0x50] sm:$0xff]
  %v890 = vld [vmem:[%s11 + $0x58] sm:$0xff]
  %v891 = vld [vmem:[%s11 + $0x60] sm:$0xff]
  %v892 = vld [vmem:[%s11 + $0x68] sm:$0xff]
  %v893 = vld [vmem:[%s11 + $0x70] sm:$0xff]
  %v894 = vld [vmem:[%s11 + $0x78] sm:$0xff]
  %v895 = vld [vmem:[%s11 + $0x80] sm:$0xff]
  %v896 = vld [vmem:[%s11 + $0x88] sm:$0xff]
  %v897 = vld [vmem:[%s11 + $0x90] sm:$0xff]
  %v898 = vld [vmem:[%s11 + $0x98] sm:$0xff]
  %v899 = vld [vmem:[%s11 + $0xa0] sm:$0xff]
  %v900 = vld [vmem:[%s11 + $0xa8] sm:$0xff]
  %v901 = vld [vmem:[%s11 + $0xb0] sm:$0xff]
  %v902 = vld [vmem:[%s11 + $0xb8] sm:$0xff]
  %v903 = vld [vmem:[%s11 + $0xc0] sm:$0xff]
  %v904 = vld [vmem:[%s11 + $0xc8] sm:$0x11]
  %v905 = vpack.c.bf16 %v863, %v861
  %v906 = vpack.c.bf16 %v864, %v862
  %v907 = vpack.c.bf16 %v867, %v865
  %v908 = vpack.c.bf16 %v868, %v866
  %v909 = vpack.c.bf16 %v871, %v869
  %v910 = vpack.c.bf16 %v872, %v870
  %v911 = vpack.c.bf16 %v875, %v873
  %v912 = vpack.c.bf16 %v876, %v874
  %v913 = vpack.c.bf16 %v877, %v877
  %v914 = vpack.c.bf16 %v878, %v878
  %v941 = vunpack.c.l.b16 %v879
  %v942 = vunpack.c.l.b16 %v880
  %v943 = vunpack.c.l.b16 %v881
  %v944 = vunpack.c.l.b16 %v882
  %v945 = vunpack.c.l.b16 %v883
  %v946 = vunpack.c.l.b16 %v884
  %v947 = vunpack.c.l.b16 %v885
  %v948 = vunpack.c.l.b16 %v886
  %v949 = vunpack.c.l.b16 %v887
  %v950 = vunpack.c.l.b16 %v888
  %v951 = vunpack.c.l.b16 %v889
  %v952 = vunpack.c.l.b16 %v890
  %v953 = vunpack.c.l.b16 %v891
  %v954 = vunpack.c.l.b16 %v892
  %v955 = vunpack.c.l.b16 %v893
  %v956 = vunpack.c.l.b16 %v894
  %v957 = vunpack.c.l.b16 %v895
  %v958 = vunpack.c.l.b16 %v896
  %v959 = vunpack.c.l.b16 %v897
  %v960 = vunpack.c.l.b16 %v898
  %v961 = vunpack.c.l.b16 %v899
  %v962 = vunpack.c.l.b16 %v900
  %v963 = vunpack.c.l.b16 %v901
  %v964 = vunpack.c.l.b16 %v902
  %v965 = vunpack.c.l.b16 %v903
  %v966 = vunpack.c.l.b16 %v904
  %v967 = vpack.c.b16 %v942, %v941
  %v968 = vpack.c.b16 %v944, %v943
  %v969 = vpack.c.b16 %v946, %v945
  %v970 = vpack.c.b16 %v948, %v947
  %v971 = vpack.c.b16 %v950, %v949
  %v972 = vpack.c.b16 %v952, %v951
  %v973 = vpack.c.b16 %v954, %v953
  %v974 = vpack.c.b16 %v956, %v955
  %v975 = vpack.c.b16 %v958, %v957
  %v976 = vpack.c.b16 %v960, %v959
  %v977 = vpack.c.b16 %v962, %v961
  %v978 = vpack.c.b16 %v964, %v963
  %v979 = vpack.c.b16 %v966, %v965
  %vm992 = vcmask 605184
  %v994 = vsel %vm992, %v906, 0
  %v997 = vsel %vm992, %v908, 0
  %v1000 = vsel %vm992, %v910, 0
  %v1003 = vsel %vm992, %v912, 0
  %v1006 = vsel %vm992, %v914, 0
  %vm1008 = vcmask 1044480
  %v1010 = vsel %vm1008, %v979, 0
  %1012 = vmatprep.subr.bf16.mxu0 0
  %1013 = vmatpush1.bf16.msra.mxu0 %v974
  %1014 = vmatprep.subr.bf16.mxu0 0
  %1015 = vmatpush1.bf16.msra.mxu0 %v973
  %1016 = vmatprep.subr.bf16.mxu0 0
  %1017 = vmatpush1.bf16.msra.mxu0 %v972
  %1018 = vmatprep.subr.bf16.mxu0 0
  %1019 = vmatpush1.bf16.msra.mxu0 %v971
  %1020 = vmatprep.subr.bf16.mxu0 0
  %1021 = vmatpush1.bf16.msra.mxu0 %v970
  %1022 = vmatprep.subr.bf16.mxu0 0
  %1023 = vmatpush1.bf16.msra.mxu0 %v969
  %1024 = vmatprep.subr.bf16.mxu0 0
  %1025 = vmatpush1.bf16.msra.mxu0 %v968
  %1026 = vmatprep.subr.bf16.mxu0 0
  %1027 = vmatpush1.bf16.msra.mxu0 %v967
  %1028 = vmatprep.subr.bf16.mxu0 0
  %1029 = vmatpush2.bf16.msra.mxu0 0
  %1030 = vmatprep.subr.bf16.mxu0 0
  %1031 = vmatpush2.bf16.msra.mxu0 0
  %1032 = vmatprep.subr.bf16.mxu0 0
  %1033 = vmatpush2.bf16.msra.mxu0 0
  %1034 = vmatprep.subr.bf16.mxu0 0
  %1035 = vmatpush2.bf16.msra.mxu0 %v1010
  %1036 = vmatprep.subr.bf16.mxu0 0
  %1037 = vmatpush2.bf16.msra.mxu0 %v978
  %1038 = vmatprep.subr.bf16.mxu0 0
  %1039 = vmatpush2.bf16.msra.mxu0 %v977
  %1040 = vmatprep.subr.bf16.mxu0 0
  %1041 = vmatpush2.bf16.msra.mxu0 %v976
  %1042 = vmatprep.subr.bf16.mxu0 0
  %1043 = vmatpush2.bf16.msra.mxu0 %v975
  %1044 = vmatprep.mubr.bf16.mxu0 %v994
  %1045 = vmatmul.mubr.bf16.gmra.mxu0 %v905
  %v1046 = vpop.f32.mrf.mxu0
  %v1047 = vadd.f32 0.0, %v1046
  %v1048 = vpop.f32.mrf.mxu0
  %v1049 = vpop.f32.mrf.mxu0
  %v1050 = vadd.f32 0.0, %v1049
  %v1051 = vpop.f32.mrf.mxu0
  %1052 = vmatprep.mubr.bf16.mxu0 %v997
  %1053 = vmatmul.mubr.bf16.gmra.mxu0 %v907
  %v1054 = vpop.f32.mrf.mxu0
  %v1055 = vadd.f32 0.0, %v1054
  %v1056 = vpop.f32.mrf.mxu0
  %v1057 = vpop.f32.mrf.mxu0
  %v1058 = vadd.f32 0.0, %v1057
  %v1059 = vpop.f32.mrf.mxu0
  %1060 = vmatprep.mubr.bf16.mxu0 %v1000
  %1061 = vmatmul.mubr.bf16.gmra.mxu0 %v909
  %v1062 = vpop.f32.mrf.mxu0
  %v1063 = vadd.f32 0.0, %v1062
  %v1064 = vpop.f32.mrf.mxu0
  %v1065 = vpop.f32.mrf.mxu0
  %v1066 = vadd.f32 0.0, %v1065
  %v1067 = vpop.f32.mrf.mxu0
  %1068 = vmatprep.mubr.bf16.mxu0 %v1003
  %1069 = vmatmul.mubr.bf16.gmra.mxu0 %v911
  %v1070 = vpop.f32.mrf.mxu0
  %v1071 = vadd.f32 0.0, %v1070
  %v1072 = vpop.f32.mrf.mxu0
  %v1073 = vpop.f32.mrf.mxu0
  %v1074 = vadd.f32 0.0, %v1073
  %v1075 = vpop.f32.mrf.mxu0
  %1076 = vmatprep.mubr.bf16.mxu0 %v1006
  %1077 = vmatmul.mubr.bf16.gmra.mxu0 %v913
  %v1078 = vpop.f32.mrf.mxu0
  %v1079 = vadd.f32 0.0, %v1078
  %v1080 = vpop.f32.mrf.mxu0
  %v1081 = vpop.f32.mrf.mxu0
  %v1082 = vpop.f32.mrf.mxu0
  %1083 = vdwg.mxu0
  %v1084 = vunpack.c.h.b16 %v879
  %v1085 = vunpack.c.h.b16 %v880
  %v1086 = vunpack.c.h.b16 %v881
  %v1087 = vunpack.c.h.b16 %v882
  %v1088 = vunpack.c.h.b16 %v883
  %v1089 = vunpack.c.h.b16 %v884
  %v1090 = vunpack.c.h.b16 %v885
  %v1091 = vunpack.c.h.b16 %v886
  %v1092 = vunpack.c.h.b16 %v887
  %v1093 = vunpack.c.h.b16 %v888
  %v1094 = vunpack.c.h.b16 %v889
  %v1095 = vunpack.c.h.b16 %v890
  %v1096 = vunpack.c.h.b16 %v891
  %v1097 = vunpack.c.h.b16 %v892
  %v1098 = vunpack.c.h.b16 %v893
  %v1099 = vunpack.c.h.b16 %v894
  %v1100 = vunpack.c.h.b16 %v895
  %v1101 = vunpack.c.h.b16 %v896
  %v1102 = vunpack.c.h.b16 %v897
  %v1103 = vunpack.c.h.b16 %v898
  %v1104 = vunpack.c.h.b16 %v899
  %v1105 = vunpack.c.h.b16 %v900
  %v1106 = vunpack.c.h.b16 %v901
  %v1107 = vunpack.c.h.b16 %v902
  %v1108 = vunpack.c.h.b16 %v903
  %v1109 = vunpack.c.h.b16 %v904
  %v1110 = vpack.c.b16 %v1085, %v1084
  %v1111 = vpack.c.b16 %v1087, %v1086
  %v1112 = vpack.c.b16 %v1089, %v1088
  %v1113 = vpack.c.b16 %v1091, %v1090
  %v1114 = vpack.c.b16 %v1093, %v1092
  %v1115 = vpack.c.b16 %v1095, %v1094
  %v1116 = vpack.c.b16 %v1097, %v1096
  %v1117 = vpack.c.b16 %v1099, %v1098
  %v1118 = vpack.c.b16 %v1101, %v1100
  %v1119 = vpack.c.b16 %v1103, %v1102
  %v1120 = vpack.c.b16 %v1105, %v1104
  %v1121 = vpack.c.b16 %v1107, %v1106
  %v1122 = vpack.c.b16 %v1109, %v1108
  %1123 = vrot.lane.b32.xlu0 %v967, 20
  %v1124 = vpop.permute.xlu0 %1123
  %1125 = vrot.lane.b32.xlu0 %v1110, 20
  %v1126 = vpop.permute.xlu0 %1125
  %1127 = vrot.lane.b32.xlu0 %v968, 20
  %v1128 = vpop.permute.xlu0 %1127
  %1129 = vrot.lane.b32.xlu0 %v1111, 20
  %v1130 = vpop.permute.xlu0 %1129
  %1131 = vrot.lane.b32.xlu0 %v969, 20
  %v1132 = vpop.permute.xlu0 %1131
  %1133 = vrot.lane.b32.xlu0 %v1112, 20
  %v1134 = vpop.permute.xlu0 %1133
  %1135 = vrot.lane.b32.xlu0 %v970, 20
  %v1136 = vpop.permute.xlu0 %1135
  %1137 = vrot.lane.b32.xlu0 %v1113, 20
  %v1138 = vpop.permute.xlu0 %1137
  %1139 = vrot.lane.b32.xlu0 %v971, 20
  %v1140 = vpop.permute.xlu0 %1139
  %1141 = vrot.lane.b32.xlu0 %v1114, 20
  %v1142 = vpop.permute.xlu0 %1141
  %1143 = vrot.lane.b32.xlu0 %v972, 20
  %v1144 = vpop.permute.xlu0 %1143
  %1145 = vrot.lane.b32.xlu0 %v1115, 20
  %v1146 = vpop.permute.xlu0 %1145
  %1147 = vrot.lane.b32.xlu0 %v973, 20
  %v1148 = vpop.permute.xlu0 %1147
  %1149 = vrot.lane.b32.xlu0 %v1116, 20
  %v1150 = vpop.permute.xlu0 %1149
  %1151 = vrot.lane.b32.xlu0 %v974, 20
  %v1152 = vpop.permute.xlu0 %1151
  %1153 = vrot.lane.b32.xlu0 %v1117, 20
  %v1154 = vpop.permute.xlu0 %1153
  %1155 = vrot.lane.b32.xlu0 %v975, 20
  %v1156 = vpop.permute.xlu0 %1155
  %1157 = vrot.lane.b32.xlu0 %v1118, 20
  %v1158 = vpop.permute.xlu0 %1157
  %1159 = vrot.lane.b32.xlu0 %v976, 20
  %v1160 = vpop.permute.xlu0 %1159
  %1161 = vrot.lane.b32.xlu0 %v1119, 20
  %v1162 = vpop.permute.xlu0 %1161
  %1163 = vrot.lane.b32.xlu0 %v977, 20
  %v1164 = vpop.permute.xlu0 %1163
  %1165 = vrot.lane.b32.xlu0 %v1120, 20
  %v1166 = vpop.permute.xlu0 %1165
  %1167 = vrot.lane.b32.xlu0 %v978, 20
  %v1168 = vpop.permute.xlu0 %1167
  %1169 = vrot.lane.b32.xlu0 %v1121, 20
  %v1170 = vpop.permute.xlu0 %1169
  %1171 = vrot.lane.b32.xlu0 %v979, 20
  %v1172 = vpop.permute.xlu0 %1171
  %1173 = vrot.lane.b32.xlu0 %v1122, 20
  %v1174 = vpop.permute.xlu0 %1173
  %vm1175 = vcmask 162816
  %v1176 = vsel %vm1175, %v1124, %v1126
  %v1177 = vsel %vm1175, %v1128, %v1130
  %v1178 = vsel %vm1175, %v1132, %v1134
  %v1179 = vsel %vm1175, %v1136, %v1138
  %v1180 = vsel %vm1175, %v1140, %v1142
  %v1181 = vsel %vm1175, %v1144, %v1146
  %v1182 = vsel %vm1175, %v1148, %v1150
  %v1183 = vsel %vm1175, %v1152, %v1154
  %v1184 = vsel %vm1175, %v1156, %v1158
  %v1185 = vsel %vm1175, %v1160, %v1162
  %v1186 = vsel %vm1175, %v1164, %v1166
  %v1187 = vsel %vm1175, %v1168, %v1170
  %v1188 = vsel %vm1175, %v1172, %v1174
  %v1202 = vsel %vm1008, %v1188, 0
  %1204 = vmatprep.subr.bf16.mxu0 0
  %1205 = vmatpush1.bf16.msra.mxu0 %v1183
  %1206 = vmatprep.subr.bf16.mxu0 0
  %1207 = vmatpush1.bf16.msra.mxu0 %v1182
  %1208 = vmatprep.subr.bf16.mxu0 0
  %1209 = vmatpush1.bf16.msra.mxu0 %v1181
  %1210 = vmatprep.subr.bf16.mxu0 0
  %1211 = vmatpush1.bf16.msra.mxu0 %v1180
  %1212 = vmatprep.subr.bf16.mxu0 0
  %1213 = vmatpush1.bf16.msra.mxu0 %v1179
  %1214 = vmatprep.subr.bf16.mxu0 0
  %1215 = vmatpush1.bf16.msra.mxu0 %v1178
  %1216 = vmatprep.subr.bf16.mxu0 0
  %1217 = vmatpush1.bf16.msra.mxu0 %v1177
  %1218 = vmatprep.subr.bf16.mxu0 0
  %1219 = vmatpush1.bf16.msra.mxu0 %v1176
  %1220 = vmatprep.subr.bf16.mxu0 0
  %1221 = vmatpush2.bf16.msra.mxu0 0
  %1222 = vmatprep.subr.bf16.mxu0 0
  %1223 = vmatpush2.bf16.msra.mxu0 0
  %1224 = vmatprep.subr.bf16.mxu0 0
  %1225 = vmatpush2.bf16.msra.mxu0 0
  %1226 = vmatprep.subr.bf16.mxu0 0
  %1227 = vmatpush2.bf16.msra.mxu0 %v1202
  %1228 = vmatprep.subr.bf16.mxu0 0
  %1229 = vmatpush2.bf16.msra.mxu0 %v1187
  %1230 = vmatprep.subr.bf16.mxu0 0
  %1231 = vmatpush2.bf16.msra.mxu0 %v1186
  %1232 = vmatprep.subr.bf16.mxu0 0
  %1233 = vmatpush2.bf16.msra.mxu0 %v1185
  %1234 = vmatprep.subr.bf16.mxu0 0
  %1235 = vmatpush2.bf16.msra.mxu0 %v1184
  %1236 = vmatprep.mubr.bf16.mxu0 %v994
  %1237 = vmatmul.mubr.bf16.gmra.mxu0 %v905
  %v1238 = vpop.f32.mrf.mxu0
  %v1239 = vadd.f32 0.0, %v1238
  %v1240 = vpop.f32.mrf.mxu0
  %v1241 = vpop.f32.mrf.mxu0
  %v1242 = vadd.f32 0.0, %v1241
  %v1243 = vpop.f32.mrf.mxu0
  %1244 = vmatprep.mubr.bf16.mxu0 %v997
  %1245 = vmatmul.mubr.bf16.gmra.mxu0 %v907
  %v1246 = vpop.f32.mrf.mxu0
  %v1247 = vadd.f32 0.0, %v1246
  %v1248 = vpop.f32.mrf.mxu0
  %v1249 = vpop.f32.mrf.mxu0
  %v1250 = vadd.f32 0.0, %v1249
  %v1251 = vpop.f32.mrf.mxu0
  %1252 = vmatprep.mubr.bf16.mxu0 %v1000
  %1253 = vmatmul.mubr.bf16.gmra.mxu0 %v909
  %v1254 = vpop.f32.mrf.mxu0
  %v1255 = vadd.f32 0.0, %v1254
  %v1256 = vpop.f32.mrf.mxu0
  %v1257 = vpop.f32.mrf.mxu0
  %v1258 = vadd.f32 0.0, %v1257
  %v1259 = vpop.f32.mrf.mxu0
  %1260 = vmatprep.mubr.bf16.mxu0 %v1003
  %1261 = vmatmul.mubr.bf16.gmra.mxu0 %v911
  %v1262 = vpop.f32.mrf.mxu0
  %v1263 = vadd.f32 0.0, %v1262
  %v1264 = vpop.f32.mrf.mxu0
  %v1265 = vpop.f32.mrf.mxu0
  %v1266 = vadd.f32 0.0, %v1265
  %v1267 = vpop.f32.mrf.mxu0
  %1268 = vmatprep.mubr.bf16.mxu0 %v1006
  %1269 = vmatmul.mubr.bf16.gmra.mxu0 %v913
  %v1270 = vpop.f32.mrf.mxu0
  %v1271 = vadd.f32 0.0, %v1270
  %v1272 = vpop.f32.mrf.mxu0
  %v1273 = vpop.f32.mrf.mxu0
  %v1274 = vpop.f32.mrf.mxu0
  %1275 = vdwg.mxu0
  %v1276 = vmax.f32 %v1047, %v1239
  %v1277 = vmax.f32 %v1050, %v1242
  %v1278 = vmax.f32 %v1055, %v1247
  %v1279 = vmax.f32 %v1058, %v1250
  %v1280 = vmax.f32 %v1063, %v1255
  %v1281 = vmax.f32 %v1066, %v1258
  %v1282 = vmax.f32 %v1071, %v1263
  %v1283 = vmax.f32 %v1074, %v1266
  %v1284 = vmax.f32 %v1079, %v1271
  %1294 = vrot.lane.b32.xlu0 %v1276, 127
  %v1295 = vpop.permute.xlu0 %1294
  %1296 = vrot.lane.b32.xlu0 %v1277, 127
  %v1297 = vpop.permute.xlu0 %1296
  %1298 = vrot.lane.b32.xlu0 %v1278, 127
  %v1299 = vpop.permute.xlu0 %1298
  %1300 = vrot.lane.b32.xlu0 %v1279, 127
  %v1301 = vpop.permute.xlu0 %1300
  %1302 = vrot.lane.b32.xlu0 %v1280, 127
  %v1303 = vpop.permute.xlu0 %1302
  %1304 = vrot.lane.b32.xlu0 %v1281, 127
  %v1305 = vpop.permute.xlu0 %1304
  %1306 = vrot.lane.b32.xlu0 %v1282, 127
  %v1307 = vpop.permute.xlu0 %1306
  %1308 = vrot.lane.b32.xlu0 %v1283, 127
  %v1309 = vpop.permute.xlu0 %1308
  %1310 = vrot.lane.b32.xlu0 %v1284, 127
  %v1311 = vpop.permute.xlu0 %1310
  %1321 = vrot.lane.b32.xlu0 %v1276, 126
  %v1322 = vpop.permute.xlu0 %1321
  %1323 = vrot.lane.b32.xlu0 %v1277, 126
  %v1324 = vpop.permute.xlu0 %1323
  %1325 = vrot.lane.b32.xlu0 %v1278, 126
  %v1326 = vpop.permute.xlu0 %1325
  %1327 = vrot.lane.b32.xlu0 %v1279, 126
  %v1328 = vpop.permute.xlu0 %1327
  %1329 = vrot.lane.b32.xlu0 %v1280, 126
  %v1330 = vpop.permute.xlu0 %1329
  %1331 = vrot.lane.b32.xlu0 %v1281, 126
  %v1332 = vpop.permute.xlu0 %1331
  %1333 = vrot.lane.b32.xlu0 %v1282, 126
  %v1334 = vpop.permute.xlu0 %1333
  %1335 = vrot.lane.b32.xlu0 %v1283, 126
  %v1336 = vpop.permute.xlu0 %1335
  %1337 = vrot.lane.b32.xlu0 %v1284, 126
  %v1338 = vpop.permute.xlu0 %1337
  %v1348 = vld [vmem:[%s2] sm:$0xff]
  %v1349 = vld [vmem:[%s2 + $0x8] sm:$0xff]
  %v1350 = vld [vmem:[%s2 + $0x10] sm:$0xff]
  %v1351 = vld [vmem:[%s2 + $0x18] sm:$0xff]
  %v1352 = vld [vmem:[%s2 + $0x20] sm:$0xff]
  %v1353 = vld [vmem:[%s2 + $0x28] sm:$0xff]
  %v1354 = vld [vmem:[%s2 + $0x30] sm:$0xff]
  %v1355 = vld [vmem:[%s2 + $0x38] sm:$0xff]
  %v1356 = vld [vmem:[%s2 + $0x40] sm:$0xff]
  %v1357 = vld [vmem:[%s2 + $0x48] sm:$0xff]
  %v1358 = vld [vmem:[%s2 + $0x50] sm:$0xff]
  %v1359 = vld [vmem:[%s2 + $0x58] sm:$0xff]
  %v1360 = vld [vmem:[%s2 + $0x60] sm:$0xff]
  %v1361 = vld [vmem:[%s2 + $0x68] sm:$0xff]
  %v1362 = vld [vmem:[%s2 + $0x70] sm:$0xff]
  %v1363 = vld [vmem:[%s2 + $0x78] sm:$0xff]
  %v1364 = vpack.c.bf16 %v1277, %v1276
  %v1365 = vpack.c.bf16 %v1279, %v1278
  %v1366 = vpack.c.bf16 %v1281, %v1280
  %v1367 = vpack.c.bf16 %v1283, %v1282
  %v1368 = vpack.c.bf16 %v1295, %v1284
  %v1369 = vpack.c.bf16 %v1299, %v1297
  %v1370 = vpack.c.bf16 %v1303, %v1301
  %v1371 = vpack.c.bf16 %v1307, %v1305
  %v1372 = vpack.c.bf16 %v1311, %v1309
  %v1373 = vpack.c.bf16 %v1324, %v1322
  %v1374 = vpack.c.bf16 %v1328, %v1326
  %v1375 = vpack.c.bf16 %v1332, %v1330
  %v1376 = vpack.c.bf16 %v1336, %v1334
  %v1377 = vpack.c.bf16 %v1338, %v1338
  %1379 = vset.pattern.permute.xlu0 0
  %1380 = vperm.xlu0 %1379, %v102
  %v1381 = vpop.permute.xlu0 %1380
  %1384 = vset.pattern.permute.xlu0 0
  %1385 = vperm.xlu0 %1384, %v103
  %v1386 = vpop.permute.xlu0 %1385
  %1389 = vset.pattern.permute.xlu0 0
  %1390 = vperm.xlu0 %1389, %v104
  %v1391 = vpop.permute.xlu0 %1390
  %1394 = vset.pattern.permute.xlu0 0
  %1395 = vperm.xlu0 %1394, %v105
  %v1396 = vpop.permute.xlu0 %1395
  %1399 = vset.pattern.permute.xlu0 0
  %1400 = vperm.xlu0 %1399, %v106
  %v1401 = vpop.permute.xlu0 %1400
  %1404 = vset.pattern.permute.xlu0 0
  %1405 = vperm.xlu0 %1404, %v107
  %v1406 = vpop.permute.xlu0 %1405
  %1409 = vset.pattern.permute.xlu0 0
  %1410 = vperm.xlu0 %1409, %v108
  %v1411 = vpop.permute.xlu0 %1410
  %1414 = vset.pattern.permute.xlu0 0
  %1415 = vperm.xlu0 %1414, %v109
  %v1416 = vpop.permute.xlu0 %1415
  %1419 = vset.pattern.permute.xlu0 0
  %1420 = vperm.xlu0 %1419, %v110
  %v1421 = vpop.permute.xlu0 %1420
  %1424 = vset.pattern.permute.xlu0 0
  %1425 = vperm.xlu0 %1424, %v111
  %v1426 = vpop.permute.xlu0 %1425
  %1429 = vset.pattern.permute.xlu0 0
  %1430 = vperm.xlu0 %1429, %v112
  %v1431 = vpop.permute.xlu0 %1430
  %1434 = vset.pattern.permute.xlu0 0
  %1435 = vperm.xlu0 %1434, %v113
  %v1436 = vpop.permute.xlu0 %1435
  %1439 = vset.pattern.permute.xlu0 0
  %1440 = vperm.xlu0 %1439, %v114
  %v1441 = vpop.permute.xlu0 %1440
  %1444 = vset.pattern.permute.xlu0 0
  %1445 = vperm.xlu0 %1444, %v115
  %v1446 = vpop.permute.xlu0 %1445
  %1449 = vset.pattern.permute.xlu0 0
  %1450 = vperm.xlu0 %1449, %v116
  %v1451 = vpop.permute.xlu0 %1450
  %1454 = vset.pattern.permute.xlu0 0
  %1455 = vperm.xlu0 %1454, %v117
  %v1456 = vpop.permute.xlu0 %1455
  %v1474 = vunpack.c.l.b16 %v1348
  %v1475 = vunpack.c.h.b16 %v1348
  %v1476 = vunpack.c.l.b16 %v1349
  %v1477 = vunpack.c.h.b16 %v1349
  %v1478 = vunpack.c.l.b16 %v1350
  %v1479 = vunpack.c.h.b16 %v1350
  %v1480 = vunpack.c.l.b16 %v1351
  %v1481 = vunpack.c.h.b16 %v1351
  %v1482 = vunpack.c.l.b16 %v1352
  %v1483 = vunpack.c.h.b16 %v1352
  %v1484 = vunpack.c.l.b16 %v1353
  %v1485 = vunpack.c.h.b16 %v1353
  %v1486 = vunpack.c.l.b16 %v1354
  %v1487 = vunpack.c.h.b16 %v1354
  %v1488 = vunpack.c.l.b16 %v1355
  %v1489 = vunpack.c.h.b16 %v1355
  %v1490 = vunpack.c.l.b16 %v1356
  %v1491 = vunpack.c.h.b16 %v1356
  %v1492 = vunpack.c.l.b16 %v1357
  %v1493 = vunpack.c.h.b16 %v1357
  %v1494 = vunpack.c.l.b16 %v1358
  %v1495 = vunpack.c.h.b16 %v1358
  %v1496 = vunpack.c.l.b16 %v1359
  %v1497 = vunpack.c.h.b16 %v1359
  %v1498 = vunpack.c.l.b16 %v1360
  %v1499 = vunpack.c.h.b16 %v1360
  %v1500 = vunpack.c.l.b16 %v1361
  %v1501 = vunpack.c.h.b16 %v1361
  %v1502 = vunpack.c.l.b16 %v1362
  %v1503 = vunpack.c.h.b16 %v1362
  %v1504 = vunpack.c.l.b16 %v1363
  %v1505 = vunpack.c.h.b16 %v1363
  %v1506 = vpack.c.b16 %v1476, %v1474
  %v1507 = vpack.c.b16 %v1477, %v1475
  %v1508 = vpack.c.b16 %v1480, %v1478
  %v1509 = vpack.c.b16 %v1481, %v1479
  %v1510 = vpack.c.b16 %v1484, %v1482
  %v1511 = vpack.c.b16 %v1485, %v1483
  %v1512 = vpack.c.b16 %v1488, %v1486
  %v1513 = vpack.c.b16 %v1489, %v1487
  %v1514 = vpack.c.b16 %v1492, %v1490
  %v1515 = vpack.c.b16 %v1493, %v1491
  %v1516 = vpack.c.b16 %v1496, %v1494
  %v1517 = vpack.c.b16 %v1497, %v1495
  %v1518 = vpack.c.b16 %v1500, %v1498
  %v1519 = vpack.c.b16 %v1501, %v1499
  %v1520 = vpack.c.b16 %v1504, %v1502
  %v1521 = vpack.c.b16 %v1505, %v1503
  %vm1530 = vcmask 719872
  %v1532 = vsel %vm1530, %v1507, 0
  %v1535 = vsel %vm1530, %v1509, 0
  %v1538 = vsel %vm1530, %v1511, 0
  %v1541 = vsel %vm1530, %v1513, 0
  %v1544 = vsel %vm1530, %v1515, 0
  %v1547 = vsel %vm1530, %v1517, 0
  %v1550 = vsel %vm1530, %v1519, 0
  %v1553 = vsel %vm1530, %v1521, 0
  %v1556 = vsel %vm241, %v1377, 0
  %1558 = vmatprep.subr.bf16.mxu0 0
  %1559 = vmatpush1.bf16.msra.mxu0 %v1371
  %1560 = vmatprep.subr.bf16.mxu0 0
  %1561 = vmatpush1.bf16.msra.mxu0 %v1370
  %1562 = vmatprep.subr.bf16.mxu0 0
  %1563 = vmatpush1.bf16.msra.mxu0 %v1369
  %1564 = vmatprep.subr.bf16.mxu0 0
  %1565 = vmatpush1.bf16.msra.mxu0 %v1368
  %1566 = vmatprep.subr.bf16.mxu0 0
  %1567 = vmatpush1.bf16.msra.mxu0 %v1367
  %1568 = vmatprep.subr.bf16.mxu0 0
  %1569 = vmatpush1.bf16.msra.mxu0 %v1366
  %1570 = vmatprep.subr.bf16.mxu0 0
  %1571 = vmatpush1.bf16.msra.mxu0 %v1365
  %1572 = vmatprep.subr.bf16.mxu0 0
  %1573 = vmatpush1.bf16.msra.mxu0 %v1364
  %1574 = vmatprep.subr.bf16.mxu0 0
  %1575 = vmatpush2.bf16.msra.mxu0 0
  %1576 = vmatprep.subr.bf16.mxu0 0
  %1577 = vmatpush2.bf16.msra.mxu0 0
  %1578 = vmatprep.subr.bf16.mxu0 0
  %1579 = vmatpush2.bf16.msra.mxu0 %v1556
  %1580 = vmatprep.subr.bf16.mxu0 0
  %1581 = vmatpush2.bf16.msra.mxu0 %v1376
  %1582 = vmatprep.subr.bf16.mxu0 0
  %1583 = vmatpush2.bf16.msra.mxu0 %v1375
  %1584 = vmatprep.subr.bf16.mxu0 0
  %1585 = vmatpush2.bf16.msra.mxu0 %v1374
  %1586 = vmatprep.subr.bf16.mxu0 0
  %1587 = vmatpush2.bf16.msra.mxu0 %v1373
  %1588 = vmatprep.subr.bf16.mxu0 0
  %1589 = vmatpush2.bf16.msra.mxu0 %v1372
  %1590 = vmatprep.mubr.bf16.mxu0 %v1532
  %1591 = vmatmul.mubr.bf16.gmra.mxu0 %v1506
  %v1592 = vpop.f32.mrf.mxu0
  %v1593 = vadd.f32 %v1381, %v1592
  %v1594 = vpop.f32.mrf.mxu0
  %v1595 = vpop.f32.mrf.mxu0
  %v1596 = vadd.f32 %v1386, %v1595
  %v1597 = vpop.f32.mrf.mxu0
  %1598 = vmatprep.mubr.bf16.mxu0 %v1535
  %1599 = vmatmul.mubr.bf16.gmra.mxu0 %v1508
  %v1600 = vpop.f32.mrf.mxu0
  %v1601 = vadd.f32 %v1391, %v1600
  %v1602 = vpop.f32.mrf.mxu0
  %v1603 = vpop.f32.mrf.mxu0
  %v1604 = vadd.f32 %v1396, %v1603
  %v1605 = vpop.f32.mrf.mxu0
  %1606 = vmatprep.mubr.bf16.mxu0 %v1538
  %1607 = vmatmul.mubr.bf16.gmra.mxu0 %v1510
  %v1608 = vpop.f32.mrf.mxu0
  %v1609 = vadd.f32 %v1401, %v1608
  %v1610 = vpop.f32.mrf.mxu0
  %v1611 = vpop.f32.mrf.mxu0
  %v1612 = vadd.f32 %v1406, %v1611
  %v1613 = vpop.f32.mrf.mxu0
  %1614 = vmatprep.mubr.bf16.mxu0 %v1541
  %1615 = vmatmul.mubr.bf16.gmra.mxu0 %v1512
  %v1616 = vpop.f32.mrf.mxu0
  %v1617 = vadd.f32 %v1411, %v1616
  %v1618 = vpop.f32.mrf.mxu0
  %v1619 = vpop.f32.mrf.mxu0
  %v1620 = vadd.f32 %v1416, %v1619
  %v1621 = vpop.f32.mrf.mxu0
  %1622 = vmatprep.mubr.bf16.mxu0 %v1544
  %1623 = vmatmul.mubr.bf16.gmra.mxu0 %v1514
  %v1624 = vpop.f32.mrf.mxu0
  %v1625 = vadd.f32 %v1421, %v1624
  %v1626 = vpop.f32.mrf.mxu0
  %v1627 = vpop.f32.mrf.mxu0
  %v1628 = vadd.f32 %v1426, %v1627
  %v1629 = vpop.f32.mrf.mxu0
  %1630 = vmatprep.mubr.bf16.mxu0 %v1547
  %1631 = vmatmul.mubr.bf16.gmra.mxu0 %v1516
  %v1632 = vpop.f32.mrf.mxu0
  %v1633 = vadd.f32 %v1431, %v1632
  %v1634 = vpop.f32.mrf.mxu0
  %v1635 = vpop.f32.mrf.mxu0
  %v1636 = vadd.f32 %v1436, %v1635
  %v1637 = vpop.f32.mrf.mxu0
  %1638 = vmatprep.mubr.bf16.mxu0 %v1550
  %1639 = vmatmul.mubr.bf16.gmra.mxu0 %v1518
  %v1640 = vpop.f32.mrf.mxu0
  %v1641 = vadd.f32 %v1441, %v1640
  %v1642 = vpop.f32.mrf.mxu0
  %v1643 = vpop.f32.mrf.mxu0
  %v1644 = vadd.f32 %v1446, %v1643
  %v1645 = vpop.f32.mrf.mxu0
  %1646 = vmatprep.mubr.bf16.mxu0 %v1553
  %1647 = vmatmul.mubr.bf16.gmra.mxu0 %v1520
  %v1648 = vpop.f32.mrf.mxu0
  %v1649 = vadd.f32 %v1451, %v1648
  %v1650 = vpop.f32.mrf.mxu0
  %v1651 = vpop.f32.mrf.mxu0
  %v1652 = vadd.f32 %v1456, %v1651
  %v1653 = vpop.f32.mrf.mxu0
  %1654 = vdwg.mxu0
  %v1655 = vmax.f32 %v1593, 0.0
  %v1656 = vmax.f32 %v1596, 0.0
  %v1657 = vmax.f32 %v1601, 0.0
  %v1658 = vmax.f32 %v1604, 0.0
  %v1659 = vmax.f32 %v1609, 0.0
  %v1660 = vmax.f32 %v1612, 0.0
  %v1661 = vmax.f32 %v1617, 0.0
  %v1662 = vmax.f32 %v1620, 0.0
  %v1663 = vmax.f32 %v1625, 0.0
  %v1664 = vmax.f32 %v1628, 0.0
  %v1665 = vmax.f32 %v1633, 0.0
  %v1666 = vmax.f32 %v1636, 0.0
  %v1667 = vmax.f32 %v1641, 0.0
  %v1668 = vmax.f32 %v1644, 0.0
  %v1669 = vmax.f32 %v1649, 0.0
  %v1670 = vmax.f32 %v1652, 0.0
  %v1671 = vld [vmem:[%s8] sm:$0xff]
  %v1672 = vld [vmem:[%s8 + $0x8] sm:$0xff]
  %v1673 = vld [vmem:[%s8 + $0x10] sm:$0xff]
  %v1674 = vld [vmem:[%s8 + $0x18] sm:$0xff]
  %v1675 = vld [vmem:[%s8 + $0x20] sm:$0xff]
  %v1676 = vld [vmem:[%s8 + $0x28] sm:$0xff]
  %v1677 = vld [vmem:[%s8 + $0x30] sm:$0xff]
  %v1678 = vld [vmem:[%s8 + $0x38] sm:$0xff]
  %v1679 = vld [vmem:[%s8 + $0x40] sm:$0xff]
  %v1680 = vld [vmem:[%s8 + $0x48] sm:$0xff]
  %v1681 = vpack.c.bf16 %v1656, %v1655
  %v1682 = vpack.c.bf16 %v1658, %v1657
  %v1683 = vpack.c.bf16 %v1660, %v1659
  %v1684 = vpack.c.bf16 %v1662, %v1661
  %v1685 = vpack.c.bf16 %v1664, %v1663
  %v1686 = vpack.c.bf16 %v1666, %v1665
  %v1687 = vpack.c.bf16 %v1668, %v1667
  %v1688 = vpack.c.bf16 %v1670, %v1669
  %v1699 = vunpack.c.l.b16 %v1671
  %v1700 = vunpack.c.l.b16 %v1672
  %v1701 = vunpack.c.l.b16 %v1673
  %v1702 = vunpack.c.l.b16 %v1674
  %v1703 = vunpack.c.l.b16 %v1675
  %v1704 = vunpack.c.l.b16 %v1676
  %v1705 = vunpack.c.l.b16 %v1677
  %v1706 = vunpack.c.l.b16 %v1678
  %v1707 = vunpack.c.l.b16 %v1679
  %v1708 = vunpack.c.l.b16 %v1680
  %v1709 = vpack.c.b16 %v1700, %v1699
  %v1710 = vpack.c.b16 %v1702, %v1701
  %v1711 = vpack.c.b16 %v1704, %v1703
  %v1712 = vpack.c.b16 %v1706, %v1705
  %v1713 = vpack.c.b16 %v1708, %v1707
  %1719 = vmatprep.subr.bf16.mxu0 0
  %1720 = vmatpush1.bf16.msra.mxu0 %v1688
  %1721 = vmatprep.subr.bf16.mxu0 0
  %1722 = vmatpush1.bf16.msra.mxu0 %v1687
  %1723 = vmatprep.subr.bf16.mxu0 0
  %1724 = vmatpush1.bf16.msra.mxu0 %v1686
  %1725 = vmatprep.subr.bf16.mxu0 0
  %1726 = vmatpush1.bf16.msra.mxu0 %v1685
  %1727 = vmatprep.subr.bf16.mxu0 0
  %1728 = vmatpush1.bf16.msra.mxu0 %v1684
  %1729 = vmatprep.subr.bf16.mxu0 0
  %1730 = vmatpush1.bf16.msra.mxu0 %v1683
  %1731 = vmatprep.subr.bf16.mxu0 0
  %1732 = vmatpush1.bf16.msra.mxu0 %v1682
  %1733 = vmatprep.subr.bf16.mxu0 0
  %1734 = vmatpush1.bf16.msra.mxu0 %v1681
  %1735 = vmatprep.subr.bf16.mxu0 0
  %1736 = vmatpush2.bf16.msra.mxu0 0
  %1737 = vmatprep.subr.bf16.mxu0 0
  %1738 = vmatpush2.bf16.msra.mxu0 0
  %1739 = vmatprep.subr.bf16.mxu0 0
  %1740 = vmatpush2.bf16.msra.mxu0 0
  %1741 = vmatprep.subr.bf16.mxu0 0
  %1742 = vmatpush2.bf16.msra.mxu0 0
  %1743 = vmatprep.subr.bf16.mxu0 0
  %1744 = vmatpush2.bf16.msra.mxu0 0
  %1745 = vmatprep.subr.bf16.mxu0 0
  %1746 = vmatpush2.bf16.msra.mxu0 0
  %1747 = vmatprep.subr.bf16.mxu0 0
  %1748 = vmatpush2.bf16.msra.mxu0 0
  %1749 = vmatprep.subr.bf16.mxu0 0
  %1750 = vmatpush2.bf16.msra.mxu0 0
  %1751 = vmatprep.mubr.bf16.mxu0 0
  %1752 = vmatmul.mubr.bf16.gmra.mxu0 %v1709
  %v1753 = vpop.f32.mrf.mxu0
  %v1754 = vadd.f32 0.0, %v1753
  %v1755 = vpop.f32.mrf.mxu0
  %v1756 = vpop.f32.mrf.mxu0
  %v1757 = vadd.f32 0.0, %v1756
  %v1758 = vpop.f32.mrf.mxu0
  %1759 = vmatprep.mubr.bf16.mxu0 0
  %1760 = vmatmul.mubr.bf16.gmra.mxu0 %v1710
  %v1761 = vpop.f32.mrf.mxu0
  %v1762 = vadd.f32 0.0, %v1761
  %v1763 = vpop.f32.mrf.mxu0
  %v1764 = vpop.f32.mrf.mxu0
  %v1765 = vadd.f32 0.0, %v1764
  %v1766 = vpop.f32.mrf.mxu0
  %1767 = vmatprep.mubr.bf16.mxu0 0
  %1768 = vmatmul.mubr.bf16.gmra.mxu0 %v1711
  %v1769 = vpop.f32.mrf.mxu0
  %v1770 = vadd.f32 0.0, %v1769
  %v1771 = vpop.f32.mrf.mxu0
  %v1772 = vpop.f32.mrf.mxu0
  %v1773 = vadd.f32 0.0, %v1772
  %v1774 = vpop.f32.mrf.mxu0
  %1775 = vmatprep.mubr.bf16.mxu0 0
  %1776 = vmatmul.mubr.bf16.gmra.mxu0 %v1712
  %v1777 = vpop.f32.mrf.mxu0
  %v1778 = vadd.f32 0.0, %v1777
  %v1779 = vpop.f32.mrf.mxu0
  %v1780 = vpop.f32.mrf.mxu0
  %v1781 = vadd.f32 0.0, %v1780
  %v1782 = vpop.f32.mrf.mxu0
  %1783 = vmatprep.mubr.bf16.mxu0 0
  %1784 = vmatmul.mubr.bf16.gmra.mxu0 %v1713
  %v1785 = vpop.f32.mrf.mxu0
  %v1786 = vadd.f32 0.0, %v1785
  %v1787 = vpop.f32.mrf.mxu0
  %v1788 = vpop.f32.mrf.mxu0
  %v1789 = vadd.f32 0.0, %v1788
  %v1790 = vpop.f32.mrf.mxu0
  %1791 = vdwg.mxu0
  %v1792 = vunpack.c.h.b16 %v1671
  %v1793 = vunpack.c.h.b16 %v1672
  %v1794 = vunpack.c.h.b16 %v1673
  %v1795 = vunpack.c.h.b16 %v1674
  %v1796 = vunpack.c.h.b16 %v1675
  %v1797 = vunpack.c.h.b16 %v1676
  %v1798 = vunpack.c.h.b16 %v1677
  %v1799 = vunpack.c.h.b16 %v1678
  %v1800 = vunpack.c.h.b16 %v1679
  %v1801 = vunpack.c.h.b16 %v1680
  %v1802 = vpack.c.b16 %v1793, %v1792
  %v1803 = vpack.c.b16 %v1795, %v1794
  %v1804 = vpack.c.b16 %v1797, %v1796
  %v1805 = vpack.c.b16 %v1799, %v1798
  %v1806 = vpack.c.b16 %v1801, %v1800
  %1812 = vmatprep.subr.bf16.mxu0 0
  %1813 = vmatpush1.bf16.msra.mxu0 %v1688
  %1814 = vmatprep.subr.bf16.mxu0 0
  %1815 = vmatpush1.bf16.msra.mxu0 %v1687
  %1816 = vmatprep.subr.bf16.mxu0 0
  %1817 = vmatpush1.bf16.msra.mxu0 %v1686
  %1818 = vmatprep.subr.bf16.mxu0 0
  %1819 = vmatpush1.bf16.msra.mxu0 %v1685
  %1820 = vmatprep.subr.bf16.mxu0 0
  %1821 = vmatpush1.bf16.msra.mxu0 %v1684
  %1822 = vmatprep.subr.bf16.mxu0 0
  %1823 = vmatpush1.bf16.msra.mxu0 %v1683
  %1824 = vmatprep.subr.bf16.mxu0 0
  %1825 = vmatpush1.bf16.msra.mxu0 %v1682
  %1826 = vmatprep.subr.bf16.mxu0 0
  %1827 = vmatpush1.bf16.msra.mxu0 %v1681
  %1828 = vmatprep.subr.bf16.mxu0 0
  %1829 = vmatpush2.bf16.msra.mxu0 0
  %1830 = vmatprep.subr.bf16.mxu0 0
  %1831 = vmatpush2.bf16.msra.mxu0 0
  %1832 = vmatprep.subr.bf16.mxu0 0
  %1833 = vmatpush2.bf16.msra.mxu0 0
  %1834 = vmatprep.subr.bf16.mxu0 0
  %1835 = vmatpush2.bf16.msra.mxu0 0
  %1836 = vmatprep.subr.bf16.mxu0 0
  %1837 = vmatpush2.bf16.msra.mxu0 0
  %1838 = vmatprep.subr.bf16.mxu0 0
  %1839 = vmatpush2.bf16.msra.mxu0 0
  %1840 = vmatprep.subr.bf16.mxu0 0
  %1841 = vmatpush2.bf16.msra.mxu0 0
  %1842 = vmatprep.subr.bf16.mxu0 0
  %1843 = vmatpush2.bf16.msra.mxu0 0
  %1844 = vmatprep.mubr.bf16.mxu0 0
  %1845 = vmatmul.mubr.bf16.gmra.mxu0 %v1802
  %v1846 = vpop.f32.mrf.mxu0
  %v1847 = vadd.f32 0.0, %v1846
  %v1848 = vpop.f32.mrf.mxu0
  %v1849 = vpop.f32.mrf.mxu0
  %v1850 = vadd.f32 0.0, %v1849
  %v1851 = vpop.f32.mrf.mxu0
  %1852 = vmatprep.mubr.bf16.mxu0 0
  %1853 = vmatmul.mubr.bf16.gmra.mxu0 %v1803
  %v1854 = vpop.f32.mrf.mxu0
  %v1855 = vadd.f32 0.0, %v1854
  %v1856 = vpop.f32.mrf.mxu0
  %v1857 = vpop.f32.mrf.mxu0
  %v1858 = vadd.f32 0.0, %v1857
  %v1859 = vpop.f32.mrf.mxu0
  %1860 = vmatprep.mubr.bf16.mxu0 0
  %1861 = vmatmul.mubr.bf16.gmra.mxu0 %v1804
  %v1862 = vpop.f32.mrf.mxu0
  %v1863 = vadd.f32 0.0, %v1862
  %v1864 = vpop.f32.mrf.mxu0
  %v1865 = vpop.f32.mrf.mxu0
  %v1866 = vadd.f32 0.0, %v1865
  %v1867 = vpop.f32.mrf.mxu0
  %1868 = vmatprep.mubr.bf16.mxu0 0
  %1869 = vmatmul.mubr.bf16.gmra.mxu0 %v1805
  %v1870 = vpop.f32.mrf.mxu0
  %v1871 = vadd.f32 0.0, %v1870
  %v1872 = vpop.f32.mrf.mxu0
  %v1873 = vpop.f32.mrf.mxu0
  %v1874 = vadd.f32 0.0, %v1873
  %v1875 = vpop.f32.mrf.mxu0
  %1876 = vmatprep.mubr.bf16.mxu0 0
  %1877 = vmatmul.mubr.bf16.gmra.mxu0 %v1806
  %v1878 = vpop.f32.mrf.mxu0
  %v1879 = vadd.f32 0.0, %v1878
  %v1880 = vpop.f32.mrf.mxu0
  %v1881 = vpop.f32.mrf.mxu0
  %v1882 = vadd.f32 0.0, %v1881
  %v1883 = vpop.f32.mrf.mxu0
  %1884 = vdwg.mxu0
  %v1885 = vmax.f32 %v1754, %v1847
  %v1886 = vmax.f32 %v1757, %v1850
  %v1887 = vmax.f32 %v1762, %v1855
  %v1888 = vmax.f32 %v1765, %v1858
  %v1889 = vmax.f32 %v1770, %v1863
  %v1890 = vmax.f32 %v1773, %v1866
  %v1891 = vmax.f32 %v1778, %v1871
  %v1892 = vmax.f32 %v1781, %v1874
  %v1893 = vmax.f32 %v1786, %v1879
  %v1894 = vmax.f32 %v1789, %v1882
  %v1895 = vld [vmem:[%s12] sm:$0xf]
  %v1896 = vld [vmem:[%s12 + $0x4] sm:$0xf]
  %v1897 = vld [vmem:[%s12 + $0x8] sm:$0xf]
  %v1898 = vld [vmem:[%s12 + $0xc] sm:$0xf]
  %v1899 = vld [vmem:[%s12 + $0x10] sm:$0xf]
  %v1900 = vld [vmem:[%s12 + $0x14] sm:$0xf]
  %v1901 = vld [vmem:[%s12 + $0x18] sm:$0xf]
  %v1902 = vld [vmem:[%s12 + $0x1c] sm:$0xf]
  %v1903 = vld [vmem:[%s12 + $0x20] sm:$0xf]
  %v1904 = vld [vmem:[%s12 + $0x24] sm:$0xf]
  %v1905 = vld [vmem:[%s12 + $0x28] sm:$0xf]
  %v1906 = vld [vmem:[%s12 + $0x2c] sm:$0xf]
  %v1907 = vld [vmem:[%s12 + $0x30] sm:$0xf]
  %v1908 = vld [vmem:[%s12 + $0x34] sm:$0x1]
  %v1909 = vpack.c.bf16 %v1886, %v1885
  %v1910 = vpack.c.bf16 %v1888, %v1887
  %v1911 = vpack.c.bf16 %v1890, %v1889
  %v1912 = vpack.c.bf16 %v1892, %v1891
  %v1913 = vpack.c.bf16 %v1894, %v1893
  %v1928 = vunpack.c.l.b16 %v1895
  %v1929 = vunpack.c.l.b16 %v1896
  %v1930 = vunpack.c.l.b16 %v1897
  %v1931 = vunpack.c.l.b16 %v1898
  %v1932 = vunpack.c.l.b16 %v1899
  %v1933 = vunpack.c.l.b16 %v1900
  %v1934 = vunpack.c.l.b16 %v1901
  %v1935 = vunpack.c.l.b16 %v1902
  %v1936 = vunpack.c.l.b16 %v1903
  %v1937 = vunpack.c.l.b16 %v1904
  %v1938 = vunpack.c.l.b16 %v1905
  %v1939 = vunpack.c.l.b16 %v1906
  %v1940 = vunpack.c.l.b16 %v1907
  %v1941 = vunpack.c.l.b16 %v1908
  %v1942 = vpack.c.b16 %v1929, %v1928
  %v1943 = vpack.c.b16 %v1931, %v1930
  %v1944 = vpack.c.b16 %v1933, %v1932
  %v1945 = vpack.c.b16 %v1935, %v1934
  %v1946 = vpack.c.b16 %v1937, %v1936
  %v1947 = vpack.c.b16 %v1939, %v1938
  %v1948 = vpack.c.b16 %v1941, %v1940
  %vm1955 = vcmask 867328
  %v1957 = vsel %vm1955, %v1909, 0
  %v1960 = vsel %vm1955, %v1910, 0
  %v1963 = vsel %vm1955, %v1911, 0
  %v1966 = vsel %vm1955, %v1912, 0
  %v1969 = vsel %vm1955, %v1913, 0
  %v1972 = vsel %vm1008, %v1948, 0
  %1974 = vmatprep.subr.bf16.mxu0 0
  %1975 = vmatpush1.bf16.msra.mxu0 0
  %1976 = vmatprep.subr.bf16.mxu0 0
  %1977 = vmatpush1.bf16.msra.mxu0 %v1972
  %1978 = vmatprep.subr.bf16.mxu0 0
  %1979 = vmatpush1.bf16.msra.mxu0 %v1947
  %1980 = vmatprep.subr.bf16.mxu0 0
  %1981 = vmatpush1.bf16.msra.mxu0 %v1946
  %1982 = vmatprep.subr.bf16.mxu0 0
  %1983 = vmatpush1.bf16.msra.mxu0 %v1945
  %1984 = vmatprep.subr.bf16.mxu0 0
  %1985 = vmatpush1.bf16.msra.mxu0 %v1944
  %1986 = vmatprep.subr.bf16.mxu0 0
  %1987 = vmatpush1.bf16.msra.mxu0 %v1943
  %1988 = vmatprep.subr.bf16.mxu0 0
  %1989 = vmatpush1.bf16.msra.mxu0 %v1942
  %1990 = vmatprep.subr.bf16.mxu0 0
  %1991 = vmatpush2.bf16.msra.mxu0 0
  %1992 = vmatprep.subr.bf16.mxu0 0
  %1993 = vmatpush2.bf16.msra.mxu0 0
  %1994 = vmatprep.subr.bf16.mxu0 0
  %1995 = vmatpush2.bf16.msra.mxu0 0
  %1996 = vmatprep.subr.bf16.mxu0 0
  %1997 = vmatpush2.bf16.msra.mxu0 0
  %1998 = vmatprep.subr.bf16.mxu0 0
  %1999 = vmatpush2.bf16.msra.mxu0 0
  %2000 = vmatprep.subr.bf16.mxu0 0
  %2001 = vmatpush2.bf16.msra.mxu0 0
  %2002 = vmatprep.subr.bf16.mxu0 0
  %2003 = vmatpush2.bf16.msra.mxu0 0
  %2004 = vmatprep.subr.bf16.mxu0 0
  %2005 = vmatpush2.bf16.msra.mxu0 0
  %2006 = vmatprep.mubr.bf16.mxu0 0
  %2007 = vmatmul.mubr.bf16.gmra.mxu0 %v1957
  %v2008 = vpop.f32.mrf.mxu0
  %v2009 = vadd.f32 0.0, %v2008
  %v2010 = vpop.f32.mrf.mxu0
  %v2011 = vpop.f32.mrf.mxu0
  %v2012 = vadd.f32 0.0, %v2011
  %v2013 = vpop.f32.mrf.mxu0
  %2014 = vmatprep.mubr.bf16.mxu0 0
  %2015 = vmatmul.mubr.bf16.gmra.mxu0 %v1960
  %v2016 = vpop.f32.mrf.mxu0
  %v2017 = vadd.f32 0.0, %v2016
  %v2018 = vpop.f32.mrf.mxu0
  %v2019 = vpop.f32.mrf.mxu0
  %v2020 = vadd.f32 0.0, %v2019
  %v2021 = vpop.f32.mrf.mxu0
  %2022 = vmatprep.mubr.bf16.mxu0 0
  %2023 = vmatmul.mubr.bf16.gmra.mxu0 %v1963
  %v2024 = vpop.f32.mrf.mxu0
  %v2025 = vadd.f32 0.0, %v2024
  %v2026 = vpop.f32.mrf.mxu0
  %v2027 = vpop.f32.mrf.mxu0
  %v2028 = vadd.f32 0.0, %v2027
  %v2029 = vpop.f32.mrf.mxu0
  %2030 = vmatprep.mubr.bf16.mxu0 0
  %2031 = vmatmul.mubr.bf16.gmra.mxu0 %v1966
  %v2032 = vpop.f32.mrf.mxu0
  %v2033 = vadd.f32 0.0, %v2032
  %v2034 = vpop.f32.mrf.mxu0
  %v2035 = vpop.f32.mrf.mxu0
  %v2036 = vadd.f32 0.0, %v2035
  %v2037 = vpop.f32.mrf.mxu0
  %2038 = vmatprep.mubr.bf16.mxu0 0
  %2039 = vmatmul.mubr.bf16.gmra.mxu0 %v1969
  %v2040 = vpop.f32.mrf.mxu0
  %v2041 = vadd.f32 0.0, %v2040
  %v2042 = vpop.f32.mrf.mxu0
  %v2043 = vpop.f32.mrf.mxu0
  %v2044 = vadd.f32 0.0, %v2043
  %v2045 = vpop.f32.mrf.mxu0
  %2046 = vdwg.mxu0
  %2047 = vrot.lane.b32.xlu0 %v1942, 68
  %v2048 = vpop.permute.xlu0 %2047
  %2049 = vrot.lane.b32.xlu0 %v1943, 68
  %v2050 = vpop.permute.xlu0 %2049
  %2051 = vrot.lane.b32.xlu0 %v1944, 68
  %v2052 = vpop.permute.xlu0 %2051
  %2053 = vrot.lane.b32.xlu0 %v1945, 68
  %v2054 = vpop.permute.xlu0 %2053
  %2055 = vrot.lane.b32.xlu0 %v1946, 68
  %v2056 = vpop.permute.xlu0 %2055
  %2057 = vrot.lane.b32.xlu0 %v1947, 68
  %v2058 = vpop.permute.xlu0 %2057
  %2059 = vrot.lane.b32.xlu0 %v1948, 68
  %v2060 = vpop.permute.xlu0 %2059
  %v2068 = vsel %vm1008, %v2060, 0
  %2070 = vmatprep.subr.bf16.mxu0 0
  %2071 = vmatpush1.bf16.msra.mxu0 0
  %2072 = vmatprep.subr.bf16.mxu0 0
  %2073 = vmatpush1.bf16.msra.mxu0 %v2068
  %2074 = vmatprep.subr.bf16.mxu0 0
  %2075 = vmatpush1.bf16.msra.mxu0 %v2058
  %2076 = vmatprep.subr.bf16.mxu0 0
  %2077 = vmatpush1.bf16.msra.mxu0 %v2056
  %2078 = vmatprep.subr.bf16.mxu0 0
  %2079 = vmatpush1.bf16.msra.mxu0 %v2054
  %2080 = vmatprep.subr.bf16.mxu0 0
  %2081 = vmatpush1.bf16.msra.mxu0 %v2052
  %2082 = vmatprep.subr.bf16.mxu0 0
  %2083 = vmatpush1.bf16.msra.mxu0 %v2050
  %2084 = vmatprep.subr.bf16.mxu0 0
  %2085 = vmatpush1.bf16.msra.mxu0 %v2048
  %2086 = vmatprep.subr.bf16.mxu0 0
  %2087 = vmatpush2.bf16.msra.mxu0 0
  %2088 = vmatprep.subr.bf16.mxu0 0
  %2089 = vmatpush2.bf16.msra.mxu0 0
  %2090 = vmatprep.subr.bf16.mxu0 0
  %2091 = vmatpush2.bf16.msra.mxu0 0
  %2092 = vmatprep.subr.bf16.mxu0 0
  %2093 = vmatpush2.bf16.msra.mxu0 0
  %2094 = vmatprep.subr.bf16.mxu0 0
  %2095 = vmatpush2.bf16.msra.mxu0 0
  %2096 = vmatprep.subr.bf16.mxu0 0
  %2097 = vmatpush2.bf16.msra.mxu0 0
  %2098 = vmatprep.subr.bf16.mxu0 0
  %2099 = vmatpush2.bf16.msra.mxu0 0
  %2100 = vmatprep.subr.bf16.mxu0 0
  %2101 = vmatpush2.bf16.msra.mxu0 0
  %2102 = vmatprep.mubr.bf16.mxu0 0
  %2103 = vmatmul.mubr.bf16.gmra.mxu0 %v1957
  %v2104 = vpop.f32.mrf.mxu0
  %v2105 = vadd.f32 0.0, %v2104
  %v2106 = vpop.f32.mrf.mxu0
  %v2107 = vpop.f32.mrf.mxu0
  %v2108 = vadd.f32 0.0, %v2107
  %v2109 = vpop.f32.mrf.mxu0
  %2110 = vmatprep.mubr.bf16.mxu0 0
  %2111 = vmatmul.mubr.bf16.gmra.mxu0 %v1960
  %v2112 = vpop.f32.mrf.mxu0
  %v2113 = vadd.f32 0.0, %v2112
  %v2114 = vpop.f32.mrf.mxu0
  %v2115 = vpop.f32.mrf.mxu0
  %v2116 = vadd.f32 0.0, %v2115
  %v2117 = vpop.f32.mrf.mxu0
  %2118 = vmatprep.mubr.bf16.mxu0 0
  %2119 = vmatmul.mubr.bf16.gmra.mxu0 %v1963
  %v2120 = vpop.f32.mrf.mxu0
  %v2121 = vadd.f32 0.0, %v2120
  %v2122 = vpop.f32.mrf.mxu0
  %v2123 = vpop.f32.mrf.mxu0
  %v2124 = vadd.f32 0.0, %v2123
  %v2125 = vpop.f32.mrf.mxu0
  %2126 = vmatprep.mubr.bf16.mxu0 0
  %2127 = vmatmul.mubr.bf16.gmra.mxu0 %v1966
  %v2128 = vpop.f32.mrf.mxu0
  %v2129 = vadd.f32 0.0, %v2128
  %v2130 = vpop.f32.mrf.mxu0
  %v2131 = vpop.f32.mrf.mxu0
  %v2132 = vadd.f32 0.0, %v2131
  %v2133 = vpop.f32.mrf.mxu0
  %2134 = vmatprep.mubr.bf16.mxu0 0
  %2135 = vmatmul.mubr.bf16.gmra.mxu0 %v1969
  %v2136 = vpop.f32.mrf.mxu0
  %v2137 = vadd.f32 0.0, %v2136
  %v2138 = vpop.f32.mrf.mxu0
  %v2139 = vpop.f32.mrf.mxu0
  %v2140 = vadd.f32 0.0, %v2139
  %v2141 = vpop.f32.mrf.mxu0
  %2142 = vdwg.mxu0
  %v2143 = vmax.f32 %v2009, %v2105
  %v2144 = vmax.f32 %v2012, %v2108
  %v2145 = vmax.f32 %v2017, %v2113
  %v2146 = vmax.f32 %v2020, %v2116
  %v2147 = vmax.f32 %v2025, %v2121
  %v2148 = vmax.f32 %v2028, %v2124
  %v2149 = vmax.f32 %v2033, %v2129
  %v2150 = vmax.f32 %v2036, %v2132
  %v2151 = vmax.f32 %v2041, %v2137
  %v2152 = vmax.f32 %v2044, %v2140
  %2163 = vrot.lane.b32.xlu0 %v2143, 127
  %v2164 = vpop.permute.xlu0 %2163
  %2165 = vrot.lane.b32.xlu0 %v2144, 127
  %v2166 = vpop.permute.xlu0 %2165
  %2167 = vrot.lane.b32.xlu0 %v2145, 127
  %v2168 = vpop.permute.xlu0 %2167
  %2169 = vrot.lane.b32.xlu0 %v2146, 127
  %v2170 = vpop.permute.xlu0 %2169
  %2171 = vrot.lane.b32.xlu0 %v2147, 127
  %v2172 = vpop.permute.xlu0 %2171
  %2173 = vrot.lane.b32.xlu0 %v2148, 127
  %v2174 = vpop.permute.xlu0 %2173
  %2175 = vrot.lane.b32.xlu0 %v2149, 127
  %v2176 = vpop.permute.xlu0 %2175
  %2177 = vrot.lane.b32.xlu0 %v2150, 127
  %v2178 = vpop.permute.xlu0 %2177
  %2179 = vrot.lane.b32.xlu0 %v2151, 127
  %v2180 = vpop.permute.xlu0 %2179
  %2181 = vrot.lane.b32.xlu0 %v2152, 127
  %v2182 = vpop.permute.xlu0 %2181
  %2193 = vrot.lane.b32.xlu0 %v2143, 126
  %v2194 = vpop.permute.xlu0 %2193
  %2195 = vrot.lane.b32.xlu0 %v2144, 126
  %v2196 = vpop.permute.xlu0 %2195
  %2197 = vrot.lane.b32.xlu0 %v2145, 126
  %v2198 = vpop.permute.xlu0 %2197
  %2199 = vrot.lane.b32.xlu0 %v2146, 126
  %v2200 = vpop.permute.xlu0 %2199
  %2201 = vrot.lane.b32.xlu0 %v2147, 126
  %v2202 = vpop.permute.xlu0 %2201
  %2203 = vrot.lane.b32.xlu0 %v2148, 126
  %v2204 = vpop.permute.xlu0 %2203
  %2205 = vrot.lane.b32.xlu0 %v2149, 126
  %v2206 = vpop.permute.xlu0 %2205
  %2207 = vrot.lane.b32.xlu0 %v2150, 126
  %v2208 = vpop.permute.xlu0 %2207
  %2209 = vrot.lane.b32.xlu0 %v2151, 126
  %v2210 = vpop.permute.xlu0 %2209
  %2211 = vrot.lane.b32.xlu0 %v2152, 126
  %v2212 = vpop.permute.xlu0 %2211
  %v2223 = vld [vmem:[%s3] sm:$0xff]
  %v2224 = vld [vmem:[%s3 + $0x8] sm:$0xff]
  %v2225 = vld [vmem:[%s3 + $0x10] sm:$0xff]
  %v2226 = vld [vmem:[%s3 + $0x18] sm:$0xff]
  %v2227 = vld [vmem:[%s3 + $0x20] sm:$0xff]
  %v2228 = vld [vmem:[%s3 + $0x28] sm:$0xff]
  %v2229 = vld [vmem:[%s3 + $0x30] sm:$0xff]
  %v2230 = vld [vmem:[%s3 + $0x38] sm:$0xff]
  %v2231 = vld [vmem:[%s3 + $0x40] sm:$0xff]
  %v2232 = vld [vmem:[%s3 + $0x48] sm:$0xff]
  %v2233 = vld [vmem:[%s3 + $0x50] sm:$0xff]
  %v2234 = vld [vmem:[%s3 + $0x58] sm:$0xff]
  %v2235 = vld [vmem:[%s3 + $0x60] sm:$0xff]
  %v2236 = vld [vmem:[%s3 + $0x68] sm:$0xff]
  %v2237 = vld [vmem:[%s3 + $0x70] sm:$0xff]
  %v2238 = vld [vmem:[%s3 + $0x78] sm:$0xff]
  %v2239 = vpack.c.bf16 %v2144, %v2143
  %v2240 = vpack.c.bf16 %v2146, %v2145
  %v2241 = vpack.c.bf16 %v2148, %v2147
  %v2242 = vpack.c.bf16 %v2150, %v2149
  %v2243 = vpack.c.bf16 %v2152, %v2151
  %v2244 = vpack.c.bf16 %v2166, %v2164
  %v2245 = vpack.c.bf16 %v2170, %v2168
  %v2246 = vpack.c.bf16 %v2174, %v2172
  %v2247 = vpack.c.bf16 %v2178, %v2176
  %v2248 = vpack.c.bf16 %v2182, %v2180
  %v2249 = vpack.c.bf16 %v2196, %v2194
  %v2250 = vpack.c.bf16 %v2200, %v2198
  %v2251 = vpack.c.bf16 %v2204, %v2202
  %v2252 = vpack.c.bf16 %v2208, %v2206
  %v2253 = vpack.c.bf16 %v2212, %v2210
  %2255 = vset.pattern.permute.xlu0 0
  %2256 = vperm.xlu0 %2255, %v118
  %v2257 = vpop.permute.xlu0 %2256
  %2260 = vset.pattern.permute.xlu0 0
  %2261 = vperm.xlu0 %2260, %v119
  %v2262 = vpop.permute.xlu0 %2261
  %2265 = vset.pattern.permute.xlu0 0
  %2266 = vperm.xlu0 %2265, %v120
  %v2267 = vpop.permute.xlu0 %2266
  %2270 = vset.pattern.permute.xlu0 0
  %2271 = vperm.xlu0 %2270, %v121
  %v2272 = vpop.permute.xlu0 %2271
  %2275 = vset.pattern.permute.xlu0 0
  %2276 = vperm.xlu0 %2275, %v122
  %v2277 = vpop.permute.xlu0 %2276
  %2280 = vset.pattern.permute.xlu0 0
  %2281 = vperm.xlu0 %2280, %v123
  %v2282 = vpop.permute.xlu0 %2281
  %2285 = vset.pattern.permute.xlu0 0
  %2286 = vperm.xlu0 %2285, %v124
  %v2287 = vpop.permute.xlu0 %2286
  %2290 = vset.pattern.permute.xlu0 0
  %2291 = vperm.xlu0 %2290, %v125
  %v2292 = vpop.permute.xlu0 %2291
  %2295 = vset.pattern.permute.xlu0 0
  %2296 = vperm.xlu0 %2295, %v126
  %v2297 = vpop.permute.xlu0 %2296
  %2300 = vset.pattern.permute.xlu0 0
  %2301 = vperm.xlu0 %2300, %v127
  %v2302 = vpop.permute.xlu0 %2301
  %2305 = vset.pattern.permute.xlu0 0
  %2306 = vperm.xlu0 %2305, %v128
  %v2307 = vpop.permute.xlu0 %2306
  %2310 = vset.pattern.permute.xlu0 0
  %2311 = vperm.xlu0 %2310, %v129
  %v2312 = vpop.permute.xlu0 %2311
  %2315 = vset.pattern.permute.xlu0 0
  %2316 = vperm.xlu0 %2315, %v130
  %v2317 = vpop.permute.xlu0 %2316
  %2320 = vset.pattern.permute.xlu0 0
  %2321 = vperm.xlu0 %2320, %v131
  %v2322 = vpop.permute.xlu0 %2321
  %2325 = vset.pattern.permute.xlu0 0
  %2326 = vperm.xlu0 %2325, %v132
  %v2327 = vpop.permute.xlu0 %2326
  %2330 = vset.pattern.permute.xlu0 0
  %2331 = vperm.xlu0 %2330, %v133
  %v2332 = vpop.permute.xlu0 %2331
  %v2350 = vunpack.c.l.b16 %v2223
  %v2351 = vunpack.c.h.b16 %v2223
  %v2352 = vunpack.c.l.b16 %v2224
  %v2353 = vunpack.c.h.b16 %v2224
  %v2354 = vunpack.c.l.b16 %v2225
  %v2355 = vunpack.c.h.b16 %v2225
  %v2356 = vunpack.c.l.b16 %v2226
  %v2357 = vunpack.c.h.b16 %v2226
  %v2358 = vunpack.c.l.b16 %v2227
  %v2359 = vunpack.c.h.b16 %v2227
  %v2360 = vunpack.c.l.b16 %v2228
  %v2361 = vunpack.c.h.b16 %v2228
  %v2362 = vunpack.c.l.b16 %v2229
  %v2363 = vunpack.c.h.b16 %v2229
  %v2364 = vunpack.c.l.b16 %v2230
  %v2365 = vunpack.c.h.b16 %v2230
  %v2366 = vunpack.c.l.b16 %v2231
  %v2367 = vunpack.c.h.b16 %v2231
  %v2368 = vunpack.c.l.b16 %v2232
  %v2369 = vunpack.c.h.b16 %v2232
  %v2370 = vunpack.c.l.b16 %v2233
  %v2371 = vunpack.c.h.b16 %v2233
  %v2372 = vunpack.c.l.b16 %v2234
  %v2373 = vunpack.c.h.b16 %v2234
  %v2374 = vunpack.c.l.b16 %v2235
  %v2375 = vunpack.c.h.b16 %v2235
  %v2376 = vunpack.c.l.b16 %v2236
  %v2377 = vunpack.c.h.b16 %v2236
  %v2378 = vunpack.c.l.b16 %v2237
  %v2379 = vunpack.c.h.b16 %v2237
  %v2380 = vunpack.c.l.b16 %v2238
  %v2381 = vunpack.c.h.b16 %v2238
  %v2382 = vpack.c.b16 %v2352, %v2350
  %v2383 = vpack.c.b16 %v2353, %v2351
  %v2384 = vpack.c.b16 %v2356, %v2354
  %v2385 = vpack.c.b16 %v2357, %v2355
  %v2386 = vpack.c.b16 %v2360, %v2358
  %v2387 = vpack.c.b16 %v2361, %v2359
  %v2388 = vpack.c.b16 %v2364, %v2362
  %v2389 = vpack.c.b16 %v2365, %v2363
  %v2390 = vpack.c.b16 %v2368, %v2366
  %v2391 = vpack.c.b16 %v2369, %v2367
  %v2392 = vpack.c.b16 %v2372, %v2370
  %v2393 = vpack.c.b16 %v2373, %v2371
  %v2394 = vpack.c.b16 %v2376, %v2374
  %v2395 = vpack.c.b16 %v2377, %v2375
  %v2396 = vpack.c.b16 %v2380, %v2378
  %v2397 = vpack.c.b16 %v2381, %v2379
  %vm2406 = vcmask 916480
  %v2408 = vsel %vm2406, %v2383, 0
  %v2411 = vsel %vm2406, %v2385, 0
  %v2414 = vsel %vm2406, %v2387, 0
  %v2417 = vsel %vm2406, %v2389, 0
  %v2420 = vsel %vm2406, %v2391, 0
  %v2423 = vsel %vm2406, %v2393, 0
  %v2426 = vsel %vm2406, %v2395, 0
  %v2429 = vsel %vm2406, %v2397, 0
  %2431 = vmatprep.subr.bf16.mxu0 0
  %2432 = vmatpush1.bf16.msra.mxu0 %v2246
  %2433 = vmatprep.subr.bf16.mxu0 0
  %2434 = vmatpush1.bf16.msra.mxu0 %v2245
  %2435 = vmatprep.subr.bf16.mxu0 0
  %2436 = vmatpush1.bf16.msra.mxu0 %v2244
  %2437 = vmatprep.subr.bf16.mxu0 0
  %2438 = vmatpush1.bf16.msra.mxu0 %v2243
  %2439 = vmatprep.subr.bf16.mxu0 0
  %2440 = vmatpush1.bf16.msra.mxu0 %v2242
  %2441 = vmatprep.subr.bf16.mxu0 0
  %2442 = vmatpush1.bf16.msra.mxu0 %v2241
  %2443 = vmatprep.subr.bf16.mxu0 0
  %2444 = vmatpush1.bf16.msra.mxu0 %v2240
  %2445 = vmatprep.subr.bf16.mxu0 0
  %2446 = vmatpush1.bf16.msra.mxu0 %v2239
  %2447 = vmatprep.subr.bf16.mxu0 0
  %2448 = vmatpush2.bf16.msra.mxu0 0
  %2449 = vmatprep.subr.bf16.mxu0 0
  %2450 = vmatpush2.bf16.msra.mxu0 %v2253
  %2451 = vmatprep.subr.bf16.mxu0 0
  %2452 = vmatpush2.bf16.msra.mxu0 %v2252
  %2453 = vmatprep.subr.bf16.mxu0 0
  %2454 = vmatpush2.bf16.msra.mxu0 %v2251
  %2455 = vmatprep.subr.bf16.mxu0 0
  %2456 = vmatpush2.bf16.msra.mxu0 %v2250
  %2457 = vmatprep.subr.bf16.mxu0 0
  %2458 = vmatpush2.bf16.msra.mxu0 %v2249
  %2459 = vmatprep.subr.bf16.mxu0 0
  %2460 = vmatpush2.bf16.msra.mxu0 %v2248
  %2461 = vmatprep.subr.bf16.mxu0 0
  %2462 = vmatpush2.bf16.msra.mxu0 %v2247
  %2463 = vmatprep.mubr.bf16.mxu0 %v2408
  %2464 = vmatmul.mubr.bf16.gmra.mxu0 %v2382
  %v2465 = vpop.f32.mrf.mxu0
  %v2466 = vadd.f32 %v2257, %v2465
  %v2467 = vpop.f32.mrf.mxu0
  %v2468 = vpop.f32.mrf.mxu0
  %v2469 = vadd.f32 %v2262, %v2468
  %v2470 = vpop.f32.mrf.mxu0
  %2471 = vmatprep.mubr.bf16.mxu0 %v2411
  %2472 = vmatmul.mubr.bf16.gmra.mxu0 %v2384
  %v2473 = vpop.f32.mrf.mxu0
  %v2474 = vadd.f32 %v2267, %v2473
  %v2475 = vpop.f32.mrf.mxu0
  %v2476 = vpop.f32.mrf.mxu0
  %v2477 = vadd.f32 %v2272, %v2476
  %v2478 = vpop.f32.mrf.mxu0
  %2479 = vmatprep.mubr.bf16.mxu0 %v2414
  %2480 = vmatmul.mubr.bf16.gmra.mxu0 %v2386
  %v2481 = vpop.f32.mrf.mxu0
  %v2482 = vadd.f32 %v2277, %v2481
  %v2483 = vpop.f32.mrf.mxu0
  %v2484 = vpop.f32.mrf.mxu0
  %v2485 = vadd.f32 %v2282, %v2484
  %v2486 = vpop.f32.mrf.mxu0
  %2487 = vmatprep.mubr.bf16.mxu0 %v2417
  %2488 = vmatmul.mubr.bf16.gmra.mxu0 %v2388
  %v2489 = vpop.f32.mrf.mxu0
  %v2490 = vadd.f32 %v2287, %v2489
  %v2491 = vpop.f32.mrf.mxu0
  %v2492 = vpop.f32.mrf.mxu0
  %v2493 = vadd.f32 %v2292, %v2492
  %v2494 = vpop.f32.mrf.mxu0
  %2495 = vmatprep.mubr.bf16.mxu0 %v2420
  %2496 = vmatmul.mubr.bf16.gmra.mxu0 %v2390
  %v2497 = vpop.f32.mrf.mxu0
  %v2498 = vadd.f32 %v2297, %v2497
  %v2499 = vpop.f32.mrf.mxu0
  %v2500 = vpop.f32.mrf.mxu0
  %v2501 = vadd.f32 %v2302, %v2500
  %v2502 = vpop.f32.mrf.mxu0
  %2503 = vmatprep.mubr.bf16.mxu0 %v2423
  %2504 = vmatmul.mubr.bf16.gmra.mxu0 %v2392
  %v2505 = vpop.f32.mrf.mxu0
  %v2506 = vadd.f32 %v2307, %v2505
  %v2507 = vpop.f32.mrf.mxu0
  %v2508 = vpop.f32.mrf.mxu0
  %v2509 = vadd.f32 %v2312, %v2508
  %v2510 = vpop.f32.mrf.mxu0
  %2511 = vmatprep.mubr.bf16.mxu0 %v2426
  %2512 = vmatmul.mubr.bf16.gmra.mxu0 %v2394
  %v2513 = vpop.f32.mrf.mxu0
  %v2514 = vadd.f32 %v2317, %v2513
  %v2515 = vpop.f32.mrf.mxu0
  %v2516 = vpop.f32.mrf.mxu0
  %v2517 = vadd.f32 %v2322, %v2516
  %v2518 = vpop.f32.mrf.mxu0
  %2519 = vmatprep.mubr.bf16.mxu0 %v2429
  %2520 = vmatmul.mubr.bf16.gmra.mxu0 %v2396
  %v2521 = vpop.f32.mrf.mxu0
  %v2522 = vadd.f32 %v2327, %v2521
  %v2523 = vpop.f32.mrf.mxu0
  %v2524 = vpop.f32.mrf.mxu0
  %v2525 = vadd.f32 %v2332, %v2524
  %v2526 = vpop.f32.mrf.mxu0
  %2527 = vdwg.mxu0
  %v2528 = vmax.f32 %v2466, 0.0
  %v2529 = vmax.f32 %v2469, 0.0
  %v2530 = vmax.f32 %v2474, 0.0
  %v2531 = vmax.f32 %v2477, 0.0
  %v2532 = vmax.f32 %v2482, 0.0
  %v2533 = vmax.f32 %v2485, 0.0
  %v2534 = vmax.f32 %v2490, 0.0
  %v2535 = vmax.f32 %v2493, 0.0
  %v2536 = vmax.f32 %v2498, 0.0
  %v2537 = vmax.f32 %v2501, 0.0
  %v2538 = vmax.f32 %v2506, 0.0
  %v2539 = vmax.f32 %v2509, 0.0
  %v2540 = vmax.f32 %v2514, 0.0
  %v2541 = vmax.f32 %v2517, 0.0
  %v2542 = vmax.f32 %v2522, 0.0
  %v2543 = vmax.f32 %v2525, 0.0
  %v2544 = vld [vmem:[%s9] sm:$0xff]
  %v2545 = vld [vmem:[%s9 + $0x8] sm:$0xff]
  %v2546 = vld [vmem:[%s9 + $0x10] sm:$0xff]
  %v2547 = vld [vmem:[%s9 + $0x18] sm:$0xff]
  %v2548 = vld [vmem:[%s9 + $0x20] sm:$0xff]
  %v2549 = vld [vmem:[%s9 + $0x28] sm:$0xff]
  %v2550 = vld [vmem:[%s9 + $0x30] sm:$0xff]
  %v2551 = vld [vmem:[%s9 + $0x38] sm:$0xff]
  %v2552 = vld [vmem:[%s9 + $0x40] sm:$0xff]
  %v2553 = vld [vmem:[%s9 + $0x48] sm:$0xff]
  %v2554 = vld [vmem:[%s9 + $0x50] sm:$0xff]
  %v2555 = vld [vmem:[%s9 + $0x58] sm:$0xff]
  %v2556 = vpack.c.bf16 %v2529, %v2528
  %v2557 = vpack.c.bf16 %v2531, %v2530
  %v2558 = vpack.c.bf16 %v2533, %v2532
  %v2559 = vpack.c.bf16 %v2535, %v2534
  %v2560 = vpack.c.bf16 %v2537, %v2536
  %v2561 = vpack.c.bf16 %v2539, %v2538
  %v2562 = vpack.c.bf16 %v2541, %v2540
  %v2563 = vpack.c.bf16 %v2543, %v2542
  %v2576 = vunpack.c.l.b16 %v2544
  %v2577 = vunpack.c.l.b16 %v2545
  %v2578 = vunpack.c.l.b16 %v2546
  %v2579 = vunpack.c.l.b16 %v2547
  %v2580 = vunpack.c.l.b16 %v2548
  %v2581 = vunpack.c.l.b16 %v2549
  %v2582 = vunpack.c.l.b16 %v2550
  %v2583 = vunpack.c.l.b16 %v2551
  %v2584 = vunpack.c.l.b16 %v2552
  %v2585 = vunpack.c.l.b16 %v2553
  %v2586 = vunpack.c.l.b16 %v2554
  %v2587 = vunpack.c.l.b16 %v2555
  %v2588 = vpack.c.b16 %v2577, %v2576
  %v2589 = vpack.c.b16 %v2579, %v2578
  %v2590 = vpack.c.b16 %v2581, %v2580
  %v2591 = vpack.c.b16 %v2583, %v2582
  %v2592 = vpack.c.b16 %v2585, %v2584
  %v2593 = vpack.c.b16 %v2587, %v2586
  %2600 = vmatprep.subr.bf16.mxu0 0
  %2601 = vmatpush1.bf16.msra.mxu0 %v2563
  %2602 = vmatprep.subr.bf16.mxu0 0
  %2603 = vmatpush1.bf16.msra.mxu0 %v2562
  %2604 = vmatprep.subr.bf16.mxu0 0
  %2605 = vmatpush1.bf16.msra.mxu0 %v2561
  %2606 = vmatprep.subr.bf16.mxu0 0
  %2607 = vmatpush1.bf16.msra.mxu0 %v2560
  %2608 = vmatprep.subr.bf16.mxu0 0
  %2609 = vmatpush1.bf16.msra.mxu0 %v2559
  %2610 = vmatprep.subr.bf16.mxu0 0
  %2611 = vmatpush1.bf16.msra.mxu0 %v2558
  %2612 = vmatprep.subr.bf16.mxu0 0
  %2613 = vmatpush1.bf16.msra.mxu0 %v2557
  %2614 = vmatprep.subr.bf16.mxu0 0
  %2615 = vmatpush1.bf16.msra.mxu0 %v2556
  %2616 = vmatprep.subr.bf16.mxu0 0
  %2617 = vmatpush2.bf16.msra.mxu0 0
  %2618 = vmatprep.subr.bf16.mxu0 0
  %2619 = vmatpush2.bf16.msra.mxu0 0
  %2620 = vmatprep.subr.bf16.mxu0 0
  %2621 = vmatpush2.bf16.msra.mxu0 0
  %2622 = vmatprep.subr.bf16.mxu0 0
  %2623 = vmatpush2.bf16.msra.mxu0 0
  %2624 = vmatprep.subr.bf16.mxu0 0
  %2625 = vmatpush2.bf16.msra.mxu0 0
  %2626 = vmatprep.subr.bf16.mxu0 0
  %2627 = vmatpush2.bf16.msra.mxu0 0
  %2628 = vmatprep.subr.bf16.mxu0 0
  %2629 = vmatpush2.bf16.msra.mxu0 0
  %2630 = vmatprep.subr.bf16.mxu0 0
  %2631 = vmatpush2.bf16.msra.mxu0 0
  %2632 = vmatprep.mubr.bf16.mxu0 0
  %2633 = vmatmul.mubr.bf16.gmra.mxu0 %v2588
  %v2634 = vpop.f32.mrf.mxu0
  %v2635 = vadd.f32 0.0, %v2634
  %v2636 = vpop.f32.mrf.mxu0
  %v2637 = vpop.f32.mrf.mxu0
  %v2638 = vadd.f32 0.0, %v2637
  %v2639 = vpop.f32.mrf.mxu0
  %2640 = vmatprep.mubr.bf16.mxu0 0
  %2641 = vmatmul.mubr.bf16.gmra.mxu0 %v2589
  %v2642 = vpop.f32.mrf.mxu0
  %v2643 = vadd.f32 0.0, %v2642
  %v2644 = vpop.f32.mrf.mxu0
  %v2645 = vpop.f32.mrf.mxu0
  %v2646 = vadd.f32 0.0, %v2645
  %v2647 = vpop.f32.mrf.mxu0
  %2648 = vmatprep.mubr.bf16.mxu0 0
  %2649 = vmatmul.mubr.bf16.gmra.mxu0 %v2590
  %v2650 = vpop.f32.mrf.mxu0
  %v2651 = vadd.f32 0.0, %v2650
  %v2652 = vpop.f32.mrf.mxu0
  %v2653 = vpop.f32.mrf.mxu0
  %v2654 = vadd.f32 0.0, %v2653
  %v2655 = vpop.f32.mrf.mxu0
  %2656 = vmatprep.mubr.bf16.mxu0 0
  %2657 = vmatmul.mubr.bf16.gmra.mxu0 %v2591
  %v2658 = vpop.f32.mrf.mxu0
  %v2659 = vadd.f32 0.0, %v2658
  %v2660 = vpop.f32.mrf.mxu0
  %v2661 = vpop.f32.mrf.mxu0
  %v2662 = vadd.f32 0.0, %v2661
  %v2663 = vpop.f32.mrf.mxu0
  %2664 = vmatprep.mubr.bf16.mxu0 0
  %2665 = vmatmul.mubr.bf16.gmra.mxu0 %v2592
  %v2666 = vpop.f32.mrf.mxu0
  %v2667 = vadd.f32 0.0, %v2666
  %v2668 = vpop.f32.mrf.mxu0
  %v2669 = vpop.f32.mrf.mxu0
  %v2670 = vadd.f32 0.0, %v2669
  %v2671 = vpop.f32.mrf.mxu0
  %2672 = vmatprep.mubr.bf16.mxu0 0
  %2673 = vmatmul.mubr.bf16.gmra.mxu0 %v2593
  %v2674 = vpop.f32.mrf.mxu0
  %v2675 = vadd.f32 0.0, %v2674
  %v2676 = vpop.f32.mrf.mxu0
  %v2677 = vpop.f32.mrf.mxu0
  %v2678 = vadd.f32 0.0, %v2677
  %v2679 = vpop.f32.mrf.mxu0
  %2680 = vdwg.mxu0
  %v2681 = vunpack.c.h.b16 %v2544
  %v2682 = vunpack.c.h.b16 %v2545
  %v2683 = vunpack.c.h.b16 %v2546
  %v2684 = vunpack.c.h.b16 %v2547
  %v2685 = vunpack.c.h.b16 %v2548
  %v2686 = vunpack.c.h.b16 %v2549
  %v2687 = vunpack.c.h.b16 %v2550
  %v2688 = vunpack.c.h.b16 %v2551
  %v2689 = vunpack.c.h.b16 %v2552
  %v2690 = vunpack.c.h.b16 %v2553
  %v2691 = vunpack.c.h.b16 %v2554
  %v2692 = vunpack.c.h.b16 %v2555
  %v2693 = vpack.c.b16 %v2682, %v2681
  %v2694 = vpack.c.b16 %v2684, %v2683
  %v2695 = vpack.c.b16 %v2686, %v2685
  %v2696 = vpack.c.b16 %v2688, %v2687
  %v2697 = vpack.c.b16 %v2690, %v2689
  %v2698 = vpack.c.b16 %v2692, %v2691
  %2705 = vmatprep.subr.bf16.mxu0 0
  %2706 = vmatpush1.bf16.msra.mxu0 %v2563
  %2707 = vmatprep.subr.bf16.mxu0 0
  %2708 = vmatpush1.bf16.msra.mxu0 %v2562
  %2709 = vmatprep.subr.bf16.mxu0 0
  %2710 = vmatpush1.bf16.msra.mxu0 %v2561
  %2711 = vmatprep.subr.bf16.mxu0 0
  %2712 = vmatpush1.bf16.msra.mxu0 %v2560
  %2713 = vmatprep.subr.bf16.mxu0 0
  %2714 = vmatpush1.bf16.msra.mxu0 %v2559
  %2715 = vmatprep.subr.bf16.mxu0 0
  %2716 = vmatpush1.bf16.msra.mxu0 %v2558
  %2717 = vmatprep.subr.bf16.mxu0 0
  %2718 = vmatpush1.bf16.msra.mxu0 %v2557
  %2719 = vmatprep.subr.bf16.mxu0 0
  %2720 = vmatpush1.bf16.msra.mxu0 %v2556
  %2721 = vmatprep.subr.bf16.mxu0 0
  %2722 = vmatpush2.bf16.msra.mxu0 0
  %2723 = vmatprep.subr.bf16.mxu0 0
  %2724 = vmatpush2.bf16.msra.mxu0 0
  %2725 = vmatprep.subr.bf16.mxu0 0
  %2726 = vmatpush2.bf16.msra.mxu0 0
  %2727 = vmatprep.subr.bf16.mxu0 0
  %2728 = vmatpush2.bf16.msra.mxu0 0
  %2729 = vmatprep.subr.bf16.mxu0 0
  %2730 = vmatpush2.bf16.msra.mxu0 0
  %2731 = vmatprep.subr.bf16.mxu0 0
  %2732 = vmatpush2.bf16.msra.mxu0 0
  %2733 = vmatprep.subr.bf16.mxu0 0
  %2734 = vmatpush2.bf16.msra.mxu0 0
  %2735 = vmatprep.subr.bf16.mxu0 0
  %2736 = vmatpush2.bf16.msra.mxu0 0
  %2737 = vmatprep.mubr.bf16.mxu0 0
  %2738 = vmatmul.mubr.bf16.gmra.mxu0 %v2693
  %v2739 = vpop.f32.mrf.mxu0
  %v2740 = vadd.f32 0.0, %v2739
  %v2741 = vpop.f32.mrf.mxu0
  %v2742 = vpop.f32.mrf.mxu0
  %v2743 = vadd.f32 0.0, %v2742
  %v2744 = vpop.f32.mrf.mxu0
  %2745 = vmatprep.mubr.bf16.mxu0 0
  %2746 = vmatmul.mubr.bf16.gmra.mxu0 %v2694
  %v2747 = vpop.f32.mrf.mxu0
  %v2748 = vadd.f32 0.0, %v2747
  %v2749 = vpop.f32.mrf.mxu0
  %v2750 = vpop.f32.mrf.mxu0
  %v2751 = vadd.f32 0.0, %v2750
  %v2752 = vpop.f32.mrf.mxu0
  %2753 = vmatprep.mubr.bf16.mxu0 0
  %2754 = vmatmul.mubr.bf16.gmra.mxu0 %v2695
  %v2755 = vpop.f32.mrf.mxu0
  %v2756 = vadd.f32 0.0, %v2755
  %v2757 = vpop.f32.mrf.mxu0
  %v2758 = vpop.f32.mrf.mxu0
  %v2759 = vadd.f32 0.0, %v2758
  %v2760 = vpop.f32.mrf.mxu0
  %2761 = vmatprep.mubr.bf16.mxu0 0
  %2762 = vmatmul.mubr.bf16.gmra.mxu0 %v2696
  %v2763 = vpop.f32.mrf.mxu0
  %v2764 = vadd.f32 0.0, %v2763
  %v2765 = vpop.f32.mrf.mxu0
  %v2766 = vpop.f32.mrf.mxu0
  %v2767 = vadd.f32 0.0, %v2766
  %v2768 = vpop.f32.mrf.mxu0
  %2769 = vmatprep.mubr.bf16.mxu0 0
  %2770 = vmatmul.mubr.bf16.gmra.mxu0 %v2697
  %v2771 = vpop.f32.mrf.mxu0
  %v2772 = vadd.f32 0.0, %v2771
  %v2773 = vpop.f32.mrf.mxu0
  %v2774 = vpop.f32.mrf.mxu0
  %v2775 = vadd.f32 0.0, %v2774
  %v2776 = vpop.f32.mrf.mxu0
  %2777 = vmatprep.mubr.bf16.mxu0 0
  %2778 = vmatmul.mubr.bf16.gmra.mxu0 %v2698
  %v2779 = vpop.f32.mrf.mxu0
  %v2780 = vadd.f32 0.0, %v2779
  %v2781 = vpop.f32.mrf.mxu0
  %v2782 = vpop.f32.mrf.mxu0
  %v2783 = vadd.f32 0.0, %v2782
  %v2784 = vpop.f32.mrf.mxu0
  %2785 = vdwg.mxu0
  %v2786 = vmax.f32 %v2635, %v2740
  %v2787 = vmax.f32 %v2638, %v2743
  %v2788 = vmax.f32 %v2643, %v2748
  %v2789 = vmax.f32 %v2646, %v2751
  %v2790 = vmax.f32 %v2651, %v2756
  %v2791 = vmax.f32 %v2654, %v2759
  %v2792 = vmax.f32 %v2659, %v2764
  %v2793 = vmax.f32 %v2662, %v2767
  %v2794 = vmax.f32 %v2667, %v2772
  %v2795 = vmax.f32 %v2670, %v2775
  %v2796 = vmax.f32 %v2675, %v2780
  %v2797 = vmax.f32 %v2678, %v2783
  %v2798 = vld [vmem:[%s13] sm:$0xf]
  %v2799 = vld [vmem:[%s13 + $0x4] sm:$0xf]
  %v2800 = vld [vmem:[%s13 + $0x8] sm:$0xf]
  %v2801 = vld [vmem:[%s13 + $0xc] sm:$0xf]
  %v2802 = vld [vmem:[%s13 + $0x10] sm:$0xf]
  %v2803 = vld [vmem:[%s13 + $0x14] sm:$0xf]
  %v2804 = vld [vmem:[%s13 + $0x18] sm:$0xf]
  %v2805 = vld [vmem:[%s13 + $0x1c] sm:$0x1]
  %v2806 = vpack.c.bf16 %v2787, %v2786
  %v2807 = vpack.c.bf16 %v2789, %v2788
  %v2808 = vpack.c.bf16 %v2791, %v2790
  %v2809 = vpack.c.bf16 %v2793, %v2792
  %v2810 = vpack.c.bf16 %v2795, %v2794
  %v2811 = vpack.c.bf16 %v2797, %v2796
  %v2820 = vunpack.c.l.b16 %v2798
  %v2821 = vunpack.c.l.b16 %v2799
  %v2822 = vunpack.c.l.b16 %v2800
  %v2823 = vunpack.c.l.b16 %v2801
  %v2824 = vunpack.c.l.b16 %v2802
  %v2825 = vunpack.c.l.b16 %v2803
  %v2826 = vunpack.c.l.b16 %v2804
  %v2827 = vunpack.c.l.b16 %v2805
  %v2828 = vpack.c.b16 %v2821, %v2820
  %v2829 = vpack.c.b16 %v2823, %v2822
  %v2830 = vpack.c.b16 %v2825, %v2824
  %v2831 = vpack.c.b16 %v2827, %v2826
  %vm2835 = vcmask 474112
  %v2837 = vsel %vm2835, %v2806, 0
  %v2840 = vsel %vm2835, %v2807, 0
  %v2843 = vsel %vm2835, %v2808, 0
  %v2846 = vsel %vm2835, %v2809, 0
  %v2849 = vsel %vm2835, %v2810, 0
  %v2852 = vsel %vm2835, %v2811, 0
  %v2855 = vsel %vm1008, %v2831, 0
  %2857 = vmatprep.subr.bf16.mxu0 0
  %2858 = vmatpush1.bf16.msra.mxu0 0
  %2859 = vmatprep.subr.bf16.mxu0 0
  %2860 = vmatpush1.bf16.msra.mxu0 0
  %2861 = vmatprep.subr.bf16.mxu0 0
  %2862 = vmatpush1.bf16.msra.mxu0 0
  %2863 = vmatprep.subr.bf16.mxu0 0
  %2864 = vmatpush1.bf16.msra.mxu0 0
  %2865 = vmatprep.subr.bf16.mxu0 0
  %2866 = vmatpush1.bf16.msra.mxu0 %v2855
  %2867 = vmatprep.subr.bf16.mxu0 0
  %2868 = vmatpush1.bf16.msra.mxu0 %v2830
  %2869 = vmatprep.subr.bf16.mxu0 0
  %2870 = vmatpush1.bf16.msra.mxu0 %v2829
  %2871 = vmatprep.subr.bf16.mxu0 0
  %2872 = vmatpush1.bf16.msra.mxu0 %v2828
  %2873 = vmatprep.subr.bf16.mxu0 0
  %2874 = vmatpush2.bf16.msra.mxu0 0
  %2875 = vmatprep.subr.bf16.mxu0 0
  %2876 = vmatpush2.bf16.msra.mxu0 0
  %2877 = vmatprep.subr.bf16.mxu0 0
  %2878 = vmatpush2.bf16.msra.mxu0 0
  %2879 = vmatprep.subr.bf16.mxu0 0
  %2880 = vmatpush2.bf16.msra.mxu0 0
  %2881 = vmatprep.subr.bf16.mxu0 0
  %2882 = vmatpush2.bf16.msra.mxu0 0
  %2883 = vmatprep.subr.bf16.mxu0 0
  %2884 = vmatpush2.bf16.msra.mxu0 0
  %2885 = vmatprep.subr.bf16.mxu0 0
  %2886 = vmatpush2.bf16.msra.mxu0 0
  %2887 = vmatprep.subr.bf16.mxu0 0
  %2888 = vmatpush2.bf16.msra.mxu0 0
  %2889 = vmatprep.mubr.bf16.mxu0 0
  %2890 = vmatmul.mubr.bf16.gmra.mxu0 %v2837
  %v2891 = vpop.f32.mrf.mxu0
  %v2892 = vadd.f32 0.0, %v2891
  %v2893 = vpop.f32.mrf.mxu0
  %v2894 = vpop.f32.mrf.mxu0
  %v2895 = vadd.f32 0.0, %v2894
  %v2896 = vpop.f32.mrf.mxu0
  %2897 = vmatprep.mubr.bf16.mxu0 0
  %2898 = vmatmul.mubr.bf16.gmra.mxu0 %v2840
  %v2899 = vpop.f32.mrf.mxu0
  %v2900 = vadd.f32 0.0, %v2899
  %v2901 = vpop.f32.mrf.mxu0
  %v2902 = vpop.f32.mrf.mxu0
  %v2903 = vadd.f32 0.0, %v2902
  %v2904 = vpop.f32.mrf.mxu0
  %2905 = vmatprep.mubr.bf16.mxu0 0
  %2906 = vmatmul.mubr.bf16.gmra.mxu0 %v2843
  %v2907 = vpop.f32.mrf.mxu0
  %v2908 = vadd.f32 0.0, %v2907
  %v2909 = vpop.f32.mrf.mxu0
  %v2910 = vpop.f32.mrf.mxu0
  %v2911 = vadd.f32 0.0, %v2910
  %v2912 = vpop.f32.mrf.mxu0
  %2913 = vmatprep.mubr.bf16.mxu0 0
  %2914 = vmatmul.mubr.bf16.gmra.mxu0 %v2846
  %v2915 = vpop.f32.mrf.mxu0
  %v2916 = vadd.f32 0.0, %v2915
  %v2917 = vpop.f32.mrf.mxu0
  %v2918 = vpop.f32.mrf.mxu0
  %v2919 = vadd.f32 0.0, %v2918
  %v2920 = vpop.f32.mrf.mxu0
  %2921 = vmatprep.mubr.bf16.mxu0 0
  %2922 = vmatmul.mubr.bf16.gmra.mxu0 %v2849
  %v2923 = vpop.f32.mrf.mxu0
  %v2924 = vadd.f32 0.0, %v2923
  %v2925 = vpop.f32.mrf.mxu0
  %v2926 = vpop.f32.mrf.mxu0
  %v2927 = vadd.f32 0.0, %v2926
  %v2928 = vpop.f32.mrf.mxu0
  %2929 = vmatprep.mubr.bf16.mxu0 0
  %2930 = vmatmul.mubr.bf16.gmra.mxu0 %v2852
  %v2931 = vpop.f32.mrf.mxu0
  %v2932 = vadd.f32 0.0, %v2931
  %v2933 = vpop.f32.mrf.mxu0
  %v2934 = vpop.f32.mrf.mxu0
  %v2935 = vadd.f32 0.0, %v2934
  %v2936 = vpop.f32.mrf.mxu0
  %2937 = vdwg.mxu0
  %2938 = vrot.lane.b32.xlu0 %v2828, 92
  %v2939 = vpop.permute.xlu0 %2938
  %2940 = vrot.lane.b32.xlu0 %v2829, 92
  %v2941 = vpop.permute.xlu0 %2940
  %2942 = vrot.lane.b32.xlu0 %v2830, 92
  %v2943 = vpop.permute.xlu0 %2942
  %2944 = vrot.lane.b32.xlu0 %v2831, 92
  %v2945 = vpop.permute.xlu0 %2944
  %v2950 = vsel %vm1008, %v2945, 0
  %2952 = vmatprep.subr.bf16.mxu0 0
  %2953 = vmatpush1.bf16.msra.mxu0 0
  %2954 = vmatprep.subr.bf16.mxu0 0
  %2955 = vmatpush1.bf16.msra.mxu0 0
  %2956 = vmatprep.subr.bf16.mxu0 0
  %2957 = vmatpush1.bf16.msra.mxu0 0
  %2958 = vmatprep.subr.bf16.mxu0 0
  %2959 = vmatpush1.bf16.msra.mxu0 0
  %2960 = vmatprep.subr.bf16.mxu0 0
  %2961 = vmatpush1.bf16.msra.mxu0 %v2950
  %2962 = vmatprep.subr.bf16.mxu0 0
  %2963 = vmatpush1.bf16.msra.mxu0 %v2943
  %2964 = vmatprep.subr.bf16.mxu0 0
  %2965 = vmatpush1.bf16.msra.mxu0 %v2941
  %2966 = vmatprep.subr.bf16.mxu0 0
  %2967 = vmatpush1.bf16.msra.mxu0 %v2939
  %2968 = vmatprep.subr.bf16.mxu0 0
  %2969 = vmatpush2.bf16.msra.mxu0 0
  %2970 = vmatprep.subr.bf16.mxu0 0
  %2971 = vmatpush2.bf16.msra.mxu0 0
  %2972 = vmatprep.subr.bf16.mxu0 0
  %2973 = vmatpush2.bf16.msra.mxu0 0
  %2974 = vmatprep.subr.bf16.mxu0 0
  %2975 = vmatpush2.bf16.msra.mxu0 0
  %2976 = vmatprep.subr.bf16.mxu0 0
  %2977 = vmatpush2.bf16.msra.mxu0 0
  %2978 = vmatprep.subr.bf16.mxu0 0
  %2979 = vmatpush2.bf16.msra.mxu0 0
  %2980 = vmatprep.subr.bf16.mxu0 0
  %2981 = vmatpush2.bf16.msra.mxu0 0
  %2982 = vmatprep.subr.bf16.mxu0 0
  %2983 = vmatpush2.bf16.msra.mxu0 0
  %2984 = vmatprep.mubr.bf16.mxu0 0
  %2985 = vmatmul.mubr.bf16.gmra.mxu0 %v2837
  %v2986 = vpop.f32.mrf.mxu0
  %v2987 = vadd.f32 0.0, %v2986
  %v2988 = vpop.f32.mrf.mxu0
  %v2989 = vpop.f32.mrf.mxu0
  %v2990 = vadd.f32 0.0, %v2989
  %v2991 = vpop.f32.mrf.mxu0
  %2992 = vmatprep.mubr.bf16.mxu0 0
  %2993 = vmatmul.mubr.bf16.gmra.mxu0 %v2840
  %v2994 = vpop.f32.mrf.mxu0
  %v2995 = vadd.f32 0.0, %v2994
  %v2996 = vpop.f32.mrf.mxu0
  %v2997 = vpop.f32.mrf.mxu0
  %v2998 = vadd.f32 0.0, %v2997
  %v2999 = vpop.f32.mrf.mxu0
  %3000 = vmatprep.mubr.bf16.mxu0 0
  %3001 = vmatmul.mubr.bf16.gmra.mxu0 %v2843
  %v3002 = vpop.f32.mrf.mxu0
  %v3003 = vadd.f32 0.0, %v3002
  %v3004 = vpop.f32.mrf.mxu0
  %v3005 = vpop.f32.mrf.mxu0
  %v3006 = vadd.f32 0.0, %v3005
  %v3007 = vpop.f32.mrf.mxu0
  %3008 = vmatprep.mubr.bf16.mxu0 0
  %3009 = vmatmul.mubr.bf16.gmra.mxu0 %v2846
  %v3010 = vpop.f32.mrf.mxu0
  %v3011 = vadd.f32 0.0, %v3010
  %v3012 = vpop.f32.mrf.mxu0
  %v3013 = vpop.f32.mrf.mxu0
  %v3014 = vadd.f32 0.0, %v3013
  %v3015 = vpop.f32.mrf.mxu0
  %3016 = vmatprep.mubr.bf16.mxu0 0
  %3017 = vmatmul.mubr.bf16.gmra.mxu0 %v2849
  %v3018 = vpop.f32.mrf.mxu0
  %v3019 = vadd.f32 0.0, %v3018
  %v3020 = vpop.f32.mrf.mxu0
  %v3021 = vpop.f32.mrf.mxu0
  %v3022 = vadd.f32 0.0, %v3021
  %v3023 = vpop.f32.mrf.mxu0
  %3024 = vmatprep.mubr.bf16.mxu0 0
  %3025 = vmatmul.mubr.bf16.gmra.mxu0 %v2852
  %v3026 = vpop.f32.mrf.mxu0
  %v3027 = vadd.f32 0.0, %v3026
  %v3028 = vpop.f32.mrf.mxu0
  %v3029 = vpop.f32.mrf.mxu0
  %v3030 = vadd.f32 0.0, %v3029
  %v3031 = vpop.f32.mrf.mxu0
  %3032 = vdwg.mxu0
  %v3033 = vmax.f32 %v2892, %v2987
  %v3034 = vmax.f32 %v2895, %v2990
  %v3035 = vmax.f32 %v2900, %v2995
  %v3036 = vmax.f32 %v2903, %v2998
  %v3037 = vmax.f32 %v2908, %v3003
  %v3038 = vmax.f32 %v2911, %v3006
  %v3039 = vmax.f32 %v2916, %v3011
  %v3040 = vmax.f32 %v2919, %v3014
  %v3041 = vmax.f32 %v2924, %v3019
  %v3042 = vmax.f32 %v2927, %v3022
  %v3043 = vmax.f32 %v2932, %v3027
  %v3044 = vmax.f32 %v2935, %v3030
  %3057 = vrot.lane.b32.xlu0 %v3033, 127
  %v3058 = vpop.permute.xlu0 %3057
  %3059 = vrot.lane.b32.xlu0 %v3034, 127
  %v3060 = vpop.permute.xlu0 %3059
  %3061 = vrot.lane.b32.xlu0 %v3035, 127
  %v3062 = vpop.permute.xlu0 %3061
  %3063 = vrot.lane.b32.xlu0 %v3036, 127
  %v3064 = vpop.permute.xlu0 %3063
  %3065 = vrot.lane.b32.xlu0 %v3037, 127
  %v3066 = vpop.permute.xlu0 %3065
  %3067 = vrot.lane.b32.xlu0 %v3038, 127
  %v3068 = vpop.permute.xlu0 %3067
  %3069 = vrot.lane.b32.xlu0 %v3039, 127
  %v3070 = vpop.permute.xlu0 %3069
  %3071 = vrot.lane.b32.xlu0 %v3040, 127
  %v3072 = vpop.permute.xlu0 %3071
  %3073 = vrot.lane.b32.xlu0 %v3041, 127
  %v3074 = vpop.permute.xlu0 %3073
  %3075 = vrot.lane.b32.xlu0 %v3042, 127
  %v3076 = vpop.permute.xlu0 %3075
  %3077 = vrot.lane.b32.xlu0 %v3043, 127
  %v3078 = vpop.permute.xlu0 %3077
  %3079 = vrot.lane.b32.xlu0 %v3044, 127
  %v3080 = vpop.permute.xlu0 %3079
  %3093 = vrot.lane.b32.xlu0 %v3033, 126
  %v3094 = vpop.permute.xlu0 %3093
  %3095 = vrot.lane.b32.xlu0 %v3034, 126
  %v3096 = vpop.permute.xlu0 %3095
  %3097 = vrot.lane.b32.xlu0 %v3035, 126
  %v3098 = vpop.permute.xlu0 %3097
  %3099 = vrot.lane.b32.xlu0 %v3036, 126
  %v3100 = vpop.permute.xlu0 %3099
  %3101 = vrot.lane.b32.xlu0 %v3037, 126
  %v3102 = vpop.permute.xlu0 %3101
  %3103 = vrot.lane.b32.xlu0 %v3038, 126
  %v3104 = vpop.permute.xlu0 %3103
  %3105 = vrot.lane.b32.xlu0 %v3039, 126
  %v3106 = vpop.permute.xlu0 %3105
  %3107 = vrot.lane.b32.xlu0 %v3040, 126
  %v3108 = vpop.permute.xlu0 %3107
  %3109 = vrot.lane.b32.xlu0 %v3041, 126
  %v3110 = vpop.permute.xlu0 %3109
  %3111 = vrot.lane.b32.xlu0 %v3042, 126
  %v3112 = vpop.permute.xlu0 %3111
  %3113 = vrot.lane.b32.xlu0 %v3043, 126
  %v3114 = vpop.permute.xlu0 %3113
  %3115 = vrot.lane.b32.xlu0 %v3044, 126
  %v3116 = vpop.permute.xlu0 %3115
  %v3129 = vld [vmem:[%s4] sm:$0xff]
  %v3130 = vld [vmem:[%s4 + $0x8] sm:$0xf]
  %v3131 = vld [vmem:[%s4 + $0xc] sm:$0xff]
  %v3132 = vld [vmem:[%s4 + $0x14] sm:$0xf]
  %v3133 = vld [vmem:[%s4 + $0x18] sm:$0xff]
  %v3134 = vld [vmem:[%s4 + $0x20] sm:$0xf]
  %v3135 = vld [vmem:[%s4 + $0x24] sm:$0xff]
  %v3136 = vld [vmem:[%s4 + $0x2c] sm:$0xf]
  %v3137 = vld [vmem:[%s4 + $0x30] sm:$0xff]
  %v3138 = vld [vmem:[%s4 + $0x38] sm:$0xf]
  %v3139 = vld [vmem:[%s4 + $0x3c] sm:$0xff]
  %v3140 = vld [vmem:[%s4 + $0x44] sm:$0xf]
  %v3141 = vld [vmem:[%s4 + $0x48] sm:$0xff]
  %v3142 = vld [vmem:[%s4 + $0x50] sm:$0xf]
  %v3143 = vld [vmem:[%s4 + $0x54] sm:$0xff]
  %v3144 = vld [vmem:[%s4 + $0x5c] sm:$0xf]
  %v3145 = vld [vmem:[%s4 + $0x60] sm:$0xff]
  %v3146 = vld [vmem:[%s4 + $0x68] sm:$0xf]
  %v3147 = vld [vmem:[%s4 + $0x6c] sm:$0xff]
  %v3148 = vld [vmem:[%s4 + $0x74] sm:$0xf]
  %v3149 = vld [vmem:[%s4 + $0x78] sm:$0xff]
  %v3150 = vld [vmem:[%s4 + $0x80] sm:$0xf]
  %v3151 = vld [vmem:[%s4 + $0x84] sm:$0xff]
  %v3152 = vld [vmem:[%s4 + $0x8c] sm:$0xf]
  %v3153 = vld [vmem:[%s4 + $0x90] sm:$0xff]
  %v3154 = vld [vmem:[%s4 + $0x98] sm:$0xf]
  %v3155 = vld [vmem:[%s4 + $0x9c] sm:$0xff]
  %v3156 = vld [vmem:[%s4 + $0xa4] sm:$0xf]
  %v3157 = vld [vmem:[%s4 + $0xa8] sm:$0xff]
  %v3158 = vld [vmem:[%s4 + $0xb0] sm:$0xf]
  %v3159 = vld [vmem:[%s4 + $0xb4] sm:$0xff]
  %v3160 = vld [vmem:[%s4 + $0xbc] sm:$0xf]
  %v3161 = vpack.c.bf16 %v3034, %v3033
  %v3162 = vpack.c.bf16 %v3036, %v3035
  %v3163 = vpack.c.bf16 %v3038, %v3037
  %v3164 = vpack.c.bf16 %v3040, %v3039
  %v3165 = vpack.c.bf16 %v3042, %v3041
  %v3166 = vpack.c.bf16 %v3044, %v3043
  %v3167 = vpack.c.bf16 %v3060, %v3058
  %v3168 = vpack.c.bf16 %v3064, %v3062
  %v3169 = vpack.c.bf16 %v3068, %v3066
  %v3170 = vpack.c.bf16 %v3072, %v3070
  %v3171 = vpack.c.bf16 %v3076, %v3074
  %v3172 = vpack.c.bf16 %v3080, %v3078
  %v3173 = vpack.c.bf16 %v3096, %v3094
  %v3174 = vpack.c.bf16 %v3100, %v3098
  %v3175 = vpack.c.bf16 %v3104, %v3102
  %v3176 = vpack.c.bf16 %v3108, %v3106
  %v3177 = vpack.c.bf16 %v3112, %v3110
  %v3178 = vpack.c.bf16 %v3116, %v3114
  %3180 = vset.pattern.permute.xlu0 0
  %3181 = vperm.xlu0 %3180, %v134
  %v3182 = vpop.permute.xlu0 %3181
  %3185 = vset.pattern.permute.xlu0 0
  %3186 = vperm.xlu0 %3185, %v135
  %v3187 = vpop.permute.xlu0 %3186
  %3190 = vset.pattern.permute.xlu0 0
  %3191 = vperm.xlu0 %3190, %v136
  %v3192 = vpop.permute.xlu0 %3191
  %3195 = vset.pattern.permute.xlu0 0
  %3196 = vperm.xlu0 %3195, %v137
  %v3197 = vpop.permute.xlu0 %3196
  %3200 = vset.pattern.permute.xlu0 0
  %3201 = vperm.xlu0 %3200, %v138
  %v3202 = vpop.permute.xlu0 %3201
  %3205 = vset.pattern.permute.xlu0 0
  %3206 = vperm.xlu0 %3205, %v139
  %v3207 = vpop.permute.xlu0 %3206
  %3210 = vset.pattern.permute.xlu0 0
  %3211 = vperm.xlu0 %3210, %v140
  %v3212 = vpop.permute.xlu0 %3211
  %3215 = vset.pattern.permute.xlu0 0
  %3216 = vperm.xlu0 %3215, %v141
  %v3217 = vpop.permute.xlu0 %3216
  %3220 = vset.pattern.permute.xlu0 0
  %3221 = vperm.xlu0 %3220, %v142
  %v3222 = vpop.permute.xlu0 %3221
  %3225 = vset.pattern.permute.xlu0 0
  %3226 = vperm.xlu0 %3225, %v143
  %v3227 = vpop.permute.xlu0 %3226
  %3230 = vset.pattern.permute.xlu0 0
  %3231 = vperm.xlu0 %3230, %v144
  %v3232 = vpop.permute.xlu0 %3231
  %3235 = vset.pattern.permute.xlu0 0
  %3236 = vperm.xlu0 %3235, %v145
  %v3237 = vpop.permute.xlu0 %3236
  %3240 = vset.pattern.permute.xlu0 0
  %3241 = vperm.xlu0 %3240, %v146
  %v3242 = vpop.permute.xlu0 %3241
  %3245 = vset.pattern.permute.xlu0 0
  %3246 = vperm.xlu0 %3245, %v147
  %v3247 = vpop.permute.xlu0 %3246
  %3250 = vset.pattern.permute.xlu0 0
  %3251 = vperm.xlu0 %3250, %v148
  %v3252 = vpop.permute.xlu0 %3251
  %3255 = vset.pattern.permute.xlu0 0
  %3256 = vperm.xlu0 %3255, %v149
  %v3257 = vpop.permute.xlu0 %3256
  %v3291 = vunpack.c.l.b16 %v3129
  %v3292 = vunpack.c.h.b16 %v3129
  %v3293 = vunpack.c.l.b16 %v3130
  %v3294 = vunpack.c.l.b16 %v3131
  %v3295 = vunpack.c.h.b16 %v3131
  %v3296 = vunpack.c.l.b16 %v3132
  %v3297 = vunpack.c.l.b16 %v3133
  %v3298 = vunpack.c.h.b16 %v3133
  %v3299 = vunpack.c.l.b16 %v3134
  %v3300 = vunpack.c.l.b16 %v3135
  %v3301 = vunpack.c.h.b16 %v3135
  %v3302 = vunpack.c.l.b16 %v3136
  %v3303 = vunpack.c.l.b16 %v3137
  %v3304 = vunpack.c.h.b16 %v3137
  %v3305 = vunpack.c.l.b16 %v3138
  %v3306 = vunpack.c.l.b16 %v3139
  %v3307 = vunpack.c.h.b16 %v3139
  %v3308 = vunpack.c.l.b16 %v3140
  %v3309 = vunpack.c.l.b16 %v3141
  %v3310 = vunpack.c.h.b16 %v3141
  %v3311 = vunpack.c.l.b16 %v3142
  %v3312 = vunpack.c.l.b16 %v3143
  %v3313 = vunpack.c.h.b16 %v3143
  %v3314 = vunpack.c.l.b16 %v3144
  %v3315 = vunpack.c.l.b16 %v3145
  %v3316 = vunpack.c.h.b16 %v3145
  %v3317 = vunpack.c.l.b16 %v3146
  %v3318 = vunpack.c.l.b16 %v3147
  %v3319 = vunpack.c.h.b16 %v3147
  %v3320 = vunpack.c.l.b16 %v3148
  %v3321 = vunpack.c.l.b16 %v3149
  %v3322 = vunpack.c.h.b16 %v3149
  %v3323 = vunpack.c.l.b16 %v3150
  %v3324 = vunpack.c.l.b16 %v3151
  %v3325 = vunpack.c.h.b16 %v3151
  %v3326 = vunpack.c.l.b16 %v3152
  %v3327 = vunpack.c.l.b16 %v3153
  %v3328 = vunpack.c.h.b16 %v3153
  %v3329 = vunpack.c.l.b16 %v3154
  %v3330 = vunpack.c.l.b16 %v3155
  %v3331 = vunpack.c.h.b16 %v3155
  %v3332 = vunpack.c.l.b16 %v3156
  %v3333 = vunpack.c.l.b16 %v3157
  %v3334 = vunpack.c.h.b16 %v3157
  %v3335 = vunpack.c.l.b16 %v3158
  %v3336 = vunpack.c.l.b16 %v3159
  %v3337 = vunpack.c.h.b16 %v3159
  %v3338 = vunpack.c.l.b16 %v3160
  %v3339 = vpack.c.b16 %v3294, %v3291
  %v3340 = vpack.c.b16 %v3295, %v3292
  %v3341 = vpack.c.b16 %v3296, %v3293
  %v3342 = vpack.c.b16 %v3300, %v3297
  %v3343 = vpack.c.b16 %v3301, %v3298
  %v3344 = vpack.c.b16 %v3302, %v3299
  %v3345 = vpack.c.b16 %v3306, %v3303
  %v3346 = vpack.c.b16 %v3307, %v3304
  %v3347 = vpack.c.b16 %v3308, %v3305
  %v3348 = vpack.c.b16 %v3312, %v3309
  %v3349 = vpack.c.b16 %v3313, %v3310
  %v3350 = vpack.c.b16 %v3314, %v3311
  %v3351 = vpack.c.b16 %v3318, %v3315
  %v3352 = vpack.c.b16 %v3319, %v3316
  %v3353 = vpack.c.b16 %v3320, %v3317
  %v3354 = vpack.c.b16 %v3324, %v3321
  %v3355 = vpack.c.b16 %v3325, %v3322
  %v3356 = vpack.c.b16 %v3326, %v3323
  %v3357 = vpack.c.b16 %v3330, %v3327
  %v3358 = vpack.c.b16 %v3331, %v3328
  %v3359 = vpack.c.b16 %v3332, %v3329
  %v3360 = vpack.c.b16 %v3336, %v3333
  %v3361 = vpack.c.b16 %v3337, %v3334
  %v3362 = vpack.c.b16 %v3338, %v3335
  %vm3379 = vcmask 261120
  %v3381 = vsel %vm3379, %v3341, 0
  %v3384 = vsel %vm3379, %v3344, 0
  %v3387 = vsel %vm3379, %v3347, 0
  %v3390 = vsel %vm3379, %v3350, 0
  %v3393 = vsel %vm3379, %v3353, 0
  %v3396 = vsel %vm3379, %v3356, 0
  %v3399 = vsel %vm3379, %v3359, 0
  %v3402 = vsel %vm3379, %v3362, 0
  %3404 = vmatprep.subr.bf16.mxu0 0
  %3405 = vmatpush1.bf16.msra.mxu0 %v3168
  %3406 = vmatprep.subr.bf16.mxu0 0
  %3407 = vmatpush1.bf16.msra.mxu0 %v3167
  %3408 = vmatprep.subr.bf16.mxu0 0
  %3409 = vmatpush1.bf16.msra.mxu0 %v3166
  %3410 = vmatprep.subr.bf16.mxu0 0
  %3411 = vmatpush1.bf16.msra.mxu0 %v3165
  %3412 = vmatprep.subr.bf16.mxu0 0
  %3413 = vmatpush1.bf16.msra.mxu0 %v3164
  %3414 = vmatprep.subr.bf16.mxu0 0
  %3415 = vmatpush1.bf16.msra.mxu0 %v3163
  %3416 = vmatprep.subr.bf16.mxu0 0
  %3417 = vmatpush1.bf16.msra.mxu0 %v3162
  %3418 = vmatprep.subr.bf16.mxu0 0
  %3419 = vmatpush1.bf16.msra.mxu0 %v3161
  %3420 = vmatprep.subr.bf16.mxu0 0
  %3421 = vmatpush2.bf16.msra.mxu0 %v3176
  %3422 = vmatprep.subr.bf16.mxu0 0
  %3423 = vmatpush2.bf16.msra.mxu0 %v3175
  %3424 = vmatprep.subr.bf16.mxu0 0
  %3425 = vmatpush2.bf16.msra.mxu0 %v3174
  %3426 = vmatprep.subr.bf16.mxu0 0
  %3427 = vmatpush2.bf16.msra.mxu0 %v3173
  %3428 = vmatprep.subr.bf16.mxu0 0
  %3429 = vmatpush2.bf16.msra.mxu0 %v3172
  %3430 = vmatprep.subr.bf16.mxu0 0
  %3431 = vmatpush2.bf16.msra.mxu0 %v3171
  %3432 = vmatprep.subr.bf16.mxu0 0
  %3433 = vmatpush2.bf16.msra.mxu0 %v3170
  %3434 = vmatprep.subr.bf16.mxu0 0
  %3435 = vmatpush2.bf16.msra.mxu0 %v3169
  %3436 = vmatprep.mubr.bf16.mxu0 %v3340
  %3437 = vmatmul.mubr.bf16.gmra.mxu0 %v3339
  %v3438 = vpop.f32.mrf.mxu0
  %v3439 = vadd.f32 %v3182, %v3438
  %v3440 = vpop.f32.mrf.mxu0
  %v3441 = vpop.f32.mrf.mxu0
  %v3442 = vadd.f32 %v3187, %v3441
  %v3443 = vpop.f32.mrf.mxu0
  %3444 = vmatprep.mubr.bf16.mxu0 %v3343
  %3445 = vmatmul.mubr.bf16.gmra.mxu0 %v3342
  %v3446 = vpop.f32.mrf.mxu0
  %v3447 = vadd.f32 %v3192, %v3446
  %v3448 = vpop.f32.mrf.mxu0
  %v3449 = vpop.f32.mrf.mxu0
  %v3450 = vadd.f32 %v3197, %v3449
  %v3451 = vpop.f32.mrf.mxu0
  %3452 = vmatprep.mubr.bf16.mxu0 %v3346
  %3453 = vmatmul.mubr.bf16.gmra.mxu0 %v3345
  %v3454 = vpop.f32.mrf.mxu0
  %v3455 = vadd.f32 %v3202, %v3454
  %v3456 = vpop.f32.mrf.mxu0
  %v3457 = vpop.f32.mrf.mxu0
  %v3458 = vadd.f32 %v3207, %v3457
  %v3459 = vpop.f32.mrf.mxu0
  %3460 = vmatprep.mubr.bf16.mxu0 %v3349
  %3461 = vmatmul.mubr.bf16.gmra.mxu0 %v3348
  %v3462 = vpop.f32.mrf.mxu0
  %v3463 = vadd.f32 %v3212, %v3462
  %v3464 = vpop.f32.mrf.mxu0
  %v3465 = vpop.f32.mrf.mxu0
  %v3466 = vadd.f32 %v3217, %v3465
  %v3467 = vpop.f32.mrf.mxu0
  %3468 = vmatprep.mubr.bf16.mxu0 %v3352
  %3469 = vmatmul.mubr.bf16.gmra.mxu0 %v3351
  %v3470 = vpop.f32.mrf.mxu0
  %v3471 = vadd.f32 %v3222, %v3470
  %v3472 = vpop.f32.mrf.mxu0
  %v3473 = vpop.f32.mrf.mxu0
  %v3474 = vadd.f32 %v3227, %v3473
  %v3475 = vpop.f32.mrf.mxu0
  %3476 = vmatprep.mubr.bf16.mxu0 %v3355
  %3477 = vmatmul.mubr.bf16.gmra.mxu0 %v3354
  %v3478 = vpop.f32.mrf.mxu0
  %v3479 = vadd.f32 %v3232, %v3478
  %v3480 = vpop.f32.mrf.mxu0
  %v3481 = vpop.f32.mrf.mxu0
  %v3482 = vadd.f32 %v3237, %v3481
  %v3483 = vpop.f32.mrf.mxu0
  %3484 = vmatprep.mubr.bf16.mxu0 %v3358
  %3485 = vmatmul.mubr.bf16.gmra.mxu0 %v3357
  %v3486 = vpop.f32.mrf.mxu0
  %v3487 = vadd.f32 %v3242, %v3486
  %v3488 = vpop.f32.mrf.mxu0
  %v3489 = vpop.f32.mrf.mxu0
  %v3490 = vadd.f32 %v3247, %v3489
  %v3491 = vpop.f32.mrf.mxu0
  %3492 = vmatprep.mubr.bf16.mxu0 %v3361
  %3493 = vmatmul.mubr.bf16.gmra.mxu0 %v3360
  %v3494 = vpop.f32.mrf.mxu0
  %v3495 = vadd.f32 %v3252, %v3494
  %v3496 = vpop.f32.mrf.mxu0
  %v3497 = vpop.f32.mrf.mxu0
  %v3498 = vadd.f32 %v3257, %v3497
  %v3499 = vpop.f32.mrf.mxu0
  %3500 = vdwg.mxu0
  %3501 = vmatprep.subr.bf16.mxu0 0
  %3502 = vmatpush1.bf16.msra.mxu0 0
  %3503 = vmatprep.subr.bf16.mxu0 0
  %3504 = vmatpush1.bf16.msra.mxu0 0
  %3505 = vmatprep.subr.bf16.mxu0 0
  %3506 = vmatpush1.bf16.msra.mxu0 0
  %3507 = vmatprep.subr.bf16.mxu0 0
  %3508 = vmatpush1.bf16.msra.mxu0 0
  %3509 = vmatprep.subr.bf16.mxu0 0
  %3510 = vmatpush1.bf16.msra.mxu0 0
  %3511 = vmatprep.subr.bf16.mxu0 0
  %3512 = vmatpush1.bf16.msra.mxu0 0
  %3513 = vmatprep.subr.bf16.mxu0 0
  %3514 = vmatpush1.bf16.msra.mxu0 %v3178
  %3515 = vmatprep.subr.bf16.mxu0 0
  %3516 = vmatpush1.bf16.msra.mxu0 %v3177
  %3517 = vmatprep.subr.bf16.mxu0 0
  %3518 = vmatpush2.bf16.msra.mxu0 0
  %3519 = vmatprep.subr.bf16.mxu0 0
  %3520 = vmatpush2.bf16.msra.mxu0 0
  %3521 = vmatprep.subr.bf16.mxu0 0
  %3522 = vmatpush2.bf16.msra.mxu0 0
  %3523 = vmatprep.subr.bf16.mxu0 0
  %3524 = vmatpush2.bf16.msra.mxu0 0
  %3525 = vmatprep.subr.bf16.mxu0 0
  %3526 = vmatpush2.bf16.msra.mxu0 0
  %3527 = vmatprep.subr.bf16.mxu0 0
  %3528 = vmatpush2.bf16.msra.mxu0 0
  %3529 = vmatprep.subr.bf16.mxu0 0
  %3530 = vmatpush2.bf16.msra.mxu0 0
  %3531 = vmatprep.subr.bf16.mxu0 0
  %3532 = vmatpush2.bf16.msra.mxu0 0
  %3533 = vmatprep.mubr.bf16.mxu0 0
  %3534 = vmatmul.mubr.bf16.gmra.mxu0 %v3381
  %v3535 = vpop.f32.mrf.mxu0
  %v3536 = vadd.f32 %v3439, %v3535
  %v3537 = vpop.f32.mrf.mxu0
  %v3538 = vpop.f32.mrf.mxu0
  %v3539 = vadd.f32 %v3442, %v3538
  %v3540 = vpop.f32.mrf.mxu0
  %3541 = vmatprep.mubr.bf16.mxu0 0
  %3542 = vmatmul.mubr.bf16.gmra.mxu0 %v3384
  %v3543 = vpop.f32.mrf.mxu0
  %v3544 = vadd.f32 %v3447, %v3543
  %v3545 = vpop.f32.mrf.mxu0
  %v3546 = vpop.f32.mrf.mxu0
  %v3547 = vadd.f32 %v3450, %v3546
  %v3548 = vpop.f32.mrf.mxu0
  %3549 = vmatprep.mubr.bf16.mxu0 0
  %3550 = vmatmul.mubr.bf16.gmra.mxu0 %v3387
  %v3551 = vpop.f32.mrf.mxu0
  %v3552 = vadd.f32 %v3455, %v3551
  %v3553 = vpop.f32.mrf.mxu0
  %v3554 = vpop.f32.mrf.mxu0
  %v3555 = vadd.f32 %v3458, %v3554
  %v3556 = vpop.f32.mrf.mxu0
  %3557 = vmatprep.mubr.bf16.mxu0 0
  %3558 = vmatmul.mubr.bf16.gmra.mxu0 %v3390
  %v3559 = vpop.f32.mrf.mxu0
  %v3560 = vadd.f32 %v3463, %v3559
  %v3561 = vpop.f32.mrf.mxu0
  %v3562 = vpop.f32.mrf.mxu0
  %v3563 = vadd.f32 %v3466, %v3562
  %v3564 = vpop.f32.mrf.mxu0
  %3565 = vmatprep.mubr.bf16.mxu0 0
  %3566 = vmatmul.mubr.bf16.gmra.mxu0 %v3393
  %v3567 = vpop.f32.mrf.mxu0
  %v3568 = vadd.f32 %v3471, %v3567
  %v3569 = vpop.f32.mrf.mxu0
  %v3570 = vpop.f32.mrf.mxu0
  %v3571 = vadd.f32 %v3474, %v3570
  %v3572 = vpop.f32.mrf.mxu0
  %3573 = vmatprep.mubr.bf16.mxu0 0
  %3574 = vmatmul.mubr.bf16.gmra.mxu0 %v3396
  %v3575 = vpop.f32.mrf.mxu0
  %v3576 = vadd.f32 %v3479, %v3575
  %v3577 = vpop.f32.mrf.mxu0
  %v3578 = vpop.f32.mrf.mxu0
  %v3579 = vadd.f32 %v3482, %v3578
  %v3580 = vpop.f32.mrf.mxu0
  %3581 = vmatprep.mubr.bf16.mxu0 0
  %3582 = vmatmul.mubr.bf16.gmra.mxu0 %v3399
  %v3583 = vpop.f32.mrf.mxu0
  %v3584 = vadd.f32 %v3487, %v3583
  %v3585 = vpop.f32.mrf.mxu0
  %v3586 = vpop.f32.mrf.mxu0
  %v3587 = vadd.f32 %v3490, %v3586
  %v3588 = vpop.f32.mrf.mxu0
  %3589 = vmatprep.mubr.bf16.mxu0 0
  %3590 = vmatmul.mubr.bf16.gmra.mxu0 %v3402
  %v3591 = vpop.f32.mrf.mxu0
  %v3592 = vadd.f32 %v3495, %v3591
  %v3593 = vpop.f32.mrf.mxu0
  %v3594 = vpop.f32.mrf.mxu0
  %v3595 = vadd.f32 %v3498, %v3594
  %v3596 = vpop.f32.mrf.mxu0
  %3597 = vdwg.mxu0
  %v3598 = vmax.f32 %v3536, 0.0
  %v3599 = vmax.f32 %v3539, 0.0
  %v3600 = vmax.f32 %v3544, 0.0
  %v3601 = vmax.f32 %v3547, 0.0
  %v3602 = vmax.f32 %v3552, 0.0
  %v3603 = vmax.f32 %v3555, 0.0
  %v3604 = vmax.f32 %v3560, 0.0
  %v3605 = vmax.f32 %v3563, 0.0
  %v3606 = vmax.f32 %v3568, 0.0
  %v3607 = vmax.f32 %v3571, 0.0
  %v3608 = vmax.f32 %v3576, 0.0
  %v3609 = vmax.f32 %v3579, 0.0
  %v3610 = vmax.f32 %v3584, 0.0
  %v3611 = vmax.f32 %v3587, 0.0
  %v3612 = vmax.f32 %v3592, 0.0
  %v3613 = vmax.f32 %v3595, 0.0
  %v3614 = vld [vmem:[%s10] sm:$0xff]
  %v3615 = vld [vmem:[%s10 + $0x8] sm:$0xff]
  %v3616 = vld [vmem:[%s10 + $0x10] sm:$0xff]
  %v3617 = vld [vmem:[%s10 + $0x18] sm:$0xff]
  %v3618 = vld [vmem:[%s10 + $0x20] sm:$0xff]
  %v3619 = vld [vmem:[%s10 + $0x28] sm:$0xff]
  %v3620 = vld [vmem:[%s10 + $0x30] sm:$0xff]
  %v3621 = vld [vmem:[%s10 + $0x38] sm:$0xff]
  %v3622 = vld [vmem:[%s10 + $0x40] sm:$0xff]
  %v3623 = vld [vmem:[%s10 + $0x48] sm:$0xff]
  %v3624 = vld [vmem:[%s10 + $0x50] sm:$0xff]
  %v3625 = vld [vmem:[%s10 + $0x58] sm:$0xff]
  %v3626 = vld [vmem:[%s10 + $0x60] sm:$0xff]
  %v3627 = vld [vmem:[%s10 + $0x68] sm:$0xff]
  %v3628 = vld [vmem:[%s10 + $0x70] sm:$0xff]
  %v3629 = vld [vmem:[%s10 + $0x78] sm:$0xff]
  %v3630 = vpack.c.bf16 %v3599, %v3598
  %v3631 = vpack.c.bf16 %v3601, %v3600
  %v3632 = vpack.c.bf16 %v3603, %v3602
  %v3633 = vpack.c.bf16 %v3605, %v3604
  %v3634 = vpack.c.bf16 %v3607, %v3606
  %v3635 = vpack.c.bf16 %v3609, %v3608
  %v3636 = vpack.c.bf16 %v3611, %v3610
  %v3637 = vpack.c.bf16 %v3613, %v3612
  %v3654 = vunpack.c.l.b16 %v3614
  %v3655 = vunpack.c.l.b16 %v3615
  %v3656 = vunpack.c.l.b16 %v3616
  %v3657 = vunpack.c.l.b16 %v3617
  %v3658 = vunpack.c.l.b16 %v3618
  %v3659 = vunpack.c.l.b16 %v3619
  %v3660 = vunpack.c.l.b16 %v3620
  %v3661 = vunpack.c.l.b16 %v3621
  %v3662 = vunpack.c.l.b16 %v3622
  %v3663 = vunpack.c.l.b16 %v3623
  %v3664 = vunpack.c.l.b16 %v3624
  %v3665 = vunpack.c.l.b16 %v3625
  %v3666 = vunpack.c.l.b16 %v3626
  %v3667 = vunpack.c.l.b16 %v3627
  %v3668 = vunpack.c.l.b16 %v3628
  %v3669 = vunpack.c.l.b16 %v3629
  %v3670 = vpack.c.b16 %v3655, %v3654
  %v3671 = vpack.c.b16 %v3657, %v3656
  %v3672 = vpack.c.b16 %v3659, %v3658
  %v3673 = vpack.c.b16 %v3661, %v3660
  %v3674 = vpack.c.b16 %v3663, %v3662
  %v3675 = vpack.c.b16 %v3665, %v3664
  %v3676 = vpack.c.b16 %v3667, %v3666
  %v3677 = vpack.c.b16 %v3669, %v3668
  %3686 = vmatprep.subr.bf16.mxu0 0
  %3687 = vmatpush1.bf16.msra.mxu0 %v3637
  %3688 = vmatprep.subr.bf16.mxu0 0
  %3689 = vmatpush1.bf16.msra.mxu0 %v3636
  %3690 = vmatprep.subr.bf16.mxu0 0
  %3691 = vmatpush1.bf16.msra.mxu0 %v3635
  %3692 = vmatprep.subr.bf16.mxu0 0
  %3693 = vmatpush1.bf16.msra.mxu0 %v3634
  %3694 = vmatprep.subr.bf16.mxu0 0
  %3695 = vmatpush1.bf16.msra.mxu0 %v3633
  %3696 = vmatprep.subr.bf16.mxu0 0
  %3697 = vmatpush1.bf16.msra.mxu0 %v3632
  %3698 = vmatprep.subr.bf16.mxu0 0
  %3699 = vmatpush1.bf16.msra.mxu0 %v3631
  %3700 = vmatprep.subr.bf16.mxu0 0
  %3701 = vmatpush1.bf16.msra.mxu0 %v3630
  %3702 = vmatprep.subr.bf16.mxu0 0
  %3703 = vmatpush2.bf16.msra.mxu0 0
  %3704 = vmatprep.subr.bf16.mxu0 0
  %3705 = vmatpush2.bf16.msra.mxu0 0
  %3706 = vmatprep.subr.bf16.mxu0 0
  %3707 = vmatpush2.bf16.msra.mxu0 0
  %3708 = vmatprep.subr.bf16.mxu0 0
  %3709 = vmatpush2.bf16.msra.mxu0 0
  %3710 = vmatprep.subr.bf16.mxu0 0
  %3711 = vmatpush2.bf16.msra.mxu0 0
  %3712 = vmatprep.subr.bf16.mxu0 0
  %3713 = vmatpush2.bf16.msra.mxu0 0
  %3714 = vmatprep.subr.bf16.mxu0 0
  %3715 = vmatpush2.bf16.msra.mxu0 0
  %3716 = vmatprep.subr.bf16.mxu0 0
  %3717 = vmatpush2.bf16.msra.mxu0 0
  %3718 = vmatprep.mubr.bf16.mxu0 0
  %3719 = vmatmul.mubr.bf16.gmra.mxu0 %v3670
  %v3720 = vpop.f32.mrf.mxu0
  %v3721 = vadd.f32 0.0, %v3720
  %v3722 = vpop.f32.mrf.mxu0
  %v3723 = vpop.f32.mrf.mxu0
  %v3724 = vadd.f32 0.0, %v3723
  %v3725 = vpop.f32.mrf.mxu0
  %3726 = vmatprep.mubr.bf16.mxu0 0
  %3727 = vmatmul.mubr.bf16.gmra.mxu0 %v3671
  %v3728 = vpop.f32.mrf.mxu0
  %v3729 = vadd.f32 0.0, %v3728
  %v3730 = vpop.f32.mrf.mxu0
  %v3731 = vpop.f32.mrf.mxu0
  %v3732 = vadd.f32 0.0, %v3731
  %v3733 = vpop.f32.mrf.mxu0
  %3734 = vmatprep.mubr.bf16.mxu0 0
  %3735 = vmatmul.mubr.bf16.gmra.mxu0 %v3672
  %v3736 = vpop.f32.mrf.mxu0
  %v3737 = vadd.f32 0.0, %v3736
  %v3738 = vpop.f32.mrf.mxu0
  %v3739 = vpop.f32.mrf.mxu0
  %v3740 = vadd.f32 0.0, %v3739
  %v3741 = vpop.f32.mrf.mxu0
  %3742 = vmatprep.mubr.bf16.mxu0 0
  %3743 = vmatmul.mubr.bf16.gmra.mxu0 %v3673
  %v3744 = vpop.f32.mrf.mxu0
  %v3745 = vadd.f32 0.0, %v3744
  %v3746 = vpop.f32.mrf.mxu0
  %v3747 = vpop.f32.mrf.mxu0
  %v3748 = vadd.f32 0.0, %v3747
  %v3749 = vpop.f32.mrf.mxu0
  %3750 = vmatprep.mubr.bf16.mxu0 0
  %3751 = vmatmul.mubr.bf16.gmra.mxu0 %v3674
  %v3752 = vpop.f32.mrf.mxu0
  %v3753 = vadd.f32 0.0, %v3752
  %v3754 = vpop.f32.mrf.mxu0
  %v3755 = vpop.f32.mrf.mxu0
  %v3756 = vadd.f32 0.0, %v3755
  %v3757 = vpop.f32.mrf.mxu0
  %3758 = vmatprep.mubr.bf16.mxu0 0
  %3759 = vmatmul.mubr.bf16.gmra.mxu0 %v3675
  %v3760 = vpop.f32.mrf.mxu0
  %v3761 = vadd.f32 0.0, %v3760
  %v3762 = vpop.f32.mrf.mxu0
  %v3763 = vpop.f32.mrf.mxu0
  %v3764 = vadd.f32 0.0, %v3763
  %v3765 = vpop.f32.mrf.mxu0
  %3766 = vmatprep.mubr.bf16.mxu0 0
  %3767 = vmatmul.mubr.bf16.gmra.mxu0 %v3676
  %v3768 = vpop.f32.mrf.mxu0
  %v3769 = vadd.f32 0.0, %v3768
  %v3770 = vpop.f32.mrf.mxu0
  %v3771 = vpop.f32.mrf.mxu0
  %v3772 = vadd.f32 0.0, %v3771
  %v3773 = vpop.f32.mrf.mxu0
  %3774 = vmatprep.mubr.bf16.mxu0 0
  %3775 = vmatmul.mubr.bf16.gmra.mxu0 %v3677
  %v3776 = vpop.f32.mrf.mxu0
  %v3777 = vadd.f32 0.0, %v3776
  %v3778 = vpop.f32.mrf.mxu0
  %v3779 = vpop.f32.mrf.mxu0
  %v3780 = vadd.f32 0.0, %v3779
  %v3781 = vpop.f32.mrf.mxu0
  %3782 = vdwg.mxu0
  %v3783 = vunpack.c.h.b16 %v3614
  %v3784 = vunpack.c.h.b16 %v3615
  %v3785 = vunpack.c.h.b16 %v3616
  %v3786 = vunpack.c.h.b16 %v3617
  %v3787 = vunpack.c.h.b16 %v3618
  %v3788 = vunpack.c.h.b16 %v3619
  %v3789 = vunpack.c.h.b16 %v3620
  %v3790 = vunpack.c.h.b16 %v3621
  %v3791 = vunpack.c.h.b16 %v3622
  %v3792 = vunpack.c.h.b16 %v3623
  %v3793 = vunpack.c.h.b16 %v3624
  %v3794 = vunpack.c.h.b16 %v3625
  %v3795 = vunpack.c.h.b16 %v3626
  %v3796 = vunpack.c.h.b16 %v3627
  %v3797 = vunpack.c.h.b16 %v3628
  %v3798 = vunpack.c.h.b16 %v3629
  %v3799 = vpack.c.b16 %v3784, %v3783
  %v3800 = vpack.c.b16 %v3786, %v3785
  %v3801 = vpack.c.b16 %v3788, %v3787
  %v3802 = vpack.c.b16 %v3790, %v3789
  %v3803 = vpack.c.b16 %v3792, %v3791
  %v3804 = vpack.c.b16 %v3794, %v3793
  %v3805 = vpack.c.b16 %v3796, %v3795
  %v3806 = vpack.c.b16 %v3798, %v3797
  %3815 = vmatprep.subr.bf16.mxu0 0
  %3816 = vmatpush1.bf16.msra.mxu0 %v3637
  %3817 = vmatprep.subr.bf16.mxu0 0
  %3818 = vmatpush1.bf16.msra.mxu0 %v3636
  %3819 = vmatprep.subr.bf16.mxu0 0
  %3820 = vmatpush1.bf16.msra.mxu0 %v3635
  %3821 = vmatprep.subr.bf16.mxu0 0
  %3822 = vmatpush1.bf16.msra.mxu0 %v3634
  %3823 = vmatprep.subr.bf16.mxu0 0
  %3824 = vmatpush1.bf16.msra.mxu0 %v3633
  %3825 = vmatprep.subr.bf16.mxu0 0
  %3826 = vmatpush1.bf16.msra.mxu0 %v3632
  %3827 = vmatprep.subr.bf16.mxu0 0
  %3828 = vmatpush1.bf16.msra.mxu0 %v3631
  %3829 = vmatprep.subr.bf16.mxu0 0
  %3830 = vmatpush1.bf16.msra.mxu0 %v3630
  %3831 = vmatprep.subr.bf16.mxu0 0
  %3832 = vmatpush2.bf16.msra.mxu0 0
  %3833 = vmatprep.subr.bf16.mxu0 0
  %3834 = vmatpush2.bf16.msra.mxu0 0
  %3835 = vmatprep.subr.bf16.mxu0 0
  %3836 = vmatpush2.bf16.msra.mxu0 0
  %3837 = vmatprep.subr.bf16.mxu0 0
  %3838 = vmatpush2.bf16.msra.mxu0 0
  %3839 = vmatprep.subr.bf16.mxu0 0
  %3840 = vmatpush2.bf16.msra.mxu0 0
  %3841 = vmatprep.subr.bf16.mxu0 0
  %3842 = vmatpush2.bf16.msra.mxu0 0
  %3843 = vmatprep.subr.bf16.mxu0 0
  %3844 = vmatpush2.bf16.msra.mxu0 0
  %3845 = vmatprep.subr.bf16.mxu0 0
  %3846 = vmatpush2.bf16.msra.mxu0 0
  %3847 = vmatprep.mubr.bf16.mxu0 0
  %3848 = vmatmul.mubr.bf16.gmra.mxu0 %v3799
  %v3849 = vpop.f32.mrf.mxu0
  %v3850 = vadd.f32 0.0, %v3849
  %v3851 = vpop.f32.mrf.mxu0
  %v3852 = vpop.f32.mrf.mxu0
  %v3853 = vadd.f32 0.0, %v3852
  %v3854 = vpop.f32.mrf.mxu0
  %3855 = vmatprep.mubr.bf16.mxu0 0
  %3856 = vmatmul.mubr.bf16.gmra.mxu0 %v3800
  %v3857 = vpop.f32.mrf.mxu0
  %v3858 = vadd.f32 0.0, %v3857
  %v3859 = vpop.f32.mrf.mxu0
  %v3860 = vpop.f32.mrf.mxu0
  %v3861 = vadd.f32 0.0, %v3860
  %v3862 = vpop.f32.mrf.mxu0
  %3863 = vmatprep.mubr.bf16.mxu0 0
  %3864 = vmatmul.mubr.bf16.gmra.mxu0 %v3801
  %v3865 = vpop.f32.mrf.mxu0
  %v3866 = vadd.f32 0.0, %v3865
  %v3867 = vpop.f32.mrf.mxu0
  %v3868 = vpop.f32.mrf.mxu0
  %v3869 = vadd.f32 0.0, %v3868
  %v3870 = vpop.f32.mrf.mxu0
  %3871 = vmatprep.mubr.bf16.mxu0 0
  %3872 = vmatmul.mubr.bf16.gmra.mxu0 %v3802
  %v3873 = vpop.f32.mrf.mxu0
  %v3874 = vadd.f32 0.0, %v3873
  %v3875 = vpop.f32.mrf.mxu0
  %v3876 = vpop.f32.mrf.mxu0
  %v3877 = vadd.f32 0.0, %v3876
  %v3878 = vpop.f32.mrf.mxu0
  %3879 = vmatprep.mubr.bf16.mxu0 0
  %3880 = vmatmul.mubr.bf16.gmra.mxu0 %v3803
  %v3881 = vpop.f32.mrf.mxu0
  %v3882 = vadd.f32 0.0, %v3881
  %v3883 = vpop.f32.mrf.mxu0
  %v3884 = vpop.f32.mrf.mxu0
  %v3885 = vadd.f32 0.0, %v3884
  %v3886 = vpop.f32.mrf.mxu0
  %3887 = vmatprep.mubr.bf16.mxu0 0
  %3888 = vmatmul.mubr.bf16.gmra.mxu0 %v3804
  %v3889 = vpop.f32.mrf.mxu0
  %v3890 = vadd.f32 0.0, %v3889
  %v3891 = vpop.f32.mrf.mxu0
  %v3892 = vpop.f32.mrf.mxu0
  %v3893 = vadd.f32 0.0, %v3892
  %v3894 = vpop.f32.mrf.mxu0
  %3895 = vmatprep.mubr.bf16.mxu0 0
  %3896 = vmatmul.mubr.bf16.gmra.mxu0 %v3805
  %v3897 = vpop.f32.mrf.mxu0
  %v3898 = vadd.f32 0.0, %v3897
  %v3899 = vpop.f32.mrf.mxu0
  %v3900 = vpop.f32.mrf.mxu0
  %v3901 = vadd.f32 0.0, %v3900
  %v3902 = vpop.f32.mrf.mxu0
  %3903 = vmatprep.mubr.bf16.mxu0 0
  %3904 = vmatmul.mubr.bf16.gmra.mxu0 %v3806
  %v3905 = vpop.f32.mrf.mxu0
  %v3906 = vadd.f32 0.0, %v3905
  %v3907 = vpop.f32.mrf.mxu0
  %v3908 = vpop.f32.mrf.mxu0
  %v3909 = vadd.f32 0.0, %v3908
  %v3910 = vpop.f32.mrf.mxu0
  %3911 = vdwg.mxu0
  %v3912 = vmax.f32 %v3721, %v3850
  %v3913 = vmax.f32 %v3724, %v3853
  %v3914 = vmax.f32 %v3729, %v3858
  %v3915 = vmax.f32 %v3732, %v3861
  %v3916 = vmax.f32 %v3737, %v3866
  %v3917 = vmax.f32 %v3740, %v3869
  %v3918 = vmax.f32 %v3745, %v3874
  %v3919 = vmax.f32 %v3748, %v3877
  %v3920 = vmax.f32 %v3753, %v3882
  %v3921 = vmax.f32 %v3756, %v3885
  %v3922 = vmax.f32 %v3761, %v3890
  %v3923 = vmax.f32 %v3764, %v3893
  %v3924 = vmax.f32 %v3769, %v3898
  %v3925 = vmax.f32 %v3772, %v3901
  %v3926 = vmax.f32 %v3777, %v3906
  %v3927 = vmax.f32 %v3780, %v3909
  %v3928 = vld [vmem:[%s14] sm:$0xf]
  %v3929 = vld [vmem:[%s14 + $0x4] sm:$0xf]
  %v3930 = vld [vmem:[%s14 + $0x8] sm:$0xf]
  %v3931 = vld [vmem:[%s14 + $0xc] sm:$0xf]
  %v3932 = vld [vmem:[%s14 + $0x10] sm:$0x1]
  %v3933 = vpack.c.bf16 %v3913, %v3912
  %v3934 = vpack.c.bf16 %v3915, %v3914
  %v3935 = vpack.c.bf16 %v3917, %v3916
  %v3936 = vpack.c.bf16 %v3919, %v3918
  %v3937 = vpack.c.bf16 %v3921, %v3920
  %v3938 = vpack.c.bf16 %v3923, %v3922
  %v3939 = vpack.c.bf16 %v3925, %v3924
  %v3940 = vpack.c.bf16 %v3927, %v3926
  %v3946 = vunpack.c.l.b16 %v3928
  %v3947 = vunpack.c.l.b16 %v3929
  %v3948 = vunpack.c.l.b16 %v3930
  %v3949 = vunpack.c.l.b16 %v3931
  %v3950 = vunpack.c.l.b16 %v3932
  %v3951 = vpack.c.b16 %v3947, %v3946
  %v3952 = vpack.c.b16 %v3949, %v3948
  %v3953 = vpack.c.b16 %v3950, %v3950
  %vm3956 = vcmask 277504
  %v3958 = vsel %vm3956, %v3933, 0
  %v3961 = vsel %vm3956, %v3934, 0
  %v3964 = vsel %vm3956, %v3935, 0
  %v3967 = vsel %vm3956, %v3936, 0
  %v3970 = vsel %vm3956, %v3937, 0
  %v3973 = vsel %vm3956, %v3938, 0
  %v3976 = vsel %vm3956, %v3939, 0
  %v3979 = vsel %vm3956, %v3940, 0
  %vm3981 = vcmask 1040384
  %v3983 = vsel %vm3981, %v3953, 0
  %3985 = vmatprep.subr.bf16.mxu0 0
  %3986 = vmatpush1.bf16.msra.mxu0 0
  %3987 = vmatprep.subr.bf16.mxu0 0
  %3988 = vmatpush1.bf16.msra.mxu0 0
  %3989 = vmatprep.subr.bf16.mxu0 0
  %3990 = vmatpush1.bf16.msra.mxu0 0
  %3991 = vmatprep.subr.bf16.mxu0 0
  %3992 = vmatpush1.bf16.msra.mxu0 0
  %3993 = vmatprep.subr.bf16.mxu0 0
  %3994 = vmatpush1.bf16.msra.mxu0 0
  %3995 = vmatprep.subr.bf16.mxu0 0
  %3996 = vmatpush1.bf16.msra.mxu0 %v3983
  %3997 = vmatprep.subr.bf16.mxu0 0
  %3998 = vmatpush1.bf16.msra.mxu0 %v3952
  %3999 = vmatprep.subr.bf16.mxu0 0
  %4000 = vmatpush1.bf16.msra.mxu0 %v3951
  %4001 = vmatprep.subr.bf16.mxu0 0
  %4002 = vmatpush2.bf16.msra.mxu0 0
  %4003 = vmatprep.subr.bf16.mxu0 0
  %4004 = vmatpush2.bf16.msra.mxu0 0
  %4005 = vmatprep.subr.bf16.mxu0 0
  %4006 = vmatpush2.bf16.msra.mxu0 0
  %4007 = vmatprep.subr.bf16.mxu0 0
  %4008 = vmatpush2.bf16.msra.mxu0 0
  %4009 = vmatprep.subr.bf16.mxu0 0
  %4010 = vmatpush2.bf16.msra.mxu0 0
  %4011 = vmatprep.subr.bf16.mxu0 0
  %4012 = vmatpush2.bf16.msra.mxu0 0
  %4013 = vmatprep.subr.bf16.mxu0 0
  %4014 = vmatpush2.bf16.msra.mxu0 0
  %4015 = vmatprep.subr.bf16.mxu0 0
  %4016 = vmatpush2.bf16.msra.mxu0 0
  %4017 = vmatprep.mubr.bf16.mxu0 0
  %4018 = vmatmul.mubr.bf16.gmra.mxu0 %v3958
  %v4019 = vpop.f32.mrf.mxu0
  %v4020 = vadd.f32 0.0, %v4019
  %v4021 = vpop.f32.mrf.mxu0
  %v4022 = vpop.f32.mrf.mxu0
  %v4023 = vadd.f32 0.0, %v4022
  %v4024 = vpop.f32.mrf.mxu0
  %4025 = vmatprep.mubr.bf16.mxu0 0
  %4026 = vmatmul.mubr.bf16.gmra.mxu0 %v3961
  %v4027 = vpop.f32.mrf.mxu0
  %v4028 = vadd.f32 0.0, %v4027
  %v4029 = vpop.f32.mrf.mxu0
  %v4030 = vpop.f32.mrf.mxu0
  %v4031 = vadd.f32 0.0, %v4030
  %v4032 = vpop.f32.mrf.mxu0
  %4033 = vmatprep.mubr.bf16.mxu0 0
  %4034 = vmatmul.mubr.bf16.gmra.mxu0 %v3964
  %v4035 = vpop.f32.mrf.mxu0
  %v4036 = vadd.f32 0.0, %v4035
  %v4037 = vpop.f32.mrf.mxu0
  %v4038 = vpop.f32.mrf.mxu0
  %v4039 = vadd.f32 0.0, %v4038
  %v4040 = vpop.f32.mrf.mxu0
  %4041 = vmatprep.mubr.bf16.mxu0 0
  %4042 = vmatmul.mubr.bf16.gmra.mxu0 %v3967
  %v4043 = vpop.f32.mrf.mxu0
  %v4044 = vadd.f32 0.0, %v4043
  %v4045 = vpop.f32.mrf.mxu0
  %v4046 = vpop.f32.mrf.mxu0
  %v4047 = vadd.f32 0.0, %v4046
  %v4048 = vpop.f32.mrf.mxu0
  %4049 = vmatprep.mubr.bf16.mxu0 0
  %4050 = vmatmul.mubr.bf16.gmra.mxu0 %v3970
  %v4051 = vpop.f32.mrf.mxu0
  %v4052 = vadd.f32 0.0, %v4051
  %v4053 = vpop.f32.mrf.mxu0
  %v4054 = vpop.f32.mrf.mxu0
  %v4055 = vadd.f32 0.0, %v4054
  %v4056 = vpop.f32.mrf.mxu0
  %4057 = vmatprep.mubr.bf16.mxu0 0
  %4058 = vmatmul.mubr.bf16.gmra.mxu0 %v3973
  %v4059 = vpop.f32.mrf.mxu0
  %v4060 = vadd.f32 0.0, %v4059
  %v4061 = vpop.f32.mrf.mxu0
  %v4062 = vpop.f32.mrf.mxu0
  %v4063 = vadd.f32 0.0, %v4062
  %v4064 = vpop.f32.mrf.mxu0
  %4065 = vmatprep.mubr.bf16.mxu0 0
  %4066 = vmatmul.mubr.bf16.gmra.mxu0 %v3976
  %v4067 = vpop.f32.mrf.mxu0
  %v4068 = vadd.f32 0.0, %v4067
  %v4069 = vpop.f32.mrf.mxu0
  %v4070 = vpop.f32.mrf.mxu0
  %v4071 = vadd.f32 0.0, %v4070
  %v4072 = vpop.f32.mrf.mxu0
  %4073 = vmatprep.mubr.bf16.mxu0 0
  %4074 = vmatmul.mubr.bf16.gmra.mxu0 %v3979
  %v4075 = vpop.f32.mrf.mxu0
  %v4076 = vadd.f32 0.0, %v4075
  %v4077 = vpop.f32.mrf.mxu0
  %v4078 = vpop.f32.mrf.mxu0
  %v4079 = vadd.f32 0.0, %v4078
  %v4080 = vpop.f32.mrf.mxu0
  %4081 = vdwg.mxu0
  %4082 = vrot.lane.b32.xlu0 %v3951, 104
  %v4083 = vpop.permute.xlu0 %4082
  %4084 = vrot.lane.b32.xlu0 %v3952, 104
  %v4085 = vpop.permute.xlu0 %4084
  %4086 = vrot.lane.b32.xlu0 %v3953, 104
  %v4087 = vpop.permute.xlu0 %4086
  %v4091 = vsel %vm3981, %v4087, 0
  %4093 = vmatprep.subr.bf16.mxu0 0
  %4094 = vmatpush1.bf16.msra.mxu0 0
  %4095 = vmatprep.subr.bf16.mxu0 0
  %4096 = vmatpush1.bf16.msra.mxu0 0
  %4097 = vmatprep.subr.bf16.mxu0 0
  %4098 = vmatpush1.bf16.msra.mxu0 0
  %4099 = vmatprep.subr.bf16.mxu0 0
  %4100 = vmatpush1.bf16.msra.mxu0 0
  %4101 = vmatprep.subr.bf16.mxu0 0
  %4102 = vmatpush1.bf16.msra.mxu0 0
  %4103 = vmatprep.subr.bf16.mxu0 0
  %4104 = vmatpush1.bf16.msra.mxu0 %v4091
  %4105 = vmatprep.subr.bf16.mxu0 0
  %4106 = vmatpush1.bf16.msra.mxu0 %v4085
  %4107 = vmatprep.subr.bf16.mxu0 0
  %4108 = vmatpush1.bf16.msra.mxu0 %v4083
  %4109 = vmatprep.subr.bf16.mxu0 0
  %4110 = vmatpush2.bf16.msra.mxu0 0
  %4111 = vmatprep.subr.bf16.mxu0 0
  %4112 = vmatpush2.bf16.msra.mxu0 0
  %4113 = vmatprep.subr.bf16.mxu0 0
  %4114 = vmatpush2.bf16.msra.mxu0 0
  %4115 = vmatprep.subr.bf16.mxu0 0
  %4116 = vmatpush2.bf16.msra.mxu0 0
  %4117 = vmatprep.subr.bf16.mxu0 0
  %4118 = vmatpush2.bf16.msra.mxu0 0
  %4119 = vmatprep.subr.bf16.mxu0 0
  %4120 = vmatpush2.bf16.msra.mxu0 0
  %4121 = vmatprep.subr.bf16.mxu0 0
  %4122 = vmatpush2.bf16.msra.mxu0 0
  %4123 = vmatprep.subr.bf16.mxu0 0
  %4124 = vmatpush2.bf16.msra.mxu0 0
  %4125 = vmatprep.mubr.bf16.mxu0 0
  %4126 = vmatmul.mubr.bf16.gmra.mxu0 %v3958
  %v4127 = vpop.f32.mrf.mxu0
  %v4128 = vadd.f32 0.0, %v4127
  %v4129 = vpop.f32.mrf.mxu0
  %v4130 = vpop.f32.mrf.mxu0
  %v4131 = vadd.f32 0.0, %v4130
  %v4132 = vpop.f32.mrf.mxu0
  %4133 = vmatprep.mubr.bf16.mxu0 0
  %4134 = vmatmul.mubr.bf16.gmra.mxu0 %v3961
  %v4135 = vpop.f32.mrf.mxu0
  %v4136 = vadd.f32 0.0, %v4135
  %v4137 = vpop.f32.mrf.mxu0
  %v4138 = vpop.f32.mrf.mxu0
  %v4139 = vadd.f32 0.0, %v4138
  %v4140 = vpop.f32.mrf.mxu0
  %4141 = vmatprep.mubr.bf16.mxu0 0
  %4142 = vmatmul.mubr.bf16.gmra.mxu0 %v3964
  %v4143 = vpop.f32.mrf.mxu0
  %v4144 = vadd.f32 0.0, %v4143
  %v4145 = vpop.f32.mrf.mxu0
  %v4146 = vpop.f32.mrf.mxu0
  %v4147 = vadd.f32 0.0, %v4146
  %v4148 = vpop.f32.mrf.mxu0
  %4149 = vmatprep.mubr.bf16.mxu0 0
  %4150 = vmatmul.mubr.bf16.gmra.mxu0 %v3967
  %v4151 = vpop.f32.mrf.mxu0
  %v4152 = vadd.f32 0.0, %v4151
  %v4153 = vpop.f32.mrf.mxu0
  %v4154 = vpop.f32.mrf.mxu0
  %v4155 = vadd.f32 0.0, %v4154
  %v4156 = vpop.f32.mrf.mxu0
  %4157 = vmatprep.mubr.bf16.mxu0 0
  %4158 = vmatmul.mubr.bf16.gmra.mxu0 %v3970
  %v4159 = vpop.f32.mrf.mxu0
  %v4160 = vadd.f32 0.0, %v4159
  %v4161 = vpop.f32.mrf.mxu0
  %v4162 = vpop.f32.mrf.mxu0
  %v4163 = vadd.f32 0.0, %v4162
  %v4164 = vpop.f32.mrf.mxu0
  %4165 = vmatprep.mubr.bf16.mxu0 0
  %4166 = vmatmul.mubr.bf16.gmra.mxu0 %v3973
  %v4167 = vpop.f32.mrf.mxu0
  %v4168 = vadd.f32 0.0, %v4167
  %v4169 = vpop.f32.mrf.mxu0
  %v4170 = vpop.f32.mrf.mxu0
  %v4171 = vadd.f32 0.0, %v4170
  %v4172 = vpop.f32.mrf.mxu0
  %4173 = vmatprep.mubr.bf16.mxu0 0
  %4174 = vmatmul.mubr.bf16.gmra.mxu0 %v3976
  %v4175 = vpop.f32.mrf.mxu0
  %v4176 = vadd.f32 0.0, %v4175
  %v4177 = vpop.f32.mrf.mxu0
  %v4178 = vpop.f32.mrf.mxu0
  %v4179 = vadd.f32 0.0, %v4178
  %v4180 = vpop.f32.mrf.mxu0
  %4181 = vmatprep.mubr.bf16.mxu0 0
  %4182 = vmatmul.mubr.bf16.gmra.mxu0 %v3979
  %v4183 = vpop.f32.mrf.mxu0
  %v4184 = vadd.f32 0.0, %v4183
  %v4185 = vpop.f32.mrf.mxu0
  %v4186 = vpop.f32.mrf.mxu0
  %v4187 = vadd.f32 0.0, %v4186
  %v4188 = vpop.f32.mrf.mxu0
  %4189 = vdwg.mxu0
  %v4190 = vmax.f32 %v4020, %v4128
  %v4191 = vmax.f32 %v4023, %v4131
  %v4192 = vmax.f32 %v4028, %v4136
  %v4193 = vmax.f32 %v4031, %v4139
  %v4194 = vmax.f32 %v4036, %v4144
  %v4195 = vmax.f32 %v4039, %v4147
  %v4196 = vmax.f32 %v4044, %v4152
  %v4197 = vmax.f32 %v4047, %v4155
  %v4198 = vmax.f32 %v4052, %v4160
  %v4199 = vmax.f32 %v4055, %v4163
  %v4200 = vmax.f32 %v4060, %v4168
  %v4201 = vmax.f32 %v4063, %v4171
  %v4202 = vmax.f32 %v4068, %v4176
  %v4203 = vmax.f32 %v4071, %v4179
  %v4204 = vmax.f32 %v4076, %v4184
  %v4205 = vmax.f32 %v4079, %v4187
  %4222 = vrot.lane.b32.xlu0 %v4190, 127
  %v4223 = vpop.permute.xlu0 %4222
  %4224 = vrot.lane.b32.xlu0 %v4191, 127
  %v4225 = vpop.permute.xlu0 %4224
  %4226 = vrot.lane.b32.xlu0 %v4192, 127
  %v4227 = vpop.permute.xlu0 %4226
  %4228 = vrot.lane.b32.xlu0 %v4193, 127
  %v4229 = vpop.permute.xlu0 %4228
  %4230 = vrot.lane.b32.xlu0 %v4194, 127
  %v4231 = vpop.permute.xlu0 %4230
  %4232 = vrot.lane.b32.xlu0 %v4195, 127
  %v4233 = vpop.permute.xlu0 %4232
  %4234 = vrot.lane.b32.xlu0 %v4196, 127
  %v4235 = vpop.permute.xlu0 %4234
  %4236 = vrot.lane.b32.xlu0 %v4197, 127
  %v4237 = vpop.permute.xlu0 %4236
  %4238 = vrot.lane.b32.xlu0 %v4198, 127
  %v4239 = vpop.permute.xlu0 %4238
  %4240 = vrot.lane.b32.xlu0 %v4199, 127
  %v4241 = vpop.permute.xlu0 %4240
  %4242 = vrot.lane.b32.xlu0 %v4200, 127
  %v4243 = vpop.permute.xlu0 %4242
  %4244 = vrot.lane.b32.xlu0 %v4201, 127
  %v4245 = vpop.permute.xlu0 %4244
  %4246 = vrot.lane.b32.xlu0 %v4202, 127
  %v4247 = vpop.permute.xlu0 %4246
  %4248 = vrot.lane.b32.xlu0 %v4203, 127
  %v4249 = vpop.permute.xlu0 %4248
  %4250 = vrot.lane.b32.xlu0 %v4204, 127
  %v4251 = vpop.permute.xlu0 %4250
  %4252 = vrot.lane.b32.xlu0 %v4205, 127
  %v4253 = vpop.permute.xlu0 %4252
  %4270 = vrot.lane.b32.xlu0 %v4190, 126
  %v4271 = vpop.permute.xlu0 %4270
  %4272 = vrot.lane.b32.xlu0 %v4191, 126
  %v4273 = vpop.permute.xlu0 %4272
  %4274 = vrot.lane.b32.xlu0 %v4192, 126
  %v4275 = vpop.permute.xlu0 %4274
  %4276 = vrot.lane.b32.xlu0 %v4193, 126
  %v4277 = vpop.permute.xlu0 %4276
  %4278 = vrot.lane.b32.xlu0 %v4194, 126
  %v4279 = vpop.permute.xlu0 %4278
  %4280 = vrot.lane.b32.xlu0 %v4195, 126
  %v4281 = vpop.permute.xlu0 %4280
  %4282 = vrot.lane.b32.xlu0 %v4196, 126
  %v4283 = vpop.permute.xlu0 %4282
  %4284 = vrot.lane.b32.xlu0 %v4197, 126
  %v4285 = vpop.permute.xlu0 %4284
  %4286 = vrot.lane.b32.xlu0 %v4198, 126
  %v4287 = vpop.permute.xlu0 %4286
  %4288 = vrot.lane.b32.xlu0 %v4199, 126
  %v4289 = vpop.permute.xlu0 %4288
  %4290 = vrot.lane.b32.xlu0 %v4200, 126
  %v4291 = vpop.permute.xlu0 %4290
  %4292 = vrot.lane.b32.xlu0 %v4201, 126
  %v4293 = vpop.permute.xlu0 %4292
  %4294 = vrot.lane.b32.xlu0 %v4202, 126
  %v4295 = vpop.permute.xlu0 %4294
  %4296 = vrot.lane.b32.xlu0 %v4203, 126
  %v4297 = vpop.permute.xlu0 %4296
  %4298 = vrot.lane.b32.xlu0 %v4204, 126
  %v4299 = vpop.permute.xlu0 %4298
  %4300 = vrot.lane.b32.xlu0 %v4205, 126
  %v4301 = vpop.permute.xlu0 %4300
  %v4318 = vld [vmem:[%s5] sm:$0xff]
  %v4319 = vld [vmem:[%s5 + $0x8] sm:$0xf]
  %v4320 = vld [vmem:[%s5 + $0xc] sm:$0xff]
  %v4321 = vld [vmem:[%s5 + $0x14] sm:$0xf]
  %v4322 = vld [vmem:[%s5 + $0x18] sm:$0xff]
  %v4323 = vld [vmem:[%s5 + $0x20] sm:$0xf]
  %v4324 = vld [vmem:[%s5 + $0x24] sm:$0xff]
  %v4325 = vld [vmem:[%s5 + $0x2c] sm:$0xf]
  %v4326 = vld [vmem:[%s5 + $0x30] sm:$0xff]
  %v4327 = vld [vmem:[%s5 + $0x38] sm:$0xf]
  %v4328 = vld [vmem:[%s5 + $0x3c] sm:$0xff]
  %v4329 = vld [vmem:[%s5 + $0x44] sm:$0xf]
  %v4330 = vld [vmem:[%s5 + $0x48] sm:$0xff]
  %v4331 = vld [vmem:[%s5 + $0x50] sm:$0xf]
  %v4332 = vld [vmem:[%s5 + $0x54] sm:$0xff]
  %v4333 = vld [vmem:[%s5 + $0x5c] sm:$0xf]
  %v4334 = vld [vmem:[%s5 + $0x60] sm:$0xff]
  %v4335 = vld [vmem:[%s5 + $0x68] sm:$0xf]
  %v4336 = vld [vmem:[%s5 + $0x6c] sm:$0xff]
  %v4337 = vld [vmem:[%s5 + $0x74] sm:$0xf]
  %v4338 = vld [vmem:[%s5 + $0x78] sm:$0xff]
  %v4339 = vld [vmem:[%s5 + $0x80] sm:$0xf]
  %v4340 = vld [vmem:[%s5 + $0x84] sm:$0xff]
  %v4341 = vld [vmem:[%s5 + $0x8c] sm:$0xf]
  %v4342 = vld [vmem:[%s5 + $0x90] sm:$0xff]
  %v4343 = vld [vmem:[%s5 + $0x98] sm:$0xf]
  %v4344 = vld [vmem:[%s5 + $0x9c] sm:$0xff]
  %v4345 = vld [vmem:[%s5 + $0xa4] sm:$0xf]
  %v4346 = vld [vmem:[%s5 + $0xa8] sm:$0xff]
  %v4347 = vld [vmem:[%s5 + $0xb0] sm:$0xf]
  %v4348 = vld [vmem:[%s5 + $0xb4] sm:$0xff]
  %v4349 = vld [vmem:[%s5 + $0xbc] sm:$0xf]
  %v4350 = vpack.c.bf16 %v4191, %v4190
  %v4351 = vpack.c.bf16 %v4193, %v4192
  %v4352 = vpack.c.bf16 %v4195, %v4194
  %v4353 = vpack.c.bf16 %v4197, %v4196
  %v4354 = vpack.c.bf16 %v4199, %v4198
  %v4355 = vpack.c.bf16 %v4201, %v4200
  %v4356 = vpack.c.bf16 %v4203, %v4202
  %v4357 = vpack.c.bf16 %v4205, %v4204
  %v4358 = vpack.c.bf16 %v4225, %v4223
  %v4359 = vpack.c.bf16 %v4229, %v4227
  %v4360 = vpack.c.bf16 %v4233, %v4231
  %v4361 = vpack.c.bf16 %v4237, %v4235
  %v4362 = vpack.c.bf16 %v4241, %v4239
  %v4363 = vpack.c.bf16 %v4245, %v4243
  %v4364 = vpack.c.bf16 %v4249, %v4247
  %v4365 = vpack.c.bf16 %v4253, %v4251
  %v4366 = vpack.c.bf16 %v4273, %v4271
  %v4367 = vpack.c.bf16 %v4277, %v4275
  %v4368 = vpack.c.bf16 %v4281, %v4279
  %v4369 = vpack.c.bf16 %v4285, %v4283
  %v4370 = vpack.c.bf16 %v4289, %v4287
  %v4371 = vpack.c.bf16 %v4293, %v4291
  %v4372 = vpack.c.bf16 %v4297, %v4295
  %v4373 = vpack.c.bf16 %v4301, %v4299
  %4375 = vset.pattern.permute.xlu0 0
  %4376 = vperm.xlu0 %4375, %v150
  %v4377 = vpop.permute.xlu0 %4376
  %4380 = vset.pattern.permute.xlu0 0
  %4381 = vperm.xlu0 %4380, %v151
  %v4382 = vpop.permute.xlu0 %4381
  %4385 = vset.pattern.permute.xlu0 0
  %4386 = vperm.xlu0 %4385, %v152
  %v4387 = vpop.permute.xlu0 %4386
  %4390 = vset.pattern.permute.xlu0 0
  %4391 = vperm.xlu0 %4390, %v153
  %v4392 = vpop.permute.xlu0 %4391
  %4395 = vset.pattern.permute.xlu0 0
  %4396 = vperm.xlu0 %4395, %v154
  %v4397 = vpop.permute.xlu0 %4396
  %4400 = vset.pattern.permute.xlu0 0
  %4401 = vperm.xlu0 %4400, %v155
  %v4402 = vpop.permute.xlu0 %4401
  %4405 = vset.pattern.permute.xlu0 0
  %4406 = vperm.xlu0 %4405, %v156
  %v4407 = vpop.permute.xlu0 %4406
  %4410 = vset.pattern.permute.xlu0 0
  %4411 = vperm.xlu0 %4410, %v157
  %v4412 = vpop.permute.xlu0 %4411
  %4415 = vset.pattern.permute.xlu0 0
  %4416 = vperm.xlu0 %4415, %v158
  %v4417 = vpop.permute.xlu0 %4416
  %4420 = vset.pattern.permute.xlu0 0
  %4421 = vperm.xlu0 %4420, %v159
  %v4422 = vpop.permute.xlu0 %4421
  %4425 = vset.pattern.permute.xlu0 0
  %4426 = vperm.xlu0 %4425, %v160
  %v4427 = vpop.permute.xlu0 %4426
  %4430 = vset.pattern.permute.xlu0 0
  %4431 = vperm.xlu0 %4430, %v161
  %v4432 = vpop.permute.xlu0 %4431
  %4435 = vset.pattern.permute.xlu0 0
  %4436 = vperm.xlu0 %4435, %v162
  %v4437 = vpop.permute.xlu0 %4436
  %4440 = vset.pattern.permute.xlu0 0
  %4441 = vperm.xlu0 %4440, %v163
  %v4442 = vpop.permute.xlu0 %4441
  %4445 = vset.pattern.permute.xlu0 0
  %4446 = vperm.xlu0 %4445, %v164
  %v4447 = vpop.permute.xlu0 %4446
  %4450 = vset.pattern.permute.xlu0 0
  %4451 = vperm.xlu0 %4450, %v165
  %v4452 = vpop.permute.xlu0 %4451
  %v4486 = vunpack.c.l.b16 %v4318
  %v4487 = vunpack.c.h.b16 %v4318
  %v4488 = vunpack.c.l.b16 %v4319
  %v4489 = vunpack.c.l.b16 %v4320
  %v4490 = vunpack.c.h.b16 %v4320
  %v4491 = vunpack.c.l.b16 %v4321
  %v4492 = vunpack.c.l.b16 %v4322
  %v4493 = vunpack.c.h.b16 %v4322
  %v4494 = vunpack.c.l.b16 %v4323
  %v4495 = vunpack.c.l.b16 %v4324
  %v4496 = vunpack.c.h.b16 %v4324
  %v4497 = vunpack.c.l.b16 %v4325
  %v4498 = vunpack.c.l.b16 %v4326
  %v4499 = vunpack.c.h.b16 %v4326
  %v4500 = vunpack.c.l.b16 %v4327
  %v4501 = vunpack.c.l.b16 %v4328
  %v4502 = vunpack.c.h.b16 %v4328
  %v4503 = vunpack.c.l.b16 %v4329
  %v4504 = vunpack.c.l.b16 %v4330
  %v4505 = vunpack.c.h.b16 %v4330
  %v4506 = vunpack.c.l.b16 %v4331
  %v4507 = vunpack.c.l.b16 %v4332
  %v4508 = vunpack.c.h.b16 %v4332
  %v4509 = vunpack.c.l.b16 %v4333
  %v4510 = vunpack.c.l.b16 %v4334
  %v4511 = vunpack.c.h.b16 %v4334
  %v4512 = vunpack.c.l.b16 %v4335
  %v4513 = vunpack.c.l.b16 %v4336
  %v4514 = vunpack.c.h.b16 %v4336
  %v4515 = vunpack.c.l.b16 %v4337
  %v4516 = vunpack.c.l.b16 %v4338
  %v4517 = vunpack.c.h.b16 %v4338
  %v4518 = vunpack.c.l.b16 %v4339
  %v4519 = vunpack.c.l.b16 %v4340
  %v4520 = vunpack.c.h.b16 %v4340
  %v4521 = vunpack.c.l.b16 %v4341
  %v4522 = vunpack.c.l.b16 %v4342
  %v4523 = vunpack.c.h.b16 %v4342
  %v4524 = vunpack.c.l.b16 %v4343
  %v4525 = vunpack.c.l.b16 %v4344
  %v4526 = vunpack.c.h.b16 %v4344
  %v4527 = vunpack.c.l.b16 %v4345
  %v4528 = vunpack.c.l.b16 %v4346
  %v4529 = vunpack.c.h.b16 %v4346
  %v4530 = vunpack.c.l.b16 %v4347
  %v4531 = vunpack.c.l.b16 %v4348
  %v4532 = vunpack.c.h.b16 %v4348
  %v4533 = vunpack.c.l.b16 %v4349
  %v4534 = vpack.c.b16 %v4489, %v4486
  %v4535 = vpack.c.b16 %v4490, %v4487
  %v4536 = vpack.c.b16 %v4491, %v4488
  %v4537 = vpack.c.b16 %v4495, %v4492
  %v4538 = vpack.c.b16 %v4496, %v4493
  %v4539 = vpack.c.b16 %v4497, %v4494
  %v4540 = vpack.c.b16 %v4501, %v4498
  %v4541 = vpack.c.b16 %v4502, %v4499
  %v4542 = vpack.c.b16 %v4503, %v4500
  %v4543 = vpack.c.b16 %v4507, %v4504
  %v4544 = vpack.c.b16 %v4508, %v4505
  %v4545 = vpack.c.b16 %v4509, %v4506
  %v4546 = vpack.c.b16 %v4513, %v4510
  %v4547 = vpack.c.b16 %v4514, %v4511
  %v4548 = vpack.c.b16 %v4515, %v4512
  %v4549 = vpack.c.b16 %v4519, %v4516
  %v4550 = vpack.c.b16 %v4520, %v4517
  %v4551 = vpack.c.b16 %v4521, %v4518
  %v4552 = vpack.c.b16 %v4525, %v4522
  %v4553 = vpack.c.b16 %v4526, %v4523
  %v4554 = vpack.c.b16 %v4527, %v4524
  %v4555 = vpack.c.b16 %v4531, %v4528
  %v4556 = vpack.c.b16 %v4532, %v4529
  %v4557 = vpack.c.b16 %v4533, %v4530
  %4582 = vmatprep.subr.bf16.mxu0 0
  %4583 = vmatpush1.bf16.msra.mxu0 %v4357
  %4584 = vmatprep.subr.bf16.mxu0 0
  %4585 = vmatpush1.bf16.msra.mxu0 %v4356
  %4586 = vmatprep.subr.bf16.mxu0 0
  %4587 = vmatpush1.bf16.msra.mxu0 %v4355
  %4588 = vmatprep.subr.bf16.mxu0 0
  %4589 = vmatpush1.bf16.msra.mxu0 %v4354
  %4590 = vmatprep.subr.bf16.mxu0 0
  %4591 = vmatpush1.bf16.msra.mxu0 %v4353
  %4592 = vmatprep.subr.bf16.mxu0 0
  %4593 = vmatpush1.bf16.msra.mxu0 %v4352
  %4594 = vmatprep.subr.bf16.mxu0 0
  %4595 = vmatpush1.bf16.msra.mxu0 %v4351
  %4596 = vmatprep.subr.bf16.mxu0 0
  %4597 = vmatpush1.bf16.msra.mxu0 %v4350
  %4598 = vmatprep.subr.bf16.mxu0 0
  %4599 = vmatpush2.bf16.msra.mxu0 %v4365
  %4600 = vmatprep.subr.bf16.mxu0 0
  %4601 = vmatpush2.bf16.msra.mxu0 %v4364
  %4602 = vmatprep.subr.bf16.mxu0 0
  %4603 = vmatpush2.bf16.msra.mxu0 %v4363
  %4604 = vmatprep.subr.bf16.mxu0 0
  %4605 = vmatpush2.bf16.msra.mxu0 %v4362
  %4606 = vmatprep.subr.bf16.mxu0 0
  %4607 = vmatpush2.bf16.msra.mxu0 %v4361
  %4608 = vmatprep.subr.bf16.mxu0 0
  %4609 = vmatpush2.bf16.msra.mxu0 %v4360
  %4610 = vmatprep.subr.bf16.mxu0 0
  %4611 = vmatpush2.bf16.msra.mxu0 %v4359
  %4612 = vmatprep.subr.bf16.mxu0 0
  %4613 = vmatpush2.bf16.msra.mxu0 %v4358
  %4614 = vmatprep.mubr.bf16.mxu0 %v4535
  %4615 = vmatmul.mubr.bf16.gmra.mxu0 %v4534
  %v4616 = vpop.f32.mrf.mxu0
  %v4617 = vadd.f32 %v4377, %v4616
  %v4618 = vpop.f32.mrf.mxu0
  %v4619 = vpop.f32.mrf.mxu0
  %v4620 = vadd.f32 %v4382, %v4619
  %v4621 = vpop.f32.mrf.mxu0
  %4622 = vmatprep.mubr.bf16.mxu0 %v4538
  %4623 = vmatmul.mubr.bf16.gmra.mxu0 %v4537
  %v4624 = vpop.f32.mrf.mxu0
  %v4625 = vadd.f32 %v4387, %v4624
  %v4626 = vpop.f32.mrf.mxu0
  %v4627 = vpop.f32.mrf.mxu0
  %v4628 = vadd.f32 %v4392, %v4627
  %v4629 = vpop.f32.mrf.mxu0
  %4630 = vmatprep.mubr.bf16.mxu0 %v4541
  %4631 = vmatmul.mubr.bf16.gmra.mxu0 %v4540
  %v4632 = vpop.f32.mrf.mxu0
  %v4633 = vadd.f32 %v4397, %v4632
  %v4634 = vpop.f32.mrf.mxu0
  %v4635 = vpop.f32.mrf.mxu0
  %v4636 = vadd.f32 %v4402, %v4635
  %v4637 = vpop.f32.mrf.mxu0
  %4638 = vmatprep.mubr.bf16.mxu0 %v4544
  %4639 = vmatmul.mubr.bf16.gmra.mxu0 %v4543
  %v4640 = vpop.f32.mrf.mxu0
  %v4641 = vadd.f32 %v4407, %v4640
  %v4642 = vpop.f32.mrf.mxu0
  %v4643 = vpop.f32.mrf.mxu0
  %v4644 = vadd.f32 %v4412, %v4643
  %v4645 = vpop.f32.mrf.mxu0
  %4646 = vmatprep.mubr.bf16.mxu0 %v4547
  %4647 = vmatmul.mubr.bf16.gmra.mxu0 %v4546
  %v4648 = vpop.f32.mrf.mxu0
  %v4649 = vadd.f32 %v4417, %v4648
  %v4650 = vpop.f32.mrf.mxu0
  %v4651 = vpop.f32.mrf.mxu0
  %v4652 = vadd.f32 %v4422, %v4651
  %v4653 = vpop.f32.mrf.mxu0
  %4654 = vmatprep.mubr.bf16.mxu0 %v4550
  %4655 = vmatmul.mubr.bf16.gmra.mxu0 %v4549
  %v4656 = vpop.f32.mrf.mxu0
  %v4657 = vadd.f32 %v4427, %v4656
  %v4658 = vpop.f32.mrf.mxu0
  %v4659 = vpop.f32.mrf.mxu0
  %v4660 = vadd.f32 %v4432, %v4659
  %v4661 = vpop.f32.mrf.mxu0
  %4662 = vmatprep.mubr.bf16.mxu0 %v4553
  %4663 = vmatmul.mubr.bf16.gmra.mxu0 %v4552
  %v4664 = vpop.f32.mrf.mxu0
  %v4665 = vadd.f32 %v4437, %v4664
  %v4666 = vpop.f32.mrf.mxu0
  %v4667 = vpop.f32.mrf.mxu0
  %v4668 = vadd.f32 %v4442, %v4667
  %v4669 = vpop.f32.mrf.mxu0
  %4670 = vmatprep.mubr.bf16.mxu0 %v4556
  %4671 = vmatmul.mubr.bf16.gmra.mxu0 %v4555
  %v4672 = vpop.f32.mrf.mxu0
  %v4673 = vadd.f32 %v4447, %v4672
  %v4674 = vpop.f32.mrf.mxu0
  %v4675 = vpop.f32.mrf.mxu0
  %v4676 = vadd.f32 %v4452, %v4675
  %v4677 = vpop.f32.mrf.mxu0
  %4678 = vdwg.mxu0
  %4679 = vmatprep.subr.bf16.mxu0 0
  %4680 = vmatpush1.bf16.msra.mxu0 %v4373
  %4681 = vmatprep.subr.bf16.mxu0 0
  %4682 = vmatpush1.bf16.msra.mxu0 %v4372
  %4683 = vmatprep.subr.bf16.mxu0 0
  %4684 = vmatpush1.bf16.msra.mxu0 %v4371
  %4685 = vmatprep.subr.bf16.mxu0 0
  %4686 = vmatpush1.bf16.msra.mxu0 %v4370
  %4687 = vmatprep.subr.bf16.mxu0 0
  %4688 = vmatpush1.bf16.msra.mxu0 %v4369
  %4689 = vmatprep.subr.bf16.mxu0 0
  %4690 = vmatpush1.bf16.msra.mxu0 %v4368
  %4691 = vmatprep.subr.bf16.mxu0 0
  %4692 = vmatpush1.bf16.msra.mxu0 %v4367
  %4693 = vmatprep.subr.bf16.mxu0 0
  %4694 = vmatpush1.bf16.msra.mxu0 %v4366
  %4695 = vmatprep.subr.bf16.mxu0 0
  %4696 = vmatpush2.bf16.msra.mxu0 0
  %4697 = vmatprep.subr.bf16.mxu0 0
  %4698 = vmatpush2.bf16.msra.mxu0 0
  %4699 = vmatprep.subr.bf16.mxu0 0
  %4700 = vmatpush2.bf16.msra.mxu0 0
  %4701 = vmatprep.subr.bf16.mxu0 0
  %4702 = vmatpush2.bf16.msra.mxu0 0
  %4703 = vmatprep.subr.bf16.mxu0 0
  %4704 = vmatpush2.bf16.msra.mxu0 0
  %4705 = vmatprep.subr.bf16.mxu0 0
  %4706 = vmatpush2.bf16.msra.mxu0 0
  %4707 = vmatprep.subr.bf16.mxu0 0
  %4708 = vmatpush2.bf16.msra.mxu0 0
  %4709 = vmatprep.subr.bf16.mxu0 0
  %4710 = vmatpush2.bf16.msra.mxu0 0
  %4711 = vmatprep.mubr.bf16.mxu0 0
  %4712 = vmatmul.mubr.bf16.gmra.mxu0 %v4536
  %v4713 = vpop.f32.mrf.mxu0
  %v4714 = vadd.f32 %v4617, %v4713
  %v4715 = vpop.f32.mrf.mxu0
  %v4716 = vpop.f32.mrf.mxu0
  %v4717 = vadd.f32 %v4620, %v4716
  %v4718 = vpop.f32.mrf.mxu0
  %4719 = vmatprep.mubr.bf16.mxu0 0
  %4720 = vmatmul.mubr.bf16.gmra.mxu0 %v4539
  %v4721 = vpop.f32.mrf.mxu0
  %v4722 = vadd.f32 %v4625, %v4721
  %v4723 = vpop.f32.mrf.mxu0
  %v4724 = vpop.f32.mrf.mxu0
  %v4725 = vadd.f32 %v4628, %v4724
  %v4726 = vpop.f32.mrf.mxu0
  %4727 = vmatprep.mubr.bf16.mxu0 0
  %4728 = vmatmul.mubr.bf16.gmra.mxu0 %v4542
  %v4729 = vpop.f32.mrf.mxu0
  %v4730 = vadd.f32 %v4633, %v4729
  %v4731 = vpop.f32.mrf.mxu0
  %v4732 = vpop.f32.mrf.mxu0
  %v4733 = vadd.f32 %v4636, %v4732
  %v4734 = vpop.f32.mrf.mxu0
  %4735 = vmatprep.mubr.bf16.mxu0 0
  %4736 = vmatmul.mubr.bf16.gmra.mxu0 %v4545
  %v4737 = vpop.f32.mrf.mxu0
  %v4738 = vadd.f32 %v4641, %v4737
  %v4739 = vpop.f32.mrf.mxu0
  %v4740 = vpop.f32.mrf.mxu0
  %v4741 = vadd.f32 %v4644, %v4740
  %v4742 = vpop.f32.mrf.mxu0
  %4743 = vmatprep.mubr.bf16.mxu0 0
  %4744 = vmatmul.mubr.bf16.gmra.mxu0 %v4548
  %v4745 = vpop.f32.mrf.mxu0
  %v4746 = vadd.f32 %v4649, %v4745
  %v4747 = vpop.f32.mrf.mxu0
  %v4748 = vpop.f32.mrf.mxu0
  %v4749 = vadd.f32 %v4652, %v4748
  %v4750 = vpop.f32.mrf.mxu0
  %4751 = vmatprep.mubr.bf16.mxu0 0
  %4752 = vmatmul.mubr.bf16.gmra.mxu0 %v4551
  %v4753 = vpop.f32.mrf.mxu0
  %v4754 = vadd.f32 %v4657, %v4753
  %v4755 = vpop.f32.mrf.mxu0
  %v4756 = vpop.f32.mrf.mxu0
  %v4757 = vadd.f32 %v4660, %v4756
  %v4758 = vpop.f32.mrf.mxu0
  %4759 = vmatprep.mubr.bf16.mxu0 0
  %4760 = vmatmul.mubr.bf16.gmra.mxu0 %v4554
  %v4761 = vpop.f32.mrf.mxu0
  %v4762 = vadd.f32 %v4665, %v4761
  %v4763 = vpop.f32.mrf.mxu0
  %v4764 = vpop.f32.mrf.mxu0
  %v4765 = vadd.f32 %v4668, %v4764
  %v4766 = vpop.f32.mrf.mxu0
  %4767 = vmatprep.mubr.bf16.mxu0 0
  %4768 = vmatmul.mubr.bf16.gmra.mxu0 %v4557
  %v4769 = vpop.f32.mrf.mxu0
  %v4770 = vadd.f32 %v4673, %v4769
  %v4771 = vpop.f32.mrf.mxu0
  %v4772 = vpop.f32.mrf.mxu0
  %v4773 = vadd.f32 %v4676, %v4772
  %v4774 = vpop.f32.mrf.mxu0
  %4775 = vdwg.mxu0
  %v4776 = vmax.f32 %v4714, 0.0
  %v4777 = vmax.f32 %v4717, 0.0
  %v4778 = vmax.f32 %v4722, 0.0
  %v4779 = vmax.f32 %v4725, 0.0
  %v4780 = vmax.f32 %v4730, 0.0
  %v4781 = vmax.f32 %v4733, 0.0
  %v4782 = vmax.f32 %v4738, 0.0
  %v4783 = vmax.f32 %v4741, 0.0
  %v4784 = vmax.f32 %v4746, 0.0
  %v4785 = vmax.f32 %v4749, 0.0
  %v4786 = vmax.f32 %v4754, 0.0
  %v4787 = vmax.f32 %v4757, 0.0
  %v4788 = vmax.f32 %v4762, 0.0
  %v4789 = vmax.f32 %v4765, 0.0
  %v4790 = vmax.f32 %v4770, 0.0
  %v4791 = vmax.f32 %v4773, 0.0
  %v4792 = vpack.c.bf16 %v4777, %v4776
  %v4793 = vpack.c.bf16 %v4779, %v4778
  %v4794 = vpack.c.bf16 %v4781, %v4780
  %v4795 = vpack.c.bf16 %v4783, %v4782
  %v4796 = vpack.c.bf16 %v4785, %v4784
  %v4797 = vpack.c.bf16 %v4787, %v4786
  %v4798 = vpack.c.bf16 %v4789, %v4788
  %v4799 = vpack.c.bf16 %v4791, %v4790
  %v4800 = vld [vmem:[%s15] sm:$0xf]
  %v4801 = vld [vmem:[%s15 + $0x4] sm:$0xf]
  %v4802 = vld [vmem:[%s15 + $0x8] sm:$0x7]
  %v4806 = vunpack.c.l.b16 %v4800
  %v4807 = vunpack.c.l.b16 %v4801
  %v4808 = vunpack.c.l.b16 %v4802
  %v4809 = vpack.c.b16 %v4807, %v4806
  %v4810 = vpack.c.b16 %v4808, %v4808
  %vm4812 = vcmask 179200
  %v4814 = vsel %vm4812, %v4792, 0
  %v4817 = vsel %vm4812, %v4793, 0
  %v4820 = vsel %vm4812, %v4794, 0
  %v4823 = vsel %vm4812, %v4795, 0
  %v4826 = vsel %vm4812, %v4796, 0
  %v4829 = vsel %vm4812, %v4797, 0
  %v4832 = vsel %vm4812, %v4798, 0
  %v4835 = vsel %vm4812, %v4799, 0
  %v4838 = vsel %vm475, %v4810, 0
  %4840 = vmatprep.subr.bf16.mxu0 0
  %4841 = vmatpush1.bf16.msra.mxu0 0
  %4842 = vmatprep.subr.bf16.mxu0 0
  %4843 = vmatpush1.bf16.msra.mxu0 0
  %4844 = vmatprep.subr.bf16.mxu0 0
  %4845 = vmatpush1.bf16.msra.mxu0 0
  %4846 = vmatprep.subr.bf16.mxu0 0
  %4847 = vmatpush1.bf16.msra.mxu0 0
  %4848 = vmatprep.subr.bf16.mxu0 0
  %4849 = vmatpush1.bf16.msra.mxu0 0
  %4850 = vmatprep.subr.bf16.mxu0 0
  %4851 = vmatpush1.bf16.msra.mxu0 0
  %4852 = vmatprep.subr.bf16.mxu0 0
  %4853 = vmatpush1.bf16.msra.mxu0 %v4838
  %4854 = vmatprep.subr.bf16.mxu0 0
  %4855 = vmatpush1.bf16.msra.mxu0 %v4809
  %4856 = vmatprep.subr.bf16.mxu0 0
  %4857 = vmatpush2.bf16.msra.mxu0 0
  %4858 = vmatprep.subr.bf16.mxu0 0
  %4859 = vmatpush2.bf16.msra.mxu0 0
  %4860 = vmatprep.subr.bf16.mxu0 0
  %4861 = vmatpush2.bf16.msra.mxu0 0
  %4862 = vmatprep.subr.bf16.mxu0 0
  %4863 = vmatpush2.bf16.msra.mxu0 0
  %4864 = vmatprep.subr.bf16.mxu0 0
  %4865 = vmatpush2.bf16.msra.mxu0 0
  %4866 = vmatprep.subr.bf16.mxu0 0
  %4867 = vmatpush2.bf16.msra.mxu0 0
  %4868 = vmatprep.subr.bf16.mxu0 0
  %4869 = vmatpush2.bf16.msra.mxu0 0
  %4870 = vmatprep.subr.bf16.mxu0 0
  %4871 = vmatpush2.bf16.msra.mxu0 0
  %4872 = vmatprep.mubr.bf16.mxu0 0
  %4873 = vmatmul.mubr.bf16.gmra.mxu0 %v4814
  %v4874 = vpop.f32.mrf.mxu0
  %v4875 = vadd.f32 0.0, %v4874
  %v4876 = vpop.f32.mrf.mxu0
  %v4877 = vpop.f32.mrf.mxu0
  %v4878 = vadd.f32 0.0, %v4877
  %v4879 = vpop.f32.mrf.mxu0
  %4880 = vmatprep.mubr.bf16.mxu0 0
  %4881 = vmatmul.mubr.bf16.gmra.mxu0 %v4817
  %v4882 = vpop.f32.mrf.mxu0
  %v4883 = vadd.f32 0.0, %v4882
  %v4884 = vpop.f32.mrf.mxu0
  %v4885 = vpop.f32.mrf.mxu0
  %v4886 = vadd.f32 0.0, %v4885
  %v4887 = vpop.f32.mrf.mxu0
  %4888 = vmatprep.mubr.bf16.mxu0 0
  %4889 = vmatmul.mubr.bf16.gmra.mxu0 %v4820
  %v4890 = vpop.f32.mrf.mxu0
  %v4891 = vadd.f32 0.0, %v4890
  %v4892 = vpop.f32.mrf.mxu0
  %v4893 = vpop.f32.mrf.mxu0
  %v4894 = vadd.f32 0.0, %v4893
  %v4895 = vpop.f32.mrf.mxu0
  %4896 = vmatprep.mubr.bf16.mxu0 0
  %4897 = vmatmul.mubr.bf16.gmra.mxu0 %v4823
  %v4898 = vpop.f32.mrf.mxu0
  %v4899 = vadd.f32 0.0, %v4898
  %v4900 = vpop.f32.mrf.mxu0
  %v4901 = vpop.f32.mrf.mxu0
  %v4902 = vadd.f32 0.0, %v4901
  %v4903 = vpop.f32.mrf.mxu0
  %4904 = vmatprep.mubr.bf16.mxu0 0
  %4905 = vmatmul.mubr.bf16.gmra.mxu0 %v4826
  %v4906 = vpop.f32.mrf.mxu0
  %v4907 = vadd.f32 0.0, %v4906
  %v4908 = vpop.f32.mrf.mxu0
  %v4909 = vpop.f32.mrf.mxu0
  %v4910 = vadd.f32 0.0, %v4909
  %v4911 = vpop.f32.mrf.mxu0
  %4912 = vmatprep.mubr.bf16.mxu0 0
  %4913 = vmatmul.mubr.bf16.gmra.mxu0 %v4829
  %v4914 = vpop.f32.mrf.mxu0
  %v4915 = vadd.f32 0.0, %v4914
  %v4916 = vpop.f32.mrf.mxu0
  %v4917 = vpop.f32.mrf.mxu0
  %v4918 = vadd.f32 0.0, %v4917
  %v4919 = vpop.f32.mrf.mxu0
  %4920 = vmatprep.mubr.bf16.mxu0 0
  %4921 = vmatmul.mubr.bf16.gmra.mxu0 %v4832
  %v4922 = vpop.f32.mrf.mxu0
  %v4923 = vadd.f32 0.0, %v4922
  %v4924 = vpop.f32.mrf.mxu0
  %v4925 = vpop.f32.mrf.mxu0
  %v4926 = vadd.f32 0.0, %v4925
  %v4927 = vpop.f32.mrf.mxu0
  %4928 = vmatprep.mubr.bf16.mxu0 0
  %4929 = vmatmul.mubr.bf16.gmra.mxu0 %v4835
  %v4930 = vpop.f32.mrf.mxu0
  %v4931 = vadd.f32 0.0, %v4930
  %v4932 = vpop.f32.mrf.mxu0
  %v4933 = vpop.f32.mrf.mxu0
  %v4934 = vadd.f32 0.0, %v4933
  %v4935 = vpop.f32.mrf.mxu0
  %4936 = vdwg.mxu0
  %4953 = vrot.lane.b32.xlu0 %v4875, 122
  %v4954 = vpop.permute.xlu0 %4953
  %4955 = vrot.lane.b32.xlu0 %v4878, 122
  %v4956 = vpop.permute.xlu0 %4955
  %4957 = vrot.lane.b32.xlu0 %v4883, 122
  %v4958 = vpop.permute.xlu0 %4957
  %4959 = vrot.lane.b32.xlu0 %v4886, 122
  %v4960 = vpop.permute.xlu0 %4959
  %4961 = vrot.lane.b32.xlu0 %v4891, 122
  %v4962 = vpop.permute.xlu0 %4961
  %4963 = vrot.lane.b32.xlu0 %v4894, 122
  %v4964 = vpop.permute.xlu0 %4963
  %4965 = vrot.lane.b32.xlu0 %v4899, 122
  %v4966 = vpop.permute.xlu0 %4965
  %4967 = vrot.lane.b32.xlu0 %v4902, 122
  %v4968 = vpop.permute.xlu0 %4967
  %4969 = vrot.lane.b32.xlu0 %v4907, 122
  %v4970 = vpop.permute.xlu0 %4969
  %4971 = vrot.lane.b32.xlu0 %v4910, 122
  %v4972 = vpop.permute.xlu0 %4971
  %4973 = vrot.lane.b32.xlu0 %v4915, 122
  %v4974 = vpop.permute.xlu0 %4973
  %4975 = vrot.lane.b32.xlu0 %v4918, 122
  %v4976 = vpop.permute.xlu0 %4975
  %4977 = vrot.lane.b32.xlu0 %v4923, 122
  %v4978 = vpop.permute.xlu0 %4977
  %4979 = vrot.lane.b32.xlu0 %v4926, 122
  %v4980 = vpop.permute.xlu0 %4979
  %4981 = vrot.lane.b32.xlu0 %v4931, 122
  %v4982 = vpop.permute.xlu0 %4981
  %4983 = vrot.lane.b32.xlu0 %v4934, 122
  %v4984 = vpop.permute.xlu0 %4983
  %v5001 = vpack.c.bf16 %v4878, %v4875
  %v5002 = vpack.c.bf16 %v4886, %v4883
  %v5003 = vpack.c.bf16 %v4894, %v4891
  %v5004 = vpack.c.bf16 %v4902, %v4899
  %v5005 = vpack.c.bf16 %v4910, %v4907
  %v5006 = vpack.c.bf16 %v4918, %v4915
  %v5007 = vpack.c.bf16 %v4926, %v4923
  %v5008 = vpack.c.bf16 %v4934, %v4931
  %v5009 = vpack.c.bf16 %v4956, %v4954
  %v5010 = vpack.c.bf16 %v4960, %v4958
  %v5011 = vpack.c.bf16 %v4964, %v4962
  %v5012 = vpack.c.bf16 %v4968, %v4966
  %v5013 = vpack.c.bf16 %v4972, %v4970
  %v5014 = vpack.c.bf16 %v4976, %v4974
  %v5015 = vpack.c.bf16 %v4980, %v4978
  %v5016 = vpack.c.bf16 %v4984, %v4982
  %v5017 = vld [vmem:[%s16] sm:$0xf]
  %v5018 = vld [vmem:[%s16 + $0x4] sm:$0xf]
  %v5019 = vld [vmem:[%s16 + $0x8] sm:$0xf]
  %v5020 = vld [vmem:[%s16 + $0xc] sm:$0xf]
  %v5021 = vld [vmem:[%s16 + $0x10] sm:$0xf]
  %v5022 = vld [vmem:[%s16 + $0x14] sm:$0xf]
  %v5023 = vld [vmem:[%s16 + $0x18] sm:$0xf]
  %v5024 = vld [vmem:[%s16 + $0x1c] sm:$0xf]
  %v5025 = vld [vmem:[%s16 + $0x20] sm:$0xf]
  %v5026 = vld [vmem:[%s16 + $0x24] sm:$0xf]
  %v5027 = vld [vmem:[%s16 + $0x28] sm:$0xf]
  %v5028 = vld [vmem:[%s16 + $0x2c] sm:$0xf]
  %v5029 = vld [vmem:[%s16 + $0x30] sm:$0xf]
  %v5030 = vld [vmem:[%s16 + $0x34] sm:$0xf]
  %v5031 = vld [vmem:[%s16 + $0x38] sm:$0xf]
  %v5032 = vld [vmem:[%s16 + $0x3c] sm:$0xf]
  %v5033 = vld [vmem:[%s16 + $0x40] sm:$0xf]
  %v5034 = vld [vmem:[%s16 + $0x44] sm:$0xf]
  %v5035 = vld [vmem:[%s16 + $0x48] sm:$0xf]
  %v5036 = vld [vmem:[%s16 + $0x4c] sm:$0xf]
  %v5037 = vld [vmem:[%s16 + $0x50] sm:$0xf]
  %v5038 = vld [vmem:[%s16 + $0x54] sm:$0xf]
  %v5039 = vld [vmem:[%s16 + $0x58] sm:$0xf]
  %v5040 = vld [vmem:[%s16 + $0x5c] sm:$0xf]
  %v5041 = vld [vmem:[%s16 + $0x60] sm:$0xf]
  %v5042 = vld [vmem:[%s16 + $0x64] sm:$0xf]
  %v5043 = vld [vmem:[%s16 + $0x68] sm:$0xf]
  %v5044 = vld [vmem:[%s16 + $0x6c] sm:$0xf]
  %v5045 = vld [vmem:[%s16 + $0x70] sm:$0xf]
  %v5046 = vld [vmem:[%s16 + $0x74] sm:$0xf]
  %v5047 = vld [vmem:[%s16 + $0x78] sm:$0xf]
  %v5048 = vld [vmem:[%s16 + $0x7c] sm:$0xf]
  %v5049 = vld [vmem:[%s17] sm:$0x1]
  %v5051 = vlaneseq
  %v5052 = vshrl.u32 %v5051, 7
  %v5053 = vsub.s32 0, %v5052
  %v5054 = vrot.slane %v5049, %v5053
  %5056 = vxpose.xlu0.c.b16.start [1/8] %v5001, 128
  %5057 = vxpose.xlu0.c.b16.cont [2/8] %v5002, 128
  %5058 = vxpose.xlu0.c.b16.cont [3/8] %v5003, 128
  %5059 = vxpose.xlu0.c.b16.cont [4/8] %v5004, 128
  %5060 = vxpose.xlu0.c.b16.cont [5/8] %v5005, 128
  %5061 = vxpose.xlu0.c.b16.cont [6/8] %v5006, 128
  %5062 = vxpose.xlu0.c.b16.cont [7/8] %v5007, 128
  %5063 = vxpose.xlu0.c.b16.end [8/8] %v5008, 128
  %v5064 = vpop.trf.xlu0
  %v5065 = vpop.trf.xlu0
  %v5066 = vpop.trf.xlu0
  %v5067 = vpop.trf.xlu0
  %v5068 = vpop.trf.xlu0
  %v5069 = vpop.trf.xlu0
  %v5070 = vpop.trf.xlu0
  %v5071 = vpop.trf.xlu0
  %5072 = vxpose.xlu0.c.b16.start [1/8] %v5009, 128
  %5073 = vxpose.xlu0.c.b16.cont [2/8] %v5010, 128
  %5074 = vxpose.xlu0.c.b16.cont [3/8] %v5011, 128
  %5075 = vxpose.xlu0.c.b16.cont [4/8] %v5012, 128
  %5076 = vxpose.xlu0.c.b16.cont [5/8] %v5013, 128
  %5077 = vxpose.xlu0.c.b16.cont [6/8] %v5014, 128
  %5078 = vxpose.xlu0.c.b16.cont [7/8] %v5015, 128
  %5079 = vxpose.xlu0.c.b16.end [8/8] %v5016, 128
  %v5080 = vpop.trf.xlu0
  %v5081 = vpop.trf.xlu0
  %v5082 = vpop.trf.xlu0
  %v5083 = vpop.trf.xlu0
  %v5084 = vpop.trf.xlu0
  %v5085 = vpop.trf.xlu0
  %v5086 = vpop.trf.xlu0
  %v5087 = vpop.trf.xlu0
  %v5120 = vunpack.c.l.b16 %v5017
  %v5121 = vunpack.c.l.b16 %v5018
  %v5122 = vunpack.c.l.b16 %v5019
  %v5123 = vunpack.c.l.b16 %v5020
  %v5124 = vunpack.c.l.b16 %v5021
  %v5125 = vunpack.c.l.b16 %v5022
  %v5126 = vunpack.c.l.b16 %v5023
  %v5127 = vunpack.c.l.b16 %v5024
  %v5128 = vunpack.c.l.b16 %v5025
  %v5129 = vunpack.c.l.b16 %v5026
  %v5130 = vunpack.c.l.b16 %v5027
  %v5131 = vunpack.c.l.b16 %v5028
  %v5132 = vunpack.c.l.b16 %v5029
  %v5133 = vunpack.c.l.b16 %v5030
  %v5134 = vunpack.c.l.b16 %v5031
  %v5135 = vunpack.c.l.b16 %v5032
  %v5136 = vunpack.c.l.b16 %v5033
  %v5137 = vunpack.c.l.b16 %v5034
  %v5138 = vunpack.c.l.b16 %v5035
  %v5139 = vunpack.c.l.b16 %v5036
  %v5140 = vunpack.c.l.b16 %v5037
  %v5141 = vunpack.c.l.b16 %v5038
  %v5142 = vunpack.c.l.b16 %v5039
  %v5143 = vunpack.c.l.b16 %v5040
  %v5144 = vunpack.c.l.b16 %v5041
  %v5145 = vunpack.c.l.b16 %v5042
  %v5146 = vunpack.c.l.b16 %v5043
  %v5147 = vunpack.c.l.b16 %v5044
  %v5148 = vunpack.c.l.b16 %v5045
  %v5149 = vunpack.c.l.b16 %v5046
  %v5150 = vunpack.c.l.b16 %v5047
  %v5151 = vunpack.c.l.b16 %v5048
  %v5152 = vpack.c.b16 %v5121, %v5120
  %v5153 = vpack.c.b16 %v5123, %v5122
  %v5154 = vpack.c.b16 %v5125, %v5124
  %v5155 = vpack.c.b16 %v5127, %v5126
  %v5156 = vpack.c.b16 %v5129, %v5128
  %v5157 = vpack.c.b16 %v5131, %v5130
  %v5158 = vpack.c.b16 %v5133, %v5132
  %v5159 = vpack.c.b16 %v5135, %v5134
  %v5160 = vpack.c.b16 %v5137, %v5136
  %v5161 = vpack.c.b16 %v5139, %v5138
  %v5162 = vpack.c.b16 %v5141, %v5140
  %v5163 = vpack.c.b16 %v5143, %v5142
  %v5164 = vpack.c.b16 %v5145, %v5144
  %v5165 = vpack.c.b16 %v5147, %v5146
  %v5166 = vpack.c.b16 %v5149, %v5148
  %v5167 = vpack.c.b16 %v5151, %v5150
  %5184 = vmatprep.subr.bf16.mxu0 0
  %5185 = vmatpush1.bf16.msra.mxu0 %v5159
  %5186 = vmatprep.subr.bf16.mxu0 0
  %5187 = vmatpush1.bf16.msra.mxu0 %v5158
  %5188 = vmatprep.subr.bf16.mxu0 0
  %5189 = vmatpush1.bf16.msra.mxu0 %v5157
  %5190 = vmatprep.subr.bf16.mxu0 0
  %5191 = vmatpush1.bf16.msra.mxu0 %v5156
  %5192 = vmatprep.subr.bf16.mxu0 0
  %5193 = vmatpush1.bf16.msra.mxu0 %v5155
  %5194 = vmatprep.subr.bf16.mxu0 0
  %5195 = vmatpush1.bf16.msra.mxu0 %v5154
  %5196 = vmatprep.subr.bf16.mxu0 0
  %5197 = vmatpush1.bf16.msra.mxu0 %v5153
  %5198 = vmatprep.subr.bf16.mxu0 0
  %5199 = vmatpush1.bf16.msra.mxu0 %v5152
  %5200 = vmatprep.subr.bf16.mxu0 0
  %5201 = vmatpush2.bf16.msra.mxu0 %v5167
  %5202 = vmatprep.subr.bf16.mxu0 0
  %5203 = vmatpush2.bf16.msra.mxu0 %v5166
  %5204 = vmatprep.subr.bf16.mxu0 0
  %5205 = vmatpush2.bf16.msra.mxu0 %v5165
  %5206 = vmatprep.subr.bf16.mxu0 0
  %5207 = vmatpush2.bf16.msra.mxu0 %v5164
  %5208 = vmatprep.subr.bf16.mxu0 0
  %5209 = vmatpush2.bf16.msra.mxu0 %v5163
  %5210 = vmatprep.subr.bf16.mxu0 0
  %5211 = vmatpush2.bf16.msra.mxu0 %v5162
  %5212 = vmatprep.subr.bf16.mxu0 0
  %5213 = vmatpush2.bf16.msra.mxu0 %v5161
  %5214 = vmatprep.subr.bf16.mxu0 0
  %5215 = vmatpush2.bf16.msra.mxu0 %v5160
  %5216 = vmatprep.mubr.bf16.mxu0 %v5080
  %5217 = vmatmul.mubr.bf16.gmra.mxu0 %v5064
  %v5218 = vpop.f32.mrf.mxu0
  %v5219 = vadd.f32 %v5054, %v5218
  %v5220 = vpop.f32.mrf.mxu0
  %v5221 = vpop.f32.mrf.mxu0
  %v5222 = vpop.f32.mrf.mxu0
  %5223 = vdwg.mxu0
  %v5224 = vmax.f32 %v5219, 0.0
  %v5225 = vpack.c.bf16 %v5224, %v5224
  %v5226 = vld [vmem:[%s18] sm:$0xff]
  %v5227 = vld [vmem:[%s18 + $0x8] sm:$0xff]
  %v5228 = vld [vmem:[%s18 + $0x10] sm:$0xff]
  %v5229 = vld [vmem:[%s18 + $0x18] sm:$0xff]
  %v5230 = vld [vmem:[%s18 + $0x20] sm:$0xff]
  %v5231 = vld [vmem:[%s18 + $0x28] sm:$0xff]
  %v5232 = vld [vmem:[%s18 + $0x30] sm:$0xff]
  %v5233 = vld [vmem:[%s18 + $0x38] sm:$0xff]
  %v5234 = vld [vmem:[%s18 + $0x40] sm:$0xff]
  %v5235 = vld [vmem:[%s18 + $0x48] sm:$0xff]
  %v5236 = vld [vmem:[%s18 + $0x50] sm:$0xff]
  %v5237 = vld [vmem:[%s18 + $0x58] sm:$0xff]
  %v5238 = vld [vmem:[%s18 + $0x60] sm:$0xff]
  %v5239 = vld [vmem:[%s18 + $0x68] sm:$0xff]
  %v5240 = vld [vmem:[%s18 + $0x70] sm:$0xff]
  %v5241 = vld [vmem:[%s18 + $0x78] sm:$0xff]
  %v5242 = vld [vmem:[%s18 + $0x80] sm:$0xff]
  %v5243 = vld [vmem:[%s18 + $0x88] sm:$0xff]
  %v5244 = vld [vmem:[%s18 + $0x90] sm:$0xff]
  %v5245 = vld [vmem:[%s18 + $0x98] sm:$0xff]
  %v5246 = vld [vmem:[%s18 + $0xa0] sm:$0xff]
  %v5247 = vld [vmem:[%s18 + $0xa8] sm:$0xff]
  %v5248 = vld [vmem:[%s18 + $0xb0] sm:$0xff]
  %v5249 = vld [vmem:[%s18 + $0xb8] sm:$0xff]
  %v5250 = vld [vmem:[%s18 + $0xc0] sm:$0xff]
  %v5251 = vld [vmem:[%s18 + $0xc8] sm:$0xff]
  %v5252 = vld [vmem:[%s18 + $0xd0] sm:$0xff]
  %v5253 = vld [vmem:[%s18 + $0xd8] sm:$0xff]
  %v5254 = vld [vmem:[%s18 + $0xe0] sm:$0xff]
  %v5255 = vld [vmem:[%s18 + $0xe8] sm:$0xff]
  %v5256 = vld [vmem:[%s18 + $0xf0] sm:$0xff]
  %v5257 = vld [vmem:[%s18 + $0xf8] sm:$0xff]
  %v5258 = vld [vmem:[%s18 + $0x100] sm:$0xff]
  %v5259 = vld [vmem:[%s18 + $0x108] sm:$0xff]
  %v5260 = vld [vmem:[%s18 + $0x110] sm:$0xff]
  %v5261 = vld [vmem:[%s18 + $0x118] sm:$0xff]
  %v5262 = vld [vmem:[%s18 + $0x120] sm:$0xff]
  %v5263 = vld [vmem:[%s18 + $0x128] sm:$0xff]
  %v5264 = vld [vmem:[%s18 + $0x130] sm:$0xff]
  %v5265 = vld [vmem:[%s18 + $0x138] sm:$0xff]
  %v5266 = vld [vmem:[%s18 + $0x140] sm:$0xff]
  %v5267 = vld [vmem:[%s18 + $0x148] sm:$0xff]
  %v5268 = vld [vmem:[%s18 + $0x150] sm:$0xff]
  %v5269 = vld [vmem:[%s18 + $0x158] sm:$0xff]
  %v5270 = vld [vmem:[%s18 + $0x160] sm:$0xff]
  %v5271 = vld [vmem:[%s18 + $0x168] sm:$0xff]
  %v5272 = vld [vmem:[%s18 + $0x170] sm:$0xff]
  %v5273 = vld [vmem:[%s18 + $0x178] sm:$0xff]
  %v5274 = vld [vmem:[%s18 + $0x180] sm:$0xff]
  %v5275 = vld [vmem:[%s18 + $0x188] sm:$0xff]
  %v5276 = vld [vmem:[%s18 + $0x190] sm:$0xff]
  %v5277 = vld [vmem:[%s18 + $0x198] sm:$0xff]
  %v5278 = vld [vmem:[%s18 + $0x1a0] sm:$0xff]
  %v5279 = vld [vmem:[%s18 + $0x1a8] sm:$0xff]
  %v5280 = vld [vmem:[%s18 + $0x1b0] sm:$0xff]
  %v5281 = vld [vmem:[%s18 + $0x1b8] sm:$0xff]
  %v5282 = vld [vmem:[%s18 + $0x1c0] sm:$0xff]
  %v5283 = vld [vmem:[%s18 + $0x1c8] sm:$0xff]
  %v5284 = vld [vmem:[%s18 + $0x1d0] sm:$0xff]
  %v5285 = vld [vmem:[%s18 + $0x1d8] sm:$0xff]
  %v5286 = vld [vmem:[%s18 + $0x1e0] sm:$0xff]
  %v5287 = vld [vmem:[%s18 + $0x1e8] sm:$0xff]
  %v5288 = vld [vmem:[%s18 + $0x1f0] sm:$0xff]
  %v5289 = vld [vmem:[%s18 + $0x1f8] sm:$0xff]
  %v5290 = vld [vmem:[%s20] sm:$0xff]
  %v5292 = vlaneseq
  %v5293 = vshrl.u32 %v5292, 7
  %v5294 = vsub.s32 0, %v5293
  %v5295 = vrot.slane %v5290, %v5294
  %v5296 = vlaneseq
  %v5297 = vshrl.u32 %v5296, 7
  %v5298 = vsub.s32 1, %v5297
  %v5299 = vrot.slane %v5290, %v5298
  %v5300 = vlaneseq
  %v5301 = vshrl.u32 %v5300, 7
  %v5302 = vsub.s32 2, %v5301
  %v5303 = vrot.slane %v5290, %v5302
  %v5304 = vlaneseq
  %v5305 = vshrl.u32 %v5304, 7
  %v5306 = vsub.s32 3, %v5305
  %v5307 = vrot.slane %v5290, %v5306
  %v5308 = vlaneseq
  %v5309 = vshrl.u32 %v5308, 7
  %v5310 = vsub.s32 4, %v5309
  %v5311 = vrot.slane %v5290, %v5310
  %v5312 = vlaneseq
  %v5313 = vshrl.u32 %v5312, 7
  %v5314 = vsub.s32 5, %v5313
  %v5315 = vrot.slane %v5290, %v5314
  %v5316 = vlaneseq
  %v5317 = vshrl.u32 %v5316, 7
  %v5318 = vsub.s32 6, %v5317
  %v5319 = vrot.slane %v5290, %v5318
  %v5320 = vlaneseq
  %v5321 = vshrl.u32 %v5320, 7
  %v5322 = vsub.s32 7, %v5321
  %v5323 = vrot.slane %v5290, %v5322
  %v5396 = vunpack.c.l.b16 %v5226
  %v5397 = vunpack.c.h.b16 %v5226
  %v5398 = vunpack.c.l.b16 %v5227
  %v5399 = vunpack.c.h.b16 %v5227
  %v5400 = vunpack.c.l.b16 %v5228
  %v5401 = vunpack.c.h.b16 %v5228
  %v5402 = vunpack.c.l.b16 %v5229
  %v5403 = vunpack.c.h.b16 %v5229
  %v5404 = vunpack.c.l.b16 %v5230
  %v5405 = vunpack.c.h.b16 %v5230
  %v5406 = vunpack.c.l.b16 %v5231
  %v5407 = vunpack.c.h.b16 %v5231
  %v5408 = vunpack.c.l.b16 %v5232
  %v5409 = vunpack.c.h.b16 %v5232
  %v5410 = vunpack.c.l.b16 %v5233
  %v5411 = vunpack.c.h.b16 %v5233
  %v5412 = vunpack.c.l.b16 %v5234
  %v5413 = vunpack.c.h.b16 %v5234
  %v5414 = vunpack.c.l.b16 %v5235
  %v5415 = vunpack.c.h.b16 %v5235
  %v5416 = vunpack.c.l.b16 %v5236
  %v5417 = vunpack.c.h.b16 %v5236
  %v5418 = vunpack.c.l.b16 %v5237
  %v5419 = vunpack.c.h.b16 %v5237
  %v5420 = vunpack.c.l.b16 %v5238
  %v5421 = vunpack.c.h.b16 %v5238
  %v5422 = vunpack.c.l.b16 %v5239
  %v5423 = vunpack.c.h.b16 %v5239
  %v5424 = vunpack.c.l.b16 %v5240
  %v5425 = vunpack.c.h.b16 %v5240
  %v5426 = vunpack.c.l.b16 %v5241
  %v5427 = vunpack.c.h.b16 %v5241
  %v5428 = vunpack.c.l.b16 %v5242
  %v5429 = vunpack.c.h.b16 %v5242
  %v5430 = vunpack.c.l.b16 %v5243
  %v5431 = vunpack.c.h.b16 %v5243
  %v5432 = vunpack.c.l.b16 %v5244
  %v5433 = vunpack.c.h.b16 %v5244
  %v5434 = vunpack.c.l.b16 %v5245
  %v5435 = vunpack.c.h.b16 %v5245
  %v5436 = vunpack.c.l.b16 %v5246
  %v5437 = vunpack.c.h.b16 %v5246
  %v5438 = vunpack.c.l.b16 %v5247
  %v5439 = vunpack.c.h.b16 %v5247
  %v5440 = vunpack.c.l.b16 %v5248
  %v5441 = vunpack.c.h.b16 %v5248
  %v5442 = vunpack.c.l.b16 %v5249
  %v5443 = vunpack.c.h.b16 %v5249
  %v5444 = vunpack.c.l.b16 %v5250
  %v5445 = vunpack.c.h.b16 %v5250
  %v5446 = vunpack.c.l.b16 %v5251
  %v5447 = vunpack.c.h.b16 %v5251
  %v5448 = vunpack.c.l.b16 %v5252
  %v5449 = vunpack.c.h.b16 %v5252
  %v5450 = vunpack.c.l.b16 %v5253
  %v5451 = vunpack.c.h.b16 %v5253
  %v5452 = vunpack.c.l.b16 %v5254
  %v5453 = vunpack.c.h.b16 %v5254
  %v5454 = vunpack.c.l.b16 %v5255
  %v5455 = vunpack.c.h.b16 %v5255
  %v5456 = vunpack.c.l.b16 %v5256
  %v5457 = vunpack.c.h.b16 %v5256
  %v5458 = vunpack.c.l.b16 %v5257
  %v5459 = vunpack.c.h.b16 %v5257
  %v5460 = vunpack.c.l.b16 %v5258
  %v5461 = vunpack.c.h.b16 %v5258
  %v5462 = vunpack.c.l.b16 %v5259
  %v5463 = vunpack.c.h.b16 %v5259
  %v5464 = vunpack.c.l.b16 %v5260
  %v5465 = vunpack.c.h.b16 %v5260
  %v5466 = vunpack.c.l.b16 %v5261
  %v5467 = vunpack.c.h.b16 %v5261
  %v5468 = vunpack.c.l.b16 %v5262
  %v5469 = vunpack.c.h.b16 %v5262
  %v5470 = vunpack.c.l.b16 %v5263
  %v5471 = vunpack.c.h.b16 %v5263
  %v5472 = vunpack.c.l.b16 %v5264
  %v5473 = vunpack.c.h.b16 %v5264
  %v5474 = vunpack.c.l.b16 %v5265
  %v5475 = vunpack.c.h.b16 %v5265
  %v5476 = vunpack.c.l.b16 %v5266
  %v5477 = vunpack.c.h.b16 %v5266
  %v5478 = vunpack.c.l.b16 %v5267
  %v5479 = vunpack.c.h.b16 %v5267
  %v5480 = vunpack.c.l.b16 %v5268
  %v5481 = vunpack.c.h.b16 %v5268
  %v5482 = vunpack.c.l.b16 %v5269
  %v5483 = vunpack.c.h.b16 %v5269
  %v5484 = vunpack.c.l.b16 %v5270
  %v5485 = vunpack.c.h.b16 %v5270
  %v5486 = vunpack.c.l.b16 %v5271
  %v5487 = vunpack.c.h.b16 %v5271
  %v5488 = vunpack.c.l.b16 %v5272
  %v5489 = vunpack.c.h.b16 %v5272
  %v5490 = vunpack.c.l.b16 %v5273
  %v5491 = vunpack.c.h.b16 %v5273
  %v5492 = vunpack.c.l.b16 %v5274
  %v5493 = vunpack.c.h.b16 %v5274
  %v5494 = vunpack.c.l.b16 %v5275
  %v5495 = vunpack.c.h.b16 %v5275
  %v5496 = vunpack.c.l.b16 %v5276
  %v5497 = vunpack.c.h.b16 %v5276
  %v5498 = vunpack.c.l.b16 %v5277
  %v5499 = vunpack.c.h.b16 %v5277
  %v5500 = vunpack.c.l.b16 %v5278
  %v5501 = vunpack.c.h.b16 %v5278
  %v5502 = vunpack.c.l.b16 %v5279
  %v5503 = vunpack.c.h.b16 %v5279
  %v5504 = vunpack.c.l.b16 %v5280
  %v5505 = vunpack.c.h.b16 %v5280
  %v5506 = vunpack.c.l.b16 %v5281
  %v5507 = vunpack.c.h.b16 %v5281
  %v5508 = vunpack.c.l.b16 %v5282
  %v5509 = vunpack.c.h.b16 %v5282
  %v5510 = vunpack.c.l.b16 %v5283
  %v5511 = vunpack.c.h.b16 %v5283
  %v5512 = vunpack.c.l.b16 %v5284
  %v5513 = vunpack.c.h.b16 %v5284
  %v5514 = vunpack.c.l.b16 %v5285
  %v5515 = vunpack.c.h.b16 %v5285
  %v5516 = vunpack.c.l.b16 %v5286
  %v5517 = vunpack.c.h.b16 %v5286
  %v5518 = vunpack.c.l.b16 %v5287
  %v5519 = vunpack.c.h.b16 %v5287
  %v5520 = vunpack.c.l.b16 %v5288
  %v5521 = vunpack.c.h.b16 %v5288
  %v5522 = vunpack.c.l.b16 %v5289
  %v5523 = vunpack.c.h.b16 %v5289
  %v5524 = vpack.c.b16 %v5404, %v5396
  %v5525 = vpack.c.b16 %v5405, %v5397
  %v5526 = vpack.c.b16 %v5406, %v5398
  %v5527 = vpack.c.b16 %v5407, %v5399
  %v5528 = vpack.c.b16 %v5408, %v5400
  %v5529 = vpack.c.b16 %v5409, %v5401
  %v5530 = vpack.c.b16 %v5410, %v5402
  %v5531 = vpack.c.b16 %v5411, %v5403
  %v5532 = vpack.c.b16 %v5420, %v5412
  %v5533 = vpack.c.b16 %v5421, %v5413
  %v5534 = vpack.c.b16 %v5422, %v5414
  %v5535 = vpack.c.b16 %v5423, %v5415
  %v5536 = vpack.c.b16 %v5424, %v5416
  %v5537 = vpack.c.b16 %v5425, %v5417
  %v5538 = vpack.c.b16 %v5426, %v5418
  %v5539 = vpack.c.b16 %v5427, %v5419
  %v5540 = vpack.c.b16 %v5436, %v5428
  %v5541 = vpack.c.b16 %v5437, %v5429
  %v5542 = vpack.c.b16 %v5438, %v5430
  %v5543 = vpack.c.b16 %v5439, %v5431
  %v5544 = vpack.c.b16 %v5440, %v5432
  %v5545 = vpack.c.b16 %v5441, %v5433
  %v5546 = vpack.c.b16 %v5442, %v5434
  %v5547 = vpack.c.b16 %v5443, %v5435
  %v5548 = vpack.c.b16 %v5452, %v5444
  %v5549 = vpack.c.b16 %v5453, %v5445
  %v5550 = vpack.c.b16 %v5454, %v5446
  %v5551 = vpack.c.b16 %v5455, %v5447
  %v5552 = vpack.c.b16 %v5456, %v5448
  %v5553 = vpack.c.b16 %v5457, %v5449
  %v5554 = vpack.c.b16 %v5458, %v5450
  %v5555 = vpack.c.b16 %v5459, %v5451
  %v5556 = vpack.c.b16 %v5468, %v5460
  %v5557 = vpack.c.b16 %v5469, %v5461
  %v5558 = vpack.c.b16 %v5470, %v5462
  %v5559 = vpack.c.b16 %v5471, %v5463
  %v5560 = vpack.c.b16 %v5472, %v5464
  %v5561 = vpack.c.b16 %v5473, %v5465
  %v5562 = vpack.c.b16 %v5474, %v5466
  %v5563 = vpack.c.b16 %v5475, %v5467
  %v5564 = vpack.c.b16 %v5484, %v5476
  %v5565 = vpack.c.b16 %v5485, %v5477
  %v5566 = vpack.c.b16 %v5486, %v5478
  %v5567 = vpack.c.b16 %v5487, %v5479
  %v5568 = vpack.c.b16 %v5488, %v5480
  %v5569 = vpack.c.b16 %v5489, %v5481
  %v5570 = vpack.c.b16 %v5490, %v5482
  %v5571 = vpack.c.b16 %v5491, %v5483
  %v5572 = vpack.c.b16 %v5500, %v5492
  %v5573 = vpack.c.b16 %v5501, %v5493
  %v5574 = vpack.c.b16 %v5502, %v5494
  %v5575 = vpack.c.b16 %v5503, %v5495
  %v5576 = vpack.c.b16 %v5504, %v5496
  %v5577 = vpack.c.b16 %v5505, %v5497
  %v5578 = vpack.c.b16 %v5506, %v5498
  %v5579 = vpack.c.b16 %v5507, %v5499
  %v5580 = vpack.c.b16 %v5516, %v5508
  %v5581 = vpack.c.b16 %v5517, %v5509
  %v5582 = vpack.c.b16 %v5518, %v5510
  %v5583 = vpack.c.b16 %v5519, %v5511
  %v5584 = vpack.c.b16 %v5520, %v5512
  %v5585 = vpack.c.b16 %v5521, %v5513
  %v5586 = vpack.c.b16 %v5522, %v5514
  %v5587 = vpack.c.b16 %v5523, %v5515
  %5652 = vmatprep.subr.bf16.mxu0 %v5581
  %5653 = vmatpush1.bf16.msra.mxu0 %v5580
  %5654 = vmatprep.subr.bf16.mxu0 %v5573
  %5655 = vmatpush1.bf16.msra.mxu0 %v5572
  %5656 = vmatprep.subr.bf16.mxu0 %v5565
  %5657 = vmatpush1.bf16.msra.mxu0 %v5564
  %5658 = vmatprep.subr.bf16.mxu0 %v5557
  %5659 = vmatpush1.bf16.msra.mxu0 %v5556
  %5660 = vmatprep.subr.bf16.mxu0 %v5549
  %5661 = vmatpush1.bf16.msra.mxu0 %v5548
  %5662 = vmatprep.subr.bf16.mxu0 %v5541
  %5663 = vmatpush1.bf16.msra.mxu0 %v5540
  %5664 = vmatprep.subr.bf16.mxu0 %v5533
  %5665 = vmatpush1.bf16.msra.mxu0 %v5532
  %5666 = vmatprep.subr.bf16.mxu0 %v5525
  %5667 = vmatpush1.bf16.msra.mxu0 %v5524
  %5668 = vmatprep.subr.bf16.mxu0 0
  %5669 = vmatpush2.bf16.msra.mxu0 0
  %5670 = vmatprep.subr.bf16.mxu0 0
  %5671 = vmatpush2.bf16.msra.mxu0 0
  %5672 = vmatprep.subr.bf16.mxu0 0
  %5673 = vmatpush2.bf16.msra.mxu0 0
  %5674 = vmatprep.subr.bf16.mxu0 0
  %5675 = vmatpush2.bf16.msra.mxu0 0
  %5676 = vmatprep.subr.bf16.mxu0 0
  %5677 = vmatpush2.bf16.msra.mxu0 0
  %5678 = vmatprep.subr.bf16.mxu0 0
  %5679 = vmatpush2.bf16.msra.mxu0 0
  %5680 = vmatprep.subr.bf16.mxu0 0
  %5681 = vmatpush2.bf16.msra.mxu0 0
  %5682 = vmatprep.subr.bf16.mxu0 0
  %5683 = vmatpush2.bf16.msra.mxu0 0
  %5684 = vmatprep.mubr.bf16.mxu0 0
  %5685 = vmatmul.mubr.bf16.gmra.mxu0 %v5225
  %v5686 = vpop.f32.mrf.mxu0
  %v5687 = vadd.f32 %v5295, %v5686
  %v5688 = vpop.f32.mrf.mxu0
  %v5689 = vadd.f32 %v5299, %v5688
  %v5690 = vpop.f32.mrf.mxu0
  %v5691 = vpop.f32.mrf.mxu0
  %5692 = vdwg.mxu0
  %5693 = vmatprep.subr.bf16.mxu0 %v5583
  %5694 = vmatpush1.bf16.msra.mxu0 %v5582
  %5695 = vmatprep.subr.bf16.mxu0 %v5575
  %5696 = vmatpush1.bf16.msra.mxu0 %v5574
  %5697 = vmatprep.subr.bf16.mxu0 %v5567
  %5698 = vmatpush1.bf16.msra.mxu0 %v5566
  %5699 = vmatprep.subr.bf16.mxu0 %v5559
  %5700 = vmatpush1.bf16.msra.mxu0 %v5558
  %5701 = vmatprep.subr.bf16.mxu0 %v5551
  %5702 = vmatpush1.bf16.msra.mxu0 %v5550
  %5703 = vmatprep.subr.bf16.mxu0 %v5543
  %5704 = vmatpush1.bf16.msra.mxu0 %v5542
  %5705 = vmatprep.subr.bf16.mxu0 %v5535
  %5706 = vmatpush1.bf16.msra.mxu0 %v5534
  %5707 = vmatprep.subr.bf16.mxu0 %v5527
  %5708 = vmatpush1.bf16.msra.mxu0 %v5526
  %5709 = vmatprep.subr.bf16.mxu0 0
  %5710 = vmatpush2.bf16.msra.mxu0 0
  %5711 = vmatprep.subr.bf16.mxu0 0
  %5712 = vmatpush2.bf16.msra.mxu0 0
  %5713 = vmatprep.subr.bf16.mxu0 0
  %5714 = vmatpush2.bf16.msra.mxu0 0
  %5715 = vmatprep.subr.bf16.mxu0 0
  %5716 = vmatpush2.bf16.msra.mxu0 0
  %5717 = vmatprep.subr.bf16.mxu0 0
  %5718 = vmatpush2.bf16.msra.mxu0 0
  %5719 = vmatprep.subr.bf16.mxu0 0
  %5720 = vmatpush2.bf16.msra.mxu0 0
  %5721 = vmatprep.subr.bf16.mxu0 0
  %5722 = vmatpush2.bf16.msra.mxu0 0
  %5723 = vmatprep.subr.bf16.mxu0 0
  %5724 = vmatpush2.bf16.msra.mxu0 0
  %5725 = vmatprep.mubr.bf16.mxu0 0
  %5726 = vmatmul.mubr.bf16.gmra.mxu0 %v5225
  %v5727 = vpop.f32.mrf.mxu0
  %v5728 = vadd.f32 %v5303, %v5727
  %v5729 = vpop.f32.mrf.mxu0
  %v5730 = vadd.f32 %v5307, %v5729
  %v5731 = vpop.f32.mrf.mxu0
  %v5732 = vpop.f32.mrf.mxu0
  %5733 = vdwg.mxu0
  %5734 = vmatprep.subr.bf16.mxu0 %v5585
  %5735 = vmatpush1.bf16.msra.mxu0 %v5584
  %5736 = vmatprep.subr.bf16.mxu0 %v5577
  %5737 = vmatpush1.bf16.msra.mxu0 %v5576
  %5738 = vmatprep.subr.bf16.mxu0 %v5569
  %5739 = vmatpush1.bf16.msra.mxu0 %v5568
  %5740 = vmatprep.subr.bf16.mxu0 %v5561
  %5741 = vmatpush1.bf16.msra.mxu0 %v5560
  %5742 = vmatprep.subr.bf16.mxu0 %v5553
  %5743 = vmatpush1.bf16.msra.mxu0 %v5552
  %5744 = vmatprep.subr.bf16.mxu0 %v5545
  %5745 = vmatpush1.bf16.msra.mxu0 %v5544
  %5746 = vmatprep.subr.bf16.mxu0 %v5537
  %5747 = vmatpush1.bf16.msra.mxu0 %v5536
  %5748 = vmatprep.subr.bf16.mxu0 %v5529
  %5749 = vmatpush1.bf16.msra.mxu0 %v5528
  %5750 = vmatprep.subr.bf16.mxu0 0
  %5751 = vmatpush2.bf16.msra.mxu0 0
  %5752 = vmatprep.subr.bf16.mxu0 0
  %5753 = vmatpush2.bf16.msra.mxu0 0
  %5754 = vmatprep.subr.bf16.mxu0 0
  %5755 = vmatpush2.bf16.msra.mxu0 0
  %5756 = vmatprep.subr.bf16.mxu0 0
  %5757 = vmatpush2.bf16.msra.mxu0 0
  %5758 = vmatprep.subr.bf16.mxu0 0
  %5759 = vmatpush2.bf16.msra.mxu0 0
  %5760 = vmatprep.subr.bf16.mxu0 0
  %5761 = vmatpush2.bf16.msra.mxu0 0
  %5762 = vmatprep.subr.bf16.mxu0 0
  %5763 = vmatpush2.bf16.msra.mxu0 0
  %5764 = vmatprep.subr.bf16.mxu0 0
  %5765 = vmatpush2.bf16.msra.mxu0 0
  %5766 = vmatprep.mubr.bf16.mxu0 0
  %5767 = vmatmul.mubr.bf16.gmra.mxu0 %v5225
  %v5768 = vpop.f32.mrf.mxu0
  %v5769 = vadd.f32 %v5311, %v5768
  %v5770 = vpop.f32.mrf.mxu0
  %v5771 = vadd.f32 %v5315, %v5770
  %v5772 = vpop.f32.mrf.mxu0
  %v5773 = vpop.f32.mrf.mxu0
  %5774 = vdwg.mxu0
  %5775 = vmatprep.subr.bf16.mxu0 %v5587
  %5776 = vmatpush1.bf16.msra.mxu0 %v5586
  %5777 = vmatprep.subr.bf16.mxu0 %v5579
  %5778 = vmatpush1.bf16.msra.mxu0 %v5578
  %5779 = vmatprep.subr.bf16.mxu0 %v5571
  %5780 = vmatpush1.bf16.msra.mxu0 %v5570
  %5781 = vmatprep.subr.bf16.mxu0 %v5563
  %5782 = vmatpush1.bf16.msra.mxu0 %v5562
  %5783 = vmatprep.subr.bf16.mxu0 %v5555
  %5784 = vmatpush1.bf16.msra.mxu0 %v5554
  %5785 = vmatprep.subr.bf16.mxu0 %v5547
  %5786 = vmatpush1.bf16.msra.mxu0 %v5546
  %5787 = vmatprep.subr.bf16.mxu0 %v5539
  %5788 = vmatpush1.bf16.msra.mxu0 %v5538
  %5789 = vmatprep.subr.bf16.mxu0 %v5531
  %5790 = vmatpush1.bf16.msra.mxu0 %v5530
  %5791 = vmatprep.subr.bf16.mxu0 0
  %5792 = vmatpush2.bf16.msra.mxu0 0
  %5793 = vmatprep.subr.bf16.mxu0 0
  %5794 = vmatpush2.bf16.msra.mxu0 0
  %5795 = vmatprep.subr.bf16.mxu0 0
  %5796 = vmatpush2.bf16.msra.mxu0 0
  %5797 = vmatprep.subr.bf16.mxu0 0
  %5798 = vmatpush2.bf16.msra.mxu0 0
  %5799 = vmatprep.subr.bf16.mxu0 0
  %5800 = vmatpush2.bf16.msra.mxu0 0
  %5801 = vmatprep.subr.bf16.mxu0 0
  %5802 = vmatpush2.bf16.msra.mxu0 0
  %5803 = vmatprep.subr.bf16.mxu0 0
  %5804 = vmatpush2.bf16.msra.mxu0 0
  %5805 = vmatprep.subr.bf16.mxu0 0
  %5806 = vmatpush2.bf16.msra.mxu0 0
  %5807 = vmatprep.mubr.bf16.mxu0 0
  %5808 = vmatmul.mubr.bf16.gmra.mxu0 %v5225
  %v5809 = vpop.f32.mrf.mxu0
  %v5810 = vadd.f32 %v5319, %v5809
  %v5811 = vpop.f32.mrf.mxu0
  %v5812 = vadd.f32 %v5323, %v5811
  %v5813 = vpop.f32.mrf.mxu0
  %v5814 = vpop.f32.mrf.mxu0
  %5815 = vdwg.mxu0
  %v5816 = vld [vmem:[%s19] sm:$0xff]
  %v5817 = vld [vmem:[%s19 + $0x8] sm:$0xff]
  %v5818 = vld [vmem:[%s19 + $0x10] sm:$0xff]
  %v5819 = vld [vmem:[%s19 + $0x18] sm:$0xff]
  %v5820 = vld [vmem:[%s19 + $0x20] sm:$0xff]
  %v5821 = vld [vmem:[%s19 + $0x28] sm:$0xff]
  %v5822 = vld [vmem:[%s19 + $0x30] sm:$0xff]
  %v5823 = vld [vmem:[%s19 + $0x38] sm:$0xff]
  %v5824 = vld [vmem:[%s19 + $0x40] sm:$0xff]
  %v5825 = vld [vmem:[%s19 + $0x48] sm:$0xff]
  %v5826 = vld [vmem:[%s19 + $0x50] sm:$0xff]
  %v5827 = vld [vmem:[%s19 + $0x58] sm:$0xff]
  %v5828 = vld [vmem:[%s19 + $0x60] sm:$0xff]
  %v5829 = vld [vmem:[%s19 + $0x68] sm:$0xff]
  %v5830 = vld [vmem:[%s19 + $0x70] sm:$0xff]
  %v5831 = vld [vmem:[%s19 + $0x78] sm:$0xff]
  %v5832 = vld [vmem:[%s19 + $0x80] sm:$0xff]
  %v5833 = vld [vmem:[%s19 + $0x88] sm:$0xff]
  %v5834 = vld [vmem:[%s19 + $0x90] sm:$0xff]
  %v5835 = vld [vmem:[%s19 + $0x98] sm:$0xff]
  %v5836 = vld [vmem:[%s19 + $0xa0] sm:$0xff]
  %v5837 = vld [vmem:[%s19 + $0xa8] sm:$0xff]
  %v5838 = vld [vmem:[%s19 + $0xb0] sm:$0xff]
  %v5839 = vld [vmem:[%s19 + $0xb8] sm:$0xff]
  %v5840 = vld [vmem:[%s19 + $0xc0] sm:$0xff]
  %v5841 = vld [vmem:[%s19 + $0xc8] sm:$0xff]
  %v5842 = vld [vmem:[%s19 + $0xd0] sm:$0xff]
  %v5843 = vld [vmem:[%s19 + $0xd8] sm:$0xff]
  %v5844 = vld [vmem:[%s19 + $0xe0] sm:$0xff]
  %v5845 = vld [vmem:[%s19 + $0xe8] sm:$0xff]
  %v5846 = vld [vmem:[%s19 + $0xf0] sm:$0xff]
  %v5847 = vld [vmem:[%s19 + $0xf8] sm:$0xff]
  %v5848 = vld [vmem:[%s19 + $0x100] sm:$0xff]
  %v5849 = vld [vmem:[%s19 + $0x108] sm:$0xff]
  %v5850 = vld [vmem:[%s19 + $0x110] sm:$0xff]
  %v5851 = vld [vmem:[%s19 + $0x118] sm:$0xff]
  %v5852 = vld [vmem:[%s19 + $0x120] sm:$0xff]
  %v5853 = vld [vmem:[%s19 + $0x128] sm:$0xff]
  %v5854 = vld [vmem:[%s19 + $0x130] sm:$0xff]
  %v5855 = vld [vmem:[%s19 + $0x138] sm:$0xff]
  %v5856 = vld [vmem:[%s19 + $0x140] sm:$0xff]
  %v5857 = vld [vmem:[%s19 + $0x148] sm:$0xff]
  %v5858 = vld [vmem:[%s19 + $0x150] sm:$0xff]
  %v5859 = vld [vmem:[%s19 + $0x158] sm:$0xff]
  %v5860 = vld [vmem:[%s19 + $0x160] sm:$0xff]
  %v5861 = vld [vmem:[%s19 + $0x168] sm:$0xff]
  %v5862 = vld [vmem:[%s19 + $0x170] sm:$0xff]
  %v5863 = vld [vmem:[%s19 + $0x178] sm:$0xff]
  %v5864 = vld [vmem:[%s19 + $0x180] sm:$0xff]
  %v5865 = vld [vmem:[%s19 + $0x188] sm:$0xff]
  %v5866 = vld [vmem:[%s19 + $0x190] sm:$0xff]
  %v5867 = vld [vmem:[%s19 + $0x198] sm:$0xff]
  %v5868 = vld [vmem:[%s19 + $0x1a0] sm:$0xff]
  %v5869 = vld [vmem:[%s19 + $0x1a8] sm:$0xff]
  %v5870 = vld [vmem:[%s19 + $0x1b0] sm:$0xff]
  %v5871 = vld [vmem:[%s19 + $0x1b8] sm:$0xff]
  %v5872 = vld [vmem:[%s19 + $0x1c0] sm:$0xff]
  %v5873 = vld [vmem:[%s19 + $0x1c8] sm:$0xff]
  %v5874 = vld [vmem:[%s19 + $0x1d0] sm:$0xff]
  %v5875 = vld [vmem:[%s19 + $0x1d8] sm:$0xff]
  %v5876 = vld [vmem:[%s19 + $0x1e0] sm:$0xff]
  %v5877 = vld [vmem:[%s19 + $0x1e8] sm:$0xff]
  %v5878 = vld [vmem:[%s19 + $0x1f0] sm:$0xff]
  %v5879 = vld [vmem:[%s19 + $0x1f8] sm:$0xff]
  %v5912 = vunpack.c.l.b16 %v5816
  %v5913 = vunpack.c.h.b16 %v5816
  %v5914 = vunpack.c.l.b16 %v5817
  %v5915 = vunpack.c.h.b16 %v5817
  %v5916 = vunpack.c.l.b16 %v5820
  %v5917 = vunpack.c.h.b16 %v5820
  %v5918 = vunpack.c.l.b16 %v5821
  %v5919 = vunpack.c.h.b16 %v5821
  %v5920 = vunpack.c.l.b16 %v5824
  %v5921 = vunpack.c.h.b16 %v5824
  %v5922 = vunpack.c.l.b16 %v5825
  %v5923 = vunpack.c.h.b16 %v5825
  %v5924 = vunpack.c.l.b16 %v5828
  %v5925 = vunpack.c.h.b16 %v5828
  %v5926 = vunpack.c.l.b16 %v5829
  %v5927 = vunpack.c.h.b16 %v5829
  %v5928 = vunpack.c.l.b16 %v5832
  %v5929 = vunpack.c.h.b16 %v5832
  %v5930 = vunpack.c.l.b16 %v5833
  %v5931 = vunpack.c.h.b16 %v5833
  %v5932 = vunpack.c.l.b16 %v5836
  %v5933 = vunpack.c.h.b16 %v5836
  %v5934 = vunpack.c.l.b16 %v5837
  %v5935 = vunpack.c.h.b16 %v5837
  %v5936 = vunpack.c.l.b16 %v5840
  %v5937 = vunpack.c.h.b16 %v5840
  %v5938 = vunpack.c.l.b16 %v5841
  %v5939 = vunpack.c.h.b16 %v5841
  %v5940 = vunpack.c.l.b16 %v5844
  %v5941 = vunpack.c.h.b16 %v5844
  %v5942 = vunpack.c.l.b16 %v5845
  %v5943 = vunpack.c.h.b16 %v5845
  %v5944 = vunpack.c.l.b16 %v5848
  %v5945 = vunpack.c.h.b16 %v5848
  %v5946 = vunpack.c.l.b16 %v5849
  %v5947 = vunpack.c.h.b16 %v5849
  %v5948 = vunpack.c.l.b16 %v5852
  %v5949 = vunpack.c.h.b16 %v5852
  %v5950 = vunpack.c.l.b16 %v5853
  %v5951 = vunpack.c.h.b16 %v5853
  %v5952 = vunpack.c.l.b16 %v5856
  %v5953 = vunpack.c.h.b16 %v5856
  %v5954 = vunpack.c.l.b16 %v5857
  %v5955 = vunpack.c.h.b16 %v5857
  %v5956 = vunpack.c.l.b16 %v5860
  %v5957 = vunpack.c.h.b16 %v5860
  %v5958 = vunpack.c.l.b16 %v5861
  %v5959 = vunpack.c.h.b16 %v5861
  %v5960 = vunpack.c.l.b16 %v5864
  %v5961 = vunpack.c.h.b16 %v5864
  %v5962 = vunpack.c.l.b16 %v5865
  %v5963 = vunpack.c.h.b16 %v5865
  %v5964 = vunpack.c.l.b16 %v5868
  %v5965 = vunpack.c.h.b16 %v5868
  %v5966 = vunpack.c.l.b16 %v5869
  %v5967 = vunpack.c.h.b16 %v5869
  %v5968 = vunpack.c.l.b16 %v5872
  %v5969 = vunpack.c.h.b16 %v5872
  %v5970 = vunpack.c.l.b16 %v5873
  %v5971 = vunpack.c.h.b16 %v5873
  %v5972 = vunpack.c.l.b16 %v5876
  %v5973 = vunpack.c.h.b16 %v5876
  %v5974 = vunpack.c.l.b16 %v5877
  %v5975 = vunpack.c.h.b16 %v5877
  %v5976 = vpack.c.b16 %v5916, %v5912
  %v5977 = vpack.c.b16 %v5917, %v5913
  %v5978 = vpack.c.b16 %v5918, %v5914
  %v5979 = vpack.c.b16 %v5919, %v5915
  %v5980 = vpack.c.b16 %v5924, %v5920
  %v5981 = vpack.c.b16 %v5925, %v5921
  %v5982 = vpack.c.b16 %v5926, %v5922
  %v5983 = vpack.c.b16 %v5927, %v5923
  %v5984 = vpack.c.b16 %v5932, %v5928
  %v5985 = vpack.c.b16 %v5933, %v5929
  %v5986 = vpack.c.b16 %v5934, %v5930
  %v5987 = vpack.c.b16 %v5935, %v5931
  %v5988 = vpack.c.b16 %v5940, %v5936
  %v5989 = vpack.c.b16 %v5941, %v5937
  %v5990 = vpack.c.b16 %v5942, %v5938
  %v5991 = vpack.c.b16 %v5943, %v5939
  %v5992 = vpack.c.b16 %v5948, %v5944
  %v5993 = vpack.c.b16 %v5949, %v5945
  %v5994 = vpack.c.b16 %v5950, %v5946
  %v5995 = vpack.c.b16 %v5951, %v5947
  %v5996 = vpack.c.b16 %v5956, %v5952
  %v5997 = vpack.c.b16 %v5957, %v5953
  %v5998 = vpack.c.b16 %v5958, %v5954
  %v5999 = vpack.c.b16 %v5959, %v5955
  %v6000 = vpack.c.b16 %v5964, %v5960
  %v6001 = vpack.c.b16 %v5965, %v5961
  %v6002 = vpack.c.b16 %v5966, %v5962
  %v6003 = vpack.c.b16 %v5967, %v5963
  %v6004 = vpack.c.b16 %v5972, %v5968
  %v6005 = vpack.c.b16 %v5973, %v5969
  %v6006 = vpack.c.b16 %v5974, %v5970
  %v6007 = vpack.c.b16 %v5975, %v5971
  %6040 = vmatprep.subr.bf16.mxu0 %v6005
  %6041 = vmatpush1.bf16.msra.mxu0 %v6004
  %6042 = vmatprep.subr.bf16.mxu0 %v6001
  %6043 = vmatpush1.bf16.msra.mxu0 %v6000
  %6044 = vmatprep.subr.bf16.mxu0 %v5997
  %6045 = vmatpush1.bf16.msra.mxu0 %v5996
  %6046 = vmatprep.subr.bf16.mxu0 %v5993
  %6047 = vmatpush1.bf16.msra.mxu0 %v5992
  %6048 = vmatprep.subr.bf16.mxu0 %v5989
  %6049 = vmatpush1.bf16.msra.mxu0 %v5988
  %6050 = vmatprep.subr.bf16.mxu0 %v5985
  %6051 = vmatpush1.bf16.msra.mxu0 %v5984
  %6052 = vmatprep.subr.bf16.mxu0 %v5981
  %6053 = vmatpush1.bf16.msra.mxu0 %v5980
  %6054 = vmatprep.subr.bf16.mxu0 %v5977
  %6055 = vmatpush1.bf16.msra.mxu0 %v5976
  %6056 = vmatprep.subr.bf16.mxu0 0
  %6057 = vmatpush2.bf16.msra.mxu0 0
  %6058 = vmatprep.subr.bf16.mxu0 0
  %6059 = vmatpush2.bf16.msra.mxu0 0
  %6060 = vmatprep.subr.bf16.mxu0 0
  %6061 = vmatpush2.bf16.msra.mxu0 0
  %6062 = vmatprep.subr.bf16.mxu0 0
  %6063 = vmatpush2.bf16.msra.mxu0 0
  %6064 = vmatprep.subr.bf16.mxu0 0
  %6065 = vmatpush2.bf16.msra.mxu0 0
  %6066 = vmatprep.subr.bf16.mxu0 0
  %6067 = vmatpush2.bf16.msra.mxu0 0
  %6068 = vmatprep.subr.bf16.mxu0 0
  %6069 = vmatpush2.bf16.msra.mxu0 0
  %6070 = vmatprep.subr.bf16.mxu0 0
  %6071 = vmatpush2.bf16.msra.mxu0 0
  %6072 = vmatprep.mubr.bf16.mxu0 0
  %6073 = vmatmul.mubr.bf16.gmra.mxu0 0
  %v6074 = vpop.f32.mrf.mxu0
  %v6075 = vadd.f32 0.0, %v6074
  %v6076 = vpop.f32.mrf.mxu0
  %v6077 = vadd.f32 0.0, %v6076
  %v6078 = vpop.f32.mrf.mxu0
  %v6079 = vpop.f32.mrf.mxu0
  %6080 = vdwg.mxu0
  %6081 = vmatprep.subr.bf16.mxu0 %v6007
  %6082 = vmatpush1.bf16.msra.mxu0 %v6006
  %6083 = vmatprep.subr.bf16.mxu0 %v6003
  %6084 = vmatpush1.bf16.msra.mxu0 %v6002
  %6085 = vmatprep.subr.bf16.mxu0 %v5999
  %6086 = vmatpush1.bf16.msra.mxu0 %v5998
  %6087 = vmatprep.subr.bf16.mxu0 %v5995
  %6088 = vmatpush1.bf16.msra.mxu0 %v5994
  %6089 = vmatprep.subr.bf16.mxu0 %v5991
  %6090 = vmatpush1.bf16.msra.mxu0 %v5990
  %6091 = vmatprep.subr.bf16.mxu0 %v5987
  %6092 = vmatpush1.bf16.msra.mxu0 %v5986
  %6093 = vmatprep.subr.bf16.mxu0 %v5983
  %6094 = vmatpush1.bf16.msra.mxu0 %v5982
  %6095 = vmatprep.subr.bf16.mxu0 %v5979
  %6096 = vmatpush1.bf16.msra.mxu0 %v5978
  %6097 = vmatprep.subr.bf16.mxu0 0
  %6098 = vmatpush2.bf16.msra.mxu0 0
  %6099 = vmatprep.subr.bf16.mxu0 0
  %6100 = vmatpush2.bf16.msra.mxu0 0
  %6101 = vmatprep.subr.bf16.mxu0 0
  %6102 = vmatpush2.bf16.msra.mxu0 0
  %6103 = vmatprep.subr.bf16.mxu0 0
  %6104 = vmatpush2.bf16.msra.mxu0 0
  %6105 = vmatprep.subr.bf16.mxu0 0
  %6106 = vmatpush2.bf16.msra.mxu0 0
  %6107 = vmatprep.subr.bf16.mxu0 0
  %6108 = vmatpush2.bf16.msra.mxu0 0
  %6109 = vmatprep.subr.bf16.mxu0 0
  %6110 = vmatpush2.bf16.msra.mxu0 0
  %6111 = vmatprep.subr.bf16.mxu0 0
  %6112 = vmatpush2.bf16.msra.mxu0 0
  %6113 = vmatprep.mubr.bf16.mxu0 0
  %6114 = vmatmul.mubr.bf16.gmra.mxu0 0
  %v6115 = vpop.f32.mrf.mxu0
  %v6116 = vadd.f32 0.0, %v6115
  %v6117 = vpop.f32.mrf.mxu0
  %v6118 = vadd.f32 0.0, %v6117
  %v6119 = vpop.f32.mrf.mxu0
  %v6120 = vpop.f32.mrf.mxu0
  %6121 = vdwg.mxu0
  %v6122 = vadd.f32 %v5687, %v6075
  %v6123 = vadd.f32 %v5689, %v6077
  %v6124 = vadd.f32 %v5728, %v6116
  %v6125 = vadd.f32 %v5730, %v6118
  %v6158 = vunpack.c.l.b16 %v5818
  %v6159 = vunpack.c.h.b16 %v5818
  %v6160 = vunpack.c.l.b16 %v5819
  %v6161 = vunpack.c.h.b16 %v5819
  %v6162 = vunpack.c.l.b16 %v5822
  %v6163 = vunpack.c.h.b16 %v5822
  %v6164 = vunpack.c.l.b16 %v5823
  %v6165 = vunpack.c.h.b16 %v5823
  %v6166 = vunpack.c.l.b16 %v5826
  %v6167 = vunpack.c.h.b16 %v5826
  %v6168 = vunpack.c.l.b16 %v5827
  %v6169 = vunpack.c.h.b16 %v5827
  %v6170 = vunpack.c.l.b16 %v5830
  %v6171 = vunpack.c.h.b16 %v5830
  %v6172 = vunpack.c.l.b16 %v5831
  %v6173 = vunpack.c.h.b16 %v5831
  %v6174 = vunpack.c.l.b16 %v5834
  %v6175 = vunpack.c.h.b16 %v5834
  %v6176 = vunpack.c.l.b16 %v5835
  %v6177 = vunpack.c.h.b16 %v5835
  %v6178 = vunpack.c.l.b16 %v5838
  %v6179 = vunpack.c.h.b16 %v5838
  %v6180 = vunpack.c.l.b16 %v5839
  %v6181 = vunpack.c.h.b16 %v5839
  %v6182 = vunpack.c.l.b16 %v5842
  %v6183 = vunpack.c.h.b16 %v5842
  %v6184 = vunpack.c.l.b16 %v5843
  %v6185 = vunpack.c.h.b16 %v5843
  %v6186 = vunpack.c.l.b16 %v5846
  %v6187 = vunpack.c.h.b16 %v5846
  %v6188 = vunpack.c.l.b16 %v5847
  %v6189 = vunpack.c.h.b16 %v5847
  %v6190 = vunpack.c.l.b16 %v5850
  %v6191 = vunpack.c.h.b16 %v5850
  %v6192 = vunpack.c.l.b16 %v5851
  %v6193 = vunpack.c.h.b16 %v5851
  %v6194 = vunpack.c.l.b16 %v5854
  %v6195 = vunpack.c.h.b16 %v5854
  %v6196 = vunpack.c.l.b16 %v5855
  %v6197 = vunpack.c.h.b16 %v5855
  %v6198 = vunpack.c.l.b16 %v5858
  %v6199 = vunpack.c.h.b16 %v5858
  %v6200 = vunpack.c.l.b16 %v5859
  %v6201 = vunpack.c.h.b16 %v5859
  %v6202 = vunpack.c.l.b16 %v5862
  %v6203 = vunpack.c.h.b16 %v5862
  %v6204 = vunpack.c.l.b16 %v5863
  %v6205 = vunpack.c.h.b16 %v5863
  %v6206 = vunpack.c.l.b16 %v5866
  %v6207 = vunpack.c.h.b16 %v5866
  %v6208 = vunpack.c.l.b16 %v5867
  %v6209 = vunpack.c.h.b16 %v5867
  %v6210 = vunpack.c.l.b16 %v5870
  %v6211 = vunpack.c.h.b16 %v5870
  %v6212 = vunpack.c.l.b16 %v5871
  %v6213 = vunpack.c.h.b16 %v5871
  %v6214 = vunpack.c.l.b16 %v5874
  %v6215 = vunpack.c.h.b16 %v5874
  %v6216 = vunpack.c.l.b16 %v5875
  %v6217 = vunpack.c.h.b16 %v5875
  %v6218 = vunpack.c.l.b16 %v5878
  %v6219 = vunpack.c.h.b16 %v5878
  %v6220 = vunpack.c.l.b16 %v5879
  %v6221 = vunpack.c.h.b16 %v5879
  %v6222 = vpack.c.b16 %v6162, %v6158
  %v6223 = vpack.c.b16 %v6163, %v6159
  %v6224 = vpack.c.b16 %v6164, %v6160
  %v6225 = vpack.c.b16 %v6165, %v6161
  %v6226 = vpack.c.b16 %v6170, %v6166
  %v6227 = vpack.c.b16 %v6171, %v6167
  %v6228 = vpack.c.b16 %v6172, %v6168
  %v6229 = vpack.c.b16 %v6173, %v6169
  %v6230 = vpack.c.b16 %v6178, %v6174
  %v6231 = vpack.c.b16 %v6179, %v6175
  %v6232 = vpack.c.b16 %v6180, %v6176
  %v6233 = vpack.c.b16 %v6181, %v6177
  %v6234 = vpack.c.b16 %v6186, %v6182
  %v6235 = vpack.c.b16 %v6187, %v6183
  %v6236 = vpack.c.b16 %v6188, %v6184
  %v6237 = vpack.c.b16 %v6189, %v6185
  %v6238 = vpack.c.b16 %v6194, %v6190
  %v6239 = vpack.c.b16 %v6195, %v6191
  %v6240 = vpack.c.b16 %v6196, %v6192
  %v6241 = vpack.c.b16 %v6197, %v6193
  %v6242 = vpack.c.b16 %v6202, %v6198
  %v6243 = vpack.c.b16 %v6203, %v6199
  %v6244 = vpack.c.b16 %v6204, %v6200
  %v6245 = vpack.c.b16 %v6205, %v6201
  %v6246 = vpack.c.b16 %v6210, %v6206
  %v6247 = vpack.c.b16 %v6211, %v6207
  %v6248 = vpack.c.b16 %v6212, %v6208
  %v6249 = vpack.c.b16 %v6213, %v6209
  %v6250 = vpack.c.b16 %v6218, %v6214
  %v6251 = vpack.c.b16 %v6219, %v6215
  %v6252 = vpack.c.b16 %v6220, %v6216
  %v6253 = vpack.c.b16 %v6221, %v6217
  %6286 = vmatprep.subr.bf16.mxu0 %v6251
  %6287 = vmatpush1.bf16.msra.mxu0 %v6250
  %6288 = vmatprep.subr.bf16.mxu0 %v6247
  %6289 = vmatpush1.bf16.msra.mxu0 %v6246
  %6290 = vmatprep.subr.bf16.mxu0 %v6243
  %6291 = vmatpush1.bf16.msra.mxu0 %v6242
  %6292 = vmatprep.subr.bf16.mxu0 %v6239
  %6293 = vmatpush1.bf16.msra.mxu0 %v6238
  %6294 = vmatprep.subr.bf16.mxu0 %v6235
  %6295 = vmatpush1.bf16.msra.mxu0 %v6234
  %6296 = vmatprep.subr.bf16.mxu0 %v6231
  %6297 = vmatpush1.bf16.msra.mxu0 %v6230
  %6298 = vmatprep.subr.bf16.mxu0 %v6227
  %6299 = vmatpush1.bf16.msra.mxu0 %v6226
  %6300 = vmatprep.subr.bf16.mxu0 %v6223
  %6301 = vmatpush1.bf16.msra.mxu0 %v6222
  %6302 = vmatprep.subr.bf16.mxu0 0
  %6303 = vmatpush2.bf16.msra.mxu0 0
  %6304 = vmatprep.subr.bf16.mxu0 0
  %6305 = vmatpush2.bf16.msra.mxu0 0
  %6306 = vmatprep.subr.bf16.mxu0 0
  %6307 = vmatpush2.bf16.msra.mxu0 0
  %6308 = vmatprep.subr.bf16.mxu0 0
  %6309 = vmatpush2.bf16.msra.mxu0 0
  %6310 = vmatprep.subr.bf16.mxu0 0
  %6311 = vmatpush2.bf16.msra.mxu0 0
  %6312 = vmatprep.subr.bf16.mxu0 0
  %6313 = vmatpush2.bf16.msra.mxu0 0
  %6314 = vmatprep.subr.bf16.mxu0 0
  %6315 = vmatpush2.bf16.msra.mxu0 0
  %6316 = vmatprep.subr.bf16.mxu0 0
  %6317 = vmatpush2.bf16.msra.mxu0 0
  %6318 = vmatprep.mubr.bf16.mxu0 0
  %6319 = vmatmul.mubr.bf16.gmra.mxu0 0
  %v6320 = vpop.f32.mrf.mxu0
  %v6321 = vadd.f32 0.0, %v6320
  %v6322 = vpop.f32.mrf.mxu0
  %v6323 = vadd.f32 0.0, %v6322
  %v6324 = vpop.f32.mrf.mxu0
  %v6325 = vpop.f32.mrf.mxu0
  %6326 = vdwg.mxu0
  %6327 = vmatprep.subr.bf16.mxu0 %v6253
  %6328 = vmatpush1.bf16.msra.mxu0 %v6252
  %6329 = vmatprep.subr.bf16.mxu0 %v6249
  %6330 = vmatpush1.bf16.msra.mxu0 %v6248
  %6331 = vmatprep.subr.bf16.mxu0 %v6245
  %6332 = vmatpush1.bf16.msra.mxu0 %v6244
  %6333 = vmatprep.subr.bf16.mxu0 %v6241
  %6334 = vmatpush1.bf16.msra.mxu0 %v6240
  %6335 = vmatprep.subr.bf16.mxu0 %v6237
  %6336 = vmatpush1.bf16.msra.mxu0 %v6236
  %6337 = vmatprep.subr.bf16.mxu0 %v6233
  %6338 = vmatpush1.bf16.msra.mxu0 %v6232
  %6339 = vmatprep.subr.bf16.mxu0 %v6229
  %6340 = vmatpush1.bf16.msra.mxu0 %v6228
  %6341 = vmatprep.subr.bf16.mxu0 %v6225
  %6342 = vmatpush1.bf16.msra.mxu0 %v6224
  %6343 = vmatprep.subr.bf16.mxu0 0
  %6344 = vmatpush2.bf16.msra.mxu0 0
  %6345 = vmatprep.subr.bf16.mxu0 0
  %6346 = vmatpush2.bf16.msra.mxu0 0
  %6347 = vmatprep.subr.bf16.mxu0 0
  %6348 = vmatpush2.bf16.msra.mxu0 0
  %6349 = vmatprep.subr.bf16.mxu0 0
  %6350 = vmatpush2.bf16.msra.mxu0 0
  %6351 = vmatprep.subr.bf16.mxu0 0
  %6352 = vmatpush2.bf16.msra.mxu0 0
  %6353 = vmatprep.subr.bf16.mxu0 0
  %6354 = vmatpush2.bf16.msra.mxu0 0
  %6355 = vmatprep.subr.bf16.mxu0 0
  %6356 = vmatpush2.bf16.msra.mxu0 0
  %6357 = vmatprep.subr.bf16.mxu0 0
  %6358 = vmatpush2.bf16.msra.mxu0 0
  %6359 = vmatprep.mubr.bf16.mxu0 0
  %6360 = vmatmul.mubr.bf16.gmra.mxu0 0
  %v6361 = vpop.f32.mrf.mxu0
  %v6362 = vadd.f32 0.0, %v6361
  %v6363 = vpop.f32.mrf.mxu0
  %v6364 = vadd.f32 0.0, %v6363
  %v6365 = vpop.f32.mrf.mxu0
  %v6366 = vpop.f32.mrf.mxu0
  %6367 = vdwg.mxu0
  %v6372 = vrot.slane %v6321, 3
  %v6373 = vrot.slane %v6323, 3
  %v6374 = vrot.slane %v6362, 3
  %v6375 = vrot.slane %v6364, 3
  %v6380 = vadd.f32 %v5769, %v6372
  %v6381 = vadd.f32 %v5771, %v6373
  %v6382 = vadd.f32 %v5810, %v6374
  %v6383 = vadd.f32 %v5812, %v6375
  %v6384 = vxor.u32 %v6122, 2147483648
  %v6385 = vmul.f32 %v6384, 1.442695
  %v6386 = vpow.pop %v6385
  %v6387 = vadd.f32 %v6386, 1.0
  %v6388 = vrcp.pop %v6387
  %v6389 = vmul.f32 1.0, %v6388
  %v6390 = vxor.u32 %v6123, 2147483648
  %v6391 = vmul.f32 %v6390, 1.442695
  %v6392 = vpow.pop %v6391
  %v6393 = vadd.f32 %v6392, 1.0
  %v6394 = vrcp.pop %v6393
  %v6395 = vmul.f32 1.0, %v6394
  %v6396 = vtanh.pop %v6124
  %v6397 = vxor.u32 %v6125, 2147483648
  %v6398 = vmul.f32 %v6397, 1.442695
  %v6399 = vpow.pop %v6398
  %v6400 = vadd.f32 %v6399, 1.0
  %v6401 = vrcp.pop %v6400
  %v6402 = vmul.f32 1.0, %v6401
  %v6403 = vmul.f32 %v6395, 0.0
  %v6404 = vmul.f32 %v6389, %v6396
  %v6405 = vadd.f32 %v6403, %v6404
  %v6406 = vtanh.pop %v6405
  %v6407 = vmul.f32 %v6402, %v6406
  %v6408 = vxor.u32 %v6380, 2147483648
  %v6409 = vmul.f32 %v6408, 1.442695
  %v6410 = vpow.pop %v6409
  %v6411 = vadd.f32 %v6410, 1.0
  %v6412 = vrcp.pop %v6411
  %v6413 = vmul.f32 1.0, %v6412
  %v6414 = vxor.u32 %v6381, 2147483648
  %v6415 = vmul.f32 %v6414, 1.442695
  %v6416 = vpow.pop %v6415
  %v6417 = vadd.f32 %v6416, 1.0
  %v6418 = vrcp.pop %v6417
  %v6419 = vmul.f32 1.0, %v6418
  %v6420 = vtanh.pop %v6382
  %v6421 = vxor.u32 %v6383, 2147483648
  %v6422 = vmul.f32 %v6421, 1.442695
  %v6423 = vpow.pop %v6422
  %v6424 = vadd.f32 %v6423, 1.0
  %v6425 = vrcp.pop %v6424
  %v6426 = vmul.f32 1.0, %v6425
  %v6427 = vmul.f32 %v6419, 0.0
  %v6428 = vmul.f32 %v6413, %v6420
  %v6429 = vadd.f32 %v6427, %v6428
  %v6430 = vtanh.pop %v6429
  %v6431 = vmul.f32 %v6426, %v6430
  %v6432 = vpack.c.bf16 %v6407, %v6407
  %6433 = vmatprep.subr.bf16.mxu0 %v6005
  %6434 = vmatpush1.bf16.msra.mxu0 %v6004
  %6435 = vmatprep.subr.bf16.mxu0 %v6001
  %6436 = vmatpush1.bf16.msra.mxu0 %v6000
  %6437 = vmatprep.subr.bf16.mxu0 %v5997
  %6438 = vmatpush1.bf16.msra.mxu0 %v5996
  %6439 = vmatprep.subr.bf16.mxu0 %v5993
  %6440 = vmatpush1.bf16.msra.mxu0 %v5992
  %6441 = vmatprep.subr.bf16.mxu0 %v5989
  %6442 = vmatpush1.bf16.msra.mxu0 %v5988
  %6443 = vmatprep.subr.bf16.mxu0 %v5985
  %6444 = vmatpush1.bf16.msra.mxu0 %v5984
  %6445 = vmatprep.subr.bf16.mxu0 %v5981
  %6446 = vmatpush1.bf16.msra.mxu0 %v5980
  %6447 = vmatprep.subr.bf16.mxu0 %v5977
  %6448 = vmatpush1.bf16.msra.mxu0 %v5976
  %6449 = vmatprep.subr.bf16.mxu0 0
  %6450 = vmatpush2.bf16.msra.mxu0 0
  %6451 = vmatprep.subr.bf16.mxu0 0
  %6452 = vmatpush2.bf16.msra.mxu0 0
  %6453 = vmatprep.subr.bf16.mxu0 0
  %6454 = vmatpush2.bf16.msra.mxu0 0
  %6455 = vmatprep.subr.bf16.mxu0 0
  %6456 = vmatpush2.bf16.msra.mxu0 0
  %6457 = vmatprep.subr.bf16.mxu0 0
  %6458 = vmatpush2.bf16.msra.mxu0 0
  %6459 = vmatprep.subr.bf16.mxu0 0
  %6460 = vmatpush2.bf16.msra.mxu0 0
  %6461 = vmatprep.subr.bf16.mxu0 0
  %6462 = vmatpush2.bf16.msra.mxu0 0
  %6463 = vmatprep.subr.bf16.mxu0 0
  %6464 = vmatpush2.bf16.msra.mxu0 0
  %6465 = vmatprep.mubr.bf16.mxu0 0
  %6466 = vmatmul.mubr.bf16.gmra.mxu0 %v6432
  %v6467 = vpop.f32.mrf.mxu0
  %v6468 = vadd.f32 0.0, %v6467
  %v6469 = vpop.f32.mrf.mxu0
  %v6470 = vadd.f32 0.0, %v6469
  %v6471 = vpop.f32.mrf.mxu0
  %v6472 = vpop.f32.mrf.mxu0
  %6473 = vdwg.mxu0
  %6474 = vmatprep.subr.bf16.mxu0 %v6007
  %6475 = vmatpush1.bf16.msra.mxu0 %v6006
  %6476 = vmatprep.subr.bf16.mxu0 %v6003
  %6477 = vmatpush1.bf16.msra.mxu0 %v6002
  %6478 = vmatprep.subr.bf16.mxu0 %v5999
  %6479 = vmatpush1.bf16.msra.mxu0 %v5998
  %6480 = vmatprep.subr.bf16.mxu0 %v5995
  %6481 = vmatpush1.bf16.msra.mxu0 %v5994
  %6482 = vmatprep.subr.bf16.mxu0 %v5991
  %6483 = vmatpush1.bf16.msra.mxu0 %v5990
  %6484 = vmatprep.subr.bf16.mxu0 %v5987
  %6485 = vmatpush1.bf16.msra.mxu0 %v5986
  %6486 = vmatprep.subr.bf16.mxu0 %v5983
  %6487 = vmatpush1.bf16.msra.mxu0 %v5982
  %6488 = vmatprep.subr.bf16.mxu0 %v5979
  %6489 = vmatpush1.bf16.msra.mxu0 %v5978
  %6490 = vmatprep.subr.bf16.mxu0 0
  %6491 = vmatpush2.bf16.msra.mxu0 0
  %6492 = vmatprep.subr.bf16.mxu0 0
  %6493 = vmatpush2.bf16.msra.mxu0 0
  %6494 = vmatprep.subr.bf16.mxu0 0
  %6495 = vmatpush2.bf16.msra.mxu0 0
  %6496 = vmatprep.subr.bf16.mxu0 0
  %6497 = vmatpush2.bf16.msra.mxu0 0
  %6498 = vmatprep.subr.bf16.mxu0 0
  %6499 = vmatpush2.bf16.msra.mxu0 0
  %6500 = vmatprep.subr.bf16.mxu0 0
  %6501 = vmatpush2.bf16.msra.mxu0 0
  %6502 = vmatprep.subr.bf16.mxu0 0
  %6503 = vmatpush2.bf16.msra.mxu0 0
  %6504 = vmatprep.subr.bf16.mxu0 0
  %6505 = vmatpush2.bf16.msra.mxu0 0
  %6506 = vmatprep.mubr.bf16.mxu0 0
  %6507 = vmatmul.mubr.bf16.gmra.mxu0 %v6432
  %v6508 = vpop.f32.mrf.mxu0
  %v6509 = vadd.f32 0.0, %v6508
  %v6510 = vpop.f32.mrf.mxu0
  %v6511 = vadd.f32 0.0, %v6510
  %v6512 = vpop.f32.mrf.mxu0
  %v6513 = vpop.f32.mrf.mxu0
  %6514 = vdwg.mxu0
  %v6519 = vrot.slane %v6468, 7
  %v6520 = vrot.slane %v6470, 7
  %v6521 = vrot.slane %v6509, 7
  %v6522 = vrot.slane %v6511, 7
  %v6527 = vadd.f32 %v5687, %v6519
  %v6528 = vadd.f32 %v5689, %v6520
  %v6529 = vadd.f32 %v5728, %v6521
  %v6530 = vadd.f32 %v5730, %v6522
  %v6531 = vpack.c.bf16 %v6431, %v6431
  %v6533 = vshrl.u32 %v6531, 16
  %v6535 = vrot.slane %v6533, 2
  %6537 = vmatprep.subr.bf16.mxu0 %v6251
  %6538 = vmatpush1.bf16.msra.mxu0 %v6250
  %6539 = vmatprep.subr.bf16.mxu0 %v6247
  %6540 = vmatpush1.bf16.msra.mxu0 %v6246
  %6541 = vmatprep.subr.bf16.mxu0 %v6243
  %6542 = vmatpush1.bf16.msra.mxu0 %v6242
  %6543 = vmatprep.subr.bf16.mxu0 %v6239
  %6544 = vmatpush1.bf16.msra.mxu0 %v6238
  %6545 = vmatprep.subr.bf16.mxu0 %v6235
  %6546 = vmatpush1.bf16.msra.mxu0 %v6234
  %6547 = vmatprep.subr.bf16.mxu0 %v6231
  %6548 = vmatpush1.bf16.msra.mxu0 %v6230
  %6549 = vmatprep.subr.bf16.mxu0 %v6227
  %6550 = vmatpush1.bf16.msra.mxu0 %v6226
  %6551 = vmatprep.subr.bf16.mxu0 %v6223
  %6552 = vmatpush1.bf16.msra.mxu0 %v6222
  %6553 = vmatprep.subr.bf16.mxu0 0
  %6554 = vmatpush2.bf16.msra.mxu0 0
  %6555 = vmatprep.subr.bf16.mxu0 0
  %6556 = vmatpush2.bf16.msra.mxu0 0
  %6557 = vmatprep.subr.bf16.mxu0 0
  %6558 = vmatpush2.bf16.msra.mxu0 0
  %6559 = vmatprep.subr.bf16.mxu0 0
  %6560 = vmatpush2.bf16.msra.mxu0 0
  %6561 = vmatprep.subr.bf16.mxu0 0
  %6562 = vmatpush2.bf16.msra.mxu0 0
  %6563 = vmatprep.subr.bf16.mxu0 0
  %6564 = vmatpush2.bf16.msra.mxu0 0
  %6565 = vmatprep.subr.bf16.mxu0 0
  %6566 = vmatpush2.bf16.msra.mxu0 0
  %6567 = vmatprep.subr.bf16.mxu0 0
  %6568 = vmatpush2.bf16.msra.mxu0 0
  %6569 = vmatprep.mubr.bf16.mxu0 0
  %6570 = vmatmul.mubr.bf16.gmra.mxu0 %v6535
  %v6571 = vpop.f32.mrf.mxu0
  %v6572 = vadd.f32 0.0, %v6571
  %v6573 = vpop.f32.mrf.mxu0
  %v6574 = vadd.f32 0.0, %v6573
  %v6575 = vpop.f32.mrf.mxu0
  %v6576 = vpop.f32.mrf.mxu0
  %6577 = vdwg.mxu0
  %6578 = vmatprep.subr.bf16.mxu0 %v6253
  %6579 = vmatpush1.bf16.msra.mxu0 %v6252
  %6580 = vmatprep.subr.bf16.mxu0 %v6249
  %6581 = vmatpush1.bf16.msra.mxu0 %v6248
  %6582 = vmatprep.subr.bf16.mxu0 %v6245
  %6583 = vmatpush1.bf16.msra.mxu0 %v6244
  %6584 = vmatprep.subr.bf16.mxu0 %v6241
  %6585 = vmatpush1.bf16.msra.mxu0 %v6240
  %6586 = vmatprep.subr.bf16.mxu0 %v6237
  %6587 = vmatpush1.bf16.msra.mxu0 %v6236
  %6588 = vmatprep.subr.bf16.mxu0 %v6233
  %6589 = vmatpush1.bf16.msra.mxu0 %v6232
  %6590 = vmatprep.subr.bf16.mxu0 %v6229
  %6591 = vmatpush1.bf16.msra.mxu0 %v6228
  %6592 = vmatprep.subr.bf16.mxu0 %v6225
  %6593 = vmatpush1.bf16.msra.mxu0 %v6224
  %6594 = vmatprep.subr.bf16.mxu0 0
  %6595 = vmatpush2.bf16.msra.mxu0 0
  %6596 = vmatprep.subr.bf16.mxu0 0
  %6597 = vmatpush2.bf16.msra.mxu0 0
  %6598 = vmatprep.subr.bf16.mxu0 0
  %6599 = vmatpush2.bf16.msra.mxu0 0
  %6600 = vmatprep.subr.bf16.mxu0 0
  %6601 = vmatpush2.bf16.msra.mxu0 0
  %6602 = vmatprep.subr.bf16.mxu0 0
  %6603 = vmatpush2.bf16.msra.mxu0 0
  %6604 = vmatprep.subr.bf16.mxu0 0
  %6605 = vmatpush2.bf16.msra.mxu0 0
  %6606 = vmatprep.subr.bf16.mxu0 0
  %6607 = vmatpush2.bf16.msra.mxu0 0
  %6608 = vmatprep.subr.bf16.mxu0 0
  %6609 = vmatpush2.bf16.msra.mxu0 0
  %6610 = vmatprep.mubr.bf16.mxu0 0
  %6611 = vmatmul.mubr.bf16.gmra.mxu0 %v6535
  %v6612 = vpop.f32.mrf.mxu0
  %v6613 = vadd.f32 0.0, %v6612
  %v6614 = vpop.f32.mrf.mxu0
  %v6615 = vadd.f32 0.0, %v6614
  %v6616 = vpop.f32.mrf.mxu0
  %v6617 = vpop.f32.mrf.mxu0
  %6618 = vdwg.mxu0
  %v6623 = vrot.slane %v6572, 4
  %v6624 = vrot.slane %v6574, 4
  %v6625 = vrot.slane %v6613, 4
  %v6626 = vrot.slane %v6615, 4
  %v6631 = vadd.f32 %v5769, %v6623
  %v6632 = vadd.f32 %v5771, %v6624
  %v6633 = vadd.f32 %v5810, %v6625
  %v6634 = vadd.f32 %v5812, %v6626
  %v6635 = vxor.u32 %v6527, 2147483648
  %v6636 = vmul.f32 %v6635, 1.442695
  %v6637 = vpow.pop %v6636
  %v6638 = vadd.f32 %v6637, 1.0
  %v6639 = vrcp.pop %v6638
  %v6640 = vmul.f32 1.0, %v6639
  %v6641 = vxor.u32 %v6528, 2147483648
  %v6642 = vmul.f32 %v6641, 1.442695
  %v6643 = vpow.pop %v6642
  %v6644 = vadd.f32 %v6643, 1.0
  %v6645 = vrcp.pop %v6644
  %v6646 = vmul.f32 1.0, %v6645
  %v6647 = vtanh.pop %v6529
  %v6648 = vxor.u32 %v6530, 2147483648
  %v6649 = vmul.f32 %v6648, 1.442695
  %v6650 = vpow.pop %v6649
  %v6651 = vadd.f32 %v6650, 1.0
  %v6652 = vrcp.pop %v6651
  %v6653 = vmul.f32 1.0, %v6652
  %v6655 = vrot.slane %v6405, 7
  %v6657 = vmul.f32 %v6646, %v6655
  %v6658 = vmul.f32 %v6640, %v6647
  %v6659 = vadd.f32 %v6657, %v6658
  %v6660 = vtanh.pop %v6659
  %v6661 = vmul.f32 %v6653, %v6660
  %v6662 = vxor.u32 %v6631, 2147483648
  %v6663 = vmul.f32 %v6662, 1.442695
  %v6664 = vpow.pop %v6663
  %v6665 = vadd.f32 %v6664, 1.0
  %v6666 = vrcp.pop %v6665
  %v6667 = vmul.f32 1.0, %v6666
  %v6668 = vxor.u32 %v6632, 2147483648
  %v6669 = vmul.f32 %v6668, 1.442695
  %v6670 = vpow.pop %v6669
  %v6671 = vadd.f32 %v6670, 1.0
  %v6672 = vrcp.pop %v6671
  %v6673 = vmul.f32 1.0, %v6672
  %v6674 = vtanh.pop %v6633
  %v6675 = vxor.u32 %v6634, 2147483648
  %v6676 = vmul.f32 %v6675, 1.442695
  %v6677 = vpow.pop %v6676
  %v6678 = vadd.f32 %v6677, 1.0
  %v6679 = vrcp.pop %v6678
  %v6680 = vmul.f32 1.0, %v6679
  %v6682 = vrot.slane %v6429, 1
  %v6684 = vmul.f32 %v6673, %v6682
  %v6685 = vmul.f32 %v6667, %v6674
  %v6686 = vadd.f32 %v6684, %v6685
  %v6687 = vtanh.pop %v6686
  %v6688 = vmul.f32 %v6680, %v6687
  %v6689 = vpack.c.bf16 %v6661, %v6661
  %v6691 = vshrl.u32 %v6689, 16
  %6694 = vmatprep.subr.bf16.mxu0 %v6005
  %6695 = vmatpush1.bf16.msra.mxu0 %v6004
  %6696 = vmatprep.subr.bf16.mxu0 %v6001
  %6697 = vmatpush1.bf16.msra.mxu0 %v6000
  %6698 = vmatprep.subr.bf16.mxu0 %v5997
  %6699 = vmatpush1.bf16.msra.mxu0 %v5996
  %6700 = vmatprep.subr.bf16.mxu0 %v5993
  %6701 = vmatpush1.bf16.msra.mxu0 %v5992
  %6702 = vmatprep.subr.bf16.mxu0 %v5989
  %6703 = vmatpush1.bf16.msra.mxu0 %v5988
  %6704 = vmatprep.subr.bf16.mxu0 %v5985
  %6705 = vmatpush1.bf16.msra.mxu0 %v5984
  %6706 = vmatprep.subr.bf16.mxu0 %v5981
  %6707 = vmatpush1.bf16.msra.mxu0 %v5980
  %6708 = vmatprep.subr.bf16.mxu0 %v5977
  %6709 = vmatpush1.bf16.msra.mxu0 %v5976
  %6710 = vmatprep.subr.bf16.mxu0 0
  %6711 = vmatpush2.bf16.msra.mxu0 0
  %6712 = vmatprep.subr.bf16.mxu0 0
  %6713 = vmatpush2.bf16.msra.mxu0 0
  %6714 = vmatprep.subr.bf16.mxu0 0
  %6715 = vmatpush2.bf16.msra.mxu0 0
  %6716 = vmatprep.subr.bf16.mxu0 0
  %6717 = vmatpush2.bf16.msra.mxu0 0
  %6718 = vmatprep.subr.bf16.mxu0 0
  %6719 = vmatpush2.bf16.msra.mxu0 0
  %6720 = vmatprep.subr.bf16.mxu0 0
  %6721 = vmatpush2.bf16.msra.mxu0 0
  %6722 = vmatprep.subr.bf16.mxu0 0
  %6723 = vmatpush2.bf16.msra.mxu0 0
  %6724 = vmatprep.subr.bf16.mxu0 0
  %6725 = vmatpush2.bf16.msra.mxu0 0
  %6726 = vmatprep.mubr.bf16.mxu0 0
  %6727 = vmatmul.mubr.bf16.gmra.mxu0 %v6691
  %v6728 = vpop.f32.mrf.mxu0
  %v6729 = vadd.f32 0.0, %v6728
  %v6730 = vpop.f32.mrf.mxu0
  %v6731 = vadd.f32 0.0, %v6730
  %v6732 = vpop.f32.mrf.mxu0
  %v6733 = vpop.f32.mrf.mxu0
  %6734 = vdwg.mxu0
  %6735 = vmatprep.subr.bf16.mxu0 %v6007
  %6736 = vmatpush1.bf16.msra.mxu0 %v6006
  %6737 = vmatprep.subr.bf16.mxu0 %v6003
  %6738 = vmatpush1.bf16.msra.mxu0 %v6002
  %6739 = vmatprep.subr.bf16.mxu0 %v5999
  %6740 = vmatpush1.bf16.msra.mxu0 %v5998
  %6741 = vmatprep.subr.bf16.mxu0 %v5995
  %6742 = vmatpush1.bf16.msra.mxu0 %v5994
  %6743 = vmatprep.subr.bf16.mxu0 %v5991
  %6744 = vmatpush1.bf16.msra.mxu0 %v5990
  %6745 = vmatprep.subr.bf16.mxu0 %v5987
  %6746 = vmatpush1.bf16.msra.mxu0 %v5986
  %6747 = vmatprep.subr.bf16.mxu0 %v5983
  %6748 = vmatpush1.bf16.msra.mxu0 %v5982
  %6749 = vmatprep.subr.bf16.mxu0 %v5979
  %6750 = vmatpush1.bf16.msra.mxu0 %v5978
  %6751 = vmatprep.subr.bf16.mxu0 0
  %6752 = vmatpush2.bf16.msra.mxu0 0
  %6753 = vmatprep.subr.bf16.mxu0 0
  %6754 = vmatpush2.bf16.msra.mxu0 0
  %6755 = vmatprep.subr.bf16.mxu0 0
  %6756 = vmatpush2.bf16.msra.mxu0 0
  %6757 = vmatprep.subr.bf16.mxu0 0
  %6758 = vmatpush2.bf16.msra.mxu0 0
  %6759 = vmatprep.subr.bf16.mxu0 0
  %6760 = vmatpush2.bf16.msra.mxu0 0
  %6761 = vmatprep.subr.bf16.mxu0 0
  %6762 = vmatpush2.bf16.msra.mxu0 0
  %6763 = vmatprep.subr.bf16.mxu0 0
  %6764 = vmatpush2.bf16.msra.mxu0 0
  %6765 = vmatprep.subr.bf16.mxu0 0
  %6766 = vmatpush2.bf16.msra.mxu0 0
  %6767 = vmatprep.mubr.bf16.mxu0 0
  %6768 = vmatmul.mubr.bf16.gmra.mxu0 %v6691
  %v6769 = vpop.f32.mrf.mxu0
  %v6770 = vadd.f32 0.0, %v6769
  %v6771 = vpop.f32.mrf.mxu0
  %v6772 = vadd.f32 0.0, %v6771
  %v6773 = vpop.f32.mrf.mxu0
  %v6774 = vpop.f32.mrf.mxu0
  %6775 = vdwg.mxu0
  %v6780 = vrot.slane %v6729, 6
  %v6781 = vrot.slane %v6731, 6
  %v6782 = vrot.slane %v6770, 6
  %v6783 = vrot.slane %v6772, 6
  %v6788 = vadd.f32 %v5687, %v6780
  %v6789 = vadd.f32 %v5689, %v6781
  %v6790 = vadd.f32 %v5728, %v6782
  %v6791 = vadd.f32 %v5730, %v6783
  %v6792 = vpack.c.bf16 %v6688, %v6688
  %v6794 = vrot.slane %v6792, 2
  %6796 = vmatprep.subr.bf16.mxu0 %v6251
  %6797 = vmatpush1.bf16.msra.mxu0 %v6250
  %6798 = vmatprep.subr.bf16.mxu0 %v6247
  %6799 = vmatpush1.bf16.msra.mxu0 %v6246
  %6800 = vmatprep.subr.bf16.mxu0 %v6243
  %6801 = vmatpush1.bf16.msra.mxu0 %v6242
  %6802 = vmatprep.subr.bf16.mxu0 %v6239
  %6803 = vmatpush1.bf16.msra.mxu0 %v6238
  %6804 = vmatprep.subr.bf16.mxu0 %v6235
  %6805 = vmatpush1.bf16.msra.mxu0 %v6234
  %6806 = vmatprep.subr.bf16.mxu0 %v6231
  %6807 = vmatpush1.bf16.msra.mxu0 %v6230
  %6808 = vmatprep.subr.bf16.mxu0 %v6227
  %6809 = vmatpush1.bf16.msra.mxu0 %v6226
  %6810 = vmatprep.subr.bf16.mxu0 %v6223
  %6811 = vmatpush1.bf16.msra.mxu0 %v6222
  %6812 = vmatprep.subr.bf16.mxu0 0
  %6813 = vmatpush2.bf16.msra.mxu0 0
  %6814 = vmatprep.subr.bf16.mxu0 0
  %6815 = vmatpush2.bf16.msra.mxu0 0
  %6816 = vmatprep.subr.bf16.mxu0 0
  %6817 = vmatpush2.bf16.msra.mxu0 0
  %6818 = vmatprep.subr.bf16.mxu0 0
  %6819 = vmatpush2.bf16.msra.mxu0 0
  %6820 = vmatprep.subr.bf16.mxu0 0
  %6821 = vmatpush2.bf16.msra.mxu0 0
  %6822 = vmatprep.subr.bf16.mxu0 0
  %6823 = vmatpush2.bf16.msra.mxu0 0
  %6824 = vmatprep.subr.bf16.mxu0 0
  %6825 = vmatpush2.bf16.msra.mxu0 0
  %6826 = vmatprep.subr.bf16.mxu0 0
  %6827 = vmatpush2.bf16.msra.mxu0 0
  %6828 = vmatprep.mubr.bf16.mxu0 0
  %6829 = vmatmul.mubr.bf16.gmra.mxu0 %v6794
  %v6830 = vpop.f32.mrf.mxu0
  %v6831 = vadd.f32 0.0, %v6830
  %v6832 = vpop.f32.mrf.mxu0
  %v6833 = vadd.f32 0.0, %v6832
  %v6834 = vpop.f32.mrf.mxu0
  %v6835 = vpop.f32.mrf.mxu0
  %6836 = vdwg.mxu0
  %6837 = vmatprep.subr.bf16.mxu0 %v6253
  %6838 = vmatpush1.bf16.msra.mxu0 %v6252
  %6839 = vmatprep.subr.bf16.mxu0 %v6249
  %6840 = vmatpush1.bf16.msra.mxu0 %v6248
  %6841 = vmatprep.subr.bf16.mxu0 %v6245
  %6842 = vmatpush1.bf16.msra.mxu0 %v6244
  %6843 = vmatprep.subr.bf16.mxu0 %v6241
  %6844 = vmatpush1.bf16.msra.mxu0 %v6240
  %6845 = vmatprep.subr.bf16.mxu0 %v6237
  %6846 = vmatpush1.bf16.msra.mxu0 %v6236
  %6847 = vmatprep.subr.bf16.mxu0 %v6233
  %6848 = vmatpush1.bf16.msra.mxu0 %v6232
  %6849 = vmatprep.subr.bf16.mxu0 %v6229
  %6850 = vmatpush1.bf16.msra.mxu0 %v6228
  %6851 = vmatprep.subr.bf16.mxu0 %v6225
  %6852 = vmatpush1.bf16.msra.mxu0 %v6224
  %6853 = vmatprep.subr.bf16.mxu0 0
  %6854 = vmatpush2.bf16.msra.mxu0 0
  %6855 = vmatprep.subr.bf16.mxu0 0
  %6856 = vmatpush2.bf16.msra.mxu0 0
  %6857 = vmatprep.subr.bf16.mxu0 0
  %6858 = vmatpush2.bf16.msra.mxu0 0
  %6859 = vmatprep.subr.bf16.mxu0 0
  %6860 = vmatpush2.bf16.msra.mxu0 0
  %6861 = vmatprep.subr.bf16.mxu0 0
  %6862 = vmatpush2.bf16.msra.mxu0 0
  %6863 = vmatprep.subr.bf16.mxu0 0
  %6864 = vmatpush2.bf16.msra.mxu0 0
  %6865 = vmatprep.subr.bf16.mxu0 0
  %6866 = vmatpush2.bf16.msra.mxu0 0
  %6867 = vmatprep.subr.bf16.mxu0 0
  %6868 = vmatpush2.bf16.msra.mxu0 0
  %6869 = vmatprep.mubr.bf16.mxu0 0
  %6870 = vmatmul.mubr.bf16.gmra.mxu0 %v6794
  %v6871 = vpop.f32.mrf.mxu0
  %v6872 = vadd.f32 0.0, %v6871
  %v6873 = vpop.f32.mrf.mxu0
  %v6874 = vadd.f32 0.0, %v6873
  %v6875 = vpop.f32.mrf.mxu0
  %v6876 = vpop.f32.mrf.mxu0
  %6877 = vdwg.mxu0
  %v6882 = vrot.slane %v6831, 5
  %v6883 = vrot.slane %v6833, 5
  %v6884 = vrot.slane %v6872, 5
  %v6885 = vrot.slane %v6874, 5
  %v6890 = vadd.f32 %v5769, %v6882
  %v6891 = vadd.f32 %v5771, %v6883
  %v6892 = vadd.f32 %v5810, %v6884
  %v6893 = vadd.f32 %v5812, %v6885
  %v6894 = vxor.u32 %v6788, 2147483648
  %v6895 = vmul.f32 %v6894, 1.442695
  %v6896 = vpow.pop %v6895
  %v6897 = vadd.f32 %v6896, 1.0
  %v6898 = vrcp.pop %v6897
  %v6899 = vmul.f32 1.0, %v6898
  %v6900 = vxor.u32 %v6789, 2147483648
  %v6901 = vmul.f32 %v6900, 1.442695
  %v6902 = vpow.pop %v6901
  %v6903 = vadd.f32 %v6902, 1.0
  %v6904 = vrcp.pop %v6903
  %v6905 = vmul.f32 1.0, %v6904
  %v6906 = vtanh.pop %v6790
  %v6907 = vxor.u32 %v6791, 2147483648
  %v6908 = vmul.f32 %v6907, 1.442695
  %v6909 = vpow.pop %v6908
  %v6910 = vadd.f32 %v6909, 1.0
  %v6911 = vrcp.pop %v6910
  %v6912 = vmul.f32 1.0, %v6911
  %v6914 = vrot.slane %v6659, 7
  %v6916 = vmul.f32 %v6905, %v6914
  %v6917 = vmul.f32 %v6899, %v6906
  %v6918 = vadd.f32 %v6916, %v6917
  %v6919 = vtanh.pop %v6918
  %v6920 = vmul.f32 %v6912, %v6919
  %v6921 = vxor.u32 %v6890, 2147483648
  %v6922 = vmul.f32 %v6921, 1.442695
  %v6923 = vpow.pop %v6922
  %v6924 = vadd.f32 %v6923, 1.0
  %v6925 = vrcp.pop %v6924
  %v6926 = vmul.f32 1.0, %v6925
  %v6927 = vxor.u32 %v6891, 2147483648
  %v6928 = vmul.f32 %v6927, 1.442695
  %v6929 = vpow.pop %v6928
  %v6930 = vadd.f32 %v6929, 1.0
  %v6931 = vrcp.pop %v6930
  %v6932 = vmul.f32 1.0, %v6931
  %v6933 = vtanh.pop %v6892
  %v6934 = vxor.u32 %v6893, 2147483648
  %v6935 = vmul.f32 %v6934, 1.442695
  %v6936 = vpow.pop %v6935
  %v6937 = vadd.f32 %v6936, 1.0
  %v6938 = vrcp.pop %v6937
  %v6939 = vmul.f32 1.0, %v6938
  %v6941 = vrot.slane %v6686, 1
  %v6943 = vmul.f32 %v6932, %v6941
  %v6944 = vmul.f32 %v6926, %v6933
  %v6945 = vadd.f32 %v6943, %v6944
  %v6946 = vtanh.pop %v6945
  %v6947 = vmul.f32 %v6939, %v6946
  %v6948 = vpack.c.bf16 %v6920, %v6920
  %v6950 = vrot.slane %v6948, 1
  %6952 = vmatprep.subr.bf16.mxu0 %v6005
  %6953 = vmatpush1.bf16.msra.mxu0 %v6004
  %6954 = vmatprep.subr.bf16.mxu0 %v6001
  %6955 = vmatpush1.bf16.msra.mxu0 %v6000
  %6956 = vmatprep.subr.bf16.mxu0 %v5997
  %6957 = vmatpush1.bf16.msra.mxu0 %v5996
  %6958 = vmatprep.subr.bf16.mxu0 %v5993
  %6959 = vmatpush1.bf16.msra.mxu0 %v5992
  %6960 = vmatprep.subr.bf16.mxu0 %v5989
  %6961 = vmatpush1.bf16.msra.mxu0 %v5988
  %6962 = vmatprep.subr.bf16.mxu0 %v5985
  %6963 = vmatpush1.bf16.msra.mxu0 %v5984
  %6964 = vmatprep.subr.bf16.mxu0 %v5981
  %6965 = vmatpush1.bf16.msra.mxu0 %v5980
  %6966 = vmatprep.subr.bf16.mxu0 %v5977
  %6967 = vmatpush1.bf16.msra.mxu0 %v5976
  %6968 = vmatprep.subr.bf16.mxu0 0
  %6969 = vmatpush2.bf16.msra.mxu0 0
  %6970 = vmatprep.subr.bf16.mxu0 0
  %6971 = vmatpush2.bf16.msra.mxu0 0
  %6972 = vmatprep.subr.bf16.mxu0 0
  %6973 = vmatpush2.bf16.msra.mxu0 0
  %6974 = vmatprep.subr.bf16.mxu0 0
  %6975 = vmatpush2.bf16.msra.mxu0 0
  %6976 = vmatprep.subr.bf16.mxu0 0
  %6977 = vmatpush2.bf16.msra.mxu0 0
  %6978 = vmatprep.subr.bf16.mxu0 0
  %6979 = vmatpush2.bf16.msra.mxu0 0
  %6980 = vmatprep.subr.bf16.mxu0 0
  %6981 = vmatpush2.bf16.msra.mxu0 0
  %6982 = vmatprep.subr.bf16.mxu0 0
  %6983 = vmatpush2.bf16.msra.mxu0 0
  %6984 = vmatprep.mubr.bf16.mxu0 0
  %6985 = vmatmul.mubr.bf16.gmra.mxu0 %v6950
  %v6986 = vpop.f32.mrf.mxu0
  %v6987 = vadd.f32 0.0, %v6986
  %v6988 = vpop.f32.mrf.mxu0
  %v6989 = vadd.f32 0.0, %v6988
  %v6990 = vpop.f32.mrf.mxu0
  %v6991 = vpop.f32.mrf.mxu0
  %6992 = vdwg.mxu0
  %6993 = vmatprep.subr.bf16.mxu0 %v6007
  %6994 = vmatpush1.bf16.msra.mxu0 %v6006
  %6995 = vmatprep.subr.bf16.mxu0 %v6003
  %6996 = vmatpush1.bf16.msra.mxu0 %v6002
  %6997 = vmatprep.subr.bf16.mxu0 %v5999
  %6998 = vmatpush1.bf16.msra.mxu0 %v5998
  %6999 = vmatprep.subr.bf16.mxu0 %v5995
  %7000 = vmatpush1.bf16.msra.mxu0 %v5994
  %7001 = vmatprep.subr.bf16.mxu0 %v5991
  %7002 = vmatpush1.bf16.msra.mxu0 %v5990
  %7003 = vmatprep.subr.bf16.mxu0 %v5987
  %7004 = vmatpush1.bf16.msra.mxu0 %v5986
  %7005 = vmatprep.subr.bf16.mxu0 %v5983
  %7006 = vmatpush1.bf16.msra.mxu0 %v5982
  %7007 = vmatprep.subr.bf16.mxu0 %v5979
  %7008 = vmatpush1.bf16.msra.mxu0 %v5978
  %7009 = vmatprep.subr.bf16.mxu0 0
  %7010 = vmatpush2.bf16.msra.mxu0 0
  %7011 = vmatprep.subr.bf16.mxu0 0
  %7012 = vmatpush2.bf16.msra.mxu0 0
  %7013 = vmatprep.subr.bf16.mxu0 0
  %7014 = vmatpush2.bf16.msra.mxu0 0
  %7015 = vmatprep.subr.bf16.mxu0 0
  %7016 = vmatpush2.bf16.msra.mxu0 0
  %7017 = vmatprep.subr.bf16.mxu0 0
  %7018 = vmatpush2.bf16.msra.mxu0 0
  %7019 = vmatprep.subr.bf16.mxu0 0
  %7020 = vmatpush2.bf16.msra.mxu0 0
  %7021 = vmatprep.subr.bf16.mxu0 0
  %7022 = vmatpush2.bf16.msra.mxu0 0
  %7023 = vmatprep.subr.bf16.mxu0 0
  %7024 = vmatpush2.bf16.msra.mxu0 0
  %7025 = vmatprep.mubr.bf16.mxu0 0
  %7026 = vmatmul.mubr.bf16.gmra.mxu0 %v6950
  %v7027 = vpop.f32.mrf.mxu0
  %v7028 = vadd.f32 0.0, %v7027
  %v7029 = vpop.f32.mrf.mxu0
  %v7030 = vadd.f32 0.0, %v7029
  %v7031 = vpop.f32.mrf.mxu0
  %v7032 = vpop.f32.mrf.mxu0
  %7033 = vdwg.mxu0
  %v7038 = vrot.slane %v6987, 5
  %v7039 = vrot.slane %v6989, 5
  %v7040 = vrot.slane %v7028, 5
  %v7041 = vrot.slane %v7030, 5
  %v7046 = vadd.f32 %v5687, %v7038
  %v7047 = vadd.f32 %v5689, %v7039
  %v7048 = vadd.f32 %v5728, %v7040
  %v7049 = vadd.f32 %v5730, %v7041
  %v7050 = vpack.c.bf16 %v6947, %v6947
  %v7052 = vshrl.u32 %v7050, 16
  %v7054 = vrot.slane %v7052, 1
  %7056 = vmatprep.subr.bf16.mxu0 %v6251
  %7057 = vmatpush1.bf16.msra.mxu0 %v6250
  %7058 = vmatprep.subr.bf16.mxu0 %v6247
  %7059 = vmatpush1.bf16.msra.mxu0 %v6246
  %7060 = vmatprep.subr.bf16.mxu0 %v6243
  %7061 = vmatpush1.bf16.msra.mxu0 %v6242
  %7062 = vmatprep.subr.bf16.mxu0 %v6239
  %7063 = vmatpush1.bf16.msra.mxu0 %v6238
  %7064 = vmatprep.subr.bf16.mxu0 %v6235
  %7065 = vmatpush1.bf16.msra.mxu0 %v6234
  %7066 = vmatprep.subr.bf16.mxu0 %v6231
  %7067 = vmatpush1.bf16.msra.mxu0 %v6230
  %7068 = vmatprep.subr.bf16.mxu0 %v6227
  %7069 = vmatpush1.bf16.msra.mxu0 %v6226
  %7070 = vmatprep.subr.bf16.mxu0 %v6223
  %7071 = vmatpush1.bf16.msra.mxu0 %v6222
  %7072 = vmatprep.subr.bf16.mxu0 0
  %7073 = vmatpush2.bf16.msra.mxu0 0
  %7074 = vmatprep.subr.bf16.mxu0 0
  %7075 = vmatpush2.bf16.msra.mxu0 0
  %7076 = vmatprep.subr.bf16.mxu0 0
  %7077 = vmatpush2.bf16.msra.mxu0 0
  %7078 = vmatprep.subr.bf16.mxu0 0
  %7079 = vmatpush2.bf16.msra.mxu0 0
  %7080 = vmatprep.subr.bf16.mxu0 0
  %7081 = vmatpush2.bf16.msra.mxu0 0
  %7082 = vmatprep.subr.bf16.mxu0 0
  %7083 = vmatpush2.bf16.msra.mxu0 0
  %7084 = vmatprep.subr.bf16.mxu0 0
  %7085 = vmatpush2.bf16.msra.mxu0 0
  %7086 = vmatprep.subr.bf16.mxu0 0
  %7087 = vmatpush2.bf16.msra.mxu0 0
  %7088 = vmatprep.mubr.bf16.mxu0 0
  %7089 = vmatmul.mubr.bf16.gmra.mxu0 %v7054
  %v7090 = vpop.f32.mrf.mxu0
  %v7091 = vadd.f32 0.0, %v7090
  %v7092 = vpop.f32.mrf.mxu0
  %v7093 = vadd.f32 0.0, %v7092
  %v7094 = vpop.f32.mrf.mxu0
  %v7095 = vpop.f32.mrf.mxu0
  %7096 = vdwg.mxu0
  %7097 = vmatprep.subr.bf16.mxu0 %v6253
  %7098 = vmatpush1.bf16.msra.mxu0 %v6252
  %7099 = vmatprep.subr.bf16.mxu0 %v6249
  %7100 = vmatpush1.bf16.msra.mxu0 %v6248
  %7101 = vmatprep.subr.bf16.mxu0 %v6245
  %7102 = vmatpush1.bf16.msra.mxu0 %v6244
  %7103 = vmatprep.subr.bf16.mxu0 %v6241
  %7104 = vmatpush1.bf16.msra.mxu0 %v6240
  %7105 = vmatprep.subr.bf16.mxu0 %v6237
  %7106 = vmatpush1.bf16.msra.mxu0 %v6236
  %7107 = vmatprep.subr.bf16.mxu0 %v6233
  %7108 = vmatpush1.bf16.msra.mxu0 %v6232
  %7109 = vmatprep.subr.bf16.mxu0 %v6229
  %7110 = vmatpush1.bf16.msra.mxu0 %v6228
  %7111 = vmatprep.subr.bf16.mxu0 %v6225
  %7112 = vmatpush1.bf16.msra.mxu0 %v6224
  %7113 = vmatprep.subr.bf16.mxu0 0
  %7114 = vmatpush2.bf16.msra.mxu0 0
  %7115 = vmatprep.subr.bf16.mxu0 0
  %7116 = vmatpush2.bf16.msra.mxu0 0
  %7117 = vmatprep.subr.bf16.mxu0 0
  %7118 = vmatpush2.bf16.msra.mxu0 0
  %7119 = vmatprep.subr.bf16.mxu0 0
  %7120 = vmatpush2.bf16.msra.mxu0 0
  %7121 = vmatprep.subr.bf16.mxu0 0
  %7122 = vmatpush2.bf16.msra.mxu0 0
  %7123 = vmatprep.subr.bf16.mxu0 0
  %7124 = vmatpush2.bf16.msra.mxu0 0
  %7125 = vmatprep.subr.bf16.mxu0 0
  %7126 = vmatpush2.bf16.msra.mxu0 0
  %7127 = vmatprep.subr.bf16.mxu0 0
  %7128 = vmatpush2.bf16.msra.mxu0 0
  %7129 = vmatprep.mubr.bf16.mxu0 0
  %7130 = vmatmul.mubr.bf16.gmra.mxu0 %v7054
  %v7131 = vpop.f32.mrf.mxu0
  %v7132 = vadd.f32 0.0, %v7131
  %v7133 = vpop.f32.mrf.mxu0
  %v7134 = vadd.f32 0.0, %v7133
  %v7135 = vpop.f32.mrf.mxu0
  %v7136 = vpop.f32.mrf.mxu0
  %7137 = vdwg.mxu0
  %v7142 = vrot.slane %v7091, 6
  %v7143 = vrot.slane %v7093, 6
  %v7144 = vrot.slane %v7132, 6
  %v7145 = vrot.slane %v7134, 6
  %v7150 = vadd.f32 %v5769, %v7142
  %v7151 = vadd.f32 %v5771, %v7143
  %v7152 = vadd.f32 %v5810, %v7144
  %v7153 = vadd.f32 %v5812, %v7145
  %v7154 = vxor.u32 %v7046, 2147483648
  %v7155 = vmul.f32 %v7154, 1.442695
  %v7156 = vpow.pop %v7155
  %v7157 = vadd.f32 %v7156, 1.0
  %v7158 = vrcp.pop %v7157
  %v7159 = vmul.f32 1.0, %v7158
  %v7160 = vxor.u32 %v7047, 2147483648
  %v7161 = vmul.f32 %v7160, 1.442695
  %v7162 = vpow.pop %v7161
  %v7163 = vadd.f32 %v7162, 1.0
  %v7164 = vrcp.pop %v7163
  %v7165 = vmul.f32 1.0, %v7164
  %v7166 = vtanh.pop %v7048
  %v7167 = vxor.u32 %v7049, 2147483648
  %v7168 = vmul.f32 %v7167, 1.442695
  %v7169 = vpow.pop %v7168
  %v7170 = vadd.f32 %v7169, 1.0
  %v7171 = vrcp.pop %v7170
  %v7172 = vmul.f32 1.0, %v7171
  %v7174 = vrot.slane %v6918, 7
  %v7176 = vmul.f32 %v7165, %v7174
  %v7177 = vmul.f32 %v7159, %v7166
  %v7178 = vadd.f32 %v7176, %v7177
  %v7179 = vtanh.pop %v7178
  %v7180 = vmul.f32 %v7172, %v7179
  %v7181 = vxor.u32 %v7150, 2147483648
  %v7182 = vmul.f32 %v7181, 1.442695
  %v7183 = vpow.pop %v7182
  %v7184 = vadd.f32 %v7183, 1.0
  %v7185 = vrcp.pop %v7184
  %v7186 = vmul.f32 1.0, %v7185
  %v7187 = vxor.u32 %v7151, 2147483648
  %v7188 = vmul.f32 %v7187, 1.442695
  %v7189 = vpow.pop %v7188
  %v7190 = vadd.f32 %v7189, 1.0
  %v7191 = vrcp.pop %v7190
  %v7192 = vmul.f32 1.0, %v7191
  %v7193 = vtanh.pop %v7152
  %v7194 = vxor.u32 %v7153, 2147483648
  %v7195 = vmul.f32 %v7194, 1.442695
  %v7196 = vpow.pop %v7195
  %v7197 = vadd.f32 %v7196, 1.0
  %v7198 = vrcp.pop %v7197
  %v7199 = vmul.f32 1.0, %v7198
  %v7201 = vrot.slane %v6945, 1
  %v7203 = vmul.f32 %v7192, %v7201
  %v7204 = vmul.f32 %v7186, %v7193
  %v7205 = vadd.f32 %v7203, %v7204
  %v7206 = vtanh.pop %v7205
  %v7207 = vmul.f32 %v7199, %v7206
  %v7208 = vpack.c.bf16 %v7180, %v7180
  %v7210 = vshrl.u32 %v7208, 16
  %v7212 = vrot.slane %v7210, 1
  %7214 = vmatprep.subr.bf16.mxu0 %v6005
  %7215 = vmatpush1.bf16.msra.mxu0 %v6004
  %7216 = vmatprep.subr.bf16.mxu0 %v6001
  %7217 = vmatpush1.bf16.msra.mxu0 %v6000
  %7218 = vmatprep.subr.bf16.mxu0 %v5997
  %7219 = vmatpush1.bf16.msra.mxu0 %v5996
  %7220 = vmatprep.subr.bf16.mxu0 %v5993
  %7221 = vmatpush1.bf16.msra.mxu0 %v5992
  %7222 = vmatprep.subr.bf16.mxu0 %v5989
  %7223 = vmatpush1.bf16.msra.mxu0 %v5988
  %7224 = vmatprep.subr.bf16.mxu0 %v5985
  %7225 = vmatpush1.bf16.msra.mxu0 %v5984
  %7226 = vmatprep.subr.bf16.mxu0 %v5981
  %7227 = vmatpush1.bf16.msra.mxu0 %v5980
  %7228 = vmatprep.subr.bf16.mxu0 %v5977
  %7229 = vmatpush1.bf16.msra.mxu0 %v5976
  %7230 = vmatprep.subr.bf16.mxu0 0
  %7231 = vmatpush2.bf16.msra.mxu0 0
  %7232 = vmatprep.subr.bf16.mxu0 0
  %7233 = vmatpush2.bf16.msra.mxu0 0
  %7234 = vmatprep.subr.bf16.mxu0 0
  %7235 = vmatpush2.bf16.msra.mxu0 0
  %7236 = vmatprep.subr.bf16.mxu0 0
  %7237 = vmatpush2.bf16.msra.mxu0 0
  %7238 = vmatprep.subr.bf16.mxu0 0
  %7239 = vmatpush2.bf16.msra.mxu0 0
  %7240 = vmatprep.subr.bf16.mxu0 0
  %7241 = vmatpush2.bf16.msra.mxu0 0
  %7242 = vmatprep.subr.bf16.mxu0 0
  %7243 = vmatpush2.bf16.msra.mxu0 0
  %7244 = vmatprep.subr.bf16.mxu0 0
  %7245 = vmatpush2.bf16.msra.mxu0 0
  %7246 = vmatprep.mubr.bf16.mxu0 0
  %7247 = vmatmul.mubr.bf16.gmra.mxu0 %v7212
  %v7248 = vpop.f32.mrf.mxu0
  %v7249 = vadd.f32 0.0, %v7248
  %v7250 = vpop.f32.mrf.mxu0
  %v7251 = vadd.f32 0.0, %v7250
  %v7252 = vpop.f32.mrf.mxu0
  %v7253 = vpop.f32.mrf.mxu0
  %7254 = vdwg.mxu0
  %7255 = vmatprep.subr.bf16.mxu0 %v6007
  %7256 = vmatpush1.bf16.msra.mxu0 %v6006
  %7257 = vmatprep.subr.bf16.mxu0 %v6003
  %7258 = vmatpush1.bf16.msra.mxu0 %v6002
  %7259 = vmatprep.subr.bf16.mxu0 %v5999
  %7260 = vmatpush1.bf16.msra.mxu0 %v5998
  %7261 = vmatprep.subr.bf16.mxu0 %v5995
  %7262 = vmatpush1.bf16.msra.mxu0 %v5994
  %7263 = vmatprep.subr.bf16.mxu0 %v5991
  %7264 = vmatpush1.bf16.msra.mxu0 %v5990
  %7265 = vmatprep.subr.bf16.mxu0 %v5987
  %7266 = vmatpush1.bf16.msra.mxu0 %v5986
  %7267 = vmatprep.subr.bf16.mxu0 %v5983
  %7268 = vmatpush1.bf16.msra.mxu0 %v5982
  %7269 = vmatprep.subr.bf16.mxu0 %v5979
  %7270 = vmatpush1.bf16.msra.mxu0 %v5978
  %7271 = vmatprep.subr.bf16.mxu0 0
  %7272 = vmatpush2.bf16.msra.mxu0 0
  %7273 = vmatprep.subr.bf16.mxu0 0
  %7274 = vmatpush2.bf16.msra.mxu0 0
  %7275 = vmatprep.subr.bf16.mxu0 0
  %7276 = vmatpush2.bf16.msra.mxu0 0
  %7277 = vmatprep.subr.bf16.mxu0 0
  %7278 = vmatpush2.bf16.msra.mxu0 0
  %7279 = vmatprep.subr.bf16.mxu0 0
  %7280 = vmatpush2.bf16.msra.mxu0 0
  %7281 = vmatprep.subr.bf16.mxu0 0
  %7282 = vmatpush2.bf16.msra.mxu0 0
  %7283 = vmatprep.subr.bf16.mxu0 0
  %7284 = vmatpush2.bf16.msra.mxu0 0
  %7285 = vmatprep.subr.bf16.mxu0 0
  %7286 = vmatpush2.bf16.msra.mxu0 0
  %7287 = vmatprep.mubr.bf16.mxu0 0
  %7288 = vmatmul.mubr.bf16.gmra.mxu0 %v7212
  %v7289 = vpop.f32.mrf.mxu0
  %v7290 = vadd.f32 0.0, %v7289
  %v7291 = vpop.f32.mrf.mxu0
  %v7292 = vadd.f32 0.0, %v7291
  %v7293 = vpop.f32.mrf.mxu0
  %v7294 = vpop.f32.mrf.mxu0
  %7295 = vdwg.mxu0
  %v7300 = vrot.slane %v7249, 4
  %v7301 = vrot.slane %v7251, 4
  %v7302 = vrot.slane %v7290, 4
  %v7303 = vrot.slane %v7292, 4
  %v7308 = vadd.f32 %v5687, %v7300
  %v7309 = vadd.f32 %v5689, %v7301
  %v7310 = vadd.f32 %v5728, %v7302
  %v7311 = vadd.f32 %v5730, %v7303
  %v7312 = vpack.c.bf16 %v7207, %v7207
  %v7314 = vrot.slane %v7312, 1
  %7316 = vmatprep.subr.bf16.mxu0 %v6251
  %7317 = vmatpush1.bf16.msra.mxu0 %v6250
  %7318 = vmatprep.subr.bf16.mxu0 %v6247
  %7319 = vmatpush1.bf16.msra.mxu0 %v6246
  %7320 = vmatprep.subr.bf16.mxu0 %v6243
  %7321 = vmatpush1.bf16.msra.mxu0 %v6242
  %7322 = vmatprep.subr.bf16.mxu0 %v6239
  %7323 = vmatpush1.bf16.msra.mxu0 %v6238
  %7324 = vmatprep.subr.bf16.mxu0 %v6235
  %7325 = vmatpush1.bf16.msra.mxu0 %v6234
  %7326 = vmatprep.subr.bf16.mxu0 %v6231
  %7327 = vmatpush1.bf16.msra.mxu0 %v6230
  %7328 = vmatprep.subr.bf16.mxu0 %v6227
  %7329 = vmatpush1.bf16.msra.mxu0 %v6226
  %7330 = vmatprep.subr.bf16.mxu0 %v6223
  %7331 = vmatpush1.bf16.msra.mxu0 %v6222
  %7332 = vmatprep.subr.bf16.mxu0 0
  %7333 = vmatpush2.bf16.msra.mxu0 0
  %7334 = vmatprep.subr.bf16.mxu0 0
  %7335 = vmatpush2.bf16.msra.mxu0 0
  %7336 = vmatprep.subr.bf16.mxu0 0
  %7337 = vmatpush2.bf16.msra.mxu0 0
  %7338 = vmatprep.subr.bf16.mxu0 0
  %7339 = vmatpush2.bf16.msra.mxu0 0
  %7340 = vmatprep.subr.bf16.mxu0 0
  %7341 = vmatpush2.bf16.msra.mxu0 0
  %7342 = vmatprep.subr.bf16.mxu0 0
  %7343 = vmatpush2.bf16.msra.mxu0 0
  %7344 = vmatprep.subr.bf16.mxu0 0
  %7345 = vmatpush2.bf16.msra.mxu0 0
  %7346 = vmatprep.subr.bf16.mxu0 0
  %7347 = vmatpush2.bf16.msra.mxu0 0
  %7348 = vmatprep.mubr.bf16.mxu0 0
  %7349 = vmatmul.mubr.bf16.gmra.mxu0 %v7314
  %v7350 = vpop.f32.mrf.mxu0
  %v7351 = vadd.f32 0.0, %v7350
  %v7352 = vpop.f32.mrf.mxu0
  %v7353 = vadd.f32 0.0, %v7352
  %v7354 = vpop.f32.mrf.mxu0
  %v7355 = vpop.f32.mrf.mxu0
  %7356 = vdwg.mxu0
  %7357 = vmatprep.subr.bf16.mxu0 %v6253
  %7358 = vmatpush1.bf16.msra.mxu0 %v6252
  %7359 = vmatprep.subr.bf16.mxu0 %v6249
  %7360 = vmatpush1.bf16.msra.mxu0 %v6248
  %7361 = vmatprep.subr.bf16.mxu0 %v6245
  %7362 = vmatpush1.bf16.msra.mxu0 %v6244
  %7363 = vmatprep.subr.bf16.mxu0 %v6241
  %7364 = vmatpush1.bf16.msra.mxu0 %v6240
  %7365 = vmatprep.subr.bf16.mxu0 %v6237
  %7366 = vmatpush1.bf16.msra.mxu0 %v6236
  %7367 = vmatprep.subr.bf16.mxu0 %v6233
  %7368 = vmatpush1.bf16.msra.mxu0 %v6232
  %7369 = vmatprep.subr.bf16.mxu0 %v6229
  %7370 = vmatpush1.bf16.msra.mxu0 %v6228
  %7371 = vmatprep.subr.bf16.mxu0 %v6225
  %7372 = vmatpush1.bf16.msra.mxu0 %v6224
  %7373 = vmatprep.subr.bf16.mxu0 0
  %7374 = vmatpush2.bf16.msra.mxu0 0
  %7375 = vmatprep.subr.bf16.mxu0 0
  %7376 = vmatpush2.bf16.msra.mxu0 0
  %7377 = vmatprep.subr.bf16.mxu0 0
  %7378 = vmatpush2.bf16.msra.mxu0 0
  %7379 = vmatprep.subr.bf16.mxu0 0
  %7380 = vmatpush2.bf16.msra.mxu0 0
  %7381 = vmatprep.subr.bf16.mxu0 0
  %7382 = vmatpush2.bf16.msra.mxu0 0
  %7383 = vmatprep.subr.bf16.mxu0 0
  %7384 = vmatpush2.bf16.msra.mxu0 0
  %7385 = vmatprep.subr.bf16.mxu0 0
  %7386 = vmatpush2.bf16.msra.mxu0 0
  %7387 = vmatprep.subr.bf16.mxu0 0
  %7388 = vmatpush2.bf16.msra.mxu0 0
  %7389 = vmatprep.mubr.bf16.mxu0 0
  %7390 = vmatmul.mubr.bf16.gmra.mxu0 %v7314
  %v7391 = vpop.f32.mrf.mxu0
  %v7392 = vadd.f32 0.0, %v7391
  %v7393 = vpop.f32.mrf.mxu0
  %v7394 = vadd.f32 0.0, %v7393
  %v7395 = vpop.f32.mrf.mxu0
  %v7396 = vpop.f32.mrf.mxu0
  %7397 = vdwg.mxu0
  %v7402 = vrot.slane %v7351, 7
  %v7403 = vrot.slane %v7353, 7
  %v7404 = vrot.slane %v7392, 7
  %v7405 = vrot.slane %v7394, 7
  %v7410 = vadd.f32 %v5769, %v7402
  %v7411 = vadd.f32 %v5771, %v7403
  %v7412 = vadd.f32 %v5810, %v7404
  %v7413 = vadd.f32 %v5812, %v7405
  %v7414 = vxor.u32 %v7308, 2147483648
  %v7415 = vmul.f32 %v7414, 1.442695
  %v7416 = vpow.pop %v7415
  %v7417 = vadd.f32 %v7416, 1.0
  %v7418 = vrcp.pop %v7417
  %v7419 = vmul.f32 1.0, %v7418
  %v7420 = vxor.u32 %v7309, 2147483648
  %v7421 = vmul.f32 %v7420, 1.442695
  %v7422 = vpow.pop %v7421
  %v7423 = vadd.f32 %v7422, 1.0
  %v7424 = vrcp.pop %v7423
  %v7425 = vmul.f32 1.0, %v7424
  %v7426 = vtanh.pop %v7310
  %v7427 = vxor.u32 %v7311, 2147483648
  %v7428 = vmul.f32 %v7427, 1.442695
  %v7429 = vpow.pop %v7428
  %v7430 = vadd.f32 %v7429, 1.0
  %v7431 = vrcp.pop %v7430
  %v7432 = vmul.f32 1.0, %v7431
  %v7434 = vrot.slane %v7178, 7
  %v7436 = vmul.f32 %v7425, %v7434
  %v7437 = vmul.f32 %v7419, %v7426
  %v7438 = vadd.f32 %v7436, %v7437
  %v7439 = vtanh.pop %v7438
  %v7440 = vmul.f32 %v7432, %v7439
  %v7441 = vxor.u32 %v7410, 2147483648
  %v7442 = vmul.f32 %v7441, 1.442695
  %v7443 = vpow.pop %v7442
  %v7444 = vadd.f32 %v7443, 1.0
  %v7445 = vrcp.pop %v7444
  %v7446 = vmul.f32 1.0, %v7445
  %v7447 = vxor.u32 %v7411, 2147483648
  %v7448 = vmul.f32 %v7447, 1.442695
  %v7449 = vpow.pop %v7448
  %v7450 = vadd.f32 %v7449, 1.0
  %v7451 = vrcp.pop %v7450
  %v7452 = vmul.f32 1.0, %v7451
  %v7453 = vtanh.pop %v7412
  %v7454 = vxor.u32 %v7413, 2147483648
  %v7455 = vmul.f32 %v7454, 1.442695
  %v7456 = vpow.pop %v7455
  %v7457 = vadd.f32 %v7456, 1.0
  %v7458 = vrcp.pop %v7457
  %v7459 = vmul.f32 1.0, %v7458
  %v7461 = vrot.slane %v7205, 1
  %v7463 = vmul.f32 %v7452, %v7461
  %v7464 = vmul.f32 %v7446, %v7453
  %v7465 = vadd.f32 %v7463, %v7464
  %v7466 = vtanh.pop %v7465
  %v7467 = vmul.f32 %v7459, %v7466
  %v7468 = vpack.c.bf16 %v7440, %v7440
  %v7470 = vrot.slane %v7468, 2
  %7472 = vmatprep.subr.bf16.mxu0 %v6005
  %7473 = vmatpush1.bf16.msra.mxu0 %v6004
  %7474 = vmatprep.subr.bf16.mxu0 %v6001
  %7475 = vmatpush1.bf16.msra.mxu0 %v6000
  %7476 = vmatprep.subr.bf16.mxu0 %v5997
  %7477 = vmatpush1.bf16.msra.mxu0 %v5996
  %7478 = vmatprep.subr.bf16.mxu0 %v5993
  %7479 = vmatpush1.bf16.msra.mxu0 %v5992
  %7480 = vmatprep.subr.bf16.mxu0 %v5989
  %7481 = vmatpush1.bf16.msra.mxu0 %v5988
  %7482 = vmatprep.subr.bf16.mxu0 %v5985
  %7483 = vmatpush1.bf16.msra.mxu0 %v5984
  %7484 = vmatprep.subr.bf16.mxu0 %v5981
  %7485 = vmatpush1.bf16.msra.mxu0 %v5980
  %7486 = vmatprep.subr.bf16.mxu0 %v5977
  %7487 = vmatpush1.bf16.msra.mxu0 %v5976
  %7488 = vmatprep.subr.bf16.mxu0 0
  %7489 = vmatpush2.bf16.msra.mxu0 0
  %7490 = vmatprep.subr.bf16.mxu0 0
  %7491 = vmatpush2.bf16.msra.mxu0 0
  %7492 = vmatprep.subr.bf16.mxu0 0
  %7493 = vmatpush2.bf16.msra.mxu0 0
  %7494 = vmatprep.subr.bf16.mxu0 0
  %7495 = vmatpush2.bf16.msra.mxu0 0
  %7496 = vmatprep.subr.bf16.mxu0 0
  %7497 = vmatpush2.bf16.msra.mxu0 0
  %7498 = vmatprep.subr.bf16.mxu0 0
  %7499 = vmatpush2.bf16.msra.mxu0 0
  %7500 = vmatprep.subr.bf16.mxu0 0
  %7501 = vmatpush2.bf16.msra.mxu0 0
  %7502 = vmatprep.subr.bf16.mxu0 0
  %7503 = vmatpush2.bf16.msra.mxu0 0
  %7504 = vmatprep.mubr.bf16.mxu0 0
  %7505 = vmatmul.mubr.bf16.gmra.mxu0 %v7470
  %v7506 = vpop.f32.mrf.mxu0
  %v7507 = vadd.f32 0.0, %v7506
  %v7508 = vpop.f32.mrf.mxu0
  %v7509 = vadd.f32 0.0, %v7508
  %v7510 = vpop.f32.mrf.mxu0
  %v7511 = vpop.f32.mrf.mxu0
  %7512 = vdwg.mxu0
  %7513 = vmatprep.subr.bf16.mxu0 %v6007
  %7514 = vmatpush1.bf16.msra.mxu0 %v6006
  %7515 = vmatprep.subr.bf16.mxu0 %v6003
  %7516 = vmatpush1.bf16.msra.mxu0 %v6002
  %7517 = vmatprep.subr.bf16.mxu0 %v5999
  %7518 = vmatpush1.bf16.msra.mxu0 %v5998
  %7519 = vmatprep.subr.bf16.mxu0 %v5995
  %7520 = vmatpush1.bf16.msra.mxu0 %v5994
  %7521 = vmatprep.subr.bf16.mxu0 %v5991
  %7522 = vmatpush1.bf16.msra.mxu0 %v5990
  %7523 = vmatprep.subr.bf16.mxu0 %v5987
  %7524 = vmatpush1.bf16.msra.mxu0 %v5986
  %7525 = vmatprep.subr.bf16.mxu0 %v5983
  %7526 = vmatpush1.bf16.msra.mxu0 %v5982
  %7527 = vmatprep.subr.bf16.mxu0 %v5979
  %7528 = vmatpush1.bf16.msra.mxu0 %v5978
  %7529 = vmatprep.subr.bf16.mxu0 0
  %7530 = vmatpush2.bf16.msra.mxu0 0
  %7531 = vmatprep.subr.bf16.mxu0 0
  %7532 = vmatpush2.bf16.msra.mxu0 0
  %7533 = vmatprep.subr.bf16.mxu0 0
  %7534 = vmatpush2.bf16.msra.mxu0 0
  %7535 = vmatprep.subr.bf16.mxu0 0
  %7536 = vmatpush2.bf16.msra.mxu0 0
  %7537 = vmatprep.subr.bf16.mxu0 0
  %7538 = vmatpush2.bf16.msra.mxu0 0
  %7539 = vmatprep.subr.bf16.mxu0 0
  %7540 = vmatpush2.bf16.msra.mxu0 0
  %7541 = vmatprep.subr.bf16.mxu0 0
  %7542 = vmatpush2.bf16.msra.mxu0 0
  %7543 = vmatprep.subr.bf16.mxu0 0
  %7544 = vmatpush2.bf16.msra.mxu0 0
  %7545 = vmatprep.mubr.bf16.mxu0 0
  %7546 = vmatmul.mubr.bf16.gmra.mxu0 %v7470
  %v7547 = vpop.f32.mrf.mxu0
  %v7548 = vadd.f32 0.0, %v7547
  %v7549 = vpop.f32.mrf.mxu0
  %v7550 = vadd.f32 0.0, %v7549
  %v7551 = vpop.f32.mrf.mxu0
  %v7552 = vpop.f32.mrf.mxu0
  %7553 = vdwg.mxu0
  %v7558 = vrot.slane %v7507, 3
  %v7559 = vrot.slane %v7509, 3
  %v7560 = vrot.slane %v7548, 3
  %v7561 = vrot.slane %v7550, 3
  %v7566 = vadd.f32 %v5687, %v7558
  %v7567 = vadd.f32 %v5689, %v7559
  %v7568 = vadd.f32 %v5728, %v7560
  %v7569 = vadd.f32 %v5730, %v7561
  %v7570 = vpack.c.bf16 %v7467, %v7467
  %v7572 = vshrl.u32 %v7570, 16
  %7575 = vmatprep.subr.bf16.mxu0 %v6251
  %7576 = vmatpush1.bf16.msra.mxu0 %v6250
  %7577 = vmatprep.subr.bf16.mxu0 %v6247
  %7578 = vmatpush1.bf16.msra.mxu0 %v6246
  %7579 = vmatprep.subr.bf16.mxu0 %v6243
  %7580 = vmatpush1.bf16.msra.mxu0 %v6242
  %7581 = vmatprep.subr.bf16.mxu0 %v6239
  %7582 = vmatpush1.bf16.msra.mxu0 %v6238
  %7583 = vmatprep.subr.bf16.mxu0 %v6235
  %7584 = vmatpush1.bf16.msra.mxu0 %v6234
  %7585 = vmatprep.subr.bf16.mxu0 %v6231
  %7586 = vmatpush1.bf16.msra.mxu0 %v6230
  %7587 = vmatprep.subr.bf16.mxu0 %v6227
  %7588 = vmatpush1.bf16.msra.mxu0 %v6226
  %7589 = vmatprep.subr.bf16.mxu0 %v6223
  %7590 = vmatpush1.bf16.msra.mxu0 %v6222
  %7591 = vmatprep.subr.bf16.mxu0 0
  %7592 = vmatpush2.bf16.msra.mxu0 0
  %7593 = vmatprep.subr.bf16.mxu0 0
  %7594 = vmatpush2.bf16.msra.mxu0 0
  %7595 = vmatprep.subr.bf16.mxu0 0
  %7596 = vmatpush2.bf16.msra.mxu0 0
  %7597 = vmatprep.subr.bf16.mxu0 0
  %7598 = vmatpush2.bf16.msra.mxu0 0
  %7599 = vmatprep.subr.bf16.mxu0 0
  %7600 = vmatpush2.bf16.msra.mxu0 0
  %7601 = vmatprep.subr.bf16.mxu0 0
  %7602 = vmatpush2.bf16.msra.mxu0 0
  %7603 = vmatprep.subr.bf16.mxu0 0
  %7604 = vmatpush2.bf16.msra.mxu0 0
  %7605 = vmatprep.subr.bf16.mxu0 0
  %7606 = vmatpush2.bf16.msra.mxu0 0
  %7607 = vmatprep.mubr.bf16.mxu0 0
  %7608 = vmatmul.mubr.bf16.gmra.mxu0 %v7572
  %v7609 = vpop.f32.mrf.mxu0
  %v7610 = vadd.f32 0.0, %v7609
  %v7611 = vpop.f32.mrf.mxu0
  %v7612 = vadd.f32 0.0, %v7611
  %v7613 = vpop.f32.mrf.mxu0
  %v7614 = vpop.f32.mrf.mxu0
  %7615 = vdwg.mxu0
  %7616 = vmatprep.subr.bf16.mxu0 %v6253
  %7617 = vmatpush1.bf16.msra.mxu0 %v6252
  %7618 = vmatprep.subr.bf16.mxu0 %v6249
  %7619 = vmatpush1.bf16.msra.mxu0 %v6248
  %7620 = vmatprep.subr.bf16.mxu0 %v6245
  %7621 = vmatpush1.bf16.msra.mxu0 %v6244
  %7622 = vmatprep.subr.bf16.mxu0 %v6241
  %7623 = vmatpush1.bf16.msra.mxu0 %v6240
  %7624 = vmatprep.subr.bf16.mxu0 %v6237
  %7625 = vmatpush1.bf16.msra.mxu0 %v6236
  %7626 = vmatprep.subr.bf16.mxu0 %v6233
  %7627 = vmatpush1.bf16.msra.mxu0 %v6232
  %7628 = vmatprep.subr.bf16.mxu0 %v6229
  %7629 = vmatpush1.bf16.msra.mxu0 %v6228
  %7630 = vmatprep.subr.bf16.mxu0 %v6225
  %7631 = vmatpush1.bf16.msra.mxu0 %v6224
  %7632 = vmatprep.subr.bf16.mxu0 0
  %7633 = vmatpush2.bf16.msra.mxu0 0
  %7634 = vmatprep.subr.bf16.mxu0 0
  %7635 = vmatpush2.bf16.msra.mxu0 0
  %7636 = vmatprep.subr.bf16.mxu0 0
  %7637 = vmatpush2.bf16.msra.mxu0 0
  %7638 = vmatprep.subr.bf16.mxu0 0
  %7639 = vmatpush2.bf16.msra.mxu0 0
  %7640 = vmatprep.subr.bf16.mxu0 0
  %7641 = vmatpush2.bf16.msra.mxu0 0
  %7642 = vmatprep.subr.bf16.mxu0 0
  %7643 = vmatpush2.bf16.msra.mxu0 0
  %7644 = vmatprep.subr.bf16.mxu0 0
  %7645 = vmatpush2.bf16.msra.mxu0 0
  %7646 = vmatprep.subr.bf16.mxu0 0
  %7647 = vmatpush2.bf16.msra.mxu0 0
  %7648 = vmatprep.mubr.bf16.mxu0 0
  %7649 = vmatmul.mubr.bf16.gmra.mxu0 %v7572
  %v7650 = vpop.f32.mrf.mxu0
  %v7651 = vadd.f32 0.0, %v7650
  %v7652 = vpop.f32.mrf.mxu0
  %v7653 = vadd.f32 0.0, %v7652
  %v7654 = vpop.f32.mrf.mxu0
  %v7655 = vpop.f32.mrf.mxu0
  %7656 = vdwg.mxu0
  %v7657 = vadd.f32 %v5769, %v7610
  %v7658 = vadd.f32 %v5771, %v7612
  %v7659 = vadd.f32 %v5810, %v7651
  %v7660 = vadd.f32 %v5812, %v7653
  %v7661 = vxor.u32 %v7566, 2147483648
  %v7662 = vmul.f32 %v7661, 1.442695
  %v7663 = vpow.pop %v7662
  %v7664 = vadd.f32 %v7663, 1.0
  %v7665 = vrcp.pop %v7664
  %v7666 = vmul.f32 1.0, %v7665
  %v7667 = vxor.u32 %v7567, 2147483648
  %v7668 = vmul.f32 %v7667, 1.442695
  %v7669 = vpow.pop %v7668
  %v7670 = vadd.f32 %v7669, 1.0
  %v7671 = vrcp.pop %v7670
  %v7672 = vmul.f32 1.0, %v7671
  %v7673 = vtanh.pop %v7568
  %v7674 = vxor.u32 %v7569, 2147483648
  %v7675 = vmul.f32 %v7674, 1.442695
  %v7676 = vpow.pop %v7675
  %v7677 = vadd.f32 %v7676, 1.0
  %v7678 = vrcp.pop %v7677
  %v7679 = vmul.f32 1.0, %v7678
  %v7681 = vrot.slane %v7438, 7
  %v7683 = vmul.f32 %v7672, %v7681
  %v7684 = vmul.f32 %v7666, %v7673
  %v7685 = vadd.f32 %v7683, %v7684
  %v7686 = vtanh.pop %v7685
  %v7687 = vmul.f32 %v7679, %v7686
  %v7688 = vxor.u32 %v7657, 2147483648
  %v7689 = vmul.f32 %v7688, 1.442695
  %v7690 = vpow.pop %v7689
  %v7691 = vadd.f32 %v7690, 1.0
  %v7692 = vrcp.pop %v7691
  %v7693 = vmul.f32 1.0, %v7692
  %v7694 = vxor.u32 %v7658, 2147483648
  %v7695 = vmul.f32 %v7694, 1.442695
  %v7696 = vpow.pop %v7695
  %v7697 = vadd.f32 %v7696, 1.0
  %v7698 = vrcp.pop %v7697
  %v7699 = vmul.f32 1.0, %v7698
  %v7700 = vtanh.pop %v7659
  %v7701 = vxor.u32 %v7660, 2147483648
  %v7702 = vmul.f32 %v7701, 1.442695
  %v7703 = vpow.pop %v7702
  %v7704 = vadd.f32 %v7703, 1.0
  %v7705 = vrcp.pop %v7704
  %v7706 = vmul.f32 1.0, %v7705
  %v7708 = vrot.slane %v7465, 1
  %v7710 = vmul.f32 %v7699, %v7708
  %v7711 = vmul.f32 %v7693, %v7700
  %v7712 = vadd.f32 %v7710, %v7711
  %v7713 = vtanh.pop %v7712
  %v7714 = vmul.f32 %v7706, %v7713
  %v7715 = vsel %vm3981, %v6407, %v6661
  %v7716 = vsel %vm186, %v7715, %v6920
  %v7717 = vsel %vm475, %v7716, %v7180
  %v7718 = vsel %vm241, %v7717, %v7440
  %v7719 = vsel %vm1008, %v7718, %v7687
  %v7720 = vsel %vm3981, %v7714, %v7467
  %v7721 = vsel %vm186, %v7720, %v7207
  %v7722 = vsel %vm475, %v7721, %v6947
  %v7723 = vsel %vm241, %v7722, %v6688
  %v7724 = vsel %vm1008, %v7723, %v6431
  %v7725 = vpack.c.bf16 %v7719, %v7719
  %v7726 = vpack.c.bf16 %v7724, %v7724
  %v7727 = vld [vmem:[%s21] sm:$0xff]
  %v7728 = vld [vmem:[%s21 + $0x8] sm:$0xff]
  %v7729 = vld [vmem:[%s21 + $0x10] sm:$0xff]
  %v7730 = vld [vmem:[%s21 + $0x18] sm:$0xff]
  %v7731 = vld [vmem:[%s21 + $0x20] sm:$0xff]
  %v7732 = vld [vmem:[%s21 + $0x28] sm:$0xff]
  %v7733 = vld [vmem:[%s21 + $0x30] sm:$0xff]
  %v7734 = vld [vmem:[%s21 + $0x38] sm:$0xff]
  %v7735 = vld [vmem:[%s21 + $0x40] sm:$0xff]
  %v7736 = vld [vmem:[%s21 + $0x48] sm:$0xff]
  %v7737 = vld [vmem:[%s21 + $0x50] sm:$0xff]
  %v7738 = vld [vmem:[%s21 + $0x58] sm:$0xff]
  %v7739 = vld [vmem:[%s21 + $0x60] sm:$0xff]
  %v7740 = vld [vmem:[%s21 + $0x68] sm:$0xff]
  %v7741 = vld [vmem:[%s21 + $0x70] sm:$0xff]
  %v7742 = vld [vmem:[%s21 + $0x78] sm:$0xff]
  %v7743 = vld [vmem:[%s21 + $0x80] sm:$0xff]
  %v7744 = vld [vmem:[%s21 + $0x88] sm:$0xff]
  %v7745 = vld [vmem:[%s21 + $0x90] sm:$0xff]
  %v7746 = vld [vmem:[%s21 + $0x98] sm:$0xff]
  %v7747 = vld [vmem:[%s21 + $0xa0] sm:$0xff]
  %v7748 = vld [vmem:[%s21 + $0xa8] sm:$0xff]
  %v7749 = vld [vmem:[%s21 + $0xb0] sm:$0xff]
  %v7750 = vld [vmem:[%s21 + $0xb8] sm:$0xff]
  %v7751 = vld [vmem:[%s21 + $0xc0] sm:$0xff]
  %v7752 = vld [vmem:[%s21 + $0xc8] sm:$0xff]
  %v7753 = vld [vmem:[%s21 + $0xd0] sm:$0xff]
  %v7754 = vld [vmem:[%s21 + $0xd8] sm:$0xff]
  %v7755 = vld [vmem:[%s21 + $0xe0] sm:$0xff]
  %v7756 = vld [vmem:[%s21 + $0xe8] sm:$0xff]
  %v7757 = vld [vmem:[%s21 + $0xf0] sm:$0xff]
  %v7758 = vld [vmem:[%s21 + $0xf8] sm:$0xff]
  %v7759 = vld [vmem:[%s21 + $0x100] sm:$0xff]
  %v7760 = vld [vmem:[%s21 + $0x108] sm:$0xff]
  %v7761 = vld [vmem:[%s21 + $0x110] sm:$0xff]
  %v7762 = vld [vmem:[%s21 + $0x118] sm:$0xff]
  %v7763 = vld [vmem:[%s21 + $0x120] sm:$0xff]
  %v7764 = vld [vmem:[%s21 + $0x128] sm:$0xff]
  %v7765 = vld [vmem:[%s21 + $0x130] sm:$0xff]
  %v7766 = vld [vmem:[%s21 + $0x138] sm:$0xff]
  %v7767 = vld [vmem:[%s21 + $0x140] sm:$0xff]
  %v7768 = vld [vmem:[%s21 + $0x148] sm:$0xff]
  %v7769 = vld [vmem:[%s21 + $0x150] sm:$0xff]
  %v7770 = vld [vmem:[%s21 + $0x158] sm:$0xff]
  %v7771 = vld [vmem:[%s21 + $0x160] sm:$0xff]
  %v7772 = vld [vmem:[%s21 + $0x168] sm:$0xff]
  %v7773 = vld [vmem:[%s21 + $0x170] sm:$0xff]
  %v7774 = vld [vmem:[%s21 + $0x178] sm:$0xff]
  %v7775 = vld [vmem:[%s21 + $0x180] sm:$0xff]
  %v7776 = vld [vmem:[%s21 + $0x188] sm:$0xff]
  %v7777 = vld [vmem:[%s21 + $0x190] sm:$0xff]
  %v7778 = vld [vmem:[%s21 + $0x198] sm:$0xff]
  %v7779 = vld [vmem:[%s21 + $0x1a0] sm:$0xff]
  %v7780 = vld [vmem:[%s21 + $0x1a8] sm:$0xff]
  %v7781 = vld [vmem:[%s21 + $0x1b0] sm:$0xff]
  %v7782 = vld [vmem:[%s21 + $0x1b8] sm:$0xff]
  %v7783 = vld [vmem:[%s21 + $0x1c0] sm:$0xff]
  %v7784 = vld [vmem:[%s21 + $0x1c8] sm:$0xff]
  %v7785 = vld [vmem:[%s21 + $0x1d0] sm:$0xff]
  %v7786 = vld [vmem:[%s21 + $0x1d8] sm:$0xff]
  %v7787 = vld [vmem:[%s21 + $0x1e0] sm:$0xff]
  %v7788 = vld [vmem:[%s21 + $0x1e8] sm:$0xff]
  %v7789 = vld [vmem:[%s21 + $0x1f0] sm:$0xff]
  %v7790 = vld [vmem:[%s21 + $0x1f8] sm:$0xff]
  %v7791 = vld [vmem:[%s21 + $0x200] sm:$0xff]
  %v7792 = vld [vmem:[%s21 + $0x208] sm:$0xff]
  %v7793 = vld [vmem:[%s21 + $0x210] sm:$0xff]
  %v7794 = vld [vmem:[%s21 + $0x218] sm:$0xff]
  %v7795 = vld [vmem:[%s21 + $0x220] sm:$0xff]
  %v7796 = vld [vmem:[%s21 + $0x228] sm:$0xff]
  %v7797 = vld [vmem:[%s21 + $0x230] sm:$0xff]
  %v7798 = vld [vmem:[%s21 + $0x238] sm:$0xff]
  %v7799 = vld [vmem:[%s21 + $0x240] sm:$0xff]
  %v7800 = vld [vmem:[%s21 + $0x248] sm:$0xff]
  %v7801 = vld [vmem:[%s21 + $0x250] sm:$0xff]
  %v7802 = vld [vmem:[%s21 + $0x258] sm:$0xff]
  %v7803 = vld [vmem:[%s21 + $0x260] sm:$0xff]
  %v7804 = vld [vmem:[%s21 + $0x268] sm:$0xff]
  %v7805 = vld [vmem:[%s21 + $0x270] sm:$0xff]
  %v7806 = vld [vmem:[%s21 + $0x278] sm:$0xff]
  %v7807 = vld [vmem:[%s21 + $0x280] sm:$0xff]
  %v7808 = vld [vmem:[%s21 + $0x288] sm:$0xff]
  %v7809 = vld [vmem:[%s21 + $0x290] sm:$0xff]
  %v7810 = vld [vmem:[%s21 + $0x298] sm:$0xff]
  %v7811 = vld [vmem:[%s21 + $0x2a0] sm:$0xff]
  %v7812 = vld [vmem:[%s21 + $0x2a8] sm:$0xff]
  %v7813 = vld [vmem:[%s21 + $0x2b0] sm:$0xff]
  %v7814 = vld [vmem:[%s21 + $0x2b8] sm:$0xff]
  %v7815 = vld [vmem:[%s21 + $0x2c0] sm:$0xff]
  %v7816 = vld [vmem:[%s21 + $0x2c8] sm:$0xff]
  %v7817 = vld [vmem:[%s21 + $0x2d0] sm:$0xff]
  %v7818 = vld [vmem:[%s21 + $0x2d8] sm:$0xff]
  %v7819 = vld [vmem:[%s21 + $0x2e0] sm:$0xff]
  %v7820 = vld [vmem:[%s21 + $0x2e8] sm:$0xff]
  %v7821 = vld [vmem:[%s21 + $0x2f0] sm:$0xff]
  %v7822 = vld [vmem:[%s21 + $0x2f8] sm:$0xff]
  %v7823 = vld [vmem:[%s21 + $0x300] sm:$0xff]
  %v7824 = vld [vmem:[%s21 + $0x308] sm:$0xff]
  %v7825 = vld [vmem:[%s21 + $0x310] sm:$0xff]
  %v7826 = vld [vmem:[%s21 + $0x318] sm:$0xff]
  %v7827 = vld [vmem:[%s21 + $0x320] sm:$0xff]
  %v7828 = vld [vmem:[%s21 + $0x328] sm:$0xff]
  %v7829 = vld [vmem:[%s21 + $0x330] sm:$0xff]
  %v7830 = vld [vmem:[%s21 + $0x338] sm:$0xff]
  %v7831 = vld [vmem:[%s21 + $0x340] sm:$0xff]
  %v7832 = vld [vmem:[%s21 + $0x348] sm:$0xff]
  %v7833 = vld [vmem:[%s21 + $0x350] sm:$0xff]
  %v7834 = vld [vmem:[%s21 + $0x358] sm:$0xff]
  %v7835 = vld [vmem:[%s21 + $0x360] sm:$0xff]
  %v7836 = vld [vmem:[%s21 + $0x368] sm:$0xff]
  %v7837 = vld [vmem:[%s21 + $0x370] sm:$0xff]
  %v7838 = vld [vmem:[%s21 + $0x378] sm:$0xff]
  %v7839 = vld [vmem:[%s21 + $0x380] sm:$0xff]
  %v7840 = vld [vmem:[%s21 + $0x388] sm:$0xff]
  %v7841 = vld [vmem:[%s21 + $0x390] sm:$0xff]
  %v7842 = vld [vmem:[%s21 + $0x398] sm:$0xff]
  %v7843 = vld [vmem:[%s21 + $0x3a0] sm:$0xff]
  %v7844 = vld [vmem:[%s21 + $0x3a8] sm:$0xff]
  %v7845 = vld [vmem:[%s21 + $0x3b0] sm:$0xff]
  %v7846 = vld [vmem:[%s21 + $0x3b8] sm:$0xff]
  %v7847 = vld [vmem:[%s21 + $0x3c0] sm:$0xff]
  %v7848 = vld [vmem:[%s21 + $0x3c8] sm:$0xff]
  %v7849 = vld [vmem:[%s21 + $0x3d0] sm:$0xff]
  %v7850 = vld [vmem:[%s21 + $0x3d8] sm:$0xff]
  %v7851 = vld [vmem:[%s21 + $0x3e0] sm:$0xff]
  %v7852 = vld [vmem:[%s21 + $0x3e8] sm:$0xff]
  %v7853 = vld [vmem:[%s21 + $0x3f0] sm:$0xff]
  %v7854 = vld [vmem:[%s21 + $0x3f8] sm:$0xff]
  %v7855 = vld [vmem:[%s23] sm:$0xff]
  %v7857 = vlaneseq
  %v7858 = vshrl.u32 %v7857, 7
  %v7859 = vsub.s32 0, %v7858
  %v7860 = vrot.slane %v7855, %v7859
  %v7861 = vlaneseq
  %v7862 = vshrl.u32 %v7861, 7
  %v7863 = vsub.s32 1, %v7862
  %v7864 = vrot.slane %v7855, %v7863
  %v7865 = vlaneseq
  %v7866 = vshrl.u32 %v7865, 7
  %v7867 = vsub.s32 2, %v7866
  %v7868 = vrot.slane %v7855, %v7867
  %v7869 = vlaneseq
  %v7870 = vshrl.u32 %v7869, 7
  %v7871 = vsub.s32 3, %v7870
  %v7872 = vrot.slane %v7855, %v7871
  %v7873 = vlaneseq
  %v7874 = vshrl.u32 %v7873, 7
  %v7875 = vsub.s32 4, %v7874
  %v7876 = vrot.slane %v7855, %v7875
  %v7877 = vlaneseq
  %v7878 = vshrl.u32 %v7877, 7
  %v7879 = vsub.s32 5, %v7878
  %v7880 = vrot.slane %v7855, %v7879
  %v7881 = vlaneseq
  %v7882 = vshrl.u32 %v7881, 7
  %v7883 = vsub.s32 6, %v7882
  %v7884 = vrot.slane %v7855, %v7883
  %v7885 = vlaneseq
  %v7886 = vshrl.u32 %v7885, 7
  %v7887 = vsub.s32 7, %v7886
  %v7888 = vrot.slane %v7855, %v7887
  %v8025 = vunpack.c.l.b16 %v7727
  %v8026 = vunpack.c.h.b16 %v7727
  %v8027 = vunpack.c.l.b16 %v7728
  %v8028 = vunpack.c.h.b16 %v7728
  %v8029 = vunpack.c.l.b16 %v7729
  %v8030 = vunpack.c.h.b16 %v7729
  %v8031 = vunpack.c.l.b16 %v7730
  %v8032 = vunpack.c.h.b16 %v7730
  %v8033 = vunpack.c.l.b16 %v7731
  %v8034 = vunpack.c.h.b16 %v7731
  %v8035 = vunpack.c.l.b16 %v7732
  %v8036 = vunpack.c.h.b16 %v7732
  %v8037 = vunpack.c.l.b16 %v7733
  %v8038 = vunpack.c.h.b16 %v7733
  %v8039 = vunpack.c.l.b16 %v7734
  %v8040 = vunpack.c.h.b16 %v7734
  %v8041 = vunpack.c.l.b16 %v7735
  %v8042 = vunpack.c.h.b16 %v7735
  %v8043 = vunpack.c.l.b16 %v7736
  %v8044 = vunpack.c.h.b16 %v7736
  %v8045 = vunpack.c.l.b16 %v7737
  %v8046 = vunpack.c.h.b16 %v7737
  %v8047 = vunpack.c.l.b16 %v7738
  %v8048 = vunpack.c.h.b16 %v7738
  %v8049 = vunpack.c.l.b16 %v7739
  %v8050 = vunpack.c.h.b16 %v7739
  %v8051 = vunpack.c.l.b16 %v7740
  %v8052 = vunpack.c.h.b16 %v7740
  %v8053 = vunpack.c.l.b16 %v7741
  %v8054 = vunpack.c.h.b16 %v7741
  %v8055 = vunpack.c.l.b16 %v7742
  %v8056 = vunpack.c.h.b16 %v7742
  %v8057 = vunpack.c.l.b16 %v7743
  %v8058 = vunpack.c.h.b16 %v7743
  %v8059 = vunpack.c.l.b16 %v7744
  %v8060 = vunpack.c.h.b16 %v7744
  %v8061 = vunpack.c.l.b16 %v7745
  %v8062 = vunpack.c.h.b16 %v7745
  %v8063 = vunpack.c.l.b16 %v7746
  %v8064 = vunpack.c.h.b16 %v7746
  %v8065 = vunpack.c.l.b16 %v7747
  %v8066 = vunpack.c.h.b16 %v7747
  %v8067 = vunpack.c.l.b16 %v7748
  %v8068 = vunpack.c.h.b16 %v7748
  %v8069 = vunpack.c.l.b16 %v7749
  %v8070 = vunpack.c.h.b16 %v7749
  %v8071 = vunpack.c.l.b16 %v7750
  %v8072 = vunpack.c.h.b16 %v7750
  %v8073 = vunpack.c.l.b16 %v7751
  %v8074 = vunpack.c.h.b16 %v7751
  %v8075 = vunpack.c.l.b16 %v7752
  %v8076 = vunpack.c.h.b16 %v7752
  %v8077 = vunpack.c.l.b16 %v7753
  %v8078 = vunpack.c.h.b16 %v7753
  %v8079 = vunpack.c.l.b16 %v7754
  %v8080 = vunpack.c.h.b16 %v7754
  %v8081 = vunpack.c.l.b16 %v7755
  %v8082 = vunpack.c.h.b16 %v7755
  %v8083 = vunpack.c.l.b16 %v7756
  %v8084 = vunpack.c.h.b16 %v7756
  %v8085 = vunpack.c.l.b16 %v7757
  %v8086 = vunpack.c.h.b16 %v7757
  %v8087 = vunpack.c.l.b16 %v7758
  %v8088 = vunpack.c.h.b16 %v7758
  %v8089 = vunpack.c.l.b16 %v7759
  %v8090 = vunpack.c.h.b16 %v7759
  %v8091 = vunpack.c.l.b16 %v7760
  %v8092 = vunpack.c.h.b16 %v7760
  %v8093 = vunpack.c.l.b16 %v7761
  %v8094 = vunpack.c.h.b16 %v7761
  %v8095 = vunpack.c.l.b16 %v7762
  %v8096 = vunpack.c.h.b16 %v7762
  %v8097 = vunpack.c.l.b16 %v7763
  %v8098 = vunpack.c.h.b16 %v7763
  %v8099 = vunpack.c.l.b16 %v7764
  %v8100 = vunpack.c.h.b16 %v7764
  %v8101 = vunpack.c.l.b16 %v7765
  %v8102 = vunpack.c.h.b16 %v7765
  %v8103 = vunpack.c.l.b16 %v7766
  %v8104 = vunpack.c.h.b16 %v7766
  %v8105 = vunpack.c.l.b16 %v7767
  %v8106 = vunpack.c.h.b16 %v7767
  %v8107 = vunpack.c.l.b16 %v7768
  %v8108 = vunpack.c.h.b16 %v7768
  %v8109 = vunpack.c.l.b16 %v7769
  %v8110 = vunpack.c.h.b16 %v7769
  %v8111 = vunpack.c.l.b16 %v7770
  %v8112 = vunpack.c.h.b16 %v7770
  %v8113 = vunpack.c.l.b16 %v7771
  %v8114 = vunpack.c.h.b16 %v7771
  %v8115 = vunpack.c.l.b16 %v7772
  %v8116 = vunpack.c.h.b16 %v7772
  %v8117 = vunpack.c.l.b16 %v7773
  %v8118 = vunpack.c.h.b16 %v7773
  %v8119 = vunpack.c.l.b16 %v7774
  %v8120 = vunpack.c.h.b16 %v7774
  %v8121 = vunpack.c.l.b16 %v7775
  %v8122 = vunpack.c.h.b16 %v7775
  %v8123 = vunpack.c.l.b16 %v7776
  %v8124 = vunpack.c.h.b16 %v7776
  %v8125 = vunpack.c.l.b16 %v7777
  %v8126 = vunpack.c.h.b16 %v7777
  %v8127 = vunpack.c.l.b16 %v7778
  %v8128 = vunpack.c.h.b16 %v7778
  %v8129 = vunpack.c.l.b16 %v7779
  %v8130 = vunpack.c.h.b16 %v7779
  %v8131 = vunpack.c.l.b16 %v7780
  %v8132 = vunpack.c.h.b16 %v7780
  %v8133 = vunpack.c.l.b16 %v7781
  %v8134 = vunpack.c.h.b16 %v7781
  %v8135 = vunpack.c.l.b16 %v7782
  %v8136 = vunpack.c.h.b16 %v7782
  %v8137 = vunpack.c.l.b16 %v7783
  %v8138 = vunpack.c.h.b16 %v7783
  %v8139 = vunpack.c.l.b16 %v7784
  %v8140 = vunpack.c.h.b16 %v7784
  %v8141 = vunpack.c.l.b16 %v7785
  %v8142 = vunpack.c.h.b16 %v7785
  %v8143 = vunpack.c.l.b16 %v7786
  %v8144 = vunpack.c.h.b16 %v7786
  %v8145 = vunpack.c.l.b16 %v7787
  %v8146 = vunpack.c.h.b16 %v7787
  %v8147 = vunpack.c.l.b16 %v7788
  %v8148 = vunpack.c.h.b16 %v7788
  %v8149 = vunpack.c.l.b16 %v7789
  %v8150 = vunpack.c.h.b16 %v7789
  %v8151 = vunpack.c.l.b16 %v7790
  %v8152 = vunpack.c.h.b16 %v7790
  %v8153 = vunpack.c.l.b16 %v7791
  %v8154 = vunpack.c.h.b16 %v7791
  %v8155 = vunpack.c.l.b16 %v7792
  %v8156 = vunpack.c.h.b16 %v7792
  %v8157 = vunpack.c.l.b16 %v7793
  %v8158 = vunpack.c.h.b16 %v7793
  %v8159 = vunpack.c.l.b16 %v7794
  %v8160 = vunpack.c.h.b16 %v7794
  %v8161 = vunpack.c.l.b16 %v7795
  %v8162 = vunpack.c.h.b16 %v7795
  %v8163 = vunpack.c.l.b16 %v7796
  %v8164 = vunpack.c.h.b16 %v7796
  %v8165 = vunpack.c.l.b16 %v7797
  %v8166 = vunpack.c.h.b16 %v7797
  %v8167 = vunpack.c.l.b16 %v7798
  %v8168 = vunpack.c.h.b16 %v7798
  %v8169 = vunpack.c.l.b16 %v7799
  %v8170 = vunpack.c.h.b16 %v7799
  %v8171 = vunpack.c.l.b16 %v7800
  %v8172 = vunpack.c.h.b16 %v7800
  %v8173 = vunpack.c.l.b16 %v7801
  %v8174 = vunpack.c.h.b16 %v7801
  %v8175 = vunpack.c.l.b16 %v7802
  %v8176 = vunpack.c.h.b16 %v7802
  %v8177 = vunpack.c.l.b16 %v7803
  %v8178 = vunpack.c.h.b16 %v7803
  %v8179 = vunpack.c.l.b16 %v7804
  %v8180 = vunpack.c.h.b16 %v7804
  %v8181 = vunpack.c.l.b16 %v7805
  %v8182 = vunpack.c.h.b16 %v7805
  %v8183 = vunpack.c.l.b16 %v7806
  %v8184 = vunpack.c.h.b16 %v7806
  %v8185 = vunpack.c.l.b16 %v7807
  %v8186 = vunpack.c.h.b16 %v7807
  %v8187 = vunpack.c.l.b16 %v7808
  %v8188 = vunpack.c.h.b16 %v7808
  %v8189 = vunpack.c.l.b16 %v7809
  %v8190 = vunpack.c.h.b16 %v7809
  %v8191 = vunpack.c.l.b16 %v7810
  %v8192 = vunpack.c.h.b16 %v7810
  %v8193 = vunpack.c.l.b16 %v7811
  %v8194 = vunpack.c.h.b16 %v7811
  %v8195 = vunpack.c.l.b16 %v7812
  %v8196 = vunpack.c.h.b16 %v7812
  %v8197 = vunpack.c.l.b16 %v7813
  %v8198 = vunpack.c.h.b16 %v7813
  %v8199 = vunpack.c.l.b16 %v7814
  %v8200 = vunpack.c.h.b16 %v7814
  %v8201 = vunpack.c.l.b16 %v7815
  %v8202 = vunpack.c.h.b16 %v7815
  %v8203 = vunpack.c.l.b16 %v7816
  %v8204 = vunpack.c.h.b16 %v7816
  %v8205 = vunpack.c.l.b16 %v7817
  %v8206 = vunpack.c.h.b16 %v7817
  %v8207 = vunpack.c.l.b16 %v7818
  %v8208 = vunpack.c.h.b16 %v7818
  %v8209 = vunpack.c.l.b16 %v7819
  %v8210 = vunpack.c.h.b16 %v7819
  %v8211 = vunpack.c.l.b16 %v7820
  %v8212 = vunpack.c.h.b16 %v7820
  %v8213 = vunpack.c.l.b16 %v7821
  %v8214 = vunpack.c.h.b16 %v7821
  %v8215 = vunpack.c.l.b16 %v7822
  %v8216 = vunpack.c.h.b16 %v7822
  %v8217 = vunpack.c.l.b16 %v7823
  %v8218 = vunpack.c.h.b16 %v7823
  %v8219 = vunpack.c.l.b16 %v7824
  %v8220 = vunpack.c.h.b16 %v7824
  %v8221 = vunpack.c.l.b16 %v7825
  %v8222 = vunpack.c.h.b16 %v7825
  %v8223 = vunpack.c.l.b16 %v7826
  %v8224 = vunpack.c.h.b16 %v7826
  %v8225 = vunpack.c.l.b16 %v7827
  %v8226 = vunpack.c.h.b16 %v7827
  %v8227 = vunpack.c.l.b16 %v7828
  %v8228 = vunpack.c.h.b16 %v7828
  %v8229 = vunpack.c.l.b16 %v7829
  %v8230 = vunpack.c.h.b16 %v7829
  %v8231 = vunpack.c.l.b16 %v7830
  %v8232 = vunpack.c.h.b16 %v7830
  %v8233 = vunpack.c.l.b16 %v7831
  %v8234 = vunpack.c.h.b16 %v7831
  %v8235 = vunpack.c.l.b16 %v7832
  %v8236 = vunpack.c.h.b16 %v7832
  %v8237 = vunpack.c.l.b16 %v7833
  %v8238 = vunpack.c.h.b16 %v7833
  %v8239 = vunpack.c.l.b16 %v7834
  %v8240 = vunpack.c.h.b16 %v7834
  %v8241 = vunpack.c.l.b16 %v7835
  %v8242 = vunpack.c.h.b16 %v7835
  %v8243 = vunpack.c.l.b16 %v7836
  %v8244 = vunpack.c.h.b16 %v7836
  %v8245 = vunpack.c.l.b16 %v7837
  %v8246 = vunpack.c.h.b16 %v7837
  %v8247 = vunpack.c.l.b16 %v7838
  %v8248 = vunpack.c.h.b16 %v7838
  %v8249 = vunpack.c.l.b16 %v7839
  %v8250 = vunpack.c.h.b16 %v7839
  %v8251 = vunpack.c.l.b16 %v7840
  %v8252 = vunpack.c.h.b16 %v7840
  %v8253 = vunpack.c.l.b16 %v7841
  %v8254 = vunpack.c.h.b16 %v7841
  %v8255 = vunpack.c.l.b16 %v7842
  %v8256 = vunpack.c.h.b16 %v7842
  %v8257 = vunpack.c.l.b16 %v7843
  %v8258 = vunpack.c.h.b16 %v7843
  %v8259 = vunpack.c.l.b16 %v7844
  %v8260 = vunpack.c.h.b16 %v7844
  %v8261 = vunpack.c.l.b16 %v7845
  %v8262 = vunpack.c.h.b16 %v7845
  %v8263 = vunpack.c.l.b16 %v7846
  %v8264 = vunpack.c.h.b16 %v7846
  %v8265 = vunpack.c.l.b16 %v7847
  %v8266 = vunpack.c.h.b16 %v7847
  %v8267 = vunpack.c.l.b16 %v7848
  %v8268 = vunpack.c.h.b16 %v7848
  %v8269 = vunpack.c.l.b16 %v7849
  %v8270 = vunpack.c.h.b16 %v7849
  %v8271 = vunpack.c.l.b16 %v7850
  %v8272 = vunpack.c.h.b16 %v7850
  %v8273 = vunpack.c.l.b16 %v7851
  %v8274 = vunpack.c.h.b16 %v7851
  %v8275 = vunpack.c.l.b16 %v7852
  %v8276 = vunpack.c.h.b16 %v7852
  %v8277 = vunpack.c.l.b16 %v7853
  %v8278 = vunpack.c.h.b16 %v7853
  %v8279 = vunpack.c.l.b16 %v7854
  %v8280 = vunpack.c.h.b16 %v7854
  %v8281 = vpack.c.b16 %v8033, %v8025
  %v8282 = vpack.c.b16 %v8034, %v8026
  %v8283 = vpack.c.b16 %v8035, %v8027
  %v8284 = vpack.c.b16 %v8036, %v8028
  %v8285 = vpack.c.b16 %v8037, %v8029
  %v8286 = vpack.c.b16 %v8038, %v8030
  %v8287 = vpack.c.b16 %v8039, %v8031
  %v8288 = vpack.c.b16 %v8040, %v8032
  %v8289 = vpack.c.b16 %v8049, %v8041
  %v8290 = vpack.c.b16 %v8050, %v8042
  %v8291 = vpack.c.b16 %v8051, %v8043
  %v8292 = vpack.c.b16 %v8052, %v8044
  %v8293 = vpack.c.b16 %v8053, %v8045
  %v8294 = vpack.c.b16 %v8054, %v8046
  %v8295 = vpack.c.b16 %v8055, %v8047
  %v8296 = vpack.c.b16 %v8056, %v8048
  %v8297 = vpack.c.b16 %v8065, %v8057
  %v8298 = vpack.c.b16 %v8066, %v8058
  %v8299 = vpack.c.b16 %v8067, %v8059
  %v8300 = vpack.c.b16 %v8068, %v8060
  %v8301 = vpack.c.b16 %v8069, %v8061
  %v8302 = vpack.c.b16 %v8070, %v8062
  %v8303 = vpack.c.b16 %v8071, %v8063
  %v8304 = vpack.c.b16 %v8072, %v8064
  %v8305 = vpack.c.b16 %v8081, %v8073
  %v8306 = vpack.c.b16 %v8082, %v8074
  %v8307 = vpack.c.b16 %v8083, %v8075
  %v8308 = vpack.c.b16 %v8084, %v8076
  %v8309 = vpack.c.b16 %v8085, %v8077
  %v8310 = vpack.c.b16 %v8086, %v8078
  %v8311 = vpack.c.b16 %v8087, %v8079
  %v8312 = vpack.c.b16 %v8088, %v8080
  %v8313 = vpack.c.b16 %v8097, %v8089
  %v8314 = vpack.c.b16 %v8098, %v8090
  %v8315 = vpack.c.b16 %v8099, %v8091
  %v8316 = vpack.c.b16 %v8100, %v8092
  %v8317 = vpack.c.b16 %v8101, %v8093
  %v8318 = vpack.c.b16 %v8102, %v8094
  %v8319 = vpack.c.b16 %v8103, %v8095
  %v8320 = vpack.c.b16 %v8104, %v8096
  %v8321 = vpack.c.b16 %v8113, %v8105
  %v8322 = vpack.c.b16 %v8114, %v8106
  %v8323 = vpack.c.b16 %v8115, %v8107
  %v8324 = vpack.c.b16 %v8116, %v8108
  %v8325 = vpack.c.b16 %v8117, %v8109
  %v8326 = vpack.c.b16 %v8118, %v8110
  %v8327 = vpack.c.b16 %v8119, %v8111
  %v8328 = vpack.c.b16 %v8120, %v8112
  %v8329 = vpack.c.b16 %v8129, %v8121
  %v8330 = vpack.c.b16 %v8130, %v8122
  %v8331 = vpack.c.b16 %v8131, %v8123
  %v8332 = vpack.c.b16 %v8132, %v8124
  %v8333 = vpack.c.b16 %v8133, %v8125
  %v8334 = vpack.c.b16 %v8134, %v8126
  %v8335 = vpack.c.b16 %v8135, %v8127
  %v8336 = vpack.c.b16 %v8136, %v8128
  %v8337 = vpack.c.b16 %v8145, %v8137
  %v8338 = vpack.c.b16 %v8146, %v8138
  %v8339 = vpack.c.b16 %v8147, %v8139
  %v8340 = vpack.c.b16 %v8148, %v8140
  %v8341 = vpack.c.b16 %v8149, %v8141
  %v8342 = vpack.c.b16 %v8150, %v8142
  %v8343 = vpack.c.b16 %v8151, %v8143
  %v8344 = vpack.c.b16 %v8152, %v8144
  %v8345 = vpack.c.b16 %v8161, %v8153
  %v8346 = vpack.c.b16 %v8162, %v8154
  %v8347 = vpack.c.b16 %v8163, %v8155
  %v8348 = vpack.c.b16 %v8164, %v8156
  %v8349 = vpack.c.b16 %v8165, %v8157
  %v8350 = vpack.c.b16 %v8166, %v8158
  %v8351 = vpack.c.b16 %v8167, %v8159
  %v8352 = vpack.c.b16 %v8168, %v8160
  %v8353 = vpack.c.b16 %v8177, %v8169
  %v8354 = vpack.c.b16 %v8178, %v8170
  %v8355 = vpack.c.b16 %v8179, %v8171
  %v8356 = vpack.c.b16 %v8180, %v8172
  %v8357 = vpack.c.b16 %v8181, %v8173
  %v8358 = vpack.c.b16 %v8182, %v8174
  %v8359 = vpack.c.b16 %v8183, %v8175
  %v8360 = vpack.c.b16 %v8184, %v8176
  %v8361 = vpack.c.b16 %v8193, %v8185
  %v8362 = vpack.c.b16 %v8194, %v8186
  %v8363 = vpack.c.b16 %v8195, %v8187
  %v8364 = vpack.c.b16 %v8196, %v8188
  %v8365 = vpack.c.b16 %v8197, %v8189
  %v8366 = vpack.c.b16 %v8198, %v8190
  %v8367 = vpack.c.b16 %v8199, %v8191
  %v8368 = vpack.c.b16 %v8200, %v8192
  %v8369 = vpack.c.b16 %v8209, %v8201
  %v8370 = vpack.c.b16 %v8210, %v8202
  %v8371 = vpack.c.b16 %v8211, %v8203
  %v8372 = vpack.c.b16 %v8212, %v8204
  %v8373 = vpack.c.b16 %v8213, %v8205
  %v8374 = vpack.c.b16 %v8214, %v8206
  %v8375 = vpack.c.b16 %v8215, %v8207
  %v8376 = vpack.c.b16 %v8216, %v8208
  %v8377 = vpack.c.b16 %v8225, %v8217
  %v8378 = vpack.c.b16 %v8226, %v8218
  %v8379 = vpack.c.b16 %v8227, %v8219
  %v8380 = vpack.c.b16 %v8228, %v8220
  %v8381 = vpack.c.b16 %v8229, %v8221
  %v8382 = vpack.c.b16 %v8230, %v8222
  %v8383 = vpack.c.b16 %v8231, %v8223
  %v8384 = vpack.c.b16 %v8232, %v8224
  %v8385 = vpack.c.b16 %v8241, %v8233
  %v8386 = vpack.c.b16 %v8242, %v8234
  %v8387 = vpack.c.b16 %v8243, %v8235
  %v8388 = vpack.c.b16 %v8244, %v8236
  %v8389 = vpack.c.b16 %v8245, %v8237
  %v8390 = vpack.c.b16 %v8246, %v8238
  %v8391 = vpack.c.b16 %v8247, %v8239
  %v8392 = vpack.c.b16 %v8248, %v8240
  %v8393 = vpack.c.b16 %v8257, %v8249
  %v8394 = vpack.c.b16 %v8258, %v8250
  %v8395 = vpack.c.b16 %v8259, %v8251
  %v8396 = vpack.c.b16 %v8260, %v8252
  %v8397 = vpack.c.b16 %v8261, %v8253
  %v8398 = vpack.c.b16 %v8262, %v8254
  %v8399 = vpack.c.b16 %v8263, %v8255
  %v8400 = vpack.c.b16 %v8264, %v8256
  %v8401 = vpack.c.b16 %v8273, %v8265
  %v8402 = vpack.c.b16 %v8274, %v8266
  %v8403 = vpack.c.b16 %v8275, %v8267
  %v8404 = vpack.c.b16 %v8276, %v8268
  %v8405 = vpack.c.b16 %v8277, %v8269
  %v8406 = vpack.c.b16 %v8278, %v8270
  %v8407 = vpack.c.b16 %v8279, %v8271
  %v8408 = vpack.c.b16 %v8280, %v8272
  %8537 = vmatprep.subr.bf16.mxu0 %v8338
  %8538 = vmatpush1.bf16.msra.mxu0 %v8337
  %8539 = vmatprep.subr.bf16.mxu0 %v8330
  %8540 = vmatpush1.bf16.msra.mxu0 %v8329
  %8541 = vmatprep.subr.bf16.mxu0 %v8322
  %8542 = vmatpush1.bf16.msra.mxu0 %v8321
  %8543 = vmatprep.subr.bf16.mxu0 %v8314
  %8544 = vmatpush1.bf16.msra.mxu0 %v8313
  %8545 = vmatprep.subr.bf16.mxu0 %v8306
  %8546 = vmatpush1.bf16.msra.mxu0 %v8305
  %8547 = vmatprep.subr.bf16.mxu0 %v8298
  %8548 = vmatpush1.bf16.msra.mxu0 %v8297
  %8549 = vmatprep.subr.bf16.mxu0 %v8290
  %8550 = vmatpush1.bf16.msra.mxu0 %v8289
  %8551 = vmatprep.subr.bf16.mxu0 %v8282
  %8552 = vmatpush1.bf16.msra.mxu0 %v8281
  %8553 = vmatprep.subr.bf16.mxu0 %v8402
  %8554 = vmatpush2.bf16.msra.mxu0 %v8401
  %8555 = vmatprep.subr.bf16.mxu0 %v8394
  %8556 = vmatpush2.bf16.msra.mxu0 %v8393
  %8557 = vmatprep.subr.bf16.mxu0 %v8386
  %8558 = vmatpush2.bf16.msra.mxu0 %v8385
  %8559 = vmatprep.subr.bf16.mxu0 %v8378
  %8560 = vmatpush2.bf16.msra.mxu0 %v8377
  %8561 = vmatprep.subr.bf16.mxu0 %v8370
  %8562 = vmatpush2.bf16.msra.mxu0 %v8369
  %8563 = vmatprep.subr.bf16.mxu0 %v8362
  %8564 = vmatpush2.bf16.msra.mxu0 %v8361
  %8565 = vmatprep.subr.bf16.mxu0 %v8354
  %8566 = vmatpush2.bf16.msra.mxu0 %v8353
  %8567 = vmatprep.subr.bf16.mxu0 %v8346
  %8568 = vmatpush2.bf16.msra.mxu0 %v8345
  %8569 = vmatprep.mubr.bf16.mxu0 %v7726
  %8570 = vmatmul.mubr.bf16.gmra.mxu0 %v7725
  %v8571 = vpop.f32.mrf.mxu0
  %v8572 = vadd.f32 %v7860, %v8571
  %v8573 = vpop.f32.mrf.mxu0
  %v8574 = vadd.f32 %v7864, %v8573
  %v8575 = vpop.f32.mrf.mxu0
  %v8576 = vpop.f32.mrf.mxu0
  %8577 = vdwg.mxu0
  %8578 = vmatprep.subr.bf16.mxu0 %v8340
  %8579 = vmatpush1.bf16.msra.mxu0 %v8339
  %8580 = vmatprep.subr.bf16.mxu0 %v8332
  %8581 = vmatpush1.bf16.msra.mxu0 %v8331
  %8582 = vmatprep.subr.bf16.mxu0 %v8324
  %8583 = vmatpush1.bf16.msra.mxu0 %v8323
  %8584 = vmatprep.subr.bf16.mxu0 %v8316
  %8585 = vmatpush1.bf16.msra.mxu0 %v8315
  %8586 = vmatprep.subr.bf16.mxu0 %v8308
  %8587 = vmatpush1.bf16.msra.mxu0 %v8307
  %8588 = vmatprep.subr.bf16.mxu0 %v8300
  %8589 = vmatpush1.bf16.msra.mxu0 %v8299
  %8590 = vmatprep.subr.bf16.mxu0 %v8292
  %8591 = vmatpush1.bf16.msra.mxu0 %v8291
  %8592 = vmatprep.subr.bf16.mxu0 %v8284
  %8593 = vmatpush1.bf16.msra.mxu0 %v8283
  %8594 = vmatprep.subr.bf16.mxu0 %v8404
  %8595 = vmatpush2.bf16.msra.mxu0 %v8403
  %8596 = vmatprep.subr.bf16.mxu0 %v8396
  %8597 = vmatpush2.bf16.msra.mxu0 %v8395
  %8598 = vmatprep.subr.bf16.mxu0 %v8388
  %8599 = vmatpush2.bf16.msra.mxu0 %v8387
  %8600 = vmatprep.subr.bf16.mxu0 %v8380
  %8601 = vmatpush2.bf16.msra.mxu0 %v8379
  %8602 = vmatprep.subr.bf16.mxu0 %v8372
  %8603 = vmatpush2.bf16.msra.mxu0 %v8371
  %8604 = vmatprep.subr.bf16.mxu0 %v8364
  %8605 = vmatpush2.bf16.msra.mxu0 %v8363
  %8606 = vmatprep.subr.bf16.mxu0 %v8356
  %8607 = vmatpush2.bf16.msra.mxu0 %v8355
  %8608 = vmatprep.subr.bf16.mxu0 %v8348
  %8609 = vmatpush2.bf16.msra.mxu0 %v8347
  %8610 = vmatprep.mubr.bf16.mxu0 %v7726
  %8611 = vmatmul.mubr.bf16.gmra.mxu0 %v7725
  %v8612 = vpop.f32.mrf.mxu0
  %v8613 = vadd.f32 %v7868, %v8612
  %v8614 = vpop.f32.mrf.mxu0
  %v8615 = vadd.f32 %v7872, %v8614
  %v8616 = vpop.f32.mrf.mxu0
  %v8617 = vpop.f32.mrf.mxu0
  %8618 = vdwg.mxu0
  %8619 = vmatprep.subr.bf16.mxu0 %v8342
  %8620 = vmatpush1.bf16.msra.mxu0 %v8341
  %8621 = vmatprep.subr.bf16.mxu0 %v8334
  %8622 = vmatpush1.bf16.msra.mxu0 %v8333
  %8623 = vmatprep.subr.bf16.mxu0 %v8326
  %8624 = vmatpush1.bf16.msra.mxu0 %v8325
  %8625 = vmatprep.subr.bf16.mxu0 %v8318
  %8626 = vmatpush1.bf16.msra.mxu0 %v8317
  %8627 = vmatprep.subr.bf16.mxu0 %v8310
  %8628 = vmatpush1.bf16.msra.mxu0 %v8309
  %8629 = vmatprep.subr.bf16.mxu0 %v8302
  %8630 = vmatpush1.bf16.msra.mxu0 %v8301
  %8631 = vmatprep.subr.bf16.mxu0 %v8294
  %8632 = vmatpush1.bf16.msra.mxu0 %v8293
  %8633 = vmatprep.subr.bf16.mxu0 %v8286
  %8634 = vmatpush1.bf16.msra.mxu0 %v8285
  %8635 = vmatprep.subr.bf16.mxu0 %v8406
  %8636 = vmatpush2.bf16.msra.mxu0 %v8405
  %8637 = vmatprep.subr.bf16.mxu0 %v8398
  %8638 = vmatpush2.bf16.msra.mxu0 %v8397
  %8639 = vmatprep.subr.bf16.mxu0 %v8390
  %8640 = vmatpush2.bf16.msra.mxu0 %v8389
  %8641 = vmatprep.subr.bf16.mxu0 %v8382
  %8642 = vmatpush2.bf16.msra.mxu0 %v8381
  %8643 = vmatprep.subr.bf16.mxu0 %v8374
  %8644 = vmatpush2.bf16.msra.mxu0 %v8373
  %8645 = vmatprep.subr.bf16.mxu0 %v8366
  %8646 = vmatpush2.bf16.msra.mxu0 %v8365
  %8647 = vmatprep.subr.bf16.mxu0 %v8358
  %8648 = vmatpush2.bf16.msra.mxu0 %v8357
  %8649 = vmatprep.subr.bf16.mxu0 %v8350
  %8650 = vmatpush2.bf16.msra.mxu0 %v8349
  %8651 = vmatprep.mubr.bf16.mxu0 %v7726
  %8652 = vmatmul.mubr.bf16.gmra.mxu0 %v7725
  %v8653 = vpop.f32.mrf.mxu0
  %v8654 = vadd.f32 %v7876, %v8653
  %v8655 = vpop.f32.mrf.mxu0
  %v8656 = vadd.f32 %v7880, %v8655
  %v8657 = vpop.f32.mrf.mxu0
  %v8658 = vpop.f32.mrf.mxu0
  %8659 = vdwg.mxu0
  %8660 = vmatprep.subr.bf16.mxu0 %v8344
  %8661 = vmatpush1.bf16.msra.mxu0 %v8343
  %8662 = vmatprep.subr.bf16.mxu0 %v8336
  %8663 = vmatpush1.bf16.msra.mxu0 %v8335
  %8664 = vmatprep.subr.bf16.mxu0 %v8328
  %8665 = vmatpush1.bf16.msra.mxu0 %v8327
  %8666 = vmatprep.subr.bf16.mxu0 %v8320
  %8667 = vmatpush1.bf16.msra.mxu0 %v8319
  %8668 = vmatprep.subr.bf16.mxu0 %v8312
  %8669 = vmatpush1.bf16.msra.mxu0 %v8311
  %8670 = vmatprep.subr.bf16.mxu0 %v8304
  %8671 = vmatpush1.bf16.msra.mxu0 %v8303
  %8672 = vmatprep.subr.bf16.mxu0 %v8296
  %8673 = vmatpush1.bf16.msra.mxu0 %v8295
  %8674 = vmatprep.subr.bf16.mxu0 %v8288
  %8675 = vmatpush1.bf16.msra.mxu0 %v8287
  %8676 = vmatprep.subr.bf16.mxu0 %v8408
  %8677 = vmatpush2.bf16.msra.mxu0 %v8407
  %8678 = vmatprep.subr.bf16.mxu0 %v8400
  %8679 = vmatpush2.bf16.msra.mxu0 %v8399
  %8680 = vmatprep.subr.bf16.mxu0 %v8392
  %8681 = vmatpush2.bf16.msra.mxu0 %v8391
  %8682 = vmatprep.subr.bf16.mxu0 %v8384
  %8683 = vmatpush2.bf16.msra.mxu0 %v8383
  %8684 = vmatprep.subr.bf16.mxu0 %v8376
  %8685 = vmatpush2.bf16.msra.mxu0 %v8375
  %8686 = vmatprep.subr.bf16.mxu0 %v8368
  %8687 = vmatpush2.bf16.msra.mxu0 %v8367
  %8688 = vmatprep.subr.bf16.mxu0 %v8360
  %8689 = vmatpush2.bf16.msra.mxu0 %v8359
  %8690 = vmatprep.subr.bf16.mxu0 %v8352
  %8691 = vmatpush2.bf16.msra.mxu0 %v8351
  %8692 = vmatprep.mubr.bf16.mxu0 %v7726
  %8693 = vmatmul.mubr.bf16.gmra.mxu0 %v7725
  %v8694 = vpop.f32.mrf.mxu0
  %v8695 = vadd.f32 %v7884, %v8694
  %v8696 = vpop.f32.mrf.mxu0
  %v8697 = vadd.f32 %v7888, %v8696
  %v8698 = vpop.f32.mrf.mxu0
  %v8699 = vpop.f32.mrf.mxu0
  %8700 = vdwg.mxu0
  %v8701 = vld [vmem:[%s22] sm:$0xff]
  %v8702 = vld [vmem:[%s22 + $0x8] sm:$0xff]
  %v8703 = vld [vmem:[%s22 + $0x10] sm:$0xff]
  %v8704 = vld [vmem:[%s22 + $0x18] sm:$0xff]
  %v8705 = vld [vmem:[%s22 + $0x20] sm:$0xff]
  %v8706 = vld [vmem:[%s22 + $0x28] sm:$0xff]
  %v8707 = vld [vmem:[%s22 + $0x30] sm:$0xff]
  %v8708 = vld [vmem:[%s22 + $0x38] sm:$0xff]
  %v8709 = vld [vmem:[%s22 + $0x40] sm:$0xff]
  %v8710 = vld [vmem:[%s22 + $0x48] sm:$0xff]
  %v8711 = vld [vmem:[%s22 + $0x50] sm:$0xff]
  %v8712 = vld [vmem:[%s22 + $0x58] sm:$0xff]
  %v8713 = vld [vmem:[%s22 + $0x60] sm:$0xff]
  %v8714 = vld [vmem:[%s22 + $0x68] sm:$0xff]
  %v8715 = vld [vmem:[%s22 + $0x70] sm:$0xff]
  %v8716 = vld [vmem:[%s22 + $0x78] sm:$0xff]
  %v8717 = vld [vmem:[%s22 + $0x80] sm:$0xff]
  %v8718 = vld [vmem:[%s22 + $0x88] sm:$0xff]
  %v8719 = vld [vmem:[%s22 + $0x90] sm:$0xff]
  %v8720 = vld [vmem:[%s22 + $0x98] sm:$0xff]
  %v8721 = vld [vmem:[%s22 + $0xa0] sm:$0xff]
  %v8722 = vld [vmem:[%s22 + $0xa8] sm:$0xff]
  %v8723 = vld [vmem:[%s22 + $0xb0] sm:$0xff]
  %v8724 = vld [vmem:[%s22 + $0xb8] sm:$0xff]
  %v8725 = vld [vmem:[%s22 + $0xc0] sm:$0xff]
  %v8726 = vld [vmem:[%s22 + $0xc8] sm:$0xff]
  %v8727 = vld [vmem:[%s22 + $0xd0] sm:$0xff]
  %v8728 = vld [vmem:[%s22 + $0xd8] sm:$0xff]
  %v8729 = vld [vmem:[%s22 + $0xe0] sm:$0xff]
  %v8730 = vld [vmem:[%s22 + $0xe8] sm:$0xff]
  %v8731 = vld [vmem:[%s22 + $0xf0] sm:$0xff]
  %v8732 = vld [vmem:[%s22 + $0xf8] sm:$0xff]
  %v8733 = vld [vmem:[%s22 + $0x100] sm:$0xff]
  %v8734 = vld [vmem:[%s22 + $0x108] sm:$0xff]
  %v8735 = vld [vmem:[%s22 + $0x110] sm:$0xff]
  %v8736 = vld [vmem:[%s22 + $0x118] sm:$0xff]
  %v8737 = vld [vmem:[%s22 + $0x120] sm:$0xff]
  %v8738 = vld [vmem:[%s22 + $0x128] sm:$0xff]
  %v8739 = vld [vmem:[%s22 + $0x130] sm:$0xff]
  %v8740 = vld [vmem:[%s22 + $0x138] sm:$0xff]
  %v8741 = vld [vmem:[%s22 + $0x140] sm:$0xff]
  %v8742 = vld [vmem:[%s22 + $0x148] sm:$0xff]
  %v8743 = vld [vmem:[%s22 + $0x150] sm:$0xff]
  %v8744 = vld [vmem:[%s22 + $0x158] sm:$0xff]
  %v8745 = vld [vmem:[%s22 + $0x160] sm:$0xff]
  %v8746 = vld [vmem:[%s22 + $0x168] sm:$0xff]
  %v8747 = vld [vmem:[%s22 + $0x170] sm:$0xff]
  %v8748 = vld [vmem:[%s22 + $0x178] sm:$0xff]
  %v8749 = vld [vmem:[%s22 + $0x180] sm:$0xff]
  %v8750 = vld [vmem:[%s22 + $0x188] sm:$0xff]
  %v8751 = vld [vmem:[%s22 + $0x190] sm:$0xff]
  %v8752 = vld [vmem:[%s22 + $0x198] sm:$0xff]
  %v8753 = vld [vmem:[%s22 + $0x1a0] sm:$0xff]
  %v8754 = vld [vmem:[%s22 + $0x1a8] sm:$0xff]
  %v8755 = vld [vmem:[%s22 + $0x1b0] sm:$0xff]
  %v8756 = vld [vmem:[%s22 + $0x1b8] sm:$0xff]
  %v8757 = vld [vmem:[%s22 + $0x1c0] sm:$0xff]
  %v8758 = vld [vmem:[%s22 + $0x1c8] sm:$0xff]
  %v8759 = vld [vmem:[%s22 + $0x1d0] sm:$0xff]
  %v8760 = vld [vmem:[%s22 + $0x1d8] sm:$0xff]
  %v8761 = vld [vmem:[%s22 + $0x1e0] sm:$0xff]
  %v8762 = vld [vmem:[%s22 + $0x1e8] sm:$0xff]
  %v8763 = vld [vmem:[%s22 + $0x1f0] sm:$0xff]
  %v8764 = vld [vmem:[%s22 + $0x1f8] sm:$0xff]
  %v8797 = vunpack.c.l.b16 %v8701
  %v8798 = vunpack.c.h.b16 %v8701
  %v8799 = vunpack.c.l.b16 %v8702
  %v8800 = vunpack.c.h.b16 %v8702
  %v8801 = vunpack.c.l.b16 %v8705
  %v8802 = vunpack.c.h.b16 %v8705
  %v8803 = vunpack.c.l.b16 %v8706
  %v8804 = vunpack.c.h.b16 %v8706
  %v8805 = vunpack.c.l.b16 %v8709
  %v8806 = vunpack.c.h.b16 %v8709
  %v8807 = vunpack.c.l.b16 %v8710
  %v8808 = vunpack.c.h.b16 %v8710
  %v8809 = vunpack.c.l.b16 %v8713
  %v8810 = vunpack.c.h.b16 %v8713
  %v8811 = vunpack.c.l.b16 %v8714
  %v8812 = vunpack.c.h.b16 %v8714
  %v8813 = vunpack.c.l.b16 %v8717
  %v8814 = vunpack.c.h.b16 %v8717
  %v8815 = vunpack.c.l.b16 %v8718
  %v8816 = vunpack.c.h.b16 %v8718
  %v8817 = vunpack.c.l.b16 %v8721
  %v8818 = vunpack.c.h.b16 %v8721
  %v8819 = vunpack.c.l.b16 %v8722
  %v8820 = vunpack.c.h.b16 %v8722
  %v8821 = vunpack.c.l.b16 %v8725
  %v8822 = vunpack.c.h.b16 %v8725
  %v8823 = vunpack.c.l.b16 %v8726
  %v8824 = vunpack.c.h.b16 %v8726
  %v8825 = vunpack.c.l.b16 %v8729
  %v8826 = vunpack.c.h.b16 %v8729
  %v8827 = vunpack.c.l.b16 %v8730
  %v8828 = vunpack.c.h.b16 %v8730
  %v8829 = vunpack.c.l.b16 %v8733
  %v8830 = vunpack.c.h.b16 %v8733
  %v8831 = vunpack.c.l.b16 %v8734
  %v8832 = vunpack.c.h.b16 %v8734
  %v8833 = vunpack.c.l.b16 %v8737
  %v8834 = vunpack.c.h.b16 %v8737
  %v8835 = vunpack.c.l.b16 %v8738
  %v8836 = vunpack.c.h.b16 %v8738
  %v8837 = vunpack.c.l.b16 %v8741
  %v8838 = vunpack.c.h.b16 %v8741
  %v8839 = vunpack.c.l.b16 %v8742
  %v8840 = vunpack.c.h.b16 %v8742
  %v8841 = vunpack.c.l.b16 %v8745
  %v8842 = vunpack.c.h.b16 %v8745
  %v8843 = vunpack.c.l.b16 %v8746
  %v8844 = vunpack.c.h.b16 %v8746
  %v8845 = vunpack.c.l.b16 %v8749
  %v8846 = vunpack.c.h.b16 %v8749
  %v8847 = vunpack.c.l.b16 %v8750
  %v8848 = vunpack.c.h.b16 %v8750
  %v8849 = vunpack.c.l.b16 %v8753
  %v8850 = vunpack.c.h.b16 %v8753
  %v8851 = vunpack.c.l.b16 %v8754
  %v8852 = vunpack.c.h.b16 %v8754
  %v8853 = vunpack.c.l.b16 %v8757
  %v8854 = vunpack.c.h.b16 %v8757
  %v8855 = vunpack.c.l.b16 %v8758
  %v8856 = vunpack.c.h.b16 %v8758
  %v8857 = vunpack.c.l.b16 %v8761
  %v8858 = vunpack.c.h.b16 %v8761
  %v8859 = vunpack.c.l.b16 %v8762
  %v8860 = vunpack.c.h.b16 %v8762
  %v8861 = vpack.c.b16 %v8801, %v8797
  %v8862 = vpack.c.b16 %v8802, %v8798
  %v8863 = vpack.c.b16 %v8803, %v8799
  %v8864 = vpack.c.b16 %v8804, %v8800
  %v8865 = vpack.c.b16 %v8809, %v8805
  %v8866 = vpack.c.b16 %v8810, %v8806
  %v8867 = vpack.c.b16 %v8811, %v8807
  %v8868 = vpack.c.b16 %v8812, %v8808
  %v8869 = vpack.c.b16 %v8817, %v8813
  %v8870 = vpack.c.b16 %v8818, %v8814
  %v8871 = vpack.c.b16 %v8819, %v8815
  %v8872 = vpack.c.b16 %v8820, %v8816
  %v8873 = vpack.c.b16 %v8825, %v8821
  %v8874 = vpack.c.b16 %v8826, %v8822
  %v8875 = vpack.c.b16 %v8827, %v8823
  %v8876 = vpack.c.b16 %v8828, %v8824
  %v8877 = vpack.c.b16 %v8833, %v8829
  %v8878 = vpack.c.b16 %v8834, %v8830
  %v8879 = vpack.c.b16 %v8835, %v8831
  %v8880 = vpack.c.b16 %v8836, %v8832
  %v8881 = vpack.c.b16 %v8841, %v8837
  %v8882 = vpack.c.b16 %v8842, %v8838
  %v8883 = vpack.c.b16 %v8843, %v8839
  %v8884 = vpack.c.b16 %v8844, %v8840
  %v8885 = vpack.c.b16 %v8849, %v8845
  %v8886 = vpack.c.b16 %v8850, %v8846
  %v8887 = vpack.c.b16 %v8851, %v8847
  %v8888 = vpack.c.b16 %v8852, %v8848
  %v8889 = vpack.c.b16 %v8857, %v8853
  %v8890 = vpack.c.b16 %v8858, %v8854
  %v8891 = vpack.c.b16 %v8859, %v8855
  %v8892 = vpack.c.b16 %v8860, %v8856
  %8925 = vmatprep.subr.bf16.mxu0 %v8890
  %8926 = vmatpush1.bf16.msra.mxu0 %v8889
  %8927 = vmatprep.subr.bf16.mxu0 %v8886
  %8928 = vmatpush1.bf16.msra.mxu0 %v8885
  %8929 = vmatprep.subr.bf16.mxu0 %v8882
  %8930 = vmatpush1.bf16.msra.mxu0 %v8881
  %8931 = vmatprep.subr.bf16.mxu0 %v8878
  %8932 = vmatpush1.bf16.msra.mxu0 %v8877
  %8933 = vmatprep.subr.bf16.mxu0 %v8874
  %8934 = vmatpush1.bf16.msra.mxu0 %v8873
  %8935 = vmatprep.subr.bf16.mxu0 %v8870
  %8936 = vmatpush1.bf16.msra.mxu0 %v8869
  %8937 = vmatprep.subr.bf16.mxu0 %v8866
  %8938 = vmatpush1.bf16.msra.mxu0 %v8865
  %8939 = vmatprep.subr.bf16.mxu0 %v8862
  %8940 = vmatpush1.bf16.msra.mxu0 %v8861
  %8941 = vmatprep.subr.bf16.mxu0 0
  %8942 = vmatpush2.bf16.msra.mxu0 0
  %8943 = vmatprep.subr.bf16.mxu0 0
  %8944 = vmatpush2.bf16.msra.mxu0 0
  %8945 = vmatprep.subr.bf16.mxu0 0
  %8946 = vmatpush2.bf16.msra.mxu0 0
  %8947 = vmatprep.subr.bf16.mxu0 0
  %8948 = vmatpush2.bf16.msra.mxu0 0
  %8949 = vmatprep.subr.bf16.mxu0 0
  %8950 = vmatpush2.bf16.msra.mxu0 0
  %8951 = vmatprep.subr.bf16.mxu0 0
  %8952 = vmatpush2.bf16.msra.mxu0 0
  %8953 = vmatprep.subr.bf16.mxu0 0
  %8954 = vmatpush2.bf16.msra.mxu0 0
  %8955 = vmatprep.subr.bf16.mxu0 0
  %8956 = vmatpush2.bf16.msra.mxu0 0
  %8957 = vmatprep.mubr.bf16.mxu0 0
  %8958 = vmatmul.mubr.bf16.gmra.mxu0 0
  %v8959 = vpop.f32.mrf.mxu0
  %v8960 = vadd.f32 0.0, %v8959
  %v8961 = vpop.f32.mrf.mxu0
  %v8962 = vadd.f32 0.0, %v8961
  %v8963 = vpop.f32.mrf.mxu0
  %v8964 = vpop.f32.mrf.mxu0
  %8965 = vdwg.mxu0
  %8966 = vmatprep.subr.bf16.mxu0 %v8892
  %8967 = vmatpush1.bf16.msra.mxu0 %v8891
  %8968 = vmatprep.subr.bf16.mxu0 %v8888
  %8969 = vmatpush1.bf16.msra.mxu0 %v8887
  %8970 = vmatprep.subr.bf16.mxu0 %v8884
  %8971 = vmatpush1.bf16.msra.mxu0 %v8883
  %8972 = vmatprep.subr.bf16.mxu0 %v8880
  %8973 = vmatpush1.bf16.msra.mxu0 %v8879
  %8974 = vmatprep.subr.bf16.mxu0 %v8876
  %8975 = vmatpush1.bf16.msra.mxu0 %v8875
  %8976 = vmatprep.subr.bf16.mxu0 %v8872
  %8977 = vmatpush1.bf16.msra.mxu0 %v8871
  %8978 = vmatprep.subr.bf16.mxu0 %v8868
  %8979 = vmatpush1.bf16.msra.mxu0 %v8867
  %8980 = vmatprep.subr.bf16.mxu0 %v8864
  %8981 = vmatpush1.bf16.msra.mxu0 %v8863
  %8982 = vmatprep.subr.bf16.mxu0 0
  %8983 = vmatpush2.bf16.msra.mxu0 0
  %8984 = vmatprep.subr.bf16.mxu0 0
  %8985 = vmatpush2.bf16.msra.mxu0 0
  %8986 = vmatprep.subr.bf16.mxu0 0
  %8987 = vmatpush2.bf16.msra.mxu0 0
  %8988 = vmatprep.subr.bf16.mxu0 0
  %8989 = vmatpush2.bf16.msra.mxu0 0
  %8990 = vmatprep.subr.bf16.mxu0 0
  %8991 = vmatpush2.bf16.msra.mxu0 0
  %8992 = vmatprep.subr.bf16.mxu0 0
  %8993 = vmatpush2.bf16.msra.mxu0 0
  %8994 = vmatprep.subr.bf16.mxu0 0
  %8995 = vmatpush2.bf16.msra.mxu0 0
  %8996 = vmatprep.subr.bf16.mxu0 0
  %8997 = vmatpush2.bf16.msra.mxu0 0
  %8998 = vmatprep.mubr.bf16.mxu0 0
  %8999 = vmatmul.mubr.bf16.gmra.mxu0 0
  %v9000 = vpop.f32.mrf.mxu0
  %v9001 = vadd.f32 0.0, %v9000
  %v9002 = vpop.f32.mrf.mxu0
  %v9003 = vadd.f32 0.0, %v9002
  %v9004 = vpop.f32.mrf.mxu0
  %v9005 = vpop.f32.mrf.mxu0
  %9006 = vdwg.mxu0
  %v9007 = vadd.f32 %v8572, %v8960
  %v9008 = vadd.f32 %v8574, %v8962
  %v9009 = vadd.f32 %v8613, %v9001
  %v9010 = vadd.f32 %v8615, %v9003
  %v9043 = vunpack.c.l.b16 %v8703
  %v9044 = vunpack.c.h.b16 %v8703
  %v9045 = vunpack.c.l.b16 %v8704
  %v9046 = vunpack.c.h.b16 %v8704
  %v9047 = vunpack.c.l.b16 %v8707
  %v9048 = vunpack.c.h.b16 %v8707
  %v9049 = vunpack.c.l.b16 %v8708
  %v9050 = vunpack.c.h.b16 %v8708
  %v9051 = vunpack.c.l.b16 %v8711
  %v9052 = vunpack.c.h.b16 %v8711
  %v9053 = vunpack.c.l.b16 %v8712
  %v9054 = vunpack.c.h.b16 %v8712
  %v9055 = vunpack.c.l.b16 %v8715
  %v9056 = vunpack.c.h.b16 %v8715
  %v9057 = vunpack.c.l.b16 %v8716
  %v9058 = vunpack.c.h.b16 %v8716
  %v9059 = vunpack.c.l.b16 %v8719
  %v9060 = vunpack.c.h.b16 %v8719
  %v9061 = vunpack.c.l.b16 %v8720
  %v9062 = vunpack.c.h.b16 %v8720
  %v9063 = vunpack.c.l.b16 %v8723
  %v9064 = vunpack.c.h.b16 %v8723
  %v9065 = vunpack.c.l.b16 %v8724
  %v9066 = vunpack.c.h.b16 %v8724
  %v9067 = vunpack.c.l.b16 %v8727
  %v9068 = vunpack.c.h.b16 %v8727
  %v9069 = vunpack.c.l.b16 %v8728
  %v9070 = vunpack.c.h.b16 %v8728
  %v9071 = vunpack.c.l.b16 %v8731
  %v9072 = vunpack.c.h.b16 %v8731
  %v9073 = vunpack.c.l.b16 %v8732
  %v9074 = vunpack.c.h.b16 %v8732
  %v9075 = vunpack.c.l.b16 %v8735
  %v9076 = vunpack.c.h.b16 %v8735
  %v9077 = vunpack.c.l.b16 %v8736
  %v9078 = vunpack.c.h.b16 %v8736
  %v9079 = vunpack.c.l.b16 %v8739
  %v9080 = vunpack.c.h.b16 %v8739
  %v9081 = vunpack.c.l.b16 %v8740
  %v9082 = vunpack.c.h.b16 %v8740
  %v9083 = vunpack.c.l.b16 %v8743
  %v9084 = vunpack.c.h.b16 %v8743
  %v9085 = vunpack.c.l.b16 %v8744
  %v9086 = vunpack.c.h.b16 %v8744
  %v9087 = vunpack.c.l.b16 %v8747
  %v9088 = vunpack.c.h.b16 %v8747
  %v9089 = vunpack.c.l.b16 %v8748
  %v9090 = vunpack.c.h.b16 %v8748
  %v9091 = vunpack.c.l.b16 %v8751
  %v9092 = vunpack.c.h.b16 %v8751
  %v9093 = vunpack.c.l.b16 %v8752
  %v9094 = vunpack.c.h.b16 %v8752
  %v9095 = vunpack.c.l.b16 %v8755
  %v9096 = vunpack.c.h.b16 %v8755
  %v9097 = vunpack.c.l.b16 %v8756
  %v9098 = vunpack.c.h.b16 %v8756
  %v9099 = vunpack.c.l.b16 %v8759
  %v9100 = vunpack.c.h.b16 %v8759
  %v9101 = vunpack.c.l.b16 %v8760
  %v9102 = vunpack.c.h.b16 %v8760
  %v9103 = vunpack.c.l.b16 %v8763
  %v9104 = vunpack.c.h.b16 %v8763
  %v9105 = vunpack.c.l.b16 %v8764
  %v9106 = vunpack.c.h.b16 %v8764
  %v9107 = vpack.c.b16 %v9047, %v9043
  %v9108 = vpack.c.b16 %v9048, %v9044
  %v9109 = vpack.c.b16 %v9049, %v9045
  %v9110 = vpack.c.b16 %v9050, %v9046
  %v9111 = vpack.c.b16 %v9055, %v9051
  %v9112 = vpack.c.b16 %v9056, %v9052
  %v9113 = vpack.c.b16 %v9057, %v9053
  %v9114 = vpack.c.b16 %v9058, %v9054
  %v9115 = vpack.c.b16 %v9063, %v9059
  %v9116 = vpack.c.b16 %v9064, %v9060
  %v9117 = vpack.c.b16 %v9065, %v9061
  %v9118 = vpack.c.b16 %v9066, %v9062
  %v9119 = vpack.c.b16 %v9071, %v9067
  %v9120 = vpack.c.b16 %v9072, %v9068
  %v9121 = vpack.c.b16 %v9073, %v9069
  %v9122 = vpack.c.b16 %v9074, %v9070
  %v9123 = vpack.c.b16 %v9079, %v9075
  %v9124 = vpack.c.b16 %v9080, %v9076
  %v9125 = vpack.c.b16 %v9081, %v9077
  %v9126 = vpack.c.b16 %v9082, %v9078
  %v9127 = vpack.c.b16 %v9087, %v9083
  %v9128 = vpack.c.b16 %v9088, %v9084
  %v9129 = vpack.c.b16 %v9089, %v9085
  %v9130 = vpack.c.b16 %v9090, %v9086
  %v9131 = vpack.c.b16 %v9095, %v9091
  %v9132 = vpack.c.b16 %v9096, %v9092
  %v9133 = vpack.c.b16 %v9097, %v9093
  %v9134 = vpack.c.b16 %v9098, %v9094
  %v9135 = vpack.c.b16 %v9103, %v9099
  %v9136 = vpack.c.b16 %v9104, %v9100
  %v9137 = vpack.c.b16 %v9105, %v9101
  %v9138 = vpack.c.b16 %v9106, %v9102
  %9171 = vmatprep.subr.bf16.mxu0 %v9136
  %9172 = vmatpush1.bf16.msra.mxu0 %v9135
  %9173 = vmatprep.subr.bf16.mxu0 %v9132
  %9174 = vmatpush1.bf16.msra.mxu0 %v9131
  %9175 = vmatprep.subr.bf16.mxu0 %v9128
  %9176 = vmatpush1.bf16.msra.mxu0 %v9127
  %9177 = vmatprep.subr.bf16.mxu0 %v9124
  %9178 = vmatpush1.bf16.msra.mxu0 %v9123
  %9179 = vmatprep.subr.bf16.mxu0 %v9120
  %9180 = vmatpush1.bf16.msra.mxu0 %v9119
  %9181 = vmatprep.subr.bf16.mxu0 %v9116
  %9182 = vmatpush1.bf16.msra.mxu0 %v9115
  %9183 = vmatprep.subr.bf16.mxu0 %v9112
  %9184 = vmatpush1.bf16.msra.mxu0 %v9111
  %9185 = vmatprep.subr.bf16.mxu0 %v9108
  %9186 = vmatpush1.bf16.msra.mxu0 %v9107
  %9187 = vmatprep.subr.bf16.mxu0 0
  %9188 = vmatpush2.bf16.msra.mxu0 0
  %9189 = vmatprep.subr.bf16.mxu0 0
  %9190 = vmatpush2.bf16.msra.mxu0 0
  %9191 = vmatprep.subr.bf16.mxu0 0
  %9192 = vmatpush2.bf16.msra.mxu0 0
  %9193 = vmatprep.subr.bf16.mxu0 0
  %9194 = vmatpush2.bf16.msra.mxu0 0
  %9195 = vmatprep.subr.bf16.mxu0 0
  %9196 = vmatpush2.bf16.msra.mxu0 0
  %9197 = vmatprep.subr.bf16.mxu0 0
  %9198 = vmatpush2.bf16.msra.mxu0 0
  %9199 = vmatprep.subr.bf16.mxu0 0
  %9200 = vmatpush2.bf16.msra.mxu0 0
  %9201 = vmatprep.subr.bf16.mxu0 0
  %9202 = vmatpush2.bf16.msra.mxu0 0
  %9203 = vmatprep.mubr.bf16.mxu0 0
  %9204 = vmatmul.mubr.bf16.gmra.mxu0 0
  %v9205 = vpop.f32.mrf.mxu0
  %v9206 = vadd.f32 0.0, %v9205
  %v9207 = vpop.f32.mrf.mxu0
  %v9208 = vadd.f32 0.0, %v9207
  %v9209 = vpop.f32.mrf.mxu0
  %v9210 = vpop.f32.mrf.mxu0
  %9211 = vdwg.mxu0
  %9212 = vmatprep.subr.bf16.mxu0 %v9138
  %9213 = vmatpush1.bf16.msra.mxu0 %v9137
  %9214 = vmatprep.subr.bf16.mxu0 %v9134
  %9215 = vmatpush1.bf16.msra.mxu0 %v9133
  %9216 = vmatprep.subr.bf16.mxu0 %v9130
  %9217 = vmatpush1.bf16.msra.mxu0 %v9129
  %9218 = vmatprep.subr.bf16.mxu0 %v9126
  %9219 = vmatpush1.bf16.msra.mxu0 %v9125
  %9220 = vmatprep.subr.bf16.mxu0 %v9122
  %9221 = vmatpush1.bf16.msra.mxu0 %v9121
  %9222 = vmatprep.subr.bf16.mxu0 %v9118
  %9223 = vmatpush1.bf16.msra.mxu0 %v9117
  %9224 = vmatprep.subr.bf16.mxu0 %v9114
  %9225 = vmatpush1.bf16.msra.mxu0 %v9113
  %9226 = vmatprep.subr.bf16.mxu0 %v9110
  %9227 = vmatpush1.bf16.msra.mxu0 %v9109
  %9228 = vmatprep.subr.bf16.mxu0 0
  %9229 = vmatpush2.bf16.msra.mxu0 0
  %9230 = vmatprep.subr.bf16.mxu0 0
  %9231 = vmatpush2.bf16.msra.mxu0 0
  %9232 = vmatprep.subr.bf16.mxu0 0
  %9233 = vmatpush2.bf16.msra.mxu0 0
  %9234 = vmatprep.subr.bf16.mxu0 0
  %9235 = vmatpush2.bf16.msra.mxu0 0
  %9236 = vmatprep.subr.bf16.mxu0 0
  %9237 = vmatpush2.bf16.msra.mxu0 0
  %9238 = vmatprep.subr.bf16.mxu0 0
  %9239 = vmatpush2.bf16.msra.mxu0 0
  %9240 = vmatprep.subr.bf16.mxu0 0
  %9241 = vmatpush2.bf16.msra.mxu0 0
  %9242 = vmatprep.subr.bf16.mxu0 0
  %9243 = vmatpush2.bf16.msra.mxu0 0
  %9244 = vmatprep.mubr.bf16.mxu0 0
  %9245 = vmatmul.mubr.bf16.gmra.mxu0 0
  %v9246 = vpop.f32.mrf.mxu0
  %v9247 = vadd.f32 0.0, %v9246
  %v9248 = vpop.f32.mrf.mxu0
  %v9249 = vadd.f32 0.0, %v9248
  %v9250 = vpop.f32.mrf.mxu0
  %v9251 = vpop.f32.mrf.mxu0
  %9252 = vdwg.mxu0
  %v9257 = vrot.slane %v9206, 3
  %v9258 = vrot.slane %v9208, 3
  %v9259 = vrot.slane %v9247, 3
  %v9260 = vrot.slane %v9249, 3
  %v9265 = vadd.f32 %v8654, %v9257
  %v9266 = vadd.f32 %v8656, %v9258
  %v9267 = vadd.f32 %v8695, %v9259
  %v9268 = vadd.f32 %v8697, %v9260
  %v9269 = vxor.u32 %v9007, 2147483648
  %v9270 = vmul.f32 %v9269, 1.442695
  %v9271 = vpow.pop %v9270
  %v9272 = vadd.f32 %v9271, 1.0
  %v9273 = vrcp.pop %v9272
  %v9274 = vmul.f32 1.0, %v9273
  %v9275 = vxor.u32 %v9008, 2147483648
  %v9276 = vmul.f32 %v9275, 1.442695
  %v9277 = vpow.pop %v9276
  %v9278 = vadd.f32 %v9277, 1.0
  %v9279 = vrcp.pop %v9278
  %v9280 = vmul.f32 1.0, %v9279
  %v9281 = vtanh.pop %v9009
  %v9282 = vxor.u32 %v9010, 2147483648
  %v9283 = vmul.f32 %v9282, 1.442695
  %v9284 = vpow.pop %v9283
  %v9285 = vadd.f32 %v9284, 1.0
  %v9286 = vrcp.pop %v9285
  %v9287 = vmul.f32 1.0, %v9286
  %v9288 = vmul.f32 %v9280, 0.0
  %v9289 = vmul.f32 %v9274, %v9281
  %v9290 = vadd.f32 %v9288, %v9289
  %v9291 = vtanh.pop %v9290
  %v9292 = vmul.f32 %v9287, %v9291
  %v9293 = vxor.u32 %v9265, 2147483648
  %v9294 = vmul.f32 %v9293, 1.442695
  %v9295 = vpow.pop %v9294
  %v9296 = vadd.f32 %v9295, 1.0
  %v9297 = vrcp.pop %v9296
  %v9298 = vmul.f32 1.0, %v9297
  %v9299 = vxor.u32 %v9266, 2147483648
  %v9300 = vmul.f32 %v9299, 1.442695
  %v9301 = vpow.pop %v9300
  %v9302 = vadd.f32 %v9301, 1.0
  %v9303 = vrcp.pop %v9302
  %v9304 = vmul.f32 1.0, %v9303
  %v9305 = vtanh.pop %v9267
  %v9306 = vxor.u32 %v9268, 2147483648
  %v9307 = vmul.f32 %v9306, 1.442695
  %v9308 = vpow.pop %v9307
  %v9309 = vadd.f32 %v9308, 1.0
  %v9310 = vrcp.pop %v9309
  %v9311 = vmul.f32 1.0, %v9310
  %v9312 = vmul.f32 %v9304, 0.0
  %v9313 = vmul.f32 %v9298, %v9305
  %v9314 = vadd.f32 %v9312, %v9313
  %v9315 = vtanh.pop %v9314
  %v9316 = vmul.f32 %v9311, %v9315
  %v9317 = vpack.c.bf16 %v9292, %v9292
  %9318 = vmatprep.subr.bf16.mxu0 %v8890
  %9319 = vmatpush1.bf16.msra.mxu0 %v8889
  %9320 = vmatprep.subr.bf16.mxu0 %v8886
  %9321 = vmatpush1.bf16.msra.mxu0 %v8885
  %9322 = vmatprep.subr.bf16.mxu0 %v8882
  %9323 = vmatpush1.bf16.msra.mxu0 %v8881
  %9324 = vmatprep.subr.bf16.mxu0 %v8878
  %9325 = vmatpush1.bf16.msra.mxu0 %v8877
  %9326 = vmatprep.subr.bf16.mxu0 %v8874
  %9327 = vmatpush1.bf16.msra.mxu0 %v8873
  %9328 = vmatprep.subr.bf16.mxu0 %v8870
  %9329 = vmatpush1.bf16.msra.mxu0 %v8869
  %9330 = vmatprep.subr.bf16.mxu0 %v8866
  %9331 = vmatpush1.bf16.msra.mxu0 %v8865
  %9332 = vmatprep.subr.bf16.mxu0 %v8862
  %9333 = vmatpush1.bf16.msra.mxu0 %v8861
  %9334 = vmatprep.subr.bf16.mxu0 0
  %9335 = vmatpush2.bf16.msra.mxu0 0
  %9336 = vmatprep.subr.bf16.mxu0 0
  %9337 = vmatpush2.bf16.msra.mxu0 0
  %9338 = vmatprep.subr.bf16.mxu0 0
  %9339 = vmatpush2.bf16.msra.mxu0 0
  %9340 = vmatprep.subr.bf16.mxu0 0
  %9341 = vmatpush2.bf16.msra.mxu0 0
  %9342 = vmatprep.subr.bf16.mxu0 0
  %9343 = vmatpush2.bf16.msra.mxu0 0
  %9344 = vmatprep.subr.bf16.mxu0 0
  %9345 = vmatpush2.bf16.msra.mxu0 0
  %9346 = vmatprep.subr.bf16.mxu0 0
  %9347 = vmatpush2.bf16.msra.mxu0 0
  %9348 = vmatprep.subr.bf16.mxu0 0
  %9349 = vmatpush2.bf16.msra.mxu0 0
  %9350 = vmatprep.mubr.bf16.mxu0 0
  %9351 = vmatmul.mubr.bf16.gmra.mxu0 %v9317
  %v9352 = vpop.f32.mrf.mxu0
  %v9353 = vadd.f32 0.0, %v9352
  %v9354 = vpop.f32.mrf.mxu0
  %v9355 = vadd.f32 0.0, %v9354
  %v9356 = vpop.f32.mrf.mxu0
  %v9357 = vpop.f32.mrf.mxu0
  %9358 = vdwg.mxu0
  %9359 = vmatprep.subr.bf16.mxu0 %v8892
  %9360 = vmatpush1.bf16.msra.mxu0 %v8891
  %9361 = vmatprep.subr.bf16.mxu0 %v8888
  %9362 = vmatpush1.bf16.msra.mxu0 %v8887
  %9363 = vmatprep.subr.bf16.mxu0 %v8884
  %9364 = vmatpush1.bf16.msra.mxu0 %v8883
  %9365 = vmatprep.subr.bf16.mxu0 %v8880
  %9366 = vmatpush1.bf16.msra.mxu0 %v8879
  %9367 = vmatprep.subr.bf16.mxu0 %v8876
  %9368 = vmatpush1.bf16.msra.mxu0 %v8875
  %9369 = vmatprep.subr.bf16.mxu0 %v8872
  %9370 = vmatpush1.bf16.msra.mxu0 %v8871
  %9371 = vmatprep.subr.bf16.mxu0 %v8868
  %9372 = vmatpush1.bf16.msra.mxu0 %v8867
  %9373 = vmatprep.subr.bf16.mxu0 %v8864
  %9374 = vmatpush1.bf16.msra.mxu0 %v8863
  %9375 = vmatprep.subr.bf16.mxu0 0
  %9376 = vmatpush2.bf16.msra.mxu0 0
  %9377 = vmatprep.subr.bf16.mxu0 0
  %9378 = vmatpush2.bf16.msra.mxu0 0
  %9379 = vmatprep.subr.bf16.mxu0 0
  %9380 = vmatpush2.bf16.msra.mxu0 0
  %9381 = vmatprep.subr.bf16.mxu0 0
  %9382 = vmatpush2.bf16.msra.mxu0 0
  %9383 = vmatprep.subr.bf16.mxu0 0
  %9384 = vmatpush2.bf16.msra.mxu0 0
  %9385 = vmatprep.subr.bf16.mxu0 0
  %9386 = vmatpush2.bf16.msra.mxu0 0
  %9387 = vmatprep.subr.bf16.mxu0 0
  %9388 = vmatpush2.bf16.msra.mxu0 0
  %9389 = vmatprep.subr.bf16.mxu0 0
  %9390 = vmatpush2.bf16.msra.mxu0 0
  %9391 = vmatprep.mubr.bf16.mxu0 0
  %9392 = vmatmul.mubr.bf16.gmra.mxu0 %v9317
  %v9393 = vpop.f32.mrf.mxu0
  %v9394 = vadd.f32 0.0, %v9393
  %v9395 = vpop.f32.mrf.mxu0
  %v9396 = vadd.f32 0.0, %v9395
  %v9397 = vpop.f32.mrf.mxu0
  %v9398 = vpop.f32.mrf.mxu0
  %9399 = vdwg.mxu0
  %v9404 = vrot.slane %v9353, 7
  %v9405 = vrot.slane %v9355, 7
  %v9406 = vrot.slane %v9394, 7
  %v9407 = vrot.slane %v9396, 7
  %v9412 = vadd.f32 %v8572, %v9404
  %v9413 = vadd.f32 %v8574, %v9405
  %v9414 = vadd.f32 %v8613, %v9406
  %v9415 = vadd.f32 %v8615, %v9407
  %v9416 = vpack.c.bf16 %v9316, %v9316
  %v9418 = vshrl.u32 %v9416, 16
  %v9420 = vrot.slane %v9418, 2
  %9422 = vmatprep.subr.bf16.mxu0 %v9136
  %9423 = vmatpush1.bf16.msra.mxu0 %v9135
  %9424 = vmatprep.subr.bf16.mxu0 %v9132
  %9425 = vmatpush1.bf16.msra.mxu0 %v9131
  %9426 = vmatprep.subr.bf16.mxu0 %v9128
  %9427 = vmatpush1.bf16.msra.mxu0 %v9127
  %9428 = vmatprep.subr.bf16.mxu0 %v9124
  %9429 = vmatpush1.bf16.msra.mxu0 %v9123
  %9430 = vmatprep.subr.bf16.mxu0 %v9120
  %9431 = vmatpush1.bf16.msra.mxu0 %v9119
  %9432 = vmatprep.subr.bf16.mxu0 %v9116
  %9433 = vmatpush1.bf16.msra.mxu0 %v9115
  %9434 = vmatprep.subr.bf16.mxu0 %v9112
  %9435 = vmatpush1.bf16.msra.mxu0 %v9111
  %9436 = vmatprep.subr.bf16.mxu0 %v9108
  %9437 = vmatpush1.bf16.msra.mxu0 %v9107
  %9438 = vmatprep.subr.bf16.mxu0 0
  %9439 = vmatpush2.bf16.msra.mxu0 0
  %9440 = vmatprep.subr.bf16.mxu0 0
  %9441 = vmatpush2.bf16.msra.mxu0 0
  %9442 = vmatprep.subr.bf16.mxu0 0
  %9443 = vmatpush2.bf16.msra.mxu0 0
  %9444 = vmatprep.subr.bf16.mxu0 0
  %9445 = vmatpush2.bf16.msra.mxu0 0
  %9446 = vmatprep.subr.bf16.mxu0 0
  %9447 = vmatpush2.bf16.msra.mxu0 0
  %9448 = vmatprep.subr.bf16.mxu0 0
  %9449 = vmatpush2.bf16.msra.mxu0 0
  %9450 = vmatprep.subr.bf16.mxu0 0
  %9451 = vmatpush2.bf16.msra.mxu0 0
  %9452 = vmatprep.subr.bf16.mxu0 0
  %9453 = vmatpush2.bf16.msra.mxu0 0
  %9454 = vmatprep.mubr.bf16.mxu0 0
  %9455 = vmatmul.mubr.bf16.gmra.mxu0 %v9420
  %v9456 = vpop.f32.mrf.mxu0
  %v9457 = vadd.f32 0.0, %v9456
  %v9458 = vpop.f32.mrf.mxu0
  %v9459 = vadd.f32 0.0, %v9458
  %v9460 = vpop.f32.mrf.mxu0
  %v9461 = vpop.f32.mrf.mxu0
  %9462 = vdwg.mxu0
  %9463 = vmatprep.subr.bf16.mxu0 %v9138
  %9464 = vmatpush1.bf16.msra.mxu0 %v9137
  %9465 = vmatprep.subr.bf16.mxu0 %v9134
  %9466 = vmatpush1.bf16.msra.mxu0 %v9133
  %9467 = vmatprep.subr.bf16.mxu0 %v9130
  %9468 = vmatpush1.bf16.msra.mxu0 %v9129
  %9469 = vmatprep.subr.bf16.mxu0 %v9126
  %9470 = vmatpush1.bf16.msra.mxu0 %v9125
  %9471 = vmatprep.subr.bf16.mxu0 %v9122
  %9472 = vmatpush1.bf16.msra.mxu0 %v9121
  %9473 = vmatprep.subr.bf16.mxu0 %v9118
  %9474 = vmatpush1.bf16.msra.mxu0 %v9117
  %9475 = vmatprep.subr.bf16.mxu0 %v9114
  %9476 = vmatpush1.bf16.msra.mxu0 %v9113
  %9477 = vmatprep.subr.bf16.mxu0 %v9110
  %9478 = vmatpush1.bf16.msra.mxu0 %v9109
  %9479 = vmatprep.subr.bf16.mxu0 0
  %9480 = vmatpush2.bf16.msra.mxu0 0
  %9481 = vmatprep.subr.bf16.mxu0 0
  %9482 = vmatpush2.bf16.msra.mxu0 0
  %9483 = vmatprep.subr.bf16.mxu0 0
  %9484 = vmatpush2.bf16.msra.mxu0 0
  %9485 = vmatprep.subr.bf16.mxu0 0
  %9486 = vmatpush2.bf16.msra.mxu0 0
  %9487 = vmatprep.subr.bf16.mxu0 0
  %9488 = vmatpush2.bf16.msra.mxu0 0
  %9489 = vmatprep.subr.bf16.mxu0 0
  %9490 = vmatpush2.bf16.msra.mxu0 0
  %9491 = vmatprep.subr.bf16.mxu0 0
  %9492 = vmatpush2.bf16.msra.mxu0 0
  %9493 = vmatprep.subr.bf16.mxu0 0
  %9494 = vmatpush2.bf16.msra.mxu0 0
  %9495 = vmatprep.mubr.bf16.mxu0 0
  %9496 = vmatmul.mubr.bf16.gmra.mxu0 %v9420
  %v9497 = vpop.f32.mrf.mxu0
  %v9498 = vadd.f32 0.0, %v9497
  %v9499 = vpop.f32.mrf.mxu0
  %v9500 = vadd.f32 0.0, %v9499
  %v9501 = vpop.f32.mrf.mxu0
  %v9502 = vpop.f32.mrf.mxu0
  %9503 = vdwg.mxu0
  %v9508 = vrot.slane %v9457, 4
  %v9509 = vrot.slane %v9459, 4
  %v9510 = vrot.slane %v9498, 4
  %v9511 = vrot.slane %v9500, 4
  %v9516 = vadd.f32 %v8654, %v9508
  %v9517 = vadd.f32 %v8656, %v9509
  %v9518 = vadd.f32 %v8695, %v9510
  %v9519 = vadd.f32 %v8697, %v9511
  %v9520 = vxor.u32 %v9412, 2147483648
  %v9521 = vmul.f32 %v9520, 1.442695
  %v9522 = vpow.pop %v9521
  %v9523 = vadd.f32 %v9522, 1.0
  %v9524 = vrcp.pop %v9523
  %v9525 = vmul.f32 1.0, %v9524
  %v9526 = vxor.u32 %v9413, 2147483648
  %v9527 = vmul.f32 %v9526, 1.442695
  %v9528 = vpow.pop %v9527
  %v9529 = vadd.f32 %v9528, 1.0
  %v9530 = vrcp.pop %v9529
  %v9531 = vmul.f32 1.0, %v9530
  %v9532 = vtanh.pop %v9414
  %v9533 = vxor.u32 %v9415, 2147483648
  %v9534 = vmul.f32 %v9533, 1.442695
  %v9535 = vpow.pop %v9534
  %v9536 = vadd.f32 %v9535, 1.0
  %v9537 = vrcp.pop %v9536
  %v9538 = vmul.f32 1.0, %v9537
  %v9540 = vrot.slane %v9290, 7
  %v9542 = vmul.f32 %v9531, %v9540
  %v9543 = vmul.f32 %v9525, %v9532
  %v9544 = vadd.f32 %v9542, %v9543
  %v9545 = vtanh.pop %v9544
  %v9546 = vmul.f32 %v9538, %v9545
  %v9547 = vxor.u32 %v9516, 2147483648
  %v9548 = vmul.f32 %v9547, 1.442695
  %v9549 = vpow.pop %v9548
  %v9550 = vadd.f32 %v9549, 1.0
  %v9551 = vrcp.pop %v9550
  %v9552 = vmul.f32 1.0, %v9551
  %v9553 = vxor.u32 %v9517, 2147483648
  %v9554 = vmul.f32 %v9553, 1.442695
  %v9555 = vpow.pop %v9554
  %v9556 = vadd.f32 %v9555, 1.0
  %v9557 = vrcp.pop %v9556
  %v9558 = vmul.f32 1.0, %v9557
  %v9559 = vtanh.pop %v9518
  %v9560 = vxor.u32 %v9519, 2147483648
  %v9561 = vmul.f32 %v9560, 1.442695
  %v9562 = vpow.pop %v9561
  %v9563 = vadd.f32 %v9562, 1.0
  %v9564 = vrcp.pop %v9563
  %v9565 = vmul.f32 1.0, %v9564
  %v9567 = vrot.slane %v9314, 1
  %v9569 = vmul.f32 %v9558, %v9567
  %v9570 = vmul.f32 %v9552, %v9559
  %v9571 = vadd.f32 %v9569, %v9570
  %v9572 = vtanh.pop %v9571
  %v9573 = vmul.f32 %v9565, %v9572
  %v9574 = vpack.c.bf16 %v9546, %v9546
  %v9576 = vshrl.u32 %v9574, 16
  %9579 = vmatprep.subr.bf16.mxu0 %v8890
  %9580 = vmatpush1.bf16.msra.mxu0 %v8889
  %9581 = vmatprep.subr.bf16.mxu0 %v8886
  %9582 = vmatpush1.bf16.msra.mxu0 %v8885
  %9583 = vmatprep.subr.bf16.mxu0 %v8882
  %9584 = vmatpush1.bf16.msra.mxu0 %v8881
  %9585 = vmatprep.subr.bf16.mxu0 %v8878
  %9586 = vmatpush1.bf16.msra.mxu0 %v8877
  %9587 = vmatprep.subr.bf16.mxu0 %v8874
  %9588 = vmatpush1.bf16.msra.mxu0 %v8873
  %9589 = vmatprep.subr.bf16.mxu0 %v8870
  %9590 = vmatpush1.bf16.msra.mxu0 %v8869
  %9591 = vmatprep.subr.bf16.mxu0 %v8866
  %9592 = vmatpush1.bf16.msra.mxu0 %v8865
  %9593 = vmatprep.subr.bf16.mxu0 %v8862
  %9594 = vmatpush1.bf16.msra.mxu0 %v8861
  %9595 = vmatprep.subr.bf16.mxu0 0
  %9596 = vmatpush2.bf16.msra.mxu0 0
  %9597 = vmatprep.subr.bf16.mxu0 0
  %9598 = vmatpush2.bf16.msra.mxu0 0
  %9599 = vmatprep.subr.bf16.mxu0 0
  %9600 = vmatpush2.bf16.msra.mxu0 0
  %9601 = vmatprep.subr.bf16.mxu0 0
  %9602 = vmatpush2.bf16.msra.mxu0 0
  %9603 = vmatprep.subr.bf16.mxu0 0
  %9604 = vmatpush2.bf16.msra.mxu0 0
  %9605 = vmatprep.subr.bf16.mxu0 0
  %9606 = vmatpush2.bf16.msra.mxu0 0
  %9607 = vmatprep.subr.bf16.mxu0 0
  %9608 = vmatpush2.bf16.msra.mxu0 0
  %9609 = vmatprep.subr.bf16.mxu0 0
  %9610 = vmatpush2.bf16.msra.mxu0 0
  %9611 = vmatprep.mubr.bf16.mxu0 0
  %9612 = vmatmul.mubr.bf16.gmra.mxu0 %v9576
  %v9613 = vpop.f32.mrf.mxu0
  %v9614 = vadd.f32 0.0, %v9613
  %v9615 = vpop.f32.mrf.mxu0
  %v9616 = vadd.f32 0.0, %v9615
  %v9617 = vpop.f32.mrf.mxu0
  %v9618 = vpop.f32.mrf.mxu0
  %9619 = vdwg.mxu0
  %9620 = vmatprep.subr.bf16.mxu0 %v8892
  %9621 = vmatpush1.bf16.msra.mxu0 %v8891
  %9622 = vmatprep.subr.bf16.mxu0 %v8888
  %9623 = vmatpush1.bf16.msra.mxu0 %v8887
  %9624 = vmatprep.subr.bf16.mxu0 %v8884
  %9625 = vmatpush1.bf16.msra.mxu0 %v8883
  %9626 = vmatprep.subr.bf16.mxu0 %v8880
  %9627 = vmatpush1.bf16.msra.mxu0 %v8879
  %9628 = vmatprep.subr.bf16.mxu0 %v8876
  %9629 = vmatpush1.bf16.msra.mxu0 %v8875
  %9630 = vmatprep.subr.bf16.mxu0 %v8872
  %9631 = vmatpush1.bf16.msra.mxu0 %v8871
  %9632 = vmatprep.subr.bf16.mxu0 %v8868
  %9633 = vmatpush1.bf16.msra.mxu0 %v8867
  %9634 = vmatprep.subr.bf16.mxu0 %v8864
  %9635 = vmatpush1.bf16.msra.mxu0 %v8863
  %9636 = vmatprep.subr.bf16.mxu0 0
  %9637 = vmatpush2.bf16.msra.mxu0 0
  %9638 = vmatprep.subr.bf16.mxu0 0
  %9639 = vmatpush2.bf16.msra.mxu0 0
  %9640 = vmatprep.subr.bf16.mxu0 0
  %9641 = vmatpush2.bf16.msra.mxu0 0
  %9642 = vmatprep.subr.bf16.mxu0 0
  %9643 = vmatpush2.bf16.msra.mxu0 0
  %9644 = vmatprep.subr.bf16.mxu0 0
  %9645 = vmatpush2.bf16.msra.mxu0 0
  %9646 = vmatprep.subr.bf16.mxu0 0
  %9647 = vmatpush2.bf16.msra.mxu0 0
  %9648 = vmatprep.subr.bf16.mxu0 0
  %9649 = vmatpush2.bf16.msra.mxu0 0
  %9650 = vmatprep.subr.bf16.mxu0 0
  %9651 = vmatpush2.bf16.msra.mxu0 0
  %9652 = vmatprep.mubr.bf16.mxu0 0
  %9653 = vmatmul.mubr.bf16.gmra.mxu0 %v9576
  %v9654 = vpop.f32.mrf.mxu0
  %v9655 = vadd.f32 0.0, %v9654
  %v9656 = vpop.f32.mrf.mxu0
  %v9657 = vadd.f32 0.0, %v9656
  %v9658 = vpop.f32.mrf.mxu0
  %v9659 = vpop.f32.mrf.mxu0
  %9660 = vdwg.mxu0
  %v9665 = vrot.slane %v9614, 6
  %v9666 = vrot.slane %v9616, 6
  %v9667 = vrot.slane %v9655, 6
  %v9668 = vrot.slane %v9657, 6
  %v9673 = vadd.f32 %v8572, %v9665
  %v9674 = vadd.f32 %v8574, %v9666
  %v9675 = vadd.f32 %v8613, %v9667
  %v9676 = vadd.f32 %v8615, %v9668
  %v9677 = vpack.c.bf16 %v9573, %v9573
  %v9679 = vrot.slane %v9677, 2
  %9681 = vmatprep.subr.bf16.mxu0 %v9136
  %9682 = vmatpush1.bf16.msra.mxu0 %v9135
  %9683 = vmatprep.subr.bf16.mxu0 %v9132
  %9684 = vmatpush1.bf16.msra.mxu0 %v9131
  %9685 = vmatprep.subr.bf16.mxu0 %v9128
  %9686 = vmatpush1.bf16.msra.mxu0 %v9127
  %9687 = vmatprep.subr.bf16.mxu0 %v9124
  %9688 = vmatpush1.bf16.msra.mxu0 %v9123
  %9689 = vmatprep.subr.bf16.mxu0 %v9120
  %9690 = vmatpush1.bf16.msra.mxu0 %v9119
  %9691 = vmatprep.subr.bf16.mxu0 %v9116
  %9692 = vmatpush1.bf16.msra.mxu0 %v9115
  %9693 = vmatprep.subr.bf16.mxu0 %v9112
  %9694 = vmatpush1.bf16.msra.mxu0 %v9111
  %9695 = vmatprep.subr.bf16.mxu0 %v9108
  %9696 = vmatpush1.bf16.msra.mxu0 %v9107
  %9697 = vmatprep.subr.bf16.mxu0 0
  %9698 = vmatpush2.bf16.msra.mxu0 0
  %9699 = vmatprep.subr.bf16.mxu0 0
  %9700 = vmatpush2.bf16.msra.mxu0 0
  %9701 = vmatprep.subr.bf16.mxu0 0
  %9702 = vmatpush2.bf16.msra.mxu0 0
  %9703 = vmatprep.subr.bf16.mxu0 0
  %9704 = vmatpush2.bf16.msra.mxu0 0
  %9705 = vmatprep.subr.bf16.mxu0 0
  %9706 = vmatpush2.bf16.msra.mxu0 0
  %9707 = vmatprep.subr.bf16.mxu0 0
  %9708 = vmatpush2.bf16.msra.mxu0 0
  %9709 = vmatprep.subr.bf16.mxu0 0
  %9710 = vmatpush2.bf16.msra.mxu0 0
  %9711 = vmatprep.subr.bf16.mxu0 0
  %9712 = vmatpush2.bf16.msra.mxu0 0
  %9713 = vmatprep.mubr.bf16.mxu0 0
  %9714 = vmatmul.mubr.bf16.gmra.mxu0 %v9679
  %v9715 = vpop.f32.mrf.mxu0
  %v9716 = vadd.f32 0.0, %v9715
  %v9717 = vpop.f32.mrf.mxu0
  %v9718 = vadd.f32 0.0, %v9717
  %v9719 = vpop.f32.mrf.mxu0
  %v9720 = vpop.f32.mrf.mxu0
  %9721 = vdwg.mxu0
  %9722 = vmatprep.subr.bf16.mxu0 %v9138
  %9723 = vmatpush1.bf16.msra.mxu0 %v9137
  %9724 = vmatprep.subr.bf16.mxu0 %v9134
  %9725 = vmatpush1.bf16.msra.mxu0 %v9133
  %9726 = vmatprep.subr.bf16.mxu0 %v9130
  %9727 = vmatpush1.bf16.msra.mxu0 %v9129
  %9728 = vmatprep.subr.bf16.mxu0 %v9126
  %9729 = vmatpush1.bf16.msra.mxu0 %v9125
  %9730 = vmatprep.subr.bf16.mxu0 %v9122
  %9731 = vmatpush1.bf16.msra.mxu0 %v9121
  %9732 = vmatprep.subr.bf16.mxu0 %v9118
  %9733 = vmatpush1.bf16.msra.mxu0 %v9117
  %9734 = vmatprep.subr.bf16.mxu0 %v9114
  %9735 = vmatpush1.bf16.msra.mxu0 %v9113
  %9736 = vmatprep.subr.bf16.mxu0 %v9110
  %9737 = vmatpush1.bf16.msra.mxu0 %v9109
  %9738 = vmatprep.subr.bf16.mxu0 0
  %9739 = vmatpush2.bf16.msra.mxu0 0
  %9740 = vmatprep.subr.bf16.mxu0 0
  %9741 = vmatpush2.bf16.msra.mxu0 0
  %9742 = vmatprep.subr.bf16.mxu0 0
  %9743 = vmatpush2.bf16.msra.mxu0 0
  %9744 = vmatprep.subr.bf16.mxu0 0
  %9745 = vmatpush2.bf16.msra.mxu0 0
  %9746 = vmatprep.subr.bf16.mxu0 0
  %9747 = vmatpush2.bf16.msra.mxu0 0
  %9748 = vmatprep.subr.bf16.mxu0 0
  %9749 = vmatpush2.bf16.msra.mxu0 0
  %9750 = vmatprep.subr.bf16.mxu0 0
  %9751 = vmatpush2.bf16.msra.mxu0 0
  %9752 = vmatprep.subr.bf16.mxu0 0
  %9753 = vmatpush2.bf16.msra.mxu0 0
  %9754 = vmatprep.mubr.bf16.mxu0 0
  %9755 = vmatmul.mubr.bf16.gmra.mxu0 %v9679
  %v9756 = vpop.f32.mrf.mxu0
  %v9757 = vadd.f32 0.0, %v9756
  %v9758 = vpop.f32.mrf.mxu0
  %v9759 = vadd.f32 0.0, %v9758
  %v9760 = vpop.f32.mrf.mxu0
  %v9761 = vpop.f32.mrf.mxu0
  %9762 = vdwg.mxu0
  %v9767 = vrot.slane %v9716, 5
  %v9768 = vrot.slane %v9718, 5
  %v9769 = vrot.slane %v9757, 5
  %v9770 = vrot.slane %v9759, 5
  %v9775 = vadd.f32 %v8654, %v9767
  %v9776 = vadd.f32 %v8656, %v9768
  %v9777 = vadd.f32 %v8695, %v9769
  %v9778 = vadd.f32 %v8697, %v9770
  %v9779 = vxor.u32 %v9673, 2147483648
  %v9780 = vmul.f32 %v9779, 1.442695
  %v9781 = vpow.pop %v9780
  %v9782 = vadd.f32 %v9781, 1.0
  %v9783 = vrcp.pop %v9782
  %v9784 = vmul.f32 1.0, %v9783
  %v9785 = vxor.u32 %v9674, 2147483648
  %v9786 = vmul.f32 %v9785, 1.442695
  %v9787 = vpow.pop %v9786
  %v9788 = vadd.f32 %v9787, 1.0
  %v9789 = vrcp.pop %v9788
  %v9790 = vmul.f32 1.0, %v9789
  %v9791 = vtanh.pop %v9675
  %v9792 = vxor.u32 %v9676, 2147483648
  %v9793 = vmul.f32 %v9792, 1.442695
  %v9794 = vpow.pop %v9793
  %v9795 = vadd.f32 %v9794, 1.0
  %v9796 = vrcp.pop %v9795
  %v9797 = vmul.f32 1.0, %v9796
  %v9799 = vrot.slane %v9544, 7
  %v9801 = vmul.f32 %v9790, %v9799
  %v9802 = vmul.f32 %v9784, %v9791
  %v9803 = vadd.f32 %v9801, %v9802
  %v9804 = vtanh.pop %v9803
  %v9805 = vmul.f32 %v9797, %v9804
  %v9806 = vxor.u32 %v9775, 2147483648
  %v9807 = vmul.f32 %v9806, 1.442695
  %v9808 = vpow.pop %v9807
  %v9809 = vadd.f32 %v9808, 1.0
  %v9810 = vrcp.pop %v9809
  %v9811 = vmul.f32 1.0, %v9810
  %v9812 = vxor.u32 %v9776, 2147483648
  %v9813 = vmul.f32 %v9812, 1.442695
  %v9814 = vpow.pop %v9813
  %v9815 = vadd.f32 %v9814, 1.0
  %v9816 = vrcp.pop %v9815
  %v9817 = vmul.f32 1.0, %v9816
  %v9818 = vtanh.pop %v9777
  %v9819 = vxor.u32 %v9778, 2147483648
  %v9820 = vmul.f32 %v9819, 1.442695
  %v9821 = vpow.pop %v9820
  %v9822 = vadd.f32 %v9821, 1.0
  %v9823 = vrcp.pop %v9822
  %v9824 = vmul.f32 1.0, %v9823
  %v9826 = vrot.slane %v9571, 1
  %v9828 = vmul.f32 %v9817, %v9826
  %v9829 = vmul.f32 %v9811, %v9818
  %v9830 = vadd.f32 %v9828, %v9829
  %v9831 = vtanh.pop %v9830
  %v9832 = vmul.f32 %v9824, %v9831
  %v9833 = vpack.c.bf16 %v9805, %v9805
  %v9835 = vrot.slane %v9833, 1
  %9837 = vmatprep.subr.bf16.mxu0 %v8890
  %9838 = vmatpush1.bf16.msra.mxu0 %v8889
  %9839 = vmatprep.subr.bf16.mxu0 %v8886
  %9840 = vmatpush1.bf16.msra.mxu0 %v8885
  %9841 = vmatprep.subr.bf16.mxu0 %v8882
  %9842 = vmatpush1.bf16.msra.mxu0 %v8881
  %9843 = vmatprep.subr.bf16.mxu0 %v8878
  %9844 = vmatpush1.bf16.msra.mxu0 %v8877
  %9845 = vmatprep.subr.bf16.mxu0 %v8874
  %9846 = vmatpush1.bf16.msra.mxu0 %v8873
  %9847 = vmatprep.subr.bf16.mxu0 %v8870
  %9848 = vmatpush1.bf16.msra.mxu0 %v8869
  %9849 = vmatprep.subr.bf16.mxu0 %v8866
  %9850 = vmatpush1.bf16.msra.mxu0 %v8865
  %9851 = vmatprep.subr.bf16.mxu0 %v8862
  %9852 = vmatpush1.bf16.msra.mxu0 %v8861
  %9853 = vmatprep.subr.bf16.mxu0 0
  %9854 = vmatpush2.bf16.msra.mxu0 0
  %9855 = vmatprep.subr.bf16.mxu0 0
  %9856 = vmatpush2.bf16.msra.mxu0 0
  %9857 = vmatprep.subr.bf16.mxu0 0
  %9858 = vmatpush2.bf16.msra.mxu0 0
  %9859 = vmatprep.subr.bf16.mxu0 0
  %9860 = vmatpush2.bf16.msra.mxu0 0
  %9861 = vmatprep.subr.bf16.mxu0 0
  %9862 = vmatpush2.bf16.msra.mxu0 0
  %9863 = vmatprep.subr.bf16.mxu0 0
  %9864 = vmatpush2.bf16.msra.mxu0 0
  %9865 = vmatprep.subr.bf16.mxu0 0
  %9866 = vmatpush2.bf16.msra.mxu0 0
  %9867 = vmatprep.subr.bf16.mxu0 0
  %9868 = vmatpush2.bf16.msra.mxu0 0
  %9869 = vmatprep.mubr.bf16.mxu0 0
  %9870 = vmatmul.mubr.bf16.gmra.mxu0 %v9835
  %v9871 = vpop.f32.mrf.mxu0
  %v9872 = vadd.f32 0.0, %v9871
  %v9873 = vpop.f32.mrf.mxu0
  %v9874 = vadd.f32 0.0, %v9873
  %v9875 = vpop.f32.mrf.mxu0
  %v9876 = vpop.f32.mrf.mxu0
  %9877 = vdwg.mxu0
  %9878 = vmatprep.subr.bf16.mxu0 %v8892
  %9879 = vmatpush1.bf16.msra.mxu0 %v8891
  %9880 = vmatprep.subr.bf16.mxu0 %v8888
  %9881 = vmatpush1.bf16.msra.mxu0 %v8887
  %9882 = vmatprep.subr.bf16.mxu0 %v8884
  %9883 = vmatpush1.bf16.msra.mxu0 %v8883
  %9884 = vmatprep.subr.bf16.mxu0 %v8880
  %9885 = vmatpush1.bf16.msra.mxu0 %v8879
  %9886 = vmatprep.subr.bf16.mxu0 %v8876
  %9887 = vmatpush1.bf16.msra.mxu0 %v8875
  %9888 = vmatprep.subr.bf16.mxu0 %v8872
  %9889 = vmatpush1.bf16.msra.mxu0 %v8871
  %9890 = vmatprep.subr.bf16.mxu0 %v8868
  %9891 = vmatpush1.bf16.msra.mxu0 %v8867
  %9892 = vmatprep.subr.bf16.mxu0 %v8864
  %9893 = vmatpush1.bf16.msra.mxu0 %v8863
  %9894 = vmatprep.subr.bf16.mxu0 0
  %9895 = vmatpush2.bf16.msra.mxu0 0
  %9896 = vmatprep.subr.bf16.mxu0 0
  %9897 = vmatpush2.bf16.msra.mxu0 0
  %9898 = vmatprep.subr.bf16.mxu0 0
  %9899 = vmatpush2.bf16.msra.mxu0 0
  %9900 = vmatprep.subr.bf16.mxu0 0
  %9901 = vmatpush2.bf16.msra.mxu0 0
  %9902 = vmatprep.subr.bf16.mxu0 0
  %9903 = vmatpush2.bf16.msra.mxu0 0
  %9904 = vmatprep.subr.bf16.mxu0 0
  %9905 = vmatpush2.bf16.msra.mxu0 0
  %9906 = vmatprep.subr.bf16.mxu0 0
  %9907 = vmatpush2.bf16.msra.mxu0 0
  %9908 = vmatprep.subr.bf16.mxu0 0
  %9909 = vmatpush2.bf16.msra.mxu0 0
  %9910 = vmatprep.mubr.bf16.mxu0 0
  %9911 = vmatmul.mubr.bf16.gmra.mxu0 %v9835
  %v9912 = vpop.f32.mrf.mxu0
  %v9913 = vadd.f32 0.0, %v9912
  %v9914 = vpop.f32.mrf.mxu0
  %v9915 = vadd.f32 0.0, %v9914
  %v9916 = vpop.f32.mrf.mxu0
  %v9917 = vpop.f32.mrf.mxu0
  %9918 = vdwg.mxu0
  %v9923 = vrot.slane %v9872, 5
  %v9924 = vrot.slane %v9874, 5
  %v9925 = vrot.slane %v9913, 5
  %v9926 = vrot.slane %v9915, 5
  %v9931 = vadd.f32 %v8572, %v9923
  %v9932 = vadd.f32 %v8574, %v9924
  %v9933 = vadd.f32 %v8613, %v9925
  %v9934 = vadd.f32 %v8615, %v9926
  %v9935 = vpack.c.bf16 %v9832, %v9832
  %v9937 = vshrl.u32 %v9935, 16
  %v9939 = vrot.slane %v9937, 1
  %9941 = vmatprep.subr.bf16.mxu0 %v9136
  %9942 = vmatpush1.bf16.msra.mxu0 %v9135
  %9943 = vmatprep.subr.bf16.mxu0 %v9132
  %9944 = vmatpush1.bf16.msra.mxu0 %v9131
  %9945 = vmatprep.subr.bf16.mxu0 %v9128
  %9946 = vmatpush1.bf16.msra.mxu0 %v9127
  %9947 = vmatprep.subr.bf16.mxu0 %v9124
  %9948 = vmatpush1.bf16.msra.mxu0 %v9123
  %9949 = vmatprep.subr.bf16.mxu0 %v9120
  %9950 = vmatpush1.bf16.msra.mxu0 %v9119
  %9951 = vmatprep.subr.bf16.mxu0 %v9116
  %9952 = vmatpush1.bf16.msra.mxu0 %v9115
  %9953 = vmatprep.subr.bf16.mxu0 %v9112
  %9954 = vmatpush1.bf16.msra.mxu0 %v9111
  %9955 = vmatprep.subr.bf16.mxu0 %v9108
  %9956 = vmatpush1.bf16.msra.mxu0 %v9107
  %9957 = vmatprep.subr.bf16.mxu0 0
  %9958 = vmatpush2.bf16.msra.mxu0 0
  %9959 = vmatprep.subr.bf16.mxu0 0
  %9960 = vmatpush2.bf16.msra.mxu0 0
  %9961 = vmatprep.subr.bf16.mxu0 0
  %9962 = vmatpush2.bf16.msra.mxu0 0
  %9963 = vmatprep.subr.bf16.mxu0 0
  %9964 = vmatpush2.bf16.msra.mxu0 0
  %9965 = vmatprep.subr.bf16.mxu0 0
  %9966 = vmatpush2.bf16.msra.mxu0 0
  %9967 = vmatprep.subr.bf16.mxu0 0
  %9968 = vmatpush2.bf16.msra.mxu0 0
  %9969 = vmatprep.subr.bf16.mxu0 0
  %9970 = vmatpush2.bf16.msra.mxu0 0
  %9971 = vmatprep.subr.bf16.mxu0 0
  %9972 = vmatpush2.bf16.msra.mxu0 0
  %9973 = vmatprep.mubr.bf16.mxu0 0
  %9974 = vmatmul.mubr.bf16.gmra.mxu0 %v9939
  %v9975 = vpop.f32.mrf.mxu0
  %v9976 = vadd.f32 0.0, %v9975
  %v9977 = vpop.f32.mrf.mxu0
  %v9978 = vadd.f32 0.0, %v9977
  %v9979 = vpop.f32.mrf.mxu0
  %v9980 = vpop.f32.mrf.mxu0
  %9981 = vdwg.mxu0
  %9982 = vmatprep.subr.bf16.mxu0 %v9138
  %9983 = vmatpush1.bf16.msra.mxu0 %v9137
  %9984 = vmatprep.subr.bf16.mxu0 %v9134
  %9985 = vmatpush1.bf16.msra.mxu0 %v9133
  %9986 = vmatprep.subr.bf16.mxu0 %v9130
  %9987 = vmatpush1.bf16.msra.mxu0 %v9129
  %9988 = vmatprep.subr.bf16.mxu0 %v9126
  %9989 = vmatpush1.bf16.msra.mxu0 %v9125
  %9990 = vmatprep.subr.bf16.mxu0 %v9122
  %9991 = vmatpush1.bf16.msra.mxu0 %v9121
  %9992 = vmatprep.subr.bf16.mxu0 %v9118
  %9993 = vmatpush1.bf16.msra.mxu0 %v9117
  %9994 = vmatprep.subr.bf16.mxu0 %v9114
  %9995 = vmatpush1.bf16.msra.mxu0 %v9113
  %9996 = vmatprep.subr.bf16.mxu0 %v9110
  %9997 = vmatpush1.bf16.msra.mxu0 %v9109
  %9998 = vmatprep.subr.bf16.mxu0 0
  %9999 = vmatpush2.bf16.msra.mxu0 0
  %10000 = vmatprep.subr.bf16.mxu0 0
  %10001 = vmatpush2.bf16.msra.mxu0 0
  %10002 = vmatprep.subr.bf16.mxu0 0
  %10003 = vmatpush2.bf16.msra.mxu0 0
  %10004 = vmatprep.subr.bf16.mxu0 0
  %10005 = vmatpush2.bf16.msra.mxu0 0
  %10006 = vmatprep.subr.bf16.mxu0 0
  %10007 = vmatpush2.bf16.msra.mxu0 0
  %10008 = vmatprep.subr.bf16.mxu0 0
  %10009 = vmatpush2.bf16.msra.mxu0 0
  %10010 = vmatprep.subr.bf16.mxu0 0
  %10011 = vmatpush2.bf16.msra.mxu0 0
  %10012 = vmatprep.subr.bf16.mxu0 0
  %10013 = vmatpush2.bf16.msra.mxu0 0
  %10014 = vmatprep.mubr.bf16.mxu0 0
  %10015 = vmatmul.mubr.bf16.gmra.mxu0 %v9939
  %v10016 = vpop.f32.mrf.mxu0
  %v10017 = vadd.f32 0.0, %v10016
  %v10018 = vpop.f32.mrf.mxu0
  %v10019 = vadd.f32 0.0, %v10018
  %v10020 = vpop.f32.mrf.mxu0
  %v10021 = vpop.f32.mrf.mxu0
  %10022 = vdwg.mxu0
  %v10027 = vrot.slane %v9976, 6
  %v10028 = vrot.slane %v9978, 6
  %v10029 = vrot.slane %v10017, 6
  %v10030 = vrot.slane %v10019, 6
  %v10035 = vadd.f32 %v8654, %v10027
  %v10036 = vadd.f32 %v8656, %v10028
  %v10037 = vadd.f32 %v8695, %v10029
  %v10038 = vadd.f32 %v8697, %v10030
  %v10039 = vxor.u32 %v9931, 2147483648
  %v10040 = vmul.f32 %v10039, 1.442695
  %v10041 = vpow.pop %v10040
  %v10042 = vadd.f32 %v10041, 1.0
  %v10043 = vrcp.pop %v10042
  %v10044 = vmul.f32 1.0, %v10043
  %v10045 = vxor.u32 %v9932, 2147483648
  %v10046 = vmul.f32 %v10045, 1.442695
  %v10047 = vpow.pop %v10046
  %v10048 = vadd.f32 %v10047, 1.0
  %v10049 = vrcp.pop %v10048
  %v10050 = vmul.f32 1.0, %v10049
  %v10051 = vtanh.pop %v9933
  %v10052 = vxor.u32 %v9934, 2147483648
  %v10053 = vmul.f32 %v10052, 1.442695
  %v10054 = vpow.pop %v10053
  %v10055 = vadd.f32 %v10054, 1.0
  %v10056 = vrcp.pop %v10055
  %v10057 = vmul.f32 1.0, %v10056
  %v10059 = vrot.slane %v9803, 7
  %v10061 = vmul.f32 %v10050, %v10059
  %v10062 = vmul.f32 %v10044, %v10051
  %v10063 = vadd.f32 %v10061, %v10062
  %v10064 = vtanh.pop %v10063
  %v10065 = vmul.f32 %v10057, %v10064
  %v10066 = vxor.u32 %v10035, 2147483648
  %v10067 = vmul.f32 %v10066, 1.442695
  %v10068 = vpow.pop %v10067
  %v10069 = vadd.f32 %v10068, 1.0
  %v10070 = vrcp.pop %v10069
  %v10071 = vmul.f32 1.0, %v10070
  %v10072 = vxor.u32 %v10036, 2147483648
  %v10073 = vmul.f32 %v10072, 1.442695
  %v10074 = vpow.pop %v10073
  %v10075 = vadd.f32 %v10074, 1.0
  %v10076 = vrcp.pop %v10075
  %v10077 = vmul.f32 1.0, %v10076
  %v10078 = vtanh.pop %v10037
  %v10079 = vxor.u32 %v10038, 2147483648
  %v10080 = vmul.f32 %v10079, 1.442695
  %v10081 = vpow.pop %v10080
  %v10082 = vadd.f32 %v10081, 1.0
  %v10083 = vrcp.pop %v10082
  %v10084 = vmul.f32 1.0, %v10083
  %v10086 = vrot.slane %v9830, 1
  %v10088 = vmul.f32 %v10077, %v10086
  %v10089 = vmul.f32 %v10071, %v10078
  %v10090 = vadd.f32 %v10088, %v10089
  %v10091 = vtanh.pop %v10090
  %v10092 = vmul.f32 %v10084, %v10091
  %v10093 = vpack.c.bf16 %v10065, %v10065
  %v10095 = vshrl.u32 %v10093, 16
  %v10097 = vrot.slane %v10095, 1
  %10099 = vmatprep.subr.bf16.mxu0 %v8890
  %10100 = vmatpush1.bf16.msra.mxu0 %v8889
  %10101 = vmatprep.subr.bf16.mxu0 %v8886
  %10102 = vmatpush1.bf16.msra.mxu0 %v8885
  %10103 = vmatprep.subr.bf16.mxu0 %v8882
  %10104 = vmatpush1.bf16.msra.mxu0 %v8881
  %10105 = vmatprep.subr.bf16.mxu0 %v8878
  %10106 = vmatpush1.bf16.msra.mxu0 %v8877
  %10107 = vmatprep.subr.bf16.mxu0 %v8874
  %10108 = vmatpush1.bf16.msra.mxu0 %v8873
  %10109 = vmatprep.subr.bf16.mxu0 %v8870
  %10110 = vmatpush1.bf16.msra.mxu0 %v8869
  %10111 = vmatprep.subr.bf16.mxu0 %v8866
  %10112 = vmatpush1.bf16.msra.mxu0 %v8865
  %10113 = vmatprep.subr.bf16.mxu0 %v8862
  %10114 = vmatpush1.bf16.msra.mxu0 %v8861
  %10115 = vmatprep.subr.bf16.mxu0 0
  %10116 = vmatpush2.bf16.msra.mxu0 0
  %10117 = vmatprep.subr.bf16.mxu0 0
  %10118 = vmatpush2.bf16.msra.mxu0 0
  %10119 = vmatprep.subr.bf16.mxu0 0
  %10120 = vmatpush2.bf16.msra.mxu0 0
  %10121 = vmatprep.subr.bf16.mxu0 0
  %10122 = vmatpush2.bf16.msra.mxu0 0
  %10123 = vmatprep.subr.bf16.mxu0 0
  %10124 = vmatpush2.bf16.msra.mxu0 0
  %10125 = vmatprep.subr.bf16.mxu0 0
  %10126 = vmatpush2.bf16.msra.mxu0 0
  %10127 = vmatprep.subr.bf16.mxu0 0
  %10128 = vmatpush2.bf16.msra.mxu0 0
  %10129 = vmatprep.subr.bf16.mxu0 0
  %10130 = vmatpush2.bf16.msra.mxu0 0
  %10131 = vmatprep.mubr.bf16.mxu0 0
  %10132 = vmatmul.mubr.bf16.gmra.mxu0 %v10097
  %v10133 = vpop.f32.mrf.mxu0
  %v10134 = vadd.f32 0.0, %v10133
  %v10135 = vpop.f32.mrf.mxu0
  %v10136 = vadd.f32 0.0, %v10135
  %v10137 = vpop.f32.mrf.mxu0
  %v10138 = vpop.f32.mrf.mxu0
  %10139 = vdwg.mxu0
  %10140 = vmatprep.subr.bf16.mxu0 %v8892
  %10141 = vmatpush1.bf16.msra.mxu0 %v8891
  %10142 = vmatprep.subr.bf16.mxu0 %v8888
  %10143 = vmatpush1.bf16.msra.mxu0 %v8887
  %10144 = vmatprep.subr.bf16.mxu0 %v8884
  %10145 = vmatpush1.bf16.msra.mxu0 %v8883
  %10146 = vmatprep.subr.bf16.mxu0 %v8880
  %10147 = vmatpush1.bf16.msra.mxu0 %v8879
  %10148 = vmatprep.subr.bf16.mxu0 %v8876
  %10149 = vmatpush1.bf16.msra.mxu0 %v8875
  %10150 = vmatprep.subr.bf16.mxu0 %v8872
  %10151 = vmatpush1.bf16.msra.mxu0 %v8871
  %10152 = vmatprep.subr.bf16.mxu0 %v8868
  %10153 = vmatpush1.bf16.msra.mxu0 %v8867
  %10154 = vmatprep.subr.bf16.mxu0 %v8864
  %10155 = vmatpush1.bf16.msra.mxu0 %v8863
  %10156 = vmatprep.subr.bf16.mxu0 0
  %10157 = vmatpush2.bf16.msra.mxu0 0
  %10158 = vmatprep.subr.bf16.mxu0 0
  %10159 = vmatpush2.bf16.msra.mxu0 0
  %10160 = vmatprep.subr.bf16.mxu0 0
  %10161 = vmatpush2.bf16.msra.mxu0 0
  %10162 = vmatprep.subr.bf16.mxu0 0
  %10163 = vmatpush2.bf16.msra.mxu0 0
  %10164 = vmatprep.subr.bf16.mxu0 0
  %10165 = vmatpush2.bf16.msra.mxu0 0
  %10166 = vmatprep.subr.bf16.mxu0 0
  %10167 = vmatpush2.bf16.msra.mxu0 0
  %10168 = vmatprep.subr.bf16.mxu0 0
  %10169 = vmatpush2.bf16.msra.mxu0 0
  %10170 = vmatprep.subr.bf16.mxu0 0
  %10171 = vmatpush2.bf16.msra.mxu0 0
  %10172 = vmatprep.mubr.bf16.mxu0 0
  %10173 = vmatmul.mubr.bf16.gmra.mxu0 %v10097
  %v10174 = vpop.f32.mrf.mxu0
  %v10175 = vadd.f32 0.0, %v10174
  %v10176 = vpop.f32.mrf.mxu0
  %v10177 = vadd.f32 0.0, %v10176
  %v10178 = vpop.f32.mrf.mxu0
  %v10179 = vpop.f32.mrf.mxu0
  %10180 = vdwg.mxu0
  %v10185 = vrot.slane %v10134, 4
  %v10186 = vrot.slane %v10136, 4
  %v10187 = vrot.slane %v10175, 4
  %v10188 = vrot.slane %v10177, 4
  %v10193 = vadd.f32 %v8572, %v10185
  %v10194 = vadd.f32 %v8574, %v10186
  %v10195 = vadd.f32 %v8613, %v10187
  %v10196 = vadd.f32 %v8615, %v10188
  %v10197 = vpack.c.bf16 %v10092, %v10092
  %v10199 = vrot.slane %v10197, 1
  %10201 = vmatprep.subr.bf16.mxu0 %v9136
  %10202 = vmatpush1.bf16.msra.mxu0 %v9135
  %10203 = vmatprep.subr.bf16.mxu0 %v9132
  %10204 = vmatpush1.bf16.msra.mxu0 %v9131
  %10205 = vmatprep.subr.bf16.mxu0 %v9128
  %10206 = vmatpush1.bf16.msra.mxu0 %v9127
  %10207 = vmatprep.subr.bf16.mxu0 %v9124
  %10208 = vmatpush1.bf16.msra.mxu0 %v9123
  %10209 = vmatprep.subr.bf16.mxu0 %v9120
  %10210 = vmatpush1.bf16.msra.mxu0 %v9119
  %10211 = vmatprep.subr.bf16.mxu0 %v9116
  %10212 = vmatpush1.bf16.msra.mxu0 %v9115
  %10213 = vmatprep.subr.bf16.mxu0 %v9112
  %10214 = vmatpush1.bf16.msra.mxu0 %v9111
  %10215 = vmatprep.subr.bf16.mxu0 %v9108
  %10216 = vmatpush1.bf16.msra.mxu0 %v9107
  %10217 = vmatprep.subr.bf16.mxu0 0
  %10218 = vmatpush2.bf16.msra.mxu0 0
  %10219 = vmatprep.subr.bf16.mxu0 0
  %10220 = vmatpush2.bf16.msra.mxu0 0
  %10221 = vmatprep.subr.bf16.mxu0 0
  %10222 = vmatpush2.bf16.msra.mxu0 0
  %10223 = vmatprep.subr.bf16.mxu0 0
  %10224 = vmatpush2.bf16.msra.mxu0 0
  %10225 = vmatprep.subr.bf16.mxu0 0
  %10226 = vmatpush2.bf16.msra.mxu0 0
  %10227 = vmatprep.subr.bf16.mxu0 0
  %10228 = vmatpush2.bf16.msra.mxu0 0
  %10229 = vmatprep.subr.bf16.mxu0 0
  %10230 = vmatpush2.bf16.msra.mxu0 0
  %10231 = vmatprep.subr.bf16.mxu0 0
  %10232 = vmatpush2.bf16.msra.mxu0 0
  %10233 = vmatprep.mubr.bf16.mxu0 0
  %10234 = vmatmul.mubr.bf16.gmra.mxu0 %v10199
  %v10235 = vpop.f32.mrf.mxu0
  %v10236 = vadd.f32 0.0, %v10235
  %v10237 = vpop.f32.mrf.mxu0
  %v10238 = vadd.f32 0.0, %v10237
  %v10239 = vpop.f32.mrf.mxu0
  %v10240 = vpop.f32.mrf.mxu0
  %10241 = vdwg.mxu0
  %10242 = vmatprep.subr.bf16.mxu0 %v9138
  %10243 = vmatpush1.bf16.msra.mxu0 %v9137
  %10244 = vmatprep.subr.bf16.mxu0 %v9134
  %10245 = vmatpush1.bf16.msra.mxu0 %v9133
  %10246 = vmatprep.subr.bf16.mxu0 %v9130
  %10247 = vmatpush1.bf16.msra.mxu0 %v9129
  %10248 = vmatprep.subr.bf16.mxu0 %v9126
  %10249 = vmatpush1.bf16.msra.mxu0 %v9125
  %10250 = vmatprep.subr.bf16.mxu0 %v9122
  %10251 = vmatpush1.bf16.msra.mxu0 %v9121
  %10252 = vmatprep.subr.bf16.mxu0 %v9118
  %10253 = vmatpush1.bf16.msra.mxu0 %v9117
  %10254 = vmatprep.subr.bf16.mxu0 %v9114
  %10255 = vmatpush1.bf16.msra.mxu0 %v9113
  %10256 = vmatprep.subr.bf16.mxu0 %v9110
  %10257 = vmatpush1.bf16.msra.mxu0 %v9109
  %10258 = vmatprep.subr.bf16.mxu0 0
  %10259 = vmatpush2.bf16.msra.mxu0 0
  %10260 = vmatprep.subr.bf16.mxu0 0
  %10261 = vmatpush2.bf16.msra.mxu0 0
  %10262 = vmatprep.subr.bf16.mxu0 0
  %10263 = vmatpush2.bf16.msra.mxu0 0
  %10264 = vmatprep.subr.bf16.mxu0 0
  %10265 = vmatpush2.bf16.msra.mxu0 0
  %10266 = vmatprep.subr.bf16.mxu0 0
  %10267 = vmatpush2.bf16.msra.mxu0 0
  %10268 = vmatprep.subr.bf16.mxu0 0
  %10269 = vmatpush2.bf16.msra.mxu0 0
  %10270 = vmatprep.subr.bf16.mxu0 0
  %10271 = vmatpush2.bf16.msra.mxu0 0
  %10272 = vmatprep.subr.bf16.mxu0 0
  %10273 = vmatpush2.bf16.msra.mxu0 0
  %10274 = vmatprep.mubr.bf16.mxu0 0
  %10275 = vmatmul.mubr.bf16.gmra.mxu0 %v10199
  %v10276 = vpop.f32.mrf.mxu0
  %v10277 = vadd.f32 0.0, %v10276
  %v10278 = vpop.f32.mrf.mxu0
  %v10279 = vadd.f32 0.0, %v10278
  %v10280 = vpop.f32.mrf.mxu0
  %v10281 = vpop.f32.mrf.mxu0
  %10282 = vdwg.mxu0
  %v10287 = vrot.slane %v10236, 7
  %v10288 = vrot.slane %v10238, 7
  %v10289 = vrot.slane %v10277, 7
  %v10290 = vrot.slane %v10279, 7
  %v10295 = vadd.f32 %v8654, %v10287
  %v10296 = vadd.f32 %v8656, %v10288
  %v10297 = vadd.f32 %v8695, %v10289
  %v10298 = vadd.f32 %v8697, %v10290
  %v10299 = vxor.u32 %v10193, 2147483648
  %v10300 = vmul.f32 %v10299, 1.442695
  %v10301 = vpow.pop %v10300
  %v10302 = vadd.f32 %v10301, 1.0
  %v10303 = vrcp.pop %v10302
  %v10304 = vmul.f32 1.0, %v10303
  %v10305 = vxor.u32 %v10194, 2147483648
  %v10306 = vmul.f32 %v10305, 1.442695
  %v10307 = vpow.pop %v10306
  %v10308 = vadd.f32 %v10307, 1.0
  %v10309 = vrcp.pop %v10308
  %v10310 = vmul.f32 1.0, %v10309
  %v10311 = vtanh.pop %v10195
  %v10312 = vxor.u32 %v10196, 2147483648
  %v10313 = vmul.f32 %v10312, 1.442695
  %v10314 = vpow.pop %v10313
  %v10315 = vadd.f32 %v10314, 1.0
  %v10316 = vrcp.pop %v10315
  %v10317 = vmul.f32 1.0, %v10316
  %v10319 = vrot.slane %v10063, 7
  %v10321 = vmul.f32 %v10310, %v10319
  %v10322 = vmul.f32 %v10304, %v10311
  %v10323 = vadd.f32 %v10321, %v10322
  %v10324 = vtanh.pop %v10323
  %v10325 = vmul.f32 %v10317, %v10324
  %v10326 = vxor.u32 %v10295, 2147483648
  %v10327 = vmul.f32 %v10326, 1.442695
  %v10328 = vpow.pop %v10327
  %v10329 = vadd.f32 %v10328, 1.0
  %v10330 = vrcp.pop %v10329
  %v10331 = vmul.f32 1.0, %v10330
  %v10332 = vxor.u32 %v10296, 2147483648
  %v10333 = vmul.f32 %v10332, 1.442695
  %v10334 = vpow.pop %v10333
  %v10335 = vadd.f32 %v10334, 1.0
  %v10336 = vrcp.pop %v10335
  %v10337 = vmul.f32 1.0, %v10336
  %v10338 = vtanh.pop %v10297
  %v10339 = vxor.u32 %v10298, 2147483648
  %v10340 = vmul.f32 %v10339, 1.442695
  %v10341 = vpow.pop %v10340
  %v10342 = vadd.f32 %v10341, 1.0
  %v10343 = vrcp.pop %v10342
  %v10344 = vmul.f32 1.0, %v10343
  %v10346 = vrot.slane %v10090, 1
  %v10348 = vmul.f32 %v10337, %v10346
  %v10349 = vmul.f32 %v10331, %v10338
  %v10350 = vadd.f32 %v10348, %v10349
  %v10351 = vtanh.pop %v10350
  %v10352 = vmul.f32 %v10344, %v10351
  %v10353 = vpack.c.bf16 %v10325, %v10325
  %v10355 = vrot.slane %v10353, 2
  %10357 = vmatprep.subr.bf16.mxu0 %v8890
  %10358 = vmatpush1.bf16.msra.mxu0 %v8889
  %10359 = vmatprep.subr.bf16.mxu0 %v8886
  %10360 = vmatpush1.bf16.msra.mxu0 %v8885
  %10361 = vmatprep.subr.bf16.mxu0 %v8882
  %10362 = vmatpush1.bf16.msra.mxu0 %v8881
  %10363 = vmatprep.subr.bf16.mxu0 %v8878
  %10364 = vmatpush1.bf16.msra.mxu0 %v8877
  %10365 = vmatprep.subr.bf16.mxu0 %v8874
  %10366 = vmatpush1.bf16.msra.mxu0 %v8873
  %10367 = vmatprep.subr.bf16.mxu0 %v8870
  %10368 = vmatpush1.bf16.msra.mxu0 %v8869
  %10369 = vmatprep.subr.bf16.mxu0 %v8866
  %10370 = vmatpush1.bf16.msra.mxu0 %v8865
  %10371 = vmatprep.subr.bf16.mxu0 %v8862
  %10372 = vmatpush1.bf16.msra.mxu0 %v8861
  %10373 = vmatprep.subr.bf16.mxu0 0
  %10374 = vmatpush2.bf16.msra.mxu0 0
  %10375 = vmatprep.subr.bf16.mxu0 0
  %10376 = vmatpush2.bf16.msra.mxu0 0
  %10377 = vmatprep.subr.bf16.mxu0 0
  %10378 = vmatpush2.bf16.msra.mxu0 0
  %10379 = vmatprep.subr.bf16.mxu0 0
  %10380 = vmatpush2.bf16.msra.mxu0 0
  %10381 = vmatprep.subr.bf16.mxu0 0
  %10382 = vmatpush2.bf16.msra.mxu0 0
  %10383 = vmatprep.subr.bf16.mxu0 0
  %10384 = vmatpush2.bf16.msra.mxu0 0
  %10385 = vmatprep.subr.bf16.mxu0 0
  %10386 = vmatpush2.bf16.msra.mxu0 0
  %10387 = vmatprep.subr.bf16.mxu0 0
  %10388 = vmatpush2.bf16.msra.mxu0 0
  %10389 = vmatprep.mubr.bf16.mxu0 0
  %10390 = vmatmul.mubr.bf16.gmra.mxu0 %v10355
  %v10391 = vpop.f32.mrf.mxu0
  %v10392 = vadd.f32 0.0, %v10391
  %v10393 = vpop.f32.mrf.mxu0
  %v10394 = vadd.f32 0.0, %v10393
  %v10395 = vpop.f32.mrf.mxu0
  %v10396 = vpop.f32.mrf.mxu0
  %10397 = vdwg.mxu0
  %10398 = vmatprep.subr.bf16.mxu0 %v8892
  %10399 = vmatpush1.bf16.msra.mxu0 %v8891
  %10400 = vmatprep.subr.bf16.mxu0 %v8888
  %10401 = vmatpush1.bf16.msra.mxu0 %v8887
  %10402 = vmatprep.subr.bf16.mxu0 %v8884
  %10403 = vmatpush1.bf16.msra.mxu0 %v8883
  %10404 = vmatprep.subr.bf16.mxu0 %v8880
  %10405 = vmatpush1.bf16.msra.mxu0 %v8879
  %10406 = vmatprep.subr.bf16.mxu0 %v8876
  %10407 = vmatpush1.bf16.msra.mxu0 %v8875
  %10408 = vmatprep.subr.bf16.mxu0 %v8872
  %10409 = vmatpush1.bf16.msra.mxu0 %v8871
  %10410 = vmatprep.subr.bf16.mxu0 %v8868
  %10411 = vmatpush1.bf16.msra.mxu0 %v8867
  %10412 = vmatprep.subr.bf16.mxu0 %v8864
  %10413 = vmatpush1.bf16.msra.mxu0 %v8863
  %10414 = vmatprep.subr.bf16.mxu0 0
  %10415 = vmatpush2.bf16.msra.mxu0 0
  %10416 = vmatprep.subr.bf16.mxu0 0
  %10417 = vmatpush2.bf16.msra.mxu0 0
  %10418 = vmatprep.subr.bf16.mxu0 0
  %10419 = vmatpush2.bf16.msra.mxu0 0
  %10420 = vmatprep.subr.bf16.mxu0 0
  %10421 = vmatpush2.bf16.msra.mxu0 0
  %10422 = vmatprep.subr.bf16.mxu0 0
  %10423 = vmatpush2.bf16.msra.mxu0 0
  %10424 = vmatprep.subr.bf16.mxu0 0
  %10425 = vmatpush2.bf16.msra.mxu0 0
  %10426 = vmatprep.subr.bf16.mxu0 0
  %10427 = vmatpush2.bf16.msra.mxu0 0
  %10428 = vmatprep.subr.bf16.mxu0 0
  %10429 = vmatpush2.bf16.msra.mxu0 0
  %10430 = vmatprep.mubr.bf16.mxu0 0
  %10431 = vmatmul.mubr.bf16.gmra.mxu0 %v10355
  %v10432 = vpop.f32.mrf.mxu0
  %v10433 = vadd.f32 0.0, %v10432
  %v10434 = vpop.f32.mrf.mxu0
  %v10435 = vadd.f32 0.0, %v10434
  %v10436 = vpop.f32.mrf.mxu0
  %v10437 = vpop.f32.mrf.mxu0
  %10438 = vdwg.mxu0
  %v10443 = vrot.slane %v10392, 3
  %v10444 = vrot.slane %v10394, 3
  %v10445 = vrot.slane %v10433, 3
  %v10446 = vrot.slane %v10435, 3
  %v10451 = vadd.f32 %v8572, %v10443
  %v10452 = vadd.f32 %v8574, %v10444
  %v10453 = vadd.f32 %v8613, %v10445
  %v10454 = vadd.f32 %v8615, %v10446
  %v10455 = vpack.c.bf16 %v10352, %v10352
  %v10457 = vshrl.u32 %v10455, 16
  %10460 = vmatprep.subr.bf16.mxu0 %v9136
  %10461 = vmatpush1.bf16.msra.mxu0 %v9135
  %10462 = vmatprep.subr.bf16.mxu0 %v9132
  %10463 = vmatpush1.bf16.msra.mxu0 %v9131
  %10464 = vmatprep.subr.bf16.mxu0 %v9128
  %10465 = vmatpush1.bf16.msra.mxu0 %v9127
  %10466 = vmatprep.subr.bf16.mxu0 %v9124
  %10467 = vmatpush1.bf16.msra.mxu0 %v9123
  %10468 = vmatprep.subr.bf16.mxu0 %v9120
  %10469 = vmatpush1.bf16.msra.mxu0 %v9119
  %10470 = vmatprep.subr.bf16.mxu0 %v9116
  %10471 = vmatpush1.bf16.msra.mxu0 %v9115
  %10472 = vmatprep.subr.bf16.mxu0 %v9112
  %10473 = vmatpush1.bf16.msra.mxu0 %v9111
  %10474 = vmatprep.subr.bf16.mxu0 %v9108
  %10475 = vmatpush1.bf16.msra.mxu0 %v9107
  %10476 = vmatprep.subr.bf16.mxu0 0
  %10477 = vmatpush2.bf16.msra.mxu0 0
  %10478 = vmatprep.subr.bf16.mxu0 0
  %10479 = vmatpush2.bf16.msra.mxu0 0
  %10480 = vmatprep.subr.bf16.mxu0 0
  %10481 = vmatpush2.bf16.msra.mxu0 0
  %10482 = vmatprep.subr.bf16.mxu0 0
  %10483 = vmatpush2.bf16.msra.mxu0 0
  %10484 = vmatprep.subr.bf16.mxu0 0
  %10485 = vmatpush2.bf16.msra.mxu0 0
  %10486 = vmatprep.subr.bf16.mxu0 0
  %10487 = vmatpush2.bf16.msra.mxu0 0
  %10488 = vmatprep.subr.bf16.mxu0 0
  %10489 = vmatpush2.bf16.msra.mxu0 0
  %10490 = vmatprep.subr.bf16.mxu0 0
  %10491 = vmatpush2.bf16.msra.mxu0 0
  %10492 = vmatprep.mubr.bf16.mxu0 0
  %10493 = vmatmul.mubr.bf16.gmra.mxu0 %v10457
  %v10494 = vpop.f32.mrf.mxu0
  %v10495 = vadd.f32 0.0, %v10494
  %v10496 = vpop.f32.mrf.mxu0
  %v10497 = vadd.f32 0.0, %v10496
  %v10498 = vpop.f32.mrf.mxu0
  %v10499 = vpop.f32.mrf.mxu0
  %10500 = vdwg.mxu0
  %10501 = vmatprep.subr.bf16.mxu0 %v9138
  %10502 = vmatpush1.bf16.msra.mxu0 %v9137
  %10503 = vmatprep.subr.bf16.mxu0 %v9134
  %10504 = vmatpush1.bf16.msra.mxu0 %v9133
  %10505 = vmatprep.subr.bf16.mxu0 %v9130
  %10506 = vmatpush1.bf16.msra.mxu0 %v9129
  %10507 = vmatprep.subr.bf16.mxu0 %v9126
  %10508 = vmatpush1.bf16.msra.mxu0 %v9125
  %10509 = vmatprep.subr.bf16.mxu0 %v9122
  %10510 = vmatpush1.bf16.msra.mxu0 %v9121
  %10511 = vmatprep.subr.bf16.mxu0 %v9118
  %10512 = vmatpush1.bf16.msra.mxu0 %v9117
  %10513 = vmatprep.subr.bf16.mxu0 %v9114
  %10514 = vmatpush1.bf16.msra.mxu0 %v9113
  %10515 = vmatprep.subr.bf16.mxu0 %v9110
  %10516 = vmatpush1.bf16.msra.mxu0 %v9109
  %10517 = vmatprep.subr.bf16.mxu0 0
  %10518 = vmatpush2.bf16.msra.mxu0 0
  %10519 = vmatprep.subr.bf16.mxu0 0
  %10520 = vmatpush2.bf16.msra.mxu0 0
  %10521 = vmatprep.subr.bf16.mxu0 0
  %10522 = vmatpush2.bf16.msra.mxu0 0
  %10523 = vmatprep.subr.bf16.mxu0 0
  %10524 = vmatpush2.bf16.msra.mxu0 0
  %10525 = vmatprep.subr.bf16.mxu0 0
  %10526 = vmatpush2.bf16.msra.mxu0 0
  %10527 = vmatprep.subr.bf16.mxu0 0
  %10528 = vmatpush2.bf16.msra.mxu0 0
  %10529 = vmatprep.subr.bf16.mxu0 0
  %10530 = vmatpush2.bf16.msra.mxu0 0
  %10531 = vmatprep.subr.bf16.mxu0 0
  %10532 = vmatpush2.bf16.msra.mxu0 0
  %10533 = vmatprep.mubr.bf16.mxu0 0
  %10534 = vmatmul.mubr.bf16.gmra.mxu0 %v10457
  %v10535 = vpop.f32.mrf.mxu0
  %v10536 = vadd.f32 0.0, %v10535
  %v10537 = vpop.f32.mrf.mxu0
  %v10538 = vadd.f32 0.0, %v10537
  %v10539 = vpop.f32.mrf.mxu0
  %v10540 = vpop.f32.mrf.mxu0
  %10541 = vdwg.mxu0
  %v10542 = vadd.f32 %v8654, %v10495
  %v10543 = vadd.f32 %v8656, %v10497
  %v10544 = vadd.f32 %v8695, %v10536
  %v10545 = vadd.f32 %v8697, %v10538
  %v10546 = vxor.u32 %v10451, 2147483648
  %v10547 = vmul.f32 %v10546, 1.442695
  %v10548 = vpow.pop %v10547
  %v10549 = vadd.f32 %v10548, 1.0
  %v10550 = vrcp.pop %v10549
  %v10551 = vmul.f32 1.0, %v10550
  %v10552 = vxor.u32 %v10452, 2147483648
  %v10553 = vmul.f32 %v10552, 1.442695
  %v10554 = vpow.pop %v10553
  %v10555 = vadd.f32 %v10554, 1.0
  %v10556 = vrcp.pop %v10555
  %v10557 = vmul.f32 1.0, %v10556
  %v10558 = vtanh.pop %v10453
  %v10559 = vxor.u32 %v10454, 2147483648
  %v10560 = vmul.f32 %v10559, 1.442695
  %v10561 = vpow.pop %v10560
  %v10562 = vadd.f32 %v10561, 1.0
  %v10563 = vrcp.pop %v10562
  %v10564 = vmul.f32 1.0, %v10563
  %v10566 = vrot.slane %v10323, 7
  %v10568 = vmul.f32 %v10557, %v10566
  %v10569 = vmul.f32 %v10551, %v10558
  %v10570 = vadd.f32 %v10568, %v10569
  %v10571 = vtanh.pop %v10570
  %v10572 = vmul.f32 %v10564, %v10571
  %v10573 = vxor.u32 %v10542, 2147483648
  %v10574 = vmul.f32 %v10573, 1.442695
  %v10575 = vpow.pop %v10574
  %v10576 = vadd.f32 %v10575, 1.0
  %v10577 = vrcp.pop %v10576
  %v10578 = vmul.f32 1.0, %v10577
  %v10579 = vxor.u32 %v10543, 2147483648
  %v10580 = vmul.f32 %v10579, 1.442695
  %v10581 = vpow.pop %v10580
  %v10582 = vadd.f32 %v10581, 1.0
  %v10583 = vrcp.pop %v10582
  %v10584 = vmul.f32 1.0, %v10583
  %v10585 = vtanh.pop %v10544
  %v10586 = vxor.u32 %v10545, 2147483648
  %v10587 = vmul.f32 %v10586, 1.442695
  %v10588 = vpow.pop %v10587
  %v10589 = vadd.f32 %v10588, 1.0
  %v10590 = vrcp.pop %v10589
  %v10591 = vmul.f32 1.0, %v10590
  %v10593 = vrot.slane %v10350, 1
  %v10595 = vmul.f32 %v10584, %v10593
  %v10596 = vmul.f32 %v10578, %v10585
  %v10597 = vadd.f32 %v10595, %v10596
  %v10598 = vtanh.pop %v10597
  %v10599 = vmul.f32 %v10591, %v10598
  %v10600 = vsel %vm3981, %v9292, %v9546
  %v10601 = vsel %vm186, %v10600, %v9805
  %v10602 = vsel %vm475, %v10601, %v10065
  %v10603 = vsel %vm241, %v10602, %v10325
  %v10604 = vsel %vm1008, %v10603, %v10572
  %v10605 = vsel %vm3981, %v10599, %v10352
  %v10606 = vsel %vm186, %v10605, %v10092
  %v10607 = vsel %vm475, %v10606, %v9832
  %v10608 = vsel %vm241, %v10607, %v9573
  %v10609 = vsel %vm1008, %v10608, %v9316
  %v10610 = vpack.c.bf16 %v10604, %v10604
  %v10611 = vpack.c.bf16 %v10609, %v10609
  %v10612 = vld [vmem:[%s24] sm:$0xf]
  %v10613 = vld [vmem:[%s24 + $0x4] sm:$0xf]
  %v10614 = vld [vmem:[%s24 + $0x8] sm:$0xf]
  %v10615 = vld [vmem:[%s24 + $0xc] sm:$0xf]
  %v10616 = vld [vmem:[%s24 + $0x10] sm:$0xf]
  %v10617 = vld [vmem:[%s24 + $0x14] sm:$0xf]
  %v10618 = vld [vmem:[%s24 + $0x18] sm:$0xf]
  %v10619 = vld [vmem:[%s24 + $0x1c] sm:$0xf]
  %v10620 = vld [vmem:[%s24 + $0x20] sm:$0xf]
  %v10621 = vld [vmem:[%s24 + $0x24] sm:$0xf]
  %v10622 = vld [vmem:[%s24 + $0x28] sm:$0xf]
  %v10623 = vld [vmem:[%s24 + $0x2c] sm:$0xf]
  %v10624 = vld [vmem:[%s24 + $0x30] sm:$0xf]
  %v10625 = vld [vmem:[%s24 + $0x34] sm:$0xf]
  %v10626 = vld [vmem:[%s24 + $0x38] sm:$0xf]
  %v10627 = vld [vmem:[%s24 + $0x3c] sm:$0xf]
  %v10628 = vld [vmem:[%s24 + $0x40] sm:$0xf]
  %v10629 = vld [vmem:[%s24 + $0x44] sm:$0xf]
  %v10630 = vld [vmem:[%s24 + $0x48] sm:$0xf]
  %v10631 = vld [vmem:[%s24 + $0x4c] sm:$0xf]
  %v10632 = vld [vmem:[%s24 + $0x50] sm:$0xf]
  %v10633 = vld [vmem:[%s24 + $0x54] sm:$0xf]
  %v10634 = vld [vmem:[%s24 + $0x58] sm:$0xf]
  %v10635 = vld [vmem:[%s24 + $0x5c] sm:$0xf]
  %v10636 = vld [vmem:[%s24 + $0x60] sm:$0xf]
  %v10637 = vld [vmem:[%s24 + $0x64] sm:$0xf]
  %v10638 = vld [vmem:[%s24 + $0x68] sm:$0xf]
  %v10639 = vld [vmem:[%s24 + $0x6c] sm:$0xf]
  %v10640 = vld [vmem:[%s24 + $0x70] sm:$0xf]
  %v10641 = vld [vmem:[%s24 + $0x74] sm:$0xf]
  %v10642 = vld [vmem:[%s24 + $0x78] sm:$0xf]
  %v10643 = vld [vmem:[%s24 + $0x7c] sm:$0xf]
  %v10644 = vld [vmem:[#allocation2] sm:$0x1]
  %v10646 = vlaneseq
  %v10647 = vshrl.u32 %v10646, 7
  %v10648 = vsub.s32 0, %v10647
  %v10649 = vrot.slane %v10644, %v10648
  %v10683 = vunpack.c.l.b16 %v10612
  %v10684 = vunpack.c.l.b16 %v10613
  %v10685 = vunpack.c.l.b16 %v10614
  %v10686 = vunpack.c.l.b16 %v10615
  %v10687 = vunpack.c.l.b16 %v10616
  %v10688 = vunpack.c.l.b16 %v10617
  %v10689 = vunpack.c.l.b16 %v10618
  %v10690 = vunpack.c.l.b16 %v10619
  %v10691 = vunpack.c.l.b16 %v10620
  %v10692 = vunpack.c.l.b16 %v10621
  %v10693 = vunpack.c.l.b16 %v10622
  %v10694 = vunpack.c.l.b16 %v10623
  %v10695 = vunpack.c.l.b16 %v10624
  %v10696 = vunpack.c.l.b16 %v10625
  %v10697 = vunpack.c.l.b16 %v10626
  %v10698 = vunpack.c.l.b16 %v10627
  %v10699 = vunpack.c.l.b16 %v10628
  %v10700 = vunpack.c.l.b16 %v10629
  %v10701 = vunpack.c.l.b16 %v10630
  %v10702 = vunpack.c.l.b16 %v10631
  %v10703 = vunpack.c.l.b16 %v10632
  %v10704 = vunpack.c.l.b16 %v10633
  %v10705 = vunpack.c.l.b16 %v10634
  %v10706 = vunpack.c.l.b16 %v10635
  %v10707 = vunpack.c.l.b16 %v10636
  %v10708 = vunpack.c.l.b16 %v10637
  %v10709 = vunpack.c.l.b16 %v10638
  %v10710 = vunpack.c.l.b16 %v10639
  %v10711 = vunpack.c.l.b16 %v10640
  %v10712 = vunpack.c.l.b16 %v10641
  %v10713 = vunpack.c.l.b16 %v10642
  %v10714 = vunpack.c.l.b16 %v10643
  %v10715 = vpack.c.b16 %v10684, %v10683
  %v10716 = vpack.c.b16 %v10686, %v10685
  %v10717 = vpack.c.b16 %v10688, %v10687
  %v10718 = vpack.c.b16 %v10690, %v10689
  %v10719 = vpack.c.b16 %v10692, %v10691
  %v10720 = vpack.c.b16 %v10694, %v10693
  %v10721 = vpack.c.b16 %v10696, %v10695
  %v10722 = vpack.c.b16 %v10698, %v10697
  %v10723 = vpack.c.b16 %v10700, %v10699
  %v10724 = vpack.c.b16 %v10702, %v10701
  %v10725 = vpack.c.b16 %v10704, %v10703
  %v10726 = vpack.c.b16 %v10706, %v10705
  %v10727 = vpack.c.b16 %v10708, %v10707
  %v10728 = vpack.c.b16 %v10710, %v10709
  %v10729 = vpack.c.b16 %v10712, %v10711
  %v10730 = vpack.c.b16 %v10714, %v10713
  %10747 = vmatprep.subr.bf16.mxu0 0
  %10748 = vmatpush1.bf16.msra.mxu0 %v10722
  %10749 = vmatprep.subr.bf16.mxu0 0
  %10750 = vmatpush1.bf16.msra.mxu0 %v10721
  %10751 = vmatprep.subr.bf16.mxu0 0
  %10752 = vmatpush1.bf16.msra.mxu0 %v10720
  %10753 = vmatprep.subr.bf16.mxu0 0
  %10754 = vmatpush1.bf16.msra.mxu0 %v10719
  %10755 = vmatprep.subr.bf16.mxu0 0
  %10756 = vmatpush1.bf16.msra.mxu0 %v10718
  %10757 = vmatprep.subr.bf16.mxu0 0
  %10758 = vmatpush1.bf16.msra.mxu0 %v10717
  %10759 = vmatprep.subr.bf16.mxu0 0
  %10760 = vmatpush1.bf16.msra.mxu0 %v10716
  %10761 = vmatprep.subr.bf16.mxu0 0
  %10762 = vmatpush1.bf16.msra.mxu0 %v10715
  %10763 = vmatprep.subr.bf16.mxu0 0
  %10764 = vmatpush2.bf16.msra.mxu0 %v10730
  %10765 = vmatprep.subr.bf16.mxu0 0
  %10766 = vmatpush2.bf16.msra.mxu0 %v10729
  %10767 = vmatprep.subr.bf16.mxu0 0
  %10768 = vmatpush2.bf16.msra.mxu0 %v10728
  %10769 = vmatprep.subr.bf16.mxu0 0
  %10770 = vmatpush2.bf16.msra.mxu0 %v10727
  %10771 = vmatprep.subr.bf16.mxu0 0
  %10772 = vmatpush2.bf16.msra.mxu0 %v10726
  %10773 = vmatprep.subr.bf16.mxu0 0
  %10774 = vmatpush2.bf16.msra.mxu0 %v10725
  %10775 = vmatprep.subr.bf16.mxu0 0
  %10776 = vmatpush2.bf16.msra.mxu0 %v10724
  %10777 = vmatprep.subr.bf16.mxu0 0
  %10778 = vmatpush2.bf16.msra.mxu0 %v10723
  %10779 = vmatprep.mubr.bf16.mxu0 %v10611
  %10780 = vmatmul.mubr.bf16.gmra.mxu0 %v10610
  %v10781 = vpop.f32.mrf.mxu0
  %v10782 = vadd.f32 %v10649, %v10781
  %v10783 = vpop.f32.mrf.mxu0
  %v10784 = vpop.f32.mrf.mxu0
  %v10785 = vpop.f32.mrf.mxu0
  %10786 = vdwg.mxu0
  %vm10787 = vcmask 5120
  %10788 = vst.msk [vmem:[%s26] sm:$0x3f] %vm10787, %v10782
  // Predicated region
  $region106: #{unet_retrain_forward.1} parent=0 // pred_check
    _
  $region107: #{unet_retrain_forward.1} parent=0 // pred_check_branch
    %10790 = sbr.rel (0) target = $region109
  $region108: #{unet_retrain_forward.1} parent=0 // pred_region
    _
  $region109: #{unet_retrain_forward.1} parent=0 // pred_fallthru
    _
  // Predicated region
  $region110: #{unet_retrain_forward.1} parent=0 // pred_check
    _
  $region111: #{unet_retrain_forward.1} parent=0 // pred_check_branch
    %10792 = sbr.rel (0) target = $region113
  $region112: #{unet_retrain_forward.1} parent=0 // pred_region
    _
  $region113: #{unet_retrain_forward.1} parent=0 // pred_fallthru
    _

</llo_original>
